<compile_context>
chip_gen: v7x
topology: tpu7x:2x2x1
jax: 0.10.0
libtpu: 0.0.40
codegen_flags: <defaults>
</compile_context>

<pallas_src>
import jax
import jax.numpy as jnp
from jax.experimental import pallas as pl
from jax.experimental.pallas import tpu as pltpu

NDF = 16
EPS = 1e-5
LEAK = 0.2
CDT = jnp.bfloat16     # conv operand / activation dtype (MXU-native, halves DMA bytes)


# ----------------------------------------------------------------------------
# Pallas kernels
# ----------------------------------------------------------------------------
def _bn_lrelu(y, s, b):
    z = y * s + b
    return jnp.where(z >= 0.0, z, LEAK * z)


def _conv_act_kernel(p_ref, w_ref, s_ref, b_ref, act_ref):
    # conv1: conv-as-matmul + BN + LeakyReLU; only the activation is needed.
    y = jnp.dot(p_ref[...], w_ref[...], preferred_element_type=jnp.float32)
    act_ref[...] = _bn_lrelu(y, s_ref[...], b_ref[...]).astype(act_ref.dtype)


def _head_from_raw(y, wmu, wvar, hb, n):
    # mu/var linear heads on the raw conv output (torch .view(-1, C*H*W) order is
    # baked into the (H*W, C) weight layout at init time).
    hw, c = wmu.shape
    y3 = y.reshape(n, hw, c)                              # leading-dim split only
    mu = jnp.sum(jnp.sum(y3 * wmu, axis=2), axis=1, keepdims=True)      # (n, 1)
    lv = jnp.sum(jnp.sum(y3 * wvar, axis=2), axis=1, keepdims=True)     # (n, 1)
    return mu + hb[:, 0:1], jnp.exp(lv + hb[:, 1:2])


def _conv_act_head_kernel(p_ref, w_ref, s_ref, b_ref, wmu_ref, wvar_ref, hb_ref,
                          act_ref, mu_ref, var_ref):
    # conv2 / conv3: conv + (next stage's) BN + LeakyReLU + this stage's mu/var head.
    y = jnp.dot(p_ref[...], w_ref[...], preferred_element_type=jnp.float32)   # (N*HW, C) f32
    act_ref[...] = _bn_lrelu(y, s_ref[...], b_ref[...]).astype(act_ref.dtype)
    mu, var = _head_from_raw(y, wmu_ref[...], wvar_ref[...], hb_ref[...],
                             mu_ref.shape[0])
    mu_ref[...] = mu
    var_ref[...] = var


def _conv_head_kernel(p_ref, w_ref, wmu_ref, wvar_ref, hb_ref, mu_ref, var_ref):
    # conv4: conv + mu/var head only; x3 never leaves VMEM, no BN/LReLU epilogue.
    y = jnp.dot(p_ref[...], w_ref[...], preferred_element_type=jnp.float32)
    mu, var = _head_from_raw(y, wmu_ref[...], wvar_ref[...], hb_ref[...],
                             mu_ref.shape[0])
    mu_ref[...] = mu
    var_ref[...] = var


# ----------------------------------------------------------------------------
# pallas_call wrappers (per-layer full blocks; no padding)
# ----------------------------------------------------------------------------
def conv1_stage(patches, w, s, b, n):
    """patches: (N*HW, K) bf16 -> act (N*HW, Cout) bf16. One block per sample."""
    m, k = patches.shape
    cout = w.shape[1]
    tm = m // n
    return pl.pallas_call(
        _conv_act_kernel,
        grid=(n,),
        in_specs=[
            pl.BlockSpec((tm, k), lambda i: (i, 0)),
            pl.BlockSpec((k, cout), lambda i: (0, 0)),
            pl.BlockSpec((1, cout), lambda i: (0, 0)),
            pl.BlockSpec((1, cout), lambda i: (0, 0)),
        ],
        out_specs=pl.BlockSpec((tm, cout), lambda i: (i, 0)),
        out_shape=jax.ShapeDtypeStruct((m, cout), CDT),
        compiler_params=pltpu.CompilerParams(
            dimension_semantics=("parallel",)),   # lets v7x megacore shard over batch
    )(patches, w, s, b)


def conv_stage_with_head(patches, w, s, b, wmu, wvar, hb, n):
    """Returns (act (M, Cout) bf16, mu (N,1) f32, var (N,1) f32)."""
    m, k = patches.shape
    cout = w.shape[1]
    hw = wmu.shape[0]
    return pl.pallas_call(
        _conv_act_head_kernel,
        grid=(1,),
        in_specs=[
            pl.BlockSpec((m, k), lambda i: (0, 0)),
            pl.BlockSpec((k, cout), lambda i: (0, 0)),
            pl.BlockSpec((1, cout), lambda i: (0, 0)),
            pl.BlockSpec((1, cout), lambda i: (0, 0)),
            pl.BlockSpec((hw, cout), lambda i: (0, 0)),
            pl.BlockSpec((hw, cout), lambda i: (0, 0)),
            pl.BlockSpec((1, 2), lambda i: (0, 0)),
        ],
        out_specs=(
            pl.BlockSpec((m, cout), lambda i: (0, 0)),
            pl.BlockSpec((n, 1), lambda i: (0, 0)),
            pl.BlockSpec((n, 1), lambda i: (0, 0)),
        ),
        out_shape=(
            jax.ShapeDtypeStruct((m, cout), CDT),
            jax.ShapeDtypeStruct((n, 1), jnp.float32),
            jax.ShapeDtypeStruct((n, 1), jnp.float32),
        ),
        compiler_params=pltpu.CompilerParams(
            dimension_semantics=("arbitrary",)),
    )(patches, w, s, b, wmu, wvar, hb)


def conv_stage_head_only(patches, w, wmu, wvar, hb, n):
    """Returns (mu (N,1) f32, var (N,1) f32); conv output never written to HBM."""
    m, k = patches.shape
    cout = w.shape[1]
    hw = wmu.shape[0]
    return pl.pallas_call(
        _conv_head_kernel,
        grid=(1,),
        in_specs=[
            pl.BlockSpec((m, k), lambda i: (0, 0)),
            pl.BlockSpec((k, cout), lambda i: (0, 0)),
            pl.BlockSpec((hw, cout), lambda i: (0, 0)),
            pl.BlockSpec((hw, cout), lambda i: (0, 0)),
            pl.BlockSpec((1, 2), lambda i: (0, 0)),
        ],
        out_specs=(
            pl.BlockSpec((n, 1), lambda i: (0, 0)),
            pl.BlockSpec((n, 1), lambda i: (0, 0)),
        ),
        out_shape=(
            jax.ShapeDtypeStruct((n, 1), jnp.float32),
            jax.ShapeDtypeStruct((n, 1), jnp.float32),
        ),
        compiler_params=pltpu.CompilerParams(
            dimension_semantics=("arbitrary",)),
    )(patches, w, wmu, wvar, hb)


# ----------------------------------------------------------------------------
# JAX glue: im2col patch extraction (pure data movement; compute is in Pallas)
# ----------------------------------------------------------------------------
def im2col(x_nhwc, ksize=4, stride=2, pad=1):
    N, H, W, C = x_nhwc.shape
    xp = jnp.pad(x_nhwc, ((0, 0), (pad, pad), (pad, pad), (0, 0)))
    OH = (H + 2 * pad - ksize) // stride + 1
    OW = (W + 2 * pad - ksize) // stride + 1
    cols = []
    for kh in range(ksize):
        for kw in range(ksize):
            cols.append(
                xp[:, kh:kh + stride * (OH - 1) + 1:stride,
                      kw:kw + stride * (OW - 1) + 1:stride, :])
    patches = jnp.stack(cols, axis=3)                       # (N, OH, OW, KH*KW, C)
    return patches.reshape(N * OH * OW, ksize * ksize * C), OH, OW


# ----------------------------------------------------------------------------
# Parameters (deterministic synthetic init)
# ----------------------------------------------------------------------------
def init_params(key):
    keys = iter(jax.random.split(key, 32))

    def conv_w(cin, cout, k=4):
        fan_in = cin * k * k
        bound = 1.0 / (fan_in ** 0.5)
        w = jax.random.uniform(next(keys), (k, k, cin, cout), jnp.float32, -bound, bound)
        return w.reshape(k * k * cin, cout).astype(CDT)     # matches im2col (kh,kw,c) order

    def bn_affine(c):
        gamma = 1.0 + 0.1 * jax.random.normal(next(keys), (c,), jnp.float32)
        beta = 0.1 * jax.random.normal(next(keys), (c,), jnp.float32)
        mean = 0.1 * jax.random.normal(next(keys), (c,), jnp.float32)
        var = 1.0 + 0.1 * jnp.abs(jax.random.normal(next(keys), (c,), jnp.float32))
        scale = gamma / jnp.sqrt(var + EPS)
        bias = beta - mean * scale
        return scale.reshape(1, c), bias.reshape(1, c)

    def head(hw, c):
        # torch Linear(C*H*W, 1) weights, pre-permuted from (c, h, w) flatten order
        # to (H*W, C) so the kernel consumes the NHWC conv output directly.
        fin = hw * c
        bound = 1.0 / (fin ** 0.5)
        wmu = jax.random.uniform(next(keys), (hw, c), jnp.float32, -bound, bound)
        wvar = jax.random.uniform(next(keys), (hw, c), jnp.float32, -bound, bound)
        hb = jax.random.uniform(next(keys), (1, 2), jnp.float32, -bound, bound)
        return wmu, wvar, hb

    p = {}
    p["w1"] = conv_w(1, NDF * 4)                            # conv1: 1 -> 64
    p["s1"], p["b1"] = bn_affine(NDF * 4)                   # BN1 (netQ1)
    p["w2"] = conv_w(NDF * 4, NDF * 2)                      # conv2: 64 -> 32
    p["s2"], p["b2"] = bn_affine(NDF * 2)                   # BN2 (netQ2) applied to x1
    p["w3"] = conv_w(NDF * 2, NDF * 4)                      # conv3: 32 -> 64
    p["s3"], p["b3"] = bn_affine(NDF * 4)                   # BN3 (netQ3) applied to x2
    p["w4"] = conv_w(NDF * 4, NDF * 8)                      # conv4: 64 -> 128

    p["hmu1"], p["hvar1"], p["hb1"] = head(16 * 16, NDF * 2)
    p["hmu2"], p["hvar2"], p["hb2"] = head(8 * 8, NDF * 4)
    p["hmu3"], p["hvar3"], p["hb3"] = head(4 * 4, NDF * 8)
    return p


# ----------------------------------------------------------------------------
# Forward pass
# ----------------------------------------------------------------------------
def qnet_forward(params, x_nchw):
    N = x_nchw.shape[0]
    x = jnp.transpose(x_nchw, (0, 2, 3, 1)).astype(CDT)     # NHWC, bf16

    # netQ1 (part 1): conv1 -> BN1 -> LeakyReLU
    p1, oh, ow = im2col(x)                                  # (N*32*32, 16)
    h = conv1_stage(p1, params["w1"], params["s1"], params["b1"], N)
    h = h.reshape(N, oh, ow, NDF * 4)                       # (N, 32, 32, 64)

    # netQ1 (part 2) + head1 + netQ2's BN2/LReLU, all in one kernel:
    #   x1 = conv2(h); mu1/var1 = heads(x1); act = lrelu(bn2(x1))
    p2, oh, ow = im2col(h)                                  # (N*16*16, 1024)
    x1_act, mu1, var1 = conv_stage_with_head(
        p2, params["w2"], params["s2"], params["b2"],
        params["hmu1"], params["hvar1"], params["hb1"], N)
    x1_act = x1_act.reshape(N, oh, ow, NDF * 2)             # (N, 16, 16, 32)

    # netQ2 conv3 + head2 + netQ3's BN3/LReLU
    p3, oh, ow = im2col(x1_act)                             # (N*8*8, 512)
    x2_act, mu2, var2 = conv_stage_with_head(
        p3, params["w3"], params["s3"], params["b3"],
        params["hmu2"], params["hvar2"], params["hb2"], N)
    x2_act = x2_act.reshape(N, oh, ow, NDF * 4)             # (N, 8, 8, 64)

    # netQ3 conv4 + head3 (x3 never leaves the kernel)
    p4, _, _ = im2col(x2_act)                               # (N*4*4, 1024)
    mu3, var3 = conv_stage_head_only(
        p4, params["w4"], params["hmu3"], params["hvar3"], params["hb3"], N)

    mu = jnp.concatenate([mu1, mu2, mu3], axis=1)           # (N, 3)
    var = jnp.concatenate([var1, var2, var3], axis=1)       # (N, 3)
    return mu, var


if __name__ == "__main__":
    key = jax.random.PRNGKey(0)
    pkey, xkey = jax.random.split(key)
    params = init_params(pkey)
    # Spatial size / channels are fixed by the module (64x64x1); small batch.
    x = jax.random.normal(xkey, (2, 1, 64, 64), jnp.float32)

    fwd = jax.jit(qnet_forward)
    mu, var = fwd(params, x)
    jax.block_until_ready(mu)
    jax.block_until_ready(var)

    assert mu.shape == (2, 3) and var.shape == (2, 3)
    assert bool(jnp.all(jnp.isfinite(mu))) and bool(jnp.all(jnp.isfinite(var)))
    assert bool(jnp.all(var > 0.0))
    print("KERNEL_OK")
</pallas_src>

<mosaic_0001>
module attributes {stable_mosaic.version = 11 : i64} {
  func.func @_conv_act_kernel(%arg0: i32, %arg1: memref<1024x16xbf16, #tpu.memory_space<vmem>>, %arg2: memref<16x64xbf16, #tpu.memory_space<vmem>>, %arg3: memref<1x64xf32, #tpu.memory_space<vmem>>, %arg4: memref<1x64xf32, #tpu.memory_space<vmem>>, %arg5: memref<1024x64xbf16, #tpu.memory_space<vmem>>) attributes {dimension_semantics = [#tpu.dimension_semantics<parallel>], iteration_bounds = array<i64: 2>, scalar_prefetch = 0 : i64, scratch_operands = 0 : i64, tpu.core_type = #tpu.core_type<tc>, window_params = [{transform_indices = @transform_0, window_bounds = array<i64: 1024, 16>}, {pipeline_mode = #tpu.pipeline_mode<synchronous>, transform_indices = @transform_1, window_bounds = array<i64: 16, 64>}, {pipeline_mode = #tpu.pipeline_mode<synchronous>, transform_indices = @transform_2, window_bounds = array<i64: 1, 64>}, {pipeline_mode = #tpu.pipeline_mode<synchronous>, transform_indices = @transform_3, window_bounds = array<i64: 1, 64>}, {transform_indices = @transform_4, window_bounds = array<i64: 1024, 64>}]} {
    %c0 = arith.constant 0 : index
    %c0_0 = arith.constant 0 : index
    %0 = vector.load %arg1[%c0, %c0_0] : memref<1024x16xbf16, #tpu.memory_space<vmem>>, vector<1024x16xbf16>
    %c0_1 = arith.constant 0 : index
    %c0_2 = arith.constant 0 : index
    %1 = vector.load %arg2[%c0_1, %c0_2] : memref<16x64xbf16, #tpu.memory_space<vmem>>, vector<16x64xbf16>
    %cst = arith.constant dense<0.000000e+00> : vector<1024x64xf32>
    %2 = tpu.matmul %0, %1, %cst {dimension_numbers = #tpu.dot_dimension_numbers<[1], [0], [0], [1], [0, 0, 1, 1], [], []>} : vector<1024x16xbf16>, vector<16x64xbf16>, vector<1024x64xf32> -> vector<1024x64xf32>
    %c0_3 = arith.constant 0 : index
    %c0_4 = arith.constant 0 : index
    %3 = vector.load %arg3[%c0_3, %c0_4] : memref<1x64xf32, #tpu.memory_space<vmem>>, vector<1x64xf32>
    %c0_5 = arith.constant 0 : index
    %c0_6 = arith.constant 0 : index
    %4 = vector.load %arg4[%c0_5, %c0_6] : memref<1x64xf32, #tpu.memory_space<vmem>>, vector<1x64xf32>
    %5 = vector.broadcast %3 : vector<1x64xf32> to vector<1024x64xf32>
    %6 = arith.mulf %2, %5 : vector<1024x64xf32>
    %7 = vector.broadcast %4 : vector<1x64xf32> to vector<1024x64xf32>
    %8 = arith.addf %6, %7 : vector<1024x64xf32>
    %cst_7 = arith.constant 0.000000e+00 : f32
    %9 = vector.broadcast %cst_7 : f32 to vector<1024x64xf32>
    %10 = arith.cmpf oge, %8, %9 : vector<1024x64xf32>
    %cst_8 = arith.constant 2.000000e-01 : f32
    %11 = vector.broadcast %cst_8 : f32 to vector<1024x64xf32>
    %12 = arith.mulf %11, %8 : vector<1024x64xf32>
    %13 = arith.select %10, %8, %12 : vector<1024x64xi1>, vector<1024x64xf32>
    %14 = arith.truncf %13 : vector<1024x64xf32> to vector<1024x64xbf16>
    %c0_9 = arith.constant 0 : index
    %c0_10 = arith.constant 0 : index
    %15 = vector.load %arg5[%c0_9, %c0_10] : memref<1024x64xbf16, #tpu.memory_space<vmem>>, vector<1024x64xbf16>
    tpu.vector_store %arg5[%c0_9, %c0_10], %14 {strides = array<i32>} : memref<1024x64xbf16, #tpu.memory_space<vmem>>, vector<1024x64xbf16>,
    return
  }
  func.func @transform_0(%arg0: i32) -> (i32, i32) {
    %c0_i32 = arith.constant 0 : i32
    %c0_i32_0 = arith.constant 0 : i32
    return %arg0, %c0_i32 : i32, i32
  }
  func.func @transform_1(%arg0: i32) -> (i32, i32) {
    %c0_i32 = arith.constant 0 : i32
    %c0_i32_0 = arith.constant 0 : i32
    %c0_i32_1 = arith.constant 0 : i32
    return %c0_i32, %c0_i32_0 : i32, i32
  }
  func.func @transform_2(%arg0: i32) -> (i32, i32) {
    %c0_i32 = arith.constant 0 : i32
    %c0_i32_0 = arith.constant 0 : i32
    %c0_i32_1 = arith.constant 0 : i32
    return %c0_i32, %c0_i32_0 : i32, i32
  }
  func.func @transform_3(%arg0: i32) -> (i32, i32) {
    %c0_i32 = arith.constant 0 : i32
    %c0_i32_0 = arith.constant 0 : i32
    %c0_i32_1 = arith.constant 0 : i32
    return %c0_i32, %c0_i32_0 : i32, i32
  }
  func.func @transform_4(%arg0: i32) -> (i32, i32) {
    %c0_i32 = arith.constant 0 : i32
    %c0_i32_0 = arith.constant 0 : i32
    return %arg0, %c0_i32 : i32, i32
  }
}

module attributes {stable_mosaic.version = 11 : i64} {
  func.func @_conv_act_head_kernel(%arg0: i32, %arg1: memref<512x1024xbf16, #tpu.memory_space<vmem>>, %arg2: memref<1024x32xbf16, #tpu.memory_space<vmem>>, %arg3: memref<1x32xf32, #tpu.memory_space<vmem>>, %arg4: memref<1x32xf32, #tpu.memory_space<vmem>>, %arg5: memref<256x32xf32, #tpu.memory_space<vmem>>, %arg6: memref<256x32xf32, #tpu.memory_space<vmem>>, %arg7: memref<1x2xf32, #tpu.memory_space<vmem>>, %arg8: memref<512x32xbf16, #tpu.memory_space<vmem>>, %arg9: memref<2x1xf32, #tpu.memory_space<vmem>>, %arg10: memref<2x1xf32, #tpu.memory_space<vmem>>) attributes {dimension_semantics = [#tpu.dimension_semantics<arbitrary>], iteration_bounds = array<i64: 1>, scalar_prefetch = 0 : i64, scratch_operands = 0 : i64, tpu.core_type = #tpu.core_type<tc>, window_params = [{pipeline_mode = #tpu.pipeline_mode<synchronous>, transform_indices = @transform_0, window_bounds = array<i64: 512, 1024>}, {pipeline_mode = #tpu.pipeline_mode<synchronous>, transform_indices = @transform_1, window_bounds = array<i64: 1024, 32>}, {pipeline_mode = #tpu.pipeline_mode<synchronous>, transform_indices = @transform_2, window_bounds = array<i64: 1, 32>}, {pipeline_mode = #tpu.pipeline_mode<synchronous>, transform_indices = @transform_3, window_bounds = array<i64: 1, 32>}, {pipeline_mode = #tpu.pipeline_mode<synchronous>, transform_indices = @transform_4, window_bounds = array<i64: 256, 32>}, {pipeline_mode = #tpu.pipeline_mode<synchronous>, transform_indices = @transform_5, window_bounds = array<i64: 256, 32>}, {pipeline_mode = #tpu.pipeline_mode<synchronous>, transform_indices = @transform_6, window_bounds = array<i64: 1, 2>}, {pipeline_mode = #tpu.pipeline_mode<synchronous>, transform_indices = @transform_7, window_bounds = array<i64: 512, 32>}, {pipeline_mode = #tpu.pipeline_mode<synchronous>, transform_indices = @transform_8, window_bounds = array<i64: 2, 1>}, {pipeline_mode = #tpu.pipeline_mode<synchronous>, transform_indices = @transform_9, window_bounds = array<i64: 2, 1>}]} {
    %c0 = arith.constant 0 : index
    %c0_0 = arith.constant 0 : index
    %0 = vector.load %arg1[%c0, %c0_0] : memref<512x1024xbf16, #tpu.memory_space<vmem>>, vector<512x1024xbf16>
    %c0_1 = arith.constant 0 : index
    %c0_2 = arith.constant 0 : index
    %1 = vector.load %arg2[%c0_1, %c0_2] : memref<1024x32xbf16, #tpu.memory_space<vmem>>, vector<1024x32xbf16>
    %cst = arith.constant dense<0.000000e+00> : vector<512x32xf32>
    %2 = tpu.matmul %0, %1, %cst {dimension_numbers = #tpu.dot_dimension_numbers<[1], [0], [0], [1], [0, 0, 1, 1], [], []>} : vector<512x1024xbf16>, vector<1024x32xbf16>, vector<512x32xf32> -> vector<512x32xf32>
    %c0_3 = arith.constant 0 : index
    %c0_4 = arith.constant 0 : index
    %3 = vector.load %arg3[%c0_3, %c0_4] : memref<1x32xf32, #tpu.memory_space<vmem>>, vector<1x32xf32>
    %c0_5 = arith.constant 0 : index
    %c0_6 = arith.constant 0 : index
    %4 = vector.load %arg4[%c0_5, %c0_6] : memref<1x32xf32, #tpu.memory_space<vmem>>, vector<1x32xf32>
    %5 = vector.broadcast %3 : vector<1x32xf32> to vector<512x32xf32>
    %6 = arith.mulf %2, %5 : vector<512x32xf32>
    %7 = vector.broadcast %4 : vector<1x32xf32> to vector<512x32xf32>
    %8 = arith.addf %6, %7 : vector<512x32xf32>
    %cst_7 = arith.constant 0.000000e+00 : f32
    %9 = vector.broadcast %cst_7 : f32 to vector<512x32xf32>
    %10 = arith.cmpf oge, %8, %9 : vector<512x32xf32>
    %cst_8 = arith.constant 2.000000e-01 : f32
    %11 = vector.broadcast %cst_8 : f32 to vector<512x32xf32>
    %12 = arith.mulf %11, %8 : vector<512x32xf32>
    %13 = arith.select %10, %8, %12 : vector<512x32xi1>, vector<512x32xf32>
    %14 = arith.truncf %13 : vector<512x32xf32> to vector<512x32xbf16>
    %c0_9 = arith.constant 0 : index
    %c0_10 = arith.constant 0 : index
    %15 = vector.load %arg8[%c0_9, %c0_10] : memref<512x32xbf16, #tpu.memory_space<vmem>>, vector<512x32xbf16>
    tpu.vector_store %arg8[%c0_9, %c0_10], %14 {strides = array<i32>} : memref<512x32xbf16, #tpu.memory_space<vmem>>, vector<512x32xbf16>,
    %c0_11 = arith.constant 0 : index
    %c0_12 = arith.constant 0 : index
    %16 = vector.load %arg5[%c0_11, %c0_12] : memref<256x32xf32, #tpu.memory_space<vmem>>, vector<256x32xf32>
    %c0_13 = arith.constant 0 : index
    %c0_14 = arith.constant 0 : index
    %17 = vector.load %arg6[%c0_13, %c0_14] : memref<256x32xf32, #tpu.memory_space<vmem>>, vector<256x32xf32>
    %c0_15 = arith.constant 0 : index
    %c0_16 = arith.constant 0 : index
    %18 = vector.load %arg7[%c0_15, %c0_16] : memref<1x2xf32, #tpu.memory_space<vmem>>, vector<1x2xf32>
    %19 = vector.shape_cast %2 : vector<512x32xf32> to vector<2x256x32xf32>
    %20 = vector.shape_cast %16 : vector<256x32xf32> to vector<1x256x32xf32>
    %21 = vector.broadcast %20 : vector<1x256x32xf32> to vector<2x256x32xf32>
    %22 = arith.mulf %19, %21 : vector<2x256x32xf32>
    %cst_17 = arith.constant dense<0.000000e+00> : vector<2x256xf32>
    %23 = vector.multi_reduction <add>, %22, %cst_17 [2] : vector<2x256x32xf32> to vector<2x256xf32>
    %cst_18 = arith.constant dense<0.000000e+00> : vector<2xf32>
    %24 = vector.multi_reduction <add>, %23, %cst_18 [1] : vector<2x256xf32> to vector<2xf32>
    %25 = vector.shape_cast %24 : vector<2xf32> to vector<2x1xf32>
    %26 = vector.shape_cast %17 : vector<256x32xf32> to vector<1x256x32xf32>
    %27 = vector.broadcast %26 : vector<1x256x32xf32> to vector<2x256x32xf32>
    %28 = arith.mulf %19, %27 : vector<2x256x32xf32>
    %cst_19 = arith.constant dense<0.000000e+00> : vector<2x256xf32>
    %29 = vector.multi_reduction <add>, %28, %cst_19 [2] : vector<2x256x32xf32> to vector<2x256xf32>
    %cst_20 = arith.constant dense<0.000000e+00> : vector<2xf32>
    %30 = vector.multi_reduction <add>, %29, %cst_20 [1] : vector<2x256xf32> to vector<2xf32>
    %31 = vector.shape_cast %30 : vector<2xf32> to vector<2x1xf32>
    %32 = vector.extract_strided_slice %18 {offsets = [0, 0], sizes = [1, 1], strides = [1, 1]} : vector<1x2xf32> to vector<1x1xf32>
    %33 = vector.broadcast %32 : vector<1x1xf32> to vector<2x1xf32>
    %34 = arith.addf %25, %33 : vector<2x1xf32>
    %35 = vector.extract_strided_slice %18 {offsets = [0, 1], sizes = [1, 1], strides = [1, 1]} : vector<1x2xf32> to vector<1x1xf32>
    %36 = vector.broadcast %35 : vector<1x1xf32> to vector<2x1xf32>
    %37 = arith.addf %31, %36 : vector<2x1xf32>
    %38 = math.exp %37 : vector<2x1xf32>
    %c0_21 = arith.constant 0 : index
    %c0_22 = arith.constant 0 : index
    %39 = vector.load %arg9[%c0_21, %c0_22] : memref<2x1xf32, #tpu.memory_space<vmem>>, vector<2x1xf32>
    tpu.vector_store %arg9[%c0_21, %c0_22], %34 {strides = array<i32>} : memref<2x1xf32, #tpu.memory_space<vmem>>, vector<2x1xf32>,
    %c0_23 = arith.constant 0 : index
    %c0_24 = arith.constant 0 : index
    %40 = vector.load %arg10[%c0_23, %c0_24] : memref<2x1xf32, #tpu.memory_space<vmem>>, vector<2x1xf32>
    tpu.vector_store %arg10[%c0_23, %c0_24], %38 {strides = array<i32>} : memref<2x1xf32, #tpu.memory_space<vmem>>, vector<2x1xf32>,
    return
  }
  func.func @transform_0(%arg0: i32) -> (i32, i32) {
    %c0_i32 = arith.constant 0 : i32
    %c0_i32_0 = arith.constant 0 : i32
    %c0_i32_1 = arith.constant 0 : i32
    return %c0_i32, %c0_i32_0 : i32, i32
  }
  func.func @transform_1(%arg0: i32) -> (i32, i32) {
    %c0_i32 = arith.constant 0 : i32
    %c0_i32_0 = arith.constant 0 : i32
    %c0_i32_1 = arith.constant 0 : i32
    return %c0_i32, %c0_i32_0 : i32, i32
  }
  func.func @transform_2(%arg0: i32) -> (i32, i32) {
    %c0_i32 = arith.constant 0 : i32
    %c0_i32_0 = arith.constant 0 : i32
    %c0_i32_1 = arith.constant 0 : i32
    return %c0_i32, %c0_i32_0 : i32, i32
  }
  func.func @transform_3(%arg0: i32) -> (i32, i32) {
    %c0_i32 = arith.constant 0 : i32
    %c0_i32_0 = arith.constant 0 : i32
    %c0_i32_1 = arith.constant 0 : i32
    return %c0_i32, %c0_i32_0 : i32, i32
  }
  func.func @transform_4(%arg0: i32) -> (i32, i32) {
    %c0_i32 = arith.constant 0 : i32
    %c0_i32_0 = arith.constant 0 : i32
    %c0_i32_1 = arith.constant 0 : i32
    return %c0_i32, %c0_i32_0 : i32, i32
  }
  func.func @transform_5(%arg0: i32) -> (i32, i32) {
    %c0_i32 = arith.constant 0 : i32
    %c0_i32_0 = arith.constant 0 : i32
    %c0_i32_1 = arith.constant 0 : i32
    return %c0_i32, %c0_i32_0 : i32, i32
  }
  func.func @transform_6(%arg0: i32) -> (i32, i32) {
    %c0_i32 = arith.constant 0 : i32
    %c0_i32_0 = arith.constant 0 : i32
    %c0_i32_1 = arith.constant 0 : i32
    return %c0_i32, %c0_i32_0 : i32, i32
  }
  func.func @transform_7(%arg0: i32) -> (i32, i32) {
    %c0_i32 = arith.constant 0 : i32
    %c0_i32_0 = arith.constant 0 : i32
    %c0_i32_1 = arith.constant 0 : i32
    return %c0_i32, %c0_i32_0 : i32, i32
  }
  func.func @transform_8(%arg0: i32) -> (i32, i32) {
    %c0_i32 = arith.constant 0 : i32
    %c0_i32_0 = arith.constant 0 : i32
    %c0_i32_1 = arith.constant 0 : i32
    return %c0_i32, %c0_i32_0 : i32, i32
  }
  func.func @transform_9(%arg0: i32) -> (i32, i32) {
    %c0_i32 = arith.constant 0 : i32
    %c0_i32_0 = arith.constant 0 : i32
    %c0_i32_1 = arith.constant 0 : i32
    return %c0_i32, %c0_i32_0 : i32, i32
  }
}

module attributes {stable_mosaic.version = 11 : i64} {
  func.func @_conv_act_head_kernel(%arg0: i32, %arg1: memref<128x512xbf16, #tpu.memory_space<vmem>>, %arg2: memref<512x64xbf16, #tpu.memory_space<vmem>>, %arg3: memref<1x64xf32, #tpu.memory_space<vmem>>, %arg4: memref<1x64xf32, #tpu.memory_space<vmem>>, %arg5: memref<64x64xf32, #tpu.memory_space<vmem>>, %arg6: memref<64x64xf32, #tpu.memory_space<vmem>>, %arg7: memref<1x2xf32, #tpu.memory_space<vmem>>, %arg8: memref<128x64xbf16, #tpu.memory_space<vmem>>, %arg9: memref<2x1xf32, #tpu.memory_space<vmem>>, %arg10: memref<2x1xf32, #tpu.memory_space<vmem>>) attributes {dimension_semantics = [#tpu.dimension_semantics<arbitrary>], iteration_bounds = array<i64: 1>, scalar_prefetch = 0 : i64, scratch_operands = 0 : i64, tpu.core_type = #tpu.core_type<tc>, window_params = [{pipeline_mode = #tpu.pipeline_mode<synchronous>, transform_indices = @transform_0, window_bounds = array<i64: 128, 512>}, {pipeline_mode = #tpu.pipeline_mode<synchronous>, transform_indices = @transform_1, window_bounds = array<i64: 512, 64>}, {pipeline_mode = #tpu.pipeline_mode<synchronous>, transform_indices = @transform_2, window_bounds = array<i64: 1, 64>}, {pipeline_mode = #tpu.pipeline_mode<synchronous>, transform_indices = @transform_3, window_bounds = array<i64: 1, 64>}, {pipeline_mode = #tpu.pipeline_mode<synchronous>, transform_indices = @transform_4, window_bounds = array<i64: 64, 64>}, {pipeline_mode = #tpu.pipeline_mode<synchronous>, transform_indices = @transform_5, window_bounds = array<i64: 64, 64>}, {pipeline_mode = #tpu.pipeline_mode<synchronous>, transform_indices = @transform_6, window_bounds = array<i64: 1, 2>}, {pipeline_mode = #tpu.pipeline_mode<synchronous>, transform_indices = @transform_7, window_bounds = array<i64: 128, 64>}, {pipeline_mode = #tpu.pipeline_mode<synchronous>, transform_indices = @transform_8, window_bounds = array<i64: 2, 1>}, {pipeline_mode = #tpu.pipeline_mode<synchronous>, transform_indices = @transform_9, window_bounds = array<i64: 2, 1>}]} {
    %c0 = arith.constant 0 : index
    %c0_0 = arith.constant 0 : index
    %0 = vector.load %arg1[%c0, %c0_0] : memref<128x512xbf16, #tpu.memory_space<vmem>>, vector<128x512xbf16>
    %c0_1 = arith.constant 0 : index
    %c0_2 = arith.constant 0 : index
    %1 = vector.load %arg2[%c0_1, %c0_2] : memref<512x64xbf16, #tpu.memory_space<vmem>>, vector<512x64xbf16>
    %cst = arith.constant dense<0.000000e+00> : vector<128x64xf32>
    %2 = tpu.matmul %0, %1, %cst {dimension_numbers = #tpu.dot_dimension_numbers<[1], [0], [0], [1], [0, 0, 1, 1], [], []>} : vector<128x512xbf16>, vector<512x64xbf16>, vector<128x64xf32> -> vector<128x64xf32>
    %c0_3 = arith.constant 0 : index
    %c0_4 = arith.constant 0 : index
    %3 = vector.load %arg3[%c0_3, %c0_4] : memref<1x64xf32, #tpu.memory_space<vmem>>, vector<1x64xf32>
    %c0_5 = arith.constant 0 : index
    %c0_6 = arith.constant 0 : index
    %4 = vector.load %arg4[%c0_5, %c0_6] : memref<1x64xf32, #tpu.memory_space<vmem>>, vector<1x64xf32>
    %5 = vector.broadcast %3 : vector<1x64xf32> to vector<128x64xf32>
    %6 = arith.mulf %2, %5 : vector<128x64xf32>
    %7 = vector.broadcast %4 : vector<1x64xf32> to vector<128x64xf32>
    %8 = arith.addf %6, %7 : vector<128x64xf32>
    %cst_7 = arith.constant 0.000000e+00 : f32
    %9 = vector.broadcast %cst_7 : f32 to vector<128x64xf32>
    %10 = arith.cmpf oge, %8, %9 : vector<128x64xf32>
    %cst_8 = arith.constant 2.000000e-01 : f32
    %11 = vector.broadcast %cst_8 : f32 to vector<128x64xf32>
    %12 = arith.mulf %11, %8 : vector<128x64xf32>
    %13 = arith.select %10, %8, %12 : vector<128x64xi1>, vector<128x64xf32>
    %14 = arith.truncf %13 : vector<128x64xf32> to vector<128x64xbf16>
    %c0_9 = arith.constant 0 : index
    %c0_10 = arith.constant 0 : index
    %15 = vector.load %arg8[%c0_9, %c0_10] : memref<128x64xbf16, #tpu.memory_space<vmem>>, vector<128x64xbf16>
    tpu.vector_store %arg8[%c0_9, %c0_10], %14 {strides = array<i32>} : memref<128x64xbf16, #tpu.memory_space<vmem>>, vector<128x64xbf16>,
    %c0_11 = arith.constant 0 : index
    %c0_12 = arith.constant 0 : index
    %16 = vector.load %arg5[%c0_11, %c0_12] : memref<64x64xf32, #tpu.memory_space<vmem>>, vector<64x64xf32>
    %c0_13 = arith.constant 0 : index
    %c0_14 = arith.constant 0 : index
    %17 = vector.load %arg6[%c0_13, %c0_14] : memref<64x64xf32, #tpu.memory_space<vmem>>, vector<64x64xf32>
    %c0_15 = arith.constant 0 : index
    %c0_16 = arith.constant 0 : index
    %18 = vector.load %arg7[%c0_15, %c0_16] : memref<1x2xf32, #tpu.memory_space<vmem>>, vector<1x2xf32>
    %19 = vector.shape_cast %2 : vector<128x64xf32> to vector<2x64x64xf32>
    %20 = vector.shape_cast %16 : vector<64x64xf32> to vector<1x64x64xf32>
    %21 = vector.broadcast %20 : vector<1x64x64xf32> to vector<2x64x64xf32>
    %22 = arith.mulf %19, %21 : vector<2x64x64xf32>
    %cst_17 = arith.constant dense<0.000000e+00> : vector<2x64xf32>
    %23 = vector.multi_reduction <add>, %22, %cst_17 [2] : vector<2x64x64xf32> to vector<2x64xf32>
    %cst_18 = arith.constant dense<0.000000e+00> : vector<2xf32>
    %24 = vector.multi_reduction <add>, %23, %cst_18 [1] : vector<2x64xf32> to vector<2xf32>
    %25 = vector.shape_cast %24 : vector<2xf32> to vector<2x1xf32>
    %26 = vector.shape_cast %17 : vector<64x64xf32> to vector<1x64x64xf32>
    %27 = vector.broadcast %26 : vector<1x64x64xf32> to vector<2x64x64xf32>
    %28 = arith.mulf %19, %27 : vector<2x64x64xf32>
    %cst_19 = arith.constant dense<0.000000e+00> : vector<2x64xf32>
    %29 = vector.multi_reduction <add>, %28, %cst_19 [2] : vector<2x64x64xf32> to vector<2x64xf32>
    %cst_20 = arith.constant dense<0.000000e+00> : vector<2xf32>
    %30 = vector.multi_reduction <add>, %29, %cst_20 [1] : vector<2x64xf32> to vector<2xf32>
    %31 = vector.shape_cast %30 : vector<2xf32> to vector<2x1xf32>
    %32 = vector.extract_strided_slice %18 {offsets = [0, 0], sizes = [1, 1], strides = [1, 1]} : vector<1x2xf32> to vector<1x1xf32>
    %33 = vector.broadcast %32 : vector<1x1xf32> to vector<2x1xf32>
    %34 = arith.addf %25, %33 : vector<2x1xf32>
    %35 = vector.extract_strided_slice %18 {offsets = [0, 1], sizes = [1, 1], strides = [1, 1]} : vector<1x2xf32> to vector<1x1xf32>
    %36 = vector.broadcast %35 : vector<1x1xf32> to vector<2x1xf32>
    %37 = arith.addf %31, %36 : vector<2x1xf32>
    %38 = math.exp %37 : vector<2x1xf32>
    %c0_21 = arith.constant 0 : index
    %c0_22 = arith.constant 0 : index
    %39 = vector.load %arg9[%c0_21, %c0_22] : memref<2x1xf32, #tpu.memory_space<vmem>>, vector<2x1xf32>
    tpu.vector_store %arg9[%c0_21, %c0_22], %34 {strides = array<i32>} : memref<2x1xf32, #tpu.memory_space<vmem>>, vector<2x1xf32>,
    %c0_23 = arith.constant 0 : index
    %c0_24 = arith.constant 0 : index
    %40 = vector.load %arg10[%c0_23, %c0_24] : memref<2x1xf32, #tpu.memory_space<vmem>>, vector<2x1xf32>
    tpu.vector_store %arg10[%c0_23, %c0_24], %38 {strides = array<i32>} : memref<2x1xf32, #tpu.memory_space<vmem>>, vector<2x1xf32>,
    return
  }
  func.func @transform_0(%arg0: i32) -> (i32, i32) {
    %c0_i32 = arith.constant 0 : i32
    %c0_i32_0 = arith.constant 0 : i32
    %c0_i32_1 = arith.constant 0 : i32
    return %c0_i32, %c0_i32_0 : i32, i32
  }
  func.func @transform_1(%arg0: i32) -> (i32, i32) {
    %c0_i32 = arith.constant 0 : i32
    %c0_i32_0 = arith.constant 0 : i32
    %c0_i32_1 = arith.constant 0 : i32
    return %c0_i32, %c0_i32_0 : i32, i32
  }
  func.func @transform_2(%arg0: i32) -> (i32, i32) {
    %c0_i32 = arith.constant 0 : i32
    %c0_i32_0 = arith.constant 0 : i32
    %c0_i32_1 = arith.constant 0 : i32
    return %c0_i32, %c0_i32_0 : i32, i32
  }
  func.func @transform_3(%arg0: i32) -> (i32, i32) {
    %c0_i32 = arith.constant 0 : i32
    %c0_i32_0 = arith.constant 0 : i32
    %c0_i32_1 = arith.constant 0 : i32
    return %c0_i32, %c0_i32_0 : i32, i32
  }
  func.func @transform_4(%arg0: i32) -> (i32, i32) {
    %c0_i32 = arith.constant 0 : i32
    %c0_i32_0 = arith.constant 0 : i32
    %c0_i32_1 = arith.constant 0 : i32
    return %c0_i32, %c0_i32_0 : i32, i32
  }
  func.func @transform_5(%arg0: i32) -> (i32, i32) {
    %c0_i32 = arith.constant 0 : i32
    %c0_i32_0 = arith.constant 0 : i32
    %c0_i32_1 = arith.constant 0 : i32
    return %c0_i32, %c0_i32_0 : i32, i32
  }
  func.func @transform_6(%arg0: i32) -> (i32, i32) {
    %c0_i32 = arith.constant 0 : i32
    %c0_i32_0 = arith.constant 0 : i32
    %c0_i32_1 = arith.constant 0 : i32
    return %c0_i32, %c0_i32_0 : i32, i32
  }
  func.func @transform_7(%arg0: i32) -> (i32, i32) {
    %c0_i32 = arith.constant 0 : i32
    %c0_i32_0 = arith.constant 0 : i32
    %c0_i32_1 = arith.constant 0 : i32
    return %c0_i32, %c0_i32_0 : i32, i32
  }
  func.func @transform_8(%arg0: i32) -> (i32, i32) {
    %c0_i32 = arith.constant 0 : i32
    %c0_i32_0 = arith.constant 0 : i32
    %c0_i32_1 = arith.constant 0 : i32
    return %c0_i32, %c0_i32_0 : i32, i32
  }
  func.func @transform_9(%arg0: i32) -> (i32, i32) {
    %c0_i32 = arith.constant 0 : i32
    %c0_i32_0 = arith.constant 0 : i32
    %c0_i32_1 = arith.constant 0 : i32
    return %c0_i32, %c0_i32_0 : i32, i32
  }
}

module attributes {stable_mosaic.version = 11 : i64} {
  func.func @_conv_head_kernel(%arg0: i32, %arg1: memref<32x1024xbf16, #tpu.memory_space<vmem>>, %arg2: memref<1024x128xbf16, #tpu.memory_space<vmem>>, %arg3: memref<16x128xf32, #tpu.memory_space<vmem>>, %arg4: memref<16x128xf32, #tpu.memory_space<vmem>>, %arg5: memref<1x2xf32, #tpu.memory_space<vmem>>, %arg6: memref<2x1xf32, #tpu.memory_space<vmem>>, %arg7: memref<2x1xf32, #tpu.memory_space<vmem>>) attributes {dimension_semantics = [#tpu.dimension_semantics<arbitrary>], iteration_bounds = array<i64: 1>, scalar_prefetch = 0 : i64, scratch_operands = 0 : i64, tpu.core_type = #tpu.core_type<tc>, window_params = [{pipeline_mode = #tpu.pipeline_mode<synchronous>, transform_indices = @transform_0, window_bounds = array<i64: 32, 1024>}, {pipeline_mode = #tpu.pipeline_mode<synchronous>, transform_indices = @transform_1, window_bounds = array<i64: 1024, 128>}, {pipeline_mode = #tpu.pipeline_mode<synchronous>, transform_indices = @transform_2, window_bounds = array<i64: 16, 128>}, {pipeline_mode = #tpu.pipeline_mode<synchronous>, transform_indices = @transform_3, window_bounds = array<i64: 16, 128>}, {pipeline_mode = #tpu.pipeline_mode<synchronous>, transform_indices = @transform_4, window_bounds = array<i64: 1, 2>}, {pipeline_mode = #tpu.pipeline_mode<synchronous>, transform_indices = @transform_5, window_bounds = array<i64: 2, 1>}, {pipeline_mode = #tpu.pipeline_mode<synchronous>, transform_indices = @transform_6, window_bounds = array<i64: 2, 1>}]} {
    %c0 = arith.constant 0 : index
    %c0_0 = arith.constant 0 : index
    %0 = vector.load %arg1[%c0, %c0_0] : memref<32x1024xbf16, #tpu.memory_space<vmem>>, vector<32x1024xbf16>
    %c0_1 = arith.constant 0 : index
    %c0_2 = arith.constant 0 : index
    %1 = vector.load %arg2[%c0_1, %c0_2] : memref<1024x128xbf16, #tpu.memory_space<vmem>>, vector<1024x128xbf16>
    %cst = arith.constant dense<0.000000e+00> : vector<32x128xf32>
    %2 = tpu.matmul %0, %1, %cst {dimension_numbers = #tpu.dot_dimension_numbers<[1], [0], [0], [1], [0, 0, 1, 1], [], []>} : vector<32x1024xbf16>, vector<1024x128xbf16>, vector<32x128xf32> -> vector<32x128xf32>
    %c0_3 = arith.constant 0 : index
    %c0_4 = arith.constant 0 : index
    %3 = vector.load %arg3[%c0_3, %c0_4] : memref<16x128xf32, #tpu.memory_space<vmem>>, vector<16x128xf32>
    %c0_5 = arith.constant 0 : index
    %c0_6 = arith.constant 0 : index
    %4 = vector.load %arg4[%c0_5, %c0_6] : memref<16x128xf32, #tpu.memory_space<vmem>>, vector<16x128xf32>
    %c0_7 = arith.constant 0 : index
    %c0_8 = arith.constant 0 : index
    %5 = vector.load %arg5[%c0_7, %c0_8] : memref<1x2xf32, #tpu.memory_space<vmem>>, vector<1x2xf32>
    %6 = vector.shape_cast %2 : vector<32x128xf32> to vector<2x16x128xf32>
    %7 = vector.shape_cast %3 : vector<16x128xf32> to vector<1x16x128xf32>
    %8 = vector.broadcast %7 : vector<1x16x128xf32> to vector<2x16x128xf32>
    %9 = arith.mulf %6, %8 : vector<2x16x128xf32>
    %cst_9 = arith.constant dense<0.000000e+00> : vector<2x16xf32>
    %10 = vector.multi_reduction <add>, %9, %cst_9 [2] : vector<2x16x128xf32> to vector<2x16xf32>
    %cst_10 = arith.constant dense<0.000000e+00> : vector<2xf32>
    %11 = vector.multi_reduction <add>, %10, %cst_10 [1] : vector<2x16xf32> to vector<2xf32>
    %12 = vector.shape_cast %11 : vector<2xf32> to vector<2x1xf32>
    %13 = vector.shape_cast %4 : vector<16x128xf32> to vector<1x16x128xf32>
    %14 = vector.broadcast %13 : vector<1x16x128xf32> to vector<2x16x128xf32>
    %15 = arith.mulf %6, %14 : vector<2x16x128xf32>
    %cst_11 = arith.constant dense<0.000000e+00> : vector<2x16xf32>
    %16 = vector.multi_reduction <add>, %15, %cst_11 [2] : vector<2x16x128xf32> to vector<2x16xf32>
    %cst_12 = arith.constant dense<0.000000e+00> : vector<2xf32>
    %17 = vector.multi_reduction <add>, %16, %cst_12 [1] : vector<2x16xf32> to vector<2xf32>
    %18 = vector.shape_cast %17 : vector<2xf32> to vector<2x1xf32>
    %19 = vector.extract_strided_slice %5 {offsets = [0, 0], sizes = [1, 1], strides = [1, 1]} : vector<1x2xf32> to vector<1x1xf32>
    %20 = vector.broadcast %19 : vector<1x1xf32> to vector<2x1xf32>
    %21 = arith.addf %12, %20 : vector<2x1xf32>
    %22 = vector.extract_strided_slice %5 {offsets = [0, 1], sizes = [1, 1], strides = [1, 1]} : vector<1x2xf32> to vector<1x1xf32>
    %23 = vector.broadcast %22 : vector<1x1xf32> to vector<2x1xf32>
    %24 = arith.addf %18, %23 : vector<2x1xf32>
    %25 = math.exp %24 : vector<2x1xf32>
    %c0_13 = arith.constant 0 : index
    %c0_14 = arith.constant 0 : index
    %26 = vector.load %arg6[%c0_13, %c0_14] : memref<2x1xf32, #tpu.memory_space<vmem>>, vector<2x1xf32>
    tpu.vector_store %arg6[%c0_13, %c0_14], %21 {strides = array<i32>} : memref<2x1xf32, #tpu.memory_space<vmem>>, vector<2x1xf32>,
    %c0_15 = arith.constant 0 : index
    %c0_16 = arith.constant 0 : index
    %27 = vector.load %arg7[%c0_15, %c0_16] : memref<2x1xf32, #tpu.memory_space<vmem>>, vector<2x1xf32>
    tpu.vector_store %arg7[%c0_15, %c0_16], %25 {strides = array<i32>} : memref<2x1xf32, #tpu.memory_space<vmem>>, vector<2x1xf32>,
    return
  }
  func.func @transform_0(%arg0: i32) -> (i32, i32) {
    %c0_i32 = arith.constant 0 : i32
    %c0_i32_0 = arith.constant 0 : i32
    %c0_i32_1 = arith.constant 0 : i32
    return %c0_i32, %c0_i32_0 : i32, i32
  }
  func.func @transform_1(%arg0: i32) -> (i32, i32) {
    %c0_i32 = arith.constant 0 : i32
    %c0_i32_0 = arith.constant 0 : i32
    %c0_i32_1 = arith.constant 0 : i32
    return %c0_i32, %c0_i32_0 : i32, i32
  }
  func.func @transform_2(%arg0: i32) -> (i32, i32) {
    %c0_i32 = arith.constant 0 : i32
    %c0_i32_0 = arith.constant 0 : i32
    %c0_i32_1 = arith.constant 0 : i32
    return %c0_i32, %c0_i32_0 : i32, i32
  }
  func.func @transform_3(%arg0: i32) -> (i32, i32) {
    %c0_i32 = arith.constant 0 : i32
    %c0_i32_0 = arith.constant 0 : i32
    %c0_i32_1 = arith.constant 0 : i32
    return %c0_i32, %c0_i32_0 : i32, i32
  }
  func.func @transform_4(%arg0: i32) -> (i32, i32) {
    %c0_i32 = arith.constant 0 : i32
    %c0_i32_0 = arith.constant 0 : i32
    %c0_i32_1 = arith.constant 0 : i32
    return %c0_i32, %c0_i32_0 : i32, i32
  }
  func.func @transform_5(%arg0: i32) -> (i32, i32) {
    %c0_i32 = arith.constant 0 : i32
    %c0_i32_0 = arith.constant 0 : i32
    %c0_i32_1 = arith.constant 0 : i32
    return %c0_i32, %c0_i32_0 : i32, i32
  }
  func.func @transform_6(%arg0: i32) -> (i32, i32) {
    %c0_i32 = arith.constant 0 : i32
    %c0_i32_0 = arith.constant 0 : i32
    %c0_i32_1 = arith.constant 0 : i32
    return %c0_i32, %c0_i32_0 : i32, i32
  }
}

</mosaic_0001>

<llo_original>
// kernel: qnet_forward.4
$region0: #{qnet_forward.4}
  #allocation0 [shape = 'u32[]', space=smem, size = 0x4, offset = 0x4, fixed_abs, tag = 'smem constant byte address 0x4 - core index']
  #allocation1 [shape = 'u32[144,128]{1,0:T(1,128)}', space=vmem, size = 0x12000, scoped, tag = 'internal scratch']
  %s0 = inlined_call_operand.vmem [shape: bf16[2048,16], index: 0, kind: input, shape index: {}]
  %s1 = inlined_call_operand.hbm [shape: bf16[16,64], index: 1, kind: input, shape index: {}]
  %s2 = inlined_call_operand.hbm [shape: f32[1,64], index: 2, kind: input, shape index: {}]
  %s3 = inlined_call_operand.hbm [shape: f32[1,64], index: 3, kind: input, shape index: {}]
  %s4 = inlined_call_operand.vmem [shape: bf16[2048,64], index: 4, kind: output, shape index: {}]
  %s5 = sld [smem:[#allocation0]]
  $region61: #{qnet_forward.4} parent=0
    _
  %s7 = ssub.s32 1, %s5
  %s8 = scalar_select 0, %s7, %s5
  $region1: #{qnet_forward.4} parent=0
    #allocation2 [shape = 'u8[4096]{0}', space=vmem, size = 0x1000, scoped, tag = 'input window, operand 1, single buffered']
    #allocation3 [shape = 's32[2]{0}', space=sflag, size = 0x8, scoped, tag = 'scoped memory for qnet_forward.4']
    #allocation4 [shape = 'u8[512]{0}', space=vmem, size = 0x400, scoped, tag = 'input window, operand 2, single buffered']
    #allocation5 [shape = 's32[1]{0}', space=sflag, size = 0x4, scoped, tag = 'scoped memory for qnet_forward.4']
    #allocation6 [shape = 'u8[512]{0}', space=vmem, size = 0x400, scoped, tag = 'input window, operand 3, single buffered']
    %9 = vsyncpa [#allocation3], 0
    %10 = vsyncpa [#allocation5], 0
    loop: start=0, step=1, limit=4
    $region2: #{qnet_forward.4} parent=1 // loop_pre_header
      _
    $region3: #{qnet_forward.4} parent=1 // loop_header
      %s12 = sphi 0, %s16
      %p13 = scmp.ge.s32.totalorder %s12, 4
      %s22 = sphi 0, %s24
      %s25 = sphi 0, %s22
      %s26 = sphi 0, %s25
      %s42 = sphi 0, %s26
      %s46 = sphi 0, %s46
      %s48 = sphi 0, %s46
      %s49 = sphi 0, %s48
      %s63 = sphi 0, %s49
      %s67 = sphi 0, %s67
      %s69 = sphi 0, %s67
      %s70 = sphi 0, %s69
      %s84 = sphi 0, %s70
      %s88 = sphi 0, %s88
      %s90 = sphi 0, %s88
      %s91 = sphi 0, %s90
      %s105 = sphi 0, %s91
      %s111 = sphi 0, %s113
      %s114 = sphi 0, %s111
      %s115 = sphi 0, %s114
      %s131 = sphi 0, %s115
    $region4: #{qnet_forward.4} parent=1 // loop_header_branch
      %15 = sbr.rel (%p13) target = $region8
    $region5: #{qnet_forward.4} parent=1 // loop_body
      %s17 = ssub.s32 %s12, 1
      %s18 = ssub.s32 %s12, 2
      %s19 = sadd.s32 %s12, 1
      %s20 = ssub.s32 %s12, %s19
      %p21 = scmp.eq.s32.totalorder %s20, 0
      %s23 = sadd.s32 %s22, 1
      %s24 = scalar_select %p21, %s22, %s23
      %p27 = pneg %p21
      %p28 = scmp.eq.s32.totalorder %s12, 1
      %p29 = por %p27, %p28
      %p30 = scmp.ne.s32.totalorder %s22, %s25
      %p31 = scmp.eq.s32.totalorder %s12, 0
      %p32 = por %p30, %p31
      %p33 = scmp.ne.s32.totalorder %s22, %s25
      %p34 = scmp.eq.s32.totalorder %s17, 1
      %p35 = por %p33, %p34
      %p36 = scmp.ne.s32.totalorder %s25, %s26
      %p37 = scmp.eq.s32.totalorder %s17, 0
      %p38 = por %p36, %p37
      %p39 = scmp.ne.s32.totalorder %s25, %s26
      %p40 = scmp.eq.s32.totalorder %s18, 1
      %p41 = por %p39, %p40
      %p43 = scmp.ne.s32.totalorder %s26, %s42
      %p44 = scmp.eq.s32.totalorder %s18, 0
      %p45 = por %p43, %p44
      %s47 = sadd.s32 %s46, 1
      %p50 = scmp.eq.s32.totalorder %s12, 1
      %p51 = scmp.ne.s32.totalorder %s46, %s48
      %p52 = scmp.eq.s32.totalorder %s12, 0
      %p53 = por %p51, %p52
      %p54 = scmp.ne.s32.totalorder %s46, %s48
      %p55 = scmp.eq.s32.totalorder %s17, 1
      %p56 = por %p54, %p55
      %p57 = scmp.ne.s32.totalorder %s48, %s49
      %p58 = scmp.eq.s32.totalorder %s17, 0
      %p59 = por %p57, %p58
      %p60 = scmp.ne.s32.totalorder %s48, %s49
      %p61 = scmp.eq.s32.totalorder %s18, 1
      %p62 = por %p60, %p61
      %p64 = scmp.ne.s32.totalorder %s49, %s63
      %p65 = scmp.eq.s32.totalorder %s18, 0
      %p66 = por %p64, %p65
      %s68 = sadd.s32 %s67, 1
      %p71 = scmp.eq.s32.totalorder %s12, 1
      %p72 = scmp.ne.s32.totalorder %s67, %s69
      %p73 = scmp.eq.s32.totalorder %s12, 0
      %p74 = por %p72, %p73
      %p75 = scmp.ne.s32.totalorder %s67, %s69
      %p76 = scmp.eq.s32.totalorder %s17, 1
      %p77 = por %p75, %p76
      %p78 = scmp.ne.s32.totalorder %s69, %s70
      %p79 = scmp.eq.s32.totalorder %s17, 0
      %p80 = por %p78, %p79
      %p81 = scmp.ne.s32.totalorder %s69, %s70
      %p82 = scmp.eq.s32.totalorder %s18, 1
      %p83 = por %p81, %p82
      %p85 = scmp.ne.s32.totalorder %s70, %s84
      %p86 = scmp.eq.s32.totalorder %s18, 0
      %p87 = por %p85, %p86
      %s89 = sadd.s32 %s88, 1
      %p92 = scmp.eq.s32.totalorder %s12, 1
      %p93 = scmp.ne.s32.totalorder %s88, %s90
      %p94 = scmp.eq.s32.totalorder %s12, 0
      %p95 = por %p93, %p94
      %p96 = scmp.ne.s32.totalorder %s88, %s90
      %p97 = scmp.eq.s32.totalorder %s17, 1
      %p98 = por %p96, %p97
      %p99 = scmp.ne.s32.totalorder %s90, %s91
      %p100 = scmp.eq.s32.totalorder %s17, 0
      %p101 = por %p99, %p100
      %p102 = scmp.ne.s32.totalorder %s90, %s91
      %p103 = scmp.eq.s32.totalorder %s18, 1
      %p104 = por %p102, %p103
      %p106 = scmp.ne.s32.totalorder %s91, %s105
      %p107 = scmp.eq.s32.totalorder %s18, 0
      %p108 = por %p106, %p107
      %s109 = ssub.s32 %s12, %s19
      %p110 = scmp.eq.s32.totalorder %s109, 0
      %s112 = sadd.s32 %s111, 1
      %s113 = scalar_select %p110, %s111, %s112
      %p116 = pneg %p110
      %p117 = scmp.eq.s32.totalorder %s12, 1
      %p118 = por %p116, %p117
      %p119 = scmp.ne.s32.totalorder %s111, %s114
      %p120 = scmp.eq.s32.totalorder %s12, 0
      %p121 = por %p119, %p120
      %p122 = scmp.ne.s32.totalorder %s111, %s114
      %p123 = scmp.eq.s32.totalorder %s17, 1
      %p124 = por %p122, %p123
      %p125 = scmp.ne.s32.totalorder %s114, %s115
      %p126 = scmp.eq.s32.totalorder %s17, 0
      %p127 = por %p125, %p126
      %p128 = scmp.ne.s32.totalorder %s114, %s115
      %p129 = scmp.eq.s32.totalorder %s18, 1
      %p130 = por %p128, %p129
      %p132 = scmp.ne.s32.totalorder %s115, %s131
      %p133 = scmp.eq.s32.totalorder %s18, 0
      %p134 = por %p132, %p133
      %p135 = scmp.le.s32.totalorder 1, %s12
      %p136 = scmp.lt.s32.totalorder %s12, 3
      %p137 = pnand %p135, %p136
      %p138 = pneg %p137
      // Predicated region
      $region9: #{qnet_forward.4} parent=5 // pred_check
        _
      $region10: #{qnet_forward.4} parent=5 // pred_check_branch
        %140 = sbr.rel (%p137) target = $region12
      $region11: #{qnet_forward.4} parent=5 // pred_region
        %s141 = ssub.s32 %s12, 1
        // Predicated region
        $region13: #{qnet_forward.4} parent=11 // pred_check
          %p142 = pneg %p59
        $region14: #{qnet_forward.4} parent=11 // pred_check_branch
          %144 = sbr.rel (%p142) target = $region16
        $region15: #{qnet_forward.4} parent=11 // pred_region
          %s146 = ssub.s32 128, 128
          %147 = vsyncadd [#allocation3], %s146
          %s148 = sshll.u32 [#allocation2], 4
          %s149 = int_to_ptr.vmem [resolvable:$true] %s148
          %154 = dma.hbm_to_vmem [thread:$0]  %s1, 128, %s149, [#allocation3], 64, 64, 4
        $region16: #{qnet_forward.4} parent=11 // pred_fallthru
          _
        // Predicated region
        $region17: #{qnet_forward.4} parent=11 // pred_check
          %p155 = pneg %p80
        $region18: #{qnet_forward.4} parent=11 // pred_check_branch
          %157 = sbr.rel (%p155) target = $region20
        $region19: #{qnet_forward.4} parent=11 // pred_region
          %s159 = ssub.s32 16, 16
          %160 = vsyncadd [#allocation5], %s159
          %s162 = sshll.u32 [#allocation4], 4
          %s163 = int_to_ptr.vmem [resolvable:$true] %s162
          %165 = dma.hbm_to_vmem [thread:$0]  %s2, 16, %s163, [#allocation5]
        $region20: #{qnet_forward.4} parent=11 // pred_fallthru
          _
        // Predicated region
        $region21: #{qnet_forward.4} parent=11 // pred_check
          %p166 = pneg %p101
        $region22: #{qnet_forward.4} parent=11 // pred_check_branch
          %168 = sbr.rel (%p166) target = $region24
        $region23: #{qnet_forward.4} parent=11 // pred_region
          %s170 = ssub.s32 16, 16
          %171 = vsyncadd [#allocation5], %s170
          %s173 = sshll.u32 [#allocation6], 4
          %s174 = int_to_ptr.vmem [resolvable:$true] %s173
          %176 = dma.hbm_to_vmem [thread:$0]  %s3, 16, %s174, [#allocation5]
        $region24: #{qnet_forward.4} parent=11 // pred_fallthru
          _
      $region12: #{qnet_forward.4} parent=5 // pred_fallthru
        _
      %p177 = scmp.lt.s32.totalorder %s12, 2
      // Predicated region
      $region25: #{qnet_forward.4} parent=5 // pred_check
        %p178 = pneg %p177
      $region26: #{qnet_forward.4} parent=5 // pred_check_branch
        %180 = sbr.rel (%p178) target = $region28
      $region27: #{qnet_forward.4} parent=5 // pred_region
        // Predicated region
        $region29: #{qnet_forward.4} parent=27 // pred_check
          %p181 = pneg %p32
        $region30: #{qnet_forward.4} parent=27 // pred_check_branch
          %183 = sbr.rel (%p181) target = $region32
        $region31: #{qnet_forward.4} parent=27 // pred_region
          %s184 = smul.u32 128, %s12
          %p185 = scmp.lt.s32.totalorder %s184, 255
          %s186 = scalar_select %p185, %s184, 255
          %s187 = smul.addr %s186, 4
          %s188 = scalar_lea.vmem %s0, %s187
          %s189 = smul.u32 128, %s12
        $region32: #{qnet_forward.4} parent=27 // pred_fallthru
          _
      $region28: #{qnet_forward.4} parent=5 // pred_fallthru
        _
      %p190 = scmp.le.s32.totalorder 1, %s12
      %p191 = scmp.lt.s32.totalorder %s12, 3
      %p192 = pnand %p190, %p191
      %p193 = pneg %p192
      // Predicated region
      $region33: #{qnet_forward.4} parent=5 // pred_check
        _
      $region34: #{qnet_forward.4} parent=5 // pred_check_branch
        %195 = sbr.rel (%p192) target = $region36
      $region35: #{qnet_forward.4} parent=5 // pred_region
        %s196 = ssub.s32 %s12, 1
        // Predicated region
        $region37: #{qnet_forward.4} parent=35 // pred_check
          %p197 = pneg %p59
        $region38: #{qnet_forward.4} parent=35 // pred_check_branch
          %199 = sbr.rel (%p197) target = $region40
        $region39: #{qnet_forward.4} parent=35 // pred_region
          %200 = dma.done [#allocation3], 128
        $region40: #{qnet_forward.4} parent=35 // pred_fallthru
          _
        // Predicated region
        $region41: #{qnet_forward.4} parent=35 // pred_check
          %p201 = pneg %p80
        $region42: #{qnet_forward.4} parent=35 // pred_check_branch
          %203 = sbr.rel (%p201) target = $region44
        $region43: #{qnet_forward.4} parent=35 // pred_region
          %204 = dma.done [#allocation5], 16
        $region44: #{qnet_forward.4} parent=35 // pred_fallthru
          _
        // Predicated region
        $region45: #{qnet_forward.4} parent=35 // pred_check
          %p205 = pneg %p101
        $region46: #{qnet_forward.4} parent=35 // pred_check_branch
          %207 = sbr.rel (%p205) target = $region48
        $region47: #{qnet_forward.4} parent=35 // pred_region
          %208 = dma.done [#allocation5], 16
        $region48: #{qnet_forward.4} parent=35 // pred_fallthru
          _
        %s209 = smul.u32 128, %s17
        %p210 = scmp.lt.s32.totalorder %s209, 255
        %s211 = scalar_select %p210, %s209, 255
        %s212 = smul.addr %s211, 4
        %s213 = scalar_lea.vmem %s0, %s212
        %p214 = pneg %p38
        %p215 = pneg %p35
        %p216 = pneg %p59
        %p217 = pneg %p56
        %p218 = pneg %p80
        %p219 = pneg %p77
        %p220 = pneg %p101
        %p221 = pneg %p98
        %p222 = pneg %p127
        %p223 = pneg %p124
        %s224 = smul.u32 128, %s17
        %p225 = scmp.lt.s32.totalorder %s224, 255
        %s226 = scalar_select %p225, %s224, 255
        %s227 = smul.addr %s226, 4
        %s228 = scalar_lea.vmem %s4, %s227
        %s229 = smul.u32 128, %s17
        %p230 = scmp.lt.s32.totalorder %s229, 255
        %s231 = scalar_select %p230, %s229, 255
        %s232 = smul.addr %s231, 4
        %s233 = scalar_lea.vmem %s0, %s232
        %s234 = smul.u32 128, %s17
        %s235 = smul.u32 128, %s17
        %p236 = scmp.lt.s32.totalorder %s235, 255
        %s237 = scalar_select %p236, %s235, 255
        %s238 = smul.addr %s237, 4
        %s239 = scalar_lea.vmem %s4, %s238
        %s240 = smul.u32 128, %s17
        %v242 = vld [vmem:[%s233] sm:$0xf]
        %v243 = vld [vmem:[%s233 + $0x4] sm:$0xf]
        %v244 = vld [vmem:[%s233 + $0x8] sm:$0xf]
        %v245 = vld [vmem:[%s233 + $0xc] sm:$0xf]
        %v246 = vld [vmem:[%s233 + $0x10] sm:$0xf]
        %v247 = vld [vmem:[%s233 + $0x14] sm:$0xf]
        %v248 = vld [vmem:[%s233 + $0x18] sm:$0xf]
        %v249 = vld [vmem:[%s233 + $0x1c] sm:$0xf]
        %v250 = vld [vmem:[%s233 + $0x20] sm:$0xf]
        %v251 = vld [vmem:[%s233 + $0x24] sm:$0xf]
        %v252 = vld [vmem:[%s233 + $0x28] sm:$0xf]
        %v253 = vld [vmem:[%s233 + $0x2c] sm:$0xf]
        %v254 = vld [vmem:[%s233 + $0x30] sm:$0xf]
        %v255 = vld [vmem:[%s233 + $0x34] sm:$0xf]
        %v256 = vld [vmem:[%s233 + $0x38] sm:$0xf]
        %v257 = vld [vmem:[%s233 + $0x3c] sm:$0xf]
        %v258 = vld [vmem:[%s233 + $0x40] sm:$0xf]
        %v259 = vld [vmem:[%s233 + $0x44] sm:$0xf]
        %v260 = vld [vmem:[%s233 + $0x48] sm:$0xf]
        %v261 = vld [vmem:[%s233 + $0x4c] sm:$0xf]
        %v262 = vld [vmem:[%s233 + $0x50] sm:$0xf]
        %v263 = vld [vmem:[%s233 + $0x54] sm:$0xf]
        %v264 = vld [vmem:[%s233 + $0x58] sm:$0xf]
        %v265 = vld [vmem:[%s233 + $0x5c] sm:$0xf]
        %v266 = vld [vmem:[%s233 + $0x60] sm:$0xf]
        %v267 = vld [vmem:[%s233 + $0x64] sm:$0xf]
        %v268 = vld [vmem:[%s233 + $0x68] sm:$0xf]
        %v269 = vld [vmem:[%s233 + $0x6c] sm:$0xf]
        %v270 = vld [vmem:[%s233 + $0x70] sm:$0xf]
        %v271 = vld [vmem:[%s233 + $0x74] sm:$0xf]
        %v272 = vld [vmem:[%s233 + $0x78] sm:$0xf]
        %v273 = vld [vmem:[%s233 + $0x7c] sm:$0xf]
        %v274 = vld [vmem:[%s233 + $0x80] sm:$0xf]
        %v275 = vld [vmem:[%s233 + $0x84] sm:$0xf]
        %v276 = vld [vmem:[%s233 + $0x88] sm:$0xf]
        %v277 = vld [vmem:[%s233 + $0x8c] sm:$0xf]
        %v278 = vld [vmem:[%s233 + $0x90] sm:$0xf]
        %v279 = vld [vmem:[%s233 + $0x94] sm:$0xf]
        %v280 = vld [vmem:[%s233 + $0x98] sm:$0xf]
        %v281 = vld [vmem:[%s233 + $0x9c] sm:$0xf]
        %v282 = vld [vmem:[%s233 + $0xa0] sm:$0xf]
        %v283 = vld [vmem:[%s233 + $0xa4] sm:$0xf]
        %v284 = vld [vmem:[%s233 + $0xa8] sm:$0xf]
        %v285 = vld [vmem:[%s233 + $0xac] sm:$0xf]
        %v286 = vld [vmem:[%s233 + $0xb0] sm:$0xf]
        %v287 = vld [vmem:[%s233 + $0xb4] sm:$0xf]
        %v288 = vld [vmem:[%s233 + $0xb8] sm:$0xf]
        %v289 = vld [vmem:[%s233 + $0xbc] sm:$0xf]
        %v290 = vld [vmem:[%s233 + $0xc0] sm:$0xf]
        %v291 = vld [vmem:[%s233 + $0xc4] sm:$0xf]
        %v292 = vld [vmem:[%s233 + $0xc8] sm:$0xf]
        %v293 = vld [vmem:[%s233 + $0xcc] sm:$0xf]
        %v294 = vld [vmem:[%s233 + $0xd0] sm:$0xf]
        %v295 = vld [vmem:[%s233 + $0xd4] sm:$0xf]
        %v296 = vld [vmem:[%s233 + $0xd8] sm:$0xf]
        %v297 = vld [vmem:[%s233 + $0xdc] sm:$0xf]
        %v298 = vld [vmem:[%s233 + $0xe0] sm:$0xf]
        %v299 = vld [vmem:[%s233 + $0xe4] sm:$0xf]
        %v300 = vld [vmem:[%s233 + $0xe8] sm:$0xf]
        %v301 = vld [vmem:[%s233 + $0xec] sm:$0xf]
        %v302 = vld [vmem:[%s233 + $0xf0] sm:$0xf]
        %v303 = vld [vmem:[%s233 + $0xf4] sm:$0xf]
        %v304 = vld [vmem:[%s233 + $0xf8] sm:$0xf]
        %v305 = vld [vmem:[%s233 + $0xfc] sm:$0xf]
        %v306 = vld [vmem:[%s233 + $0x100] sm:$0xf]
        %v307 = vld [vmem:[%s233 + $0x104] sm:$0xf]
        %v308 = vld [vmem:[%s233 + $0x108] sm:$0xf]
        %v309 = vld [vmem:[%s233 + $0x10c] sm:$0xf]
        %v310 = vld [vmem:[%s233 + $0x110] sm:$0xf]
        %v311 = vld [vmem:[%s233 + $0x114] sm:$0xf]
        %v312 = vld [vmem:[%s233 + $0x118] sm:$0xf]
        %v313 = vld [vmem:[%s233 + $0x11c] sm:$0xf]
        %v314 = vld [vmem:[%s233 + $0x120] sm:$0xf]
        %v315 = vld [vmem:[%s233 + $0x124] sm:$0xf]
        %v316 = vld [vmem:[%s233 + $0x128] sm:$0xf]
        %v317 = vld [vmem:[%s233 + $0x12c] sm:$0xf]
        %v318 = vld [vmem:[%s233 + $0x130] sm:$0xf]
        %v319 = vld [vmem:[%s233 + $0x134] sm:$0xf]
        %v320 = vld [vmem:[%s233 + $0x138] sm:$0xf]
        %v321 = vld [vmem:[%s233 + $0x13c] sm:$0xf]
        %v322 = vld [vmem:[%s233 + $0x140] sm:$0xf]
        %v323 = vld [vmem:[%s233 + $0x144] sm:$0xf]
        %v324 = vld [vmem:[%s233 + $0x148] sm:$0xf]
        %v325 = vld [vmem:[%s233 + $0x14c] sm:$0xf]
        %v326 = vld [vmem:[%s233 + $0x150] sm:$0xf]
        %v327 = vld [vmem:[%s233 + $0x154] sm:$0xf]
        %v328 = vld [vmem:[%s233 + $0x158] sm:$0xf]
        %v329 = vld [vmem:[%s233 + $0x15c] sm:$0xf]
        %v330 = vld [vmem:[%s233 + $0x160] sm:$0xf]
        %v331 = vld [vmem:[%s233 + $0x164] sm:$0xf]
        %v332 = vld [vmem:[%s233 + $0x168] sm:$0xf]
        %v333 = vld [vmem:[%s233 + $0x16c] sm:$0xf]
        %v334 = vld [vmem:[%s233 + $0x170] sm:$0xf]
        %v335 = vld [vmem:[%s233 + $0x174] sm:$0xf]
        %v336 = vld [vmem:[%s233 + $0x178] sm:$0xf]
        %v337 = vld [vmem:[%s233 + $0x17c] sm:$0xf]
        %v338 = vld [vmem:[%s233 + $0x180] sm:$0xf]
        %v339 = vld [vmem:[%s233 + $0x184] sm:$0xf]
        %v340 = vld [vmem:[%s233 + $0x188] sm:$0xf]
        %v341 = vld [vmem:[%s233 + $0x18c] sm:$0xf]
        %v342 = vld [vmem:[%s233 + $0x190] sm:$0xf]
        %v343 = vld [vmem:[%s233 + $0x194] sm:$0xf]
        %v344 = vld [vmem:[%s233 + $0x198] sm:$0xf]
        %v345 = vld [vmem:[%s233 + $0x19c] sm:$0xf]
        %v346 = vld [vmem:[%s233 + $0x1a0] sm:$0xf]
        %v347 = vld [vmem:[%s233 + $0x1a4] sm:$0xf]
        %v348 = vld [vmem:[%s233 + $0x1a8] sm:$0xf]
        %v349 = vld [vmem:[%s233 + $0x1ac] sm:$0xf]
        %v350 = vld [vmem:[%s233 + $0x1b0] sm:$0xf]
        %v351 = vld [vmem:[%s233 + $0x1b4] sm:$0xf]
        %v352 = vld [vmem:[%s233 + $0x1b8] sm:$0xf]
        %v353 = vld [vmem:[%s233 + $0x1bc] sm:$0xf]
        %v354 = vld [vmem:[%s233 + $0x1c0] sm:$0xf]
        %v355 = vld [vmem:[%s233 + $0x1c4] sm:$0xf]
        %v356 = vld [vmem:[%s233 + $0x1c8] sm:$0xf]
        %v357 = vld [vmem:[%s233 + $0x1cc] sm:$0xf]
        %v358 = vld [vmem:[%s233 + $0x1d0] sm:$0xf]
        %v359 = vld [vmem:[%s233 + $0x1d4] sm:$0xf]
        %v360 = vld [vmem:[%s233 + $0x1d8] sm:$0xf]
        %v361 = vld [vmem:[%s233 + $0x1dc] sm:$0xf]
        %v362 = vld [vmem:[%s233 + $0x1e0] sm:$0xf]
        %v363 = vld [vmem:[%s233 + $0x1e4] sm:$0xf]
        %v364 = vld [vmem:[%s233 + $0x1e8] sm:$0xf]
        %v365 = vld [vmem:[%s233 + $0x1ec] sm:$0xf]
        %v366 = vld [vmem:[%s233 + $0x1f0] sm:$0xf]
        %v367 = vld [vmem:[%s233 + $0x1f4] sm:$0xf]
        %v368 = vld [vmem:[%s233 + $0x1f8] sm:$0xf]
        %v369 = vld [vmem:[%s233 + $0x1fc] sm:$0xf]
        %v370 = vld [vmem:[#allocation2] sm:$0xf]
        %v371 = vld [vmem:[#allocation2 + $0x4] sm:$0xf]
        %v500 = vunpack.c.l.b16 %v242
        %v501 = vunpack.c.l.b16 %v243
        %v502 = vunpack.c.l.b16 %v244
        %v503 = vunpack.c.l.b16 %v245
        %v504 = vunpack.c.l.b16 %v246
        %v505 = vunpack.c.l.b16 %v247
        %v506 = vunpack.c.l.b16 %v248
        %v507 = vunpack.c.l.b16 %v249
        %v508 = vunpack.c.l.b16 %v250
        %v509 = vunpack.c.l.b16 %v251
        %v510 = vunpack.c.l.b16 %v252
        %v511 = vunpack.c.l.b16 %v253
        %v512 = vunpack.c.l.b16 %v254
        %v513 = vunpack.c.l.b16 %v255
        %v514 = vunpack.c.l.b16 %v256
        %v515 = vunpack.c.l.b16 %v257
        %v516 = vunpack.c.l.b16 %v258
        %v517 = vunpack.c.l.b16 %v259
        %v518 = vunpack.c.l.b16 %v260
        %v519 = vunpack.c.l.b16 %v261
        %v520 = vunpack.c.l.b16 %v262
        %v521 = vunpack.c.l.b16 %v263
        %v522 = vunpack.c.l.b16 %v264
        %v523 = vunpack.c.l.b16 %v265
        %v524 = vunpack.c.l.b16 %v266
        %v525 = vunpack.c.l.b16 %v267
        %v526 = vunpack.c.l.b16 %v268
        %v527 = vunpack.c.l.b16 %v269
        %v528 = vunpack.c.l.b16 %v270
        %v529 = vunpack.c.l.b16 %v271
        %v530 = vunpack.c.l.b16 %v272
        %v531 = vunpack.c.l.b16 %v273
        %v532 = vunpack.c.l.b16 %v274
        %v533 = vunpack.c.l.b16 %v275
        %v534 = vunpack.c.l.b16 %v276
        %v535 = vunpack.c.l.b16 %v277
        %v536 = vunpack.c.l.b16 %v278
        %v537 = vunpack.c.l.b16 %v279
        %v538 = vunpack.c.l.b16 %v280
        %v539 = vunpack.c.l.b16 %v281
        %v540 = vunpack.c.l.b16 %v282
        %v541 = vunpack.c.l.b16 %v283
        %v542 = vunpack.c.l.b16 %v284
        %v543 = vunpack.c.l.b16 %v285
        %v544 = vunpack.c.l.b16 %v286
        %v545 = vunpack.c.l.b16 %v287
        %v546 = vunpack.c.l.b16 %v288
        %v547 = vunpack.c.l.b16 %v289
        %v548 = vunpack.c.l.b16 %v290
        %v549 = vunpack.c.l.b16 %v291
        %v550 = vunpack.c.l.b16 %v292
        %v551 = vunpack.c.l.b16 %v293
        %v552 = vunpack.c.l.b16 %v294
        %v553 = vunpack.c.l.b16 %v295
        %v554 = vunpack.c.l.b16 %v296
        %v555 = vunpack.c.l.b16 %v297
        %v556 = vunpack.c.l.b16 %v298
        %v557 = vunpack.c.l.b16 %v299
        %v558 = vunpack.c.l.b16 %v300
        %v559 = vunpack.c.l.b16 %v301
        %v560 = vunpack.c.l.b16 %v302
        %v561 = vunpack.c.l.b16 %v303
        %v562 = vunpack.c.l.b16 %v304
        %v563 = vunpack.c.l.b16 %v305
        %v564 = vunpack.c.l.b16 %v306
        %v565 = vunpack.c.l.b16 %v307
        %v566 = vunpack.c.l.b16 %v308
        %v567 = vunpack.c.l.b16 %v309
        %v568 = vunpack.c.l.b16 %v310
        %v569 = vunpack.c.l.b16 %v311
        %v570 = vunpack.c.l.b16 %v312
        %v571 = vunpack.c.l.b16 %v313
        %v572 = vunpack.c.l.b16 %v314
        %v573 = vunpack.c.l.b16 %v315
        %v574 = vunpack.c.l.b16 %v316
        %v575 = vunpack.c.l.b16 %v317
        %v576 = vunpack.c.l.b16 %v318
        %v577 = vunpack.c.l.b16 %v319
        %v578 = vunpack.c.l.b16 %v320
        %v579 = vunpack.c.l.b16 %v321
        %v580 = vunpack.c.l.b16 %v322
        %v581 = vunpack.c.l.b16 %v323
        %v582 = vunpack.c.l.b16 %v324
        %v583 = vunpack.c.l.b16 %v325
        %v584 = vunpack.c.l.b16 %v326
        %v585 = vunpack.c.l.b16 %v327
        %v586 = vunpack.c.l.b16 %v328
        %v587 = vunpack.c.l.b16 %v329
        %v588 = vunpack.c.l.b16 %v330
        %v589 = vunpack.c.l.b16 %v331
        %v590 = vunpack.c.l.b16 %v332
        %v591 = vunpack.c.l.b16 %v333
        %v592 = vunpack.c.l.b16 %v334
        %v593 = vunpack.c.l.b16 %v335
        %v594 = vunpack.c.l.b16 %v336
        %v595 = vunpack.c.l.b16 %v337
        %v596 = vunpack.c.l.b16 %v338
        %v597 = vunpack.c.l.b16 %v339
        %v598 = vunpack.c.l.b16 %v340
        %v599 = vunpack.c.l.b16 %v341
        %v600 = vunpack.c.l.b16 %v342
        %v601 = vunpack.c.l.b16 %v343
        %v602 = vunpack.c.l.b16 %v344
        %v603 = vunpack.c.l.b16 %v345
        %v604 = vunpack.c.l.b16 %v346
        %v605 = vunpack.c.l.b16 %v347
        %v606 = vunpack.c.l.b16 %v348
        %v607 = vunpack.c.l.b16 %v349
        %v608 = vunpack.c.l.b16 %v350
        %v609 = vunpack.c.l.b16 %v351
        %v610 = vunpack.c.l.b16 %v352
        %v611 = vunpack.c.l.b16 %v353
        %v612 = vunpack.c.l.b16 %v354
        %v613 = vunpack.c.l.b16 %v355
        %v614 = vunpack.c.l.b16 %v356
        %v615 = vunpack.c.l.b16 %v357
        %v616 = vunpack.c.l.b16 %v358
        %v617 = vunpack.c.l.b16 %v359
        %v618 = vunpack.c.l.b16 %v360
        %v619 = vunpack.c.l.b16 %v361
        %v620 = vunpack.c.l.b16 %v362
        %v621 = vunpack.c.l.b16 %v363
        %v622 = vunpack.c.l.b16 %v364
        %v623 = vunpack.c.l.b16 %v365
        %v624 = vunpack.c.l.b16 %v366
        %v625 = vunpack.c.l.b16 %v367
        %v626 = vunpack.c.l.b16 %v368
        %v627 = vunpack.c.l.b16 %v369
        %v628 = vpack.c.b16 %v501, %v500
        %v629 = vpack.c.b16 %v503, %v502
        %v630 = vpack.c.b16 %v505, %v504
        %v631 = vpack.c.b16 %v507, %v506
        %v632 = vpack.c.b16 %v509, %v508
        %v633 = vpack.c.b16 %v511, %v510
        %v634 = vpack.c.b16 %v513, %v512
        %v635 = vpack.c.b16 %v515, %v514
        %v636 = vpack.c.b16 %v517, %v516
        %v637 = vpack.c.b16 %v519, %v518
        %v638 = vpack.c.b16 %v521, %v520
        %v639 = vpack.c.b16 %v523, %v522
        %v640 = vpack.c.b16 %v525, %v524
        %v641 = vpack.c.b16 %v527, %v526
        %v642 = vpack.c.b16 %v529, %v528
        %v643 = vpack.c.b16 %v531, %v530
        %v644 = vpack.c.b16 %v533, %v532
        %v645 = vpack.c.b16 %v535, %v534
        %v646 = vpack.c.b16 %v537, %v536
        %v647 = vpack.c.b16 %v539, %v538
        %v648 = vpack.c.b16 %v541, %v540
        %v649 = vpack.c.b16 %v543, %v542
        %v650 = vpack.c.b16 %v545, %v544
        %v651 = vpack.c.b16 %v547, %v546
        %v652 = vpack.c.b16 %v549, %v548
        %v653 = vpack.c.b16 %v551, %v550
        %v654 = vpack.c.b16 %v553, %v552
        %v655 = vpack.c.b16 %v555, %v554
        %v656 = vpack.c.b16 %v557, %v556
        %v657 = vpack.c.b16 %v559, %v558
        %v658 = vpack.c.b16 %v561, %v560
        %v659 = vpack.c.b16 %v563, %v562
        %v660 = vpack.c.b16 %v565, %v564
        %v661 = vpack.c.b16 %v567, %v566
        %v662 = vpack.c.b16 %v569, %v568
        %v663 = vpack.c.b16 %v571, %v570
        %v664 = vpack.c.b16 %v573, %v572
        %v665 = vpack.c.b16 %v575, %v574
        %v666 = vpack.c.b16 %v577, %v576
        %v667 = vpack.c.b16 %v579, %v578
        %v668 = vpack.c.b16 %v581, %v580
        %v669 = vpack.c.b16 %v583, %v582
        %v670 = vpack.c.b16 %v585, %v584
        %v671 = vpack.c.b16 %v587, %v586
        %v672 = vpack.c.b16 %v589, %v588
        %v673 = vpack.c.b16 %v591, %v590
        %v674 = vpack.c.b16 %v593, %v592
        %v675 = vpack.c.b16 %v595, %v594
        %v676 = vpack.c.b16 %v597, %v596
        %v677 = vpack.c.b16 %v599, %v598
        %v678 = vpack.c.b16 %v601, %v600
        %v679 = vpack.c.b16 %v603, %v602
        %v680 = vpack.c.b16 %v605, %v604
        %v681 = vpack.c.b16 %v607, %v606
        %v682 = vpack.c.b16 %v609, %v608
        %v683 = vpack.c.b16 %v611, %v610
        %v684 = vpack.c.b16 %v613, %v612
        %v685 = vpack.c.b16 %v615, %v614
        %v686 = vpack.c.b16 %v617, %v616
        %v687 = vpack.c.b16 %v619, %v618
        %v688 = vpack.c.b16 %v621, %v620
        %v689 = vpack.c.b16 %v623, %v622
        %v690 = vpack.c.b16 %v625, %v624
        %v691 = vpack.c.b16 %v627, %v626
        %v694 = vunpack.c.l.b16 %v370
        %v695 = vunpack.c.l.b16 %v371
        %v696 = vpack.c.b16 %v695, %v694
        %vm698 = vcmask 130048
        %v700 = vsel %vm698, %v628, 0
        %v703 = vsel %vm698, %v629, 0
        %v706 = vsel %vm698, %v630, 0
        %v709 = vsel %vm698, %v631, 0
        %v712 = vsel %vm698, %v632, 0
        %v715 = vsel %vm698, %v633, 0
        %v718 = vsel %vm698, %v634, 0
        %v721 = vsel %vm698, %v635, 0
        %v724 = vsel %vm698, %v636, 0
        %v727 = vsel %vm698, %v637, 0
        %v730 = vsel %vm698, %v638, 0
        %v733 = vsel %vm698, %v639, 0
        %v736 = vsel %vm698, %v640, 0
        %v739 = vsel %vm698, %v641, 0
        %v742 = vsel %vm698, %v642, 0
        %v745 = vsel %vm698, %v643, 0
        %v748 = vsel %vm698, %v644, 0
        %v751 = vsel %vm698, %v645, 0
        %v754 = vsel %vm698, %v646, 0
        %v757 = vsel %vm698, %v647, 0
        %v760 = vsel %vm698, %v648, 0
        %v763 = vsel %vm698, %v649, 0
        %v766 = vsel %vm698, %v650, 0
        %v769 = vsel %vm698, %v651, 0
        %v772 = vsel %vm698, %v652, 0
        %v775 = vsel %vm698, %v653, 0
        %v778 = vsel %vm698, %v654, 0
        %v781 = vsel %vm698, %v655, 0
        %v784 = vsel %vm698, %v656, 0
        %v787 = vsel %vm698, %v657, 0
        %v790 = vsel %vm698, %v658, 0
        %v793 = vsel %vm698, %v659, 0
        %v796 = vsel %vm698, %v660, 0
        %v799 = vsel %vm698, %v661, 0
        %v802 = vsel %vm698, %v662, 0
        %v805 = vsel %vm698, %v663, 0
        %v808 = vsel %vm698, %v664, 0
        %v811 = vsel %vm698, %v665, 0
        %v814 = vsel %vm698, %v666, 0
        %v817 = vsel %vm698, %v667, 0
        %v820 = vsel %vm698, %v668, 0
        %v823 = vsel %vm698, %v669, 0
        %v826 = vsel %vm698, %v670, 0
        %v829 = vsel %vm698, %v671, 0
        %v832 = vsel %vm698, %v672, 0
        %v835 = vsel %vm698, %v673, 0
        %v838 = vsel %vm698, %v674, 0
        %v841 = vsel %vm698, %v675, 0
        %v844 = vsel %vm698, %v676, 0
        %v847 = vsel %vm698, %v677, 0
        %v850 = vsel %vm698, %v678, 0
        %v853 = vsel %vm698, %v679, 0
        %v856 = vsel %vm698, %v680, 0
        %v859 = vsel %vm698, %v681, 0
        %v862 = vsel %vm698, %v682, 0
        %v865 = vsel %vm698, %v683, 0
        %v868 = vsel %vm698, %v684, 0
        %v871 = vsel %vm698, %v685, 0
        %v874 = vsel %vm698, %v686, 0
        %v877 = vsel %vm698, %v687, 0
        %v880 = vsel %vm698, %v688, 0
        %v883 = vsel %vm698, %v689, 0
        %v886 = vsel %vm698, %v690, 0
        %v889 = vsel %vm698, %v691, 0
        %891 = vmatprep.subr.bf16.mxu0 0
        %892 = vmatpush1.bf16.msra.mxu0 %v696
        %893 = vmatprep.subr.bf16.mxu0 0
        %894 = vmatpush1.bf16.msra.mxu0 0
        %895 = vmatprep.subr.bf16.mxu0 0
        %896 = vmatpush1.bf16.msra.mxu0 0
        %897 = vmatprep.subr.bf16.mxu0 0
        %898 = vmatpush1.bf16.msra.mxu0 0
        %899 = vmatprep.subr.bf16.mxu0 0
        %900 = vmatpush1.bf16.msra.mxu0 0
        %901 = vmatprep.subr.bf16.mxu0 0
        %902 = vmatpush1.bf16.msra.mxu0 0
        %903 = vmatprep.subr.bf16.mxu0 0
        %904 = vmatpush1.bf16.msra.mxu0 0
        %905 = vmatprep.subr.bf16.mxu0 0
        %906 = vmatpush1.bf16.msra.mxu0 0
        %907 = vmatprep.subr.bf16.mxu0 0
        %908 = vmatpush1.bf16.msra.mxu0 0
        %909 = vmatprep.subr.bf16.mxu0 0
        %910 = vmatpush1.bf16.msra.mxu0 0
        %911 = vmatprep.subr.bf16.mxu0 0
        %912 = vmatpush1.bf16.msra.mxu0 0
        %913 = vmatprep.subr.bf16.mxu0 0
        %914 = vmatpush1.bf16.msra.mxu0 0
        %915 = vmatprep.subr.bf16.mxu0 0
        %916 = vmatpush1.bf16.msra.mxu0 0
        %917 = vmatprep.subr.bf16.mxu0 0
        %918 = vmatpush1.bf16.msra.mxu0 0
        %919 = vmatprep.subr.bf16.mxu0 0
        %920 = vmatpush1.bf16.msra.mxu0 0
        %921 = vmatprep.subr.bf16.mxu0 0
        %922 = vmatpush1.bf16.msra.mxu0 0
        %923 = vmatprep.mubr.bf16.mxu0 0
        %924 = vmatmul.mubr.bf16.gmra.mrb[0].mxu0 %v700
        %v925 = vpop.f32.mrb[0].mxu0
        %v926 = vadd.f32 0.0, %v925
        %v927 = vpop.f32.mrb[0].mxu0
        %v928 = vpop.f32.mrb[0].mxu0
        %v929 = vadd.f32 0.0, %v928
        %v930 = vpop.f32.mrb[0].mxu0
        %931 = vmatprep.mubr.bf16.mxu0 0
        %932 = vmatmul.mubr.bf16.gmra.mrb[0].mxu0 %v703
        %v933 = vpop.f32.mrb[0].mxu0
        %v934 = vadd.f32 0.0, %v933
        %v935 = vpop.f32.mrb[0].mxu0
        %v936 = vpop.f32.mrb[0].mxu0
        %v937 = vadd.f32 0.0, %v936
        %v938 = vpop.f32.mrb[0].mxu0
        %939 = vmatprep.mubr.bf16.mxu0 0
        %940 = vmatmul.mubr.bf16.gmra.mrb[0].mxu0 %v706
        %v941 = vpop.f32.mrb[0].mxu0
        %v942 = vadd.f32 0.0, %v941
        %v943 = vpop.f32.mrb[0].mxu0
        %v944 = vpop.f32.mrb[0].mxu0
        %v945 = vadd.f32 0.0, %v944
        %v946 = vpop.f32.mrb[0].mxu0
        %947 = vmatprep.mubr.bf16.mxu0 0
        %948 = vmatmul.mubr.bf16.gmra.mrb[0].mxu0 %v709
        %v949 = vpop.f32.mrb[0].mxu0
        %v950 = vadd.f32 0.0, %v949
        %v951 = vpop.f32.mrb[0].mxu0
        %v952 = vpop.f32.mrb[0].mxu0
        %v953 = vadd.f32 0.0, %v952
        %v954 = vpop.f32.mrb[0].mxu0
        %955 = vmatprep.mubr.bf16.mxu0 0
        %956 = vmatmul.mubr.bf16.gmra.mrb[0].mxu0 %v712
        %v957 = vpop.f32.mrb[0].mxu0
        %v958 = vadd.f32 0.0, %v957
        %v959 = vpop.f32.mrb[0].mxu0
        %v960 = vpop.f32.mrb[0].mxu0
        %v961 = vadd.f32 0.0, %v960
        %v962 = vpop.f32.mrb[0].mxu0
        %963 = vmatprep.mubr.bf16.mxu0 0
        %964 = vmatmul.mubr.bf16.gmra.mrb[0].mxu0 %v715
        %v965 = vpop.f32.mrb[0].mxu0
        %v966 = vadd.f32 0.0, %v965
        %v967 = vpop.f32.mrb[0].mxu0
        %v968 = vpop.f32.mrb[0].mxu0
        %v969 = vadd.f32 0.0, %v968
        %v970 = vpop.f32.mrb[0].mxu0
        %971 = vmatprep.mubr.bf16.mxu0 0
        %972 = vmatmul.mubr.bf16.gmra.mrb[0].mxu0 %v718
        %v973 = vpop.f32.mrb[0].mxu0
        %v974 = vadd.f32 0.0, %v973
        %v975 = vpop.f32.mrb[0].mxu0
        %v976 = vpop.f32.mrb[0].mxu0
        %v977 = vadd.f32 0.0, %v976
        %v978 = vpop.f32.mrb[0].mxu0
        %979 = vmatprep.mubr.bf16.mxu0 0
        %980 = vmatmul.mubr.bf16.gmra.mrb[0].mxu0 %v721
        %v981 = vpop.f32.mrb[0].mxu0
        %v982 = vadd.f32 0.0, %v981
        %v983 = vpop.f32.mrb[0].mxu0
        %v984 = vpop.f32.mrb[0].mxu0
        %v985 = vadd.f32 0.0, %v984
        %v986 = vpop.f32.mrb[0].mxu0
        %987 = vmatprep.mubr.bf16.mxu0 0
        %988 = vmatmul.mubr.bf16.gmra.mrb[0].mxu0 %v724
        %v989 = vpop.f32.mrb[0].mxu0
        %v990 = vadd.f32 0.0, %v989
        %v991 = vpop.f32.mrb[0].mxu0
        %v992 = vpop.f32.mrb[0].mxu0
        %v993 = vadd.f32 0.0, %v992
        %v994 = vpop.f32.mrb[0].mxu0
        %995 = vmatprep.mubr.bf16.mxu0 0
        %996 = vmatmul.mubr.bf16.gmra.mrb[0].mxu0 %v727
        %v997 = vpop.f32.mrb[0].mxu0
        %v998 = vadd.f32 0.0, %v997
        %v999 = vpop.f32.mrb[0].mxu0
        %v1000 = vpop.f32.mrb[0].mxu0
        %v1001 = vadd.f32 0.0, %v1000
        %v1002 = vpop.f32.mrb[0].mxu0
        %1003 = vmatprep.mubr.bf16.mxu0 0
        %1004 = vmatmul.mubr.bf16.gmra.mrb[0].mxu0 %v730
        %v1005 = vpop.f32.mrb[0].mxu0
        %v1006 = vadd.f32 0.0, %v1005
        %v1007 = vpop.f32.mrb[0].mxu0
        %v1008 = vpop.f32.mrb[0].mxu0
        %v1009 = vadd.f32 0.0, %v1008
        %v1010 = vpop.f32.mrb[0].mxu0
        %1011 = vmatprep.mubr.bf16.mxu0 0
        %1012 = vmatmul.mubr.bf16.gmra.mrb[0].mxu0 %v733
        %v1013 = vpop.f32.mrb[0].mxu0
        %v1014 = vadd.f32 0.0, %v1013
        %v1015 = vpop.f32.mrb[0].mxu0
        %v1016 = vpop.f32.mrb[0].mxu0
        %v1017 = vadd.f32 0.0, %v1016
        %v1018 = vpop.f32.mrb[0].mxu0
        %1019 = vmatprep.mubr.bf16.mxu0 0
        %1020 = vmatmul.mubr.bf16.gmra.mrb[0].mxu0 %v736
        %v1021 = vpop.f32.mrb[0].mxu0
        %v1022 = vadd.f32 0.0, %v1021
        %v1023 = vpop.f32.mrb[0].mxu0
        %v1024 = vpop.f32.mrb[0].mxu0
        %v1025 = vadd.f32 0.0, %v1024
        %v1026 = vpop.f32.mrb[0].mxu0
        %1027 = vmatprep.mubr.bf16.mxu0 0
        %1028 = vmatmul.mubr.bf16.gmra.mrb[0].mxu0 %v739
        %v1029 = vpop.f32.mrb[0].mxu0
        %v1030 = vadd.f32 0.0, %v1029
        %v1031 = vpop.f32.mrb[0].mxu0
        %v1032 = vpop.f32.mrb[0].mxu0
        %v1033 = vadd.f32 0.0, %v1032
        %v1034 = vpop.f32.mrb[0].mxu0
        %1035 = vmatprep.mubr.bf16.mxu0 0
        %1036 = vmatmul.mubr.bf16.gmra.mrb[0].mxu0 %v742
        %v1037 = vpop.f32.mrb[0].mxu0
        %v1038 = vadd.f32 0.0, %v1037
        %v1039 = vpop.f32.mrb[0].mxu0
        %v1040 = vpop.f32.mrb[0].mxu0
        %v1041 = vadd.f32 0.0, %v1040
        %v1042 = vpop.f32.mrb[0].mxu0
        %1043 = vmatprep.mubr.bf16.mxu0 0
        %1044 = vmatmul.mubr.bf16.gmra.mrb[0].mxu0 %v745
        %v1045 = vpop.f32.mrb[0].mxu0
        %v1046 = vadd.f32 0.0, %v1045
        %v1047 = vpop.f32.mrb[0].mxu0
        %v1048 = vpop.f32.mrb[0].mxu0
        %v1049 = vadd.f32 0.0, %v1048
        %v1050 = vpop.f32.mrb[0].mxu0
        %1051 = vmatprep.mubr.bf16.mxu0 0
        %1052 = vmatmul.mubr.bf16.gmra.mrb[0].mxu0 %v748
        %v1053 = vpop.f32.mrb[0].mxu0
        %v1054 = vadd.f32 0.0, %v1053
        %v1055 = vpop.f32.mrb[0].mxu0
        %v1056 = vpop.f32.mrb[0].mxu0
        %v1057 = vadd.f32 0.0, %v1056
        %v1058 = vpop.f32.mrb[0].mxu0
        %1059 = vmatprep.mubr.bf16.mxu0 0
        %1060 = vmatmul.mubr.bf16.gmra.mrb[0].mxu0 %v751
        %v1061 = vpop.f32.mrb[0].mxu0
        %v1062 = vadd.f32 0.0, %v1061
        %v1063 = vpop.f32.mrb[0].mxu0
        %v1064 = vpop.f32.mrb[0].mxu0
        %v1065 = vadd.f32 0.0, %v1064
        %v1066 = vpop.f32.mrb[0].mxu0
        %1067 = vmatprep.mubr.bf16.mxu0 0
        %1068 = vmatmul.mubr.bf16.gmra.mrb[0].mxu0 %v754
        %v1069 = vpop.f32.mrb[0].mxu0
        %v1070 = vadd.f32 0.0, %v1069
        %v1071 = vpop.f32.mrb[0].mxu0
        %v1072 = vpop.f32.mrb[0].mxu0
        %v1073 = vadd.f32 0.0, %v1072
        %v1074 = vpop.f32.mrb[0].mxu0
        %1075 = vmatprep.mubr.bf16.mxu0 0
        %1076 = vmatmul.mubr.bf16.gmra.mrb[0].mxu0 %v757
        %v1077 = vpop.f32.mrb[0].mxu0
        %v1078 = vadd.f32 0.0, %v1077
        %v1079 = vpop.f32.mrb[0].mxu0
        %v1080 = vpop.f32.mrb[0].mxu0
        %v1081 = vadd.f32 0.0, %v1080
        %v1082 = vpop.f32.mrb[0].mxu0
        %1083 = vmatprep.mubr.bf16.mxu0 0
        %1084 = vmatmul.mubr.bf16.gmra.mrb[0].mxu0 %v760
        %v1085 = vpop.f32.mrb[0].mxu0
        %v1086 = vadd.f32 0.0, %v1085
        %v1087 = vpop.f32.mrb[0].mxu0
        %v1088 = vpop.f32.mrb[0].mxu0
        %v1089 = vadd.f32 0.0, %v1088
        %v1090 = vpop.f32.mrb[0].mxu0
        %1091 = vmatprep.mubr.bf16.mxu0 0
        %1092 = vmatmul.mubr.bf16.gmra.mrb[0].mxu0 %v763
        %v1093 = vpop.f32.mrb[0].mxu0
        %v1094 = vadd.f32 0.0, %v1093
        %v1095 = vpop.f32.mrb[0].mxu0
        %v1096 = vpop.f32.mrb[0].mxu0
        %v1097 = vadd.f32 0.0, %v1096
        %v1098 = vpop.f32.mrb[0].mxu0
        %1099 = vmatprep.mubr.bf16.mxu0 0
        %1100 = vmatmul.mubr.bf16.gmra.mrb[0].mxu0 %v766
        %v1101 = vpop.f32.mrb[0].mxu0
        %v1102 = vadd.f32 0.0, %v1101
        %v1103 = vpop.f32.mrb[0].mxu0
        %v1104 = vpop.f32.mrb[0].mxu0
        %v1105 = vadd.f32 0.0, %v1104
        %v1106 = vpop.f32.mrb[0].mxu0
        %1107 = vmatprep.mubr.bf16.mxu0 0
        %1108 = vmatmul.mubr.bf16.gmra.mrb[0].mxu0 %v769
        %v1109 = vpop.f32.mrb[0].mxu0
        %v1110 = vadd.f32 0.0, %v1109
        %v1111 = vpop.f32.mrb[0].mxu0
        %v1112 = vpop.f32.mrb[0].mxu0
        %v1113 = vadd.f32 0.0, %v1112
        %v1114 = vpop.f32.mrb[0].mxu0
        %1115 = vmatprep.mubr.bf16.mxu0 0
        %1116 = vmatmul.mubr.bf16.gmra.mrb[0].mxu0 %v772
        %v1117 = vpop.f32.mrb[0].mxu0
        %v1118 = vadd.f32 0.0, %v1117
        %v1119 = vpop.f32.mrb[0].mxu0
        %v1120 = vpop.f32.mrb[0].mxu0
        %v1121 = vadd.f32 0.0, %v1120
        %v1122 = vpop.f32.mrb[0].mxu0
        %1123 = vmatprep.mubr.bf16.mxu0 0
        %1124 = vmatmul.mubr.bf16.gmra.mrb[0].mxu0 %v775
        %v1125 = vpop.f32.mrb[0].mxu0
        %v1126 = vadd.f32 0.0, %v1125
        %v1127 = vpop.f32.mrb[0].mxu0
        %v1128 = vpop.f32.mrb[0].mxu0
        %v1129 = vadd.f32 0.0, %v1128
        %v1130 = vpop.f32.mrb[0].mxu0
        %1131 = vmatprep.mubr.bf16.mxu0 0
        %1132 = vmatmul.mubr.bf16.gmra.mrb[0].mxu0 %v778
        %v1133 = vpop.f32.mrb[0].mxu0
        %v1134 = vadd.f32 0.0, %v1133
        %v1135 = vpop.f32.mrb[0].mxu0
        %v1136 = vpop.f32.mrb[0].mxu0
        %v1137 = vadd.f32 0.0, %v1136
        %v1138 = vpop.f32.mrb[0].mxu0
        %1139 = vmatprep.mubr.bf16.mxu0 0
        %1140 = vmatmul.mubr.bf16.gmra.mrb[0].mxu0 %v781
        %v1141 = vpop.f32.mrb[0].mxu0
        %v1142 = vadd.f32 0.0, %v1141
        %v1143 = vpop.f32.mrb[0].mxu0
        %v1144 = vpop.f32.mrb[0].mxu0
        %v1145 = vadd.f32 0.0, %v1144
        %v1146 = vpop.f32.mrb[0].mxu0
        %1147 = vmatprep.mubr.bf16.mxu0 0
        %1148 = vmatmul.mubr.bf16.gmra.mrb[0].mxu0 %v784
        %v1149 = vpop.f32.mrb[0].mxu0
        %v1150 = vadd.f32 0.0, %v1149
        %v1151 = vpop.f32.mrb[0].mxu0
        %v1152 = vpop.f32.mrb[0].mxu0
        %v1153 = vadd.f32 0.0, %v1152
        %v1154 = vpop.f32.mrb[0].mxu0
        %1155 = vmatprep.mubr.bf16.mxu0 0
        %1156 = vmatmul.mubr.bf16.gmra.mrb[0].mxu0 %v787
        %v1157 = vpop.f32.mrb[0].mxu0
        %v1158 = vadd.f32 0.0, %v1157
        %v1159 = vpop.f32.mrb[0].mxu0
        %v1160 = vpop.f32.mrb[0].mxu0
        %v1161 = vadd.f32 0.0, %v1160
        %v1162 = vpop.f32.mrb[0].mxu0
        %1163 = vmatprep.mubr.bf16.mxu0 0
        %1164 = vmatmul.mubr.bf16.gmra.mrb[0].mxu0 %v790
        %v1165 = vpop.f32.mrb[0].mxu0
        %v1166 = vadd.f32 0.0, %v1165
        %v1167 = vpop.f32.mrb[0].mxu0
        %v1168 = vpop.f32.mrb[0].mxu0
        %v1169 = vadd.f32 0.0, %v1168
        %v1170 = vpop.f32.mrb[0].mxu0
        %1171 = vmatprep.mubr.bf16.mxu0 0
        %1172 = vmatmul.mubr.bf16.gmra.mrb[0].mxu0 %v793
        %v1173 = vpop.f32.mrb[0].mxu0
        %v1174 = vadd.f32 0.0, %v1173
        %v1175 = vpop.f32.mrb[0].mxu0
        %v1176 = vpop.f32.mrb[0].mxu0
        %v1177 = vadd.f32 0.0, %v1176
        %v1178 = vpop.f32.mrb[0].mxu0
        %1179 = vmatprep.mubr.bf16.mxu0 0
        %1180 = vmatmul.mubr.bf16.gmra.mrb[0].mxu0 %v796
        %v1181 = vpop.f32.mrb[0].mxu0
        %v1182 = vadd.f32 0.0, %v1181
        %v1183 = vpop.f32.mrb[0].mxu0
        %v1184 = vpop.f32.mrb[0].mxu0
        %v1185 = vadd.f32 0.0, %v1184
        %v1186 = vpop.f32.mrb[0].mxu0
        %1187 = vmatprep.mubr.bf16.mxu0 0
        %1188 = vmatmul.mubr.bf16.gmra.mrb[0].mxu0 %v799
        %v1189 = vpop.f32.mrb[0].mxu0
        %v1190 = vadd.f32 0.0, %v1189
        %v1191 = vpop.f32.mrb[0].mxu0
        %v1192 = vpop.f32.mrb[0].mxu0
        %v1193 = vadd.f32 0.0, %v1192
        %v1194 = vpop.f32.mrb[0].mxu0
        %1195 = vmatprep.mubr.bf16.mxu0 0
        %1196 = vmatmul.mubr.bf16.gmra.mrb[0].mxu0 %v802
        %v1197 = vpop.f32.mrb[0].mxu0
        %v1198 = vadd.f32 0.0, %v1197
        %v1199 = vpop.f32.mrb[0].mxu0
        %v1200 = vpop.f32.mrb[0].mxu0
        %v1201 = vadd.f32 0.0, %v1200
        %v1202 = vpop.f32.mrb[0].mxu0
        %1203 = vmatprep.mubr.bf16.mxu0 0
        %1204 = vmatmul.mubr.bf16.gmra.mrb[0].mxu0 %v805
        %v1205 = vpop.f32.mrb[0].mxu0
        %v1206 = vadd.f32 0.0, %v1205
        %v1207 = vpop.f32.mrb[0].mxu0
        %v1208 = vpop.f32.mrb[0].mxu0
        %v1209 = vadd.f32 0.0, %v1208
        %v1210 = vpop.f32.mrb[0].mxu0
        %1211 = vmatprep.mubr.bf16.mxu0 0
        %1212 = vmatmul.mubr.bf16.gmra.mrb[0].mxu0 %v808
        %v1213 = vpop.f32.mrb[0].mxu0
        %v1214 = vadd.f32 0.0, %v1213
        %v1215 = vpop.f32.mrb[0].mxu0
        %v1216 = vpop.f32.mrb[0].mxu0
        %v1217 = vadd.f32 0.0, %v1216
        %v1218 = vpop.f32.mrb[0].mxu0
        %1219 = vmatprep.mubr.bf16.mxu0 0
        %1220 = vmatmul.mubr.bf16.gmra.mrb[0].mxu0 %v811
        %v1221 = vpop.f32.mrb[0].mxu0
        %v1222 = vadd.f32 0.0, %v1221
        %v1223 = vpop.f32.mrb[0].mxu0
        %v1224 = vpop.f32.mrb[0].mxu0
        %v1225 = vadd.f32 0.0, %v1224
        %v1226 = vpop.f32.mrb[0].mxu0
        %1227 = vmatprep.mubr.bf16.mxu0 0
        %1228 = vmatmul.mubr.bf16.gmra.mrb[0].mxu0 %v814
        %v1229 = vpop.f32.mrb[0].mxu0
        %v1230 = vadd.f32 0.0, %v1229
        %v1231 = vpop.f32.mrb[0].mxu0
        %v1232 = vpop.f32.mrb[0].mxu0
        %v1233 = vadd.f32 0.0, %v1232
        %v1234 = vpop.f32.mrb[0].mxu0
        %1235 = vmatprep.mubr.bf16.mxu0 0
        %1236 = vmatmul.mubr.bf16.gmra.mrb[0].mxu0 %v817
        %v1237 = vpop.f32.mrb[0].mxu0
        %v1238 = vadd.f32 0.0, %v1237
        %v1239 = vpop.f32.mrb[0].mxu0
        %v1240 = vpop.f32.mrb[0].mxu0
        %v1241 = vadd.f32 0.0, %v1240
        %v1242 = vpop.f32.mrb[0].mxu0
        %1243 = vmatprep.mubr.bf16.mxu0 0
        %1244 = vmatmul.mubr.bf16.gmra.mrb[0].mxu0 %v820
        %v1245 = vpop.f32.mrb[0].mxu0
        %v1246 = vadd.f32 0.0, %v1245
        %v1247 = vpop.f32.mrb[0].mxu0
        %v1248 = vpop.f32.mrb[0].mxu0
        %v1249 = vadd.f32 0.0, %v1248
        %v1250 = vpop.f32.mrb[0].mxu0
        %1251 = vmatprep.mubr.bf16.mxu0 0
        %1252 = vmatmul.mubr.bf16.gmra.mrb[0].mxu0 %v823
        %v1253 = vpop.f32.mrb[0].mxu0
        %v1254 = vadd.f32 0.0, %v1253
        %v1255 = vpop.f32.mrb[0].mxu0
        %v1256 = vpop.f32.mrb[0].mxu0
        %v1257 = vadd.f32 0.0, %v1256
        %v1258 = vpop.f32.mrb[0].mxu0
        %1259 = vmatprep.mubr.bf16.mxu0 0
        %1260 = vmatmul.mubr.bf16.gmra.mrb[0].mxu0 %v826
        %v1261 = vpop.f32.mrb[0].mxu0
        %v1262 = vadd.f32 0.0, %v1261
        %v1263 = vpop.f32.mrb[0].mxu0
        %v1264 = vpop.f32.mrb[0].mxu0
        %v1265 = vadd.f32 0.0, %v1264
        %v1266 = vpop.f32.mrb[0].mxu0
        %1267 = vmatprep.mubr.bf16.mxu0 0
        %1268 = vmatmul.mubr.bf16.gmra.mrb[0].mxu0 %v829
        %v1269 = vpop.f32.mrb[0].mxu0
        %v1270 = vadd.f32 0.0, %v1269
        %v1271 = vpop.f32.mrb[0].mxu0
        %v1272 = vpop.f32.mrb[0].mxu0
        %v1273 = vadd.f32 0.0, %v1272
        %v1274 = vpop.f32.mrb[0].mxu0
        %1275 = vmatprep.mubr.bf16.mxu0 0
        %1276 = vmatmul.mubr.bf16.gmra.mrb[0].mxu0 %v832
        %v1277 = vpop.f32.mrb[0].mxu0
        %v1278 = vadd.f32 0.0, %v1277
        %v1279 = vpop.f32.mrb[0].mxu0
        %v1280 = vpop.f32.mrb[0].mxu0
        %v1281 = vadd.f32 0.0, %v1280
        %v1282 = vpop.f32.mrb[0].mxu0
        %1283 = vmatprep.mubr.bf16.mxu0 0
        %1284 = vmatmul.mubr.bf16.gmra.mrb[0].mxu0 %v835
        %v1285 = vpop.f32.mrb[0].mxu0
        %v1286 = vadd.f32 0.0, %v1285
        %v1287 = vpop.f32.mrb[0].mxu0
        %v1288 = vpop.f32.mrb[0].mxu0
        %v1289 = vadd.f32 0.0, %v1288
        %v1290 = vpop.f32.mrb[0].mxu0
        %1291 = vmatprep.mubr.bf16.mxu0 0
        %1292 = vmatmul.mubr.bf16.gmra.mrb[0].mxu0 %v838
        %v1293 = vpop.f32.mrb[0].mxu0
        %v1294 = vadd.f32 0.0, %v1293
        %v1295 = vpop.f32.mrb[0].mxu0
        %v1296 = vpop.f32.mrb[0].mxu0
        %v1297 = vadd.f32 0.0, %v1296
        %v1298 = vpop.f32.mrb[0].mxu0
        %1299 = vmatprep.mubr.bf16.mxu0 0
        %1300 = vmatmul.mubr.bf16.gmra.mrb[0].mxu0 %v841
        %v1301 = vpop.f32.mrb[0].mxu0
        %v1302 = vadd.f32 0.0, %v1301
        %v1303 = vpop.f32.mrb[0].mxu0
        %v1304 = vpop.f32.mrb[0].mxu0
        %v1305 = vadd.f32 0.0, %v1304
        %v1306 = vpop.f32.mrb[0].mxu0
        %1307 = vmatprep.mubr.bf16.mxu0 0
        %1308 = vmatmul.mubr.bf16.gmra.mrb[0].mxu0 %v844
        %v1309 = vpop.f32.mrb[0].mxu0
        %v1310 = vadd.f32 0.0, %v1309
        %v1311 = vpop.f32.mrb[0].mxu0
        %v1312 = vpop.f32.mrb[0].mxu0
        %v1313 = vadd.f32 0.0, %v1312
        %v1314 = vpop.f32.mrb[0].mxu0
        %1315 = vmatprep.mubr.bf16.mxu0 0
        %1316 = vmatmul.mubr.bf16.gmra.mrb[0].mxu0 %v847
        %v1317 = vpop.f32.mrb[0].mxu0
        %v1318 = vadd.f32 0.0, %v1317
        %v1319 = vpop.f32.mrb[0].mxu0
        %v1320 = vpop.f32.mrb[0].mxu0
        %v1321 = vadd.f32 0.0, %v1320
        %v1322 = vpop.f32.mrb[0].mxu0
        %1323 = vmatprep.mubr.bf16.mxu0 0
        %1324 = vmatmul.mubr.bf16.gmra.mrb[0].mxu0 %v850
        %v1325 = vpop.f32.mrb[0].mxu0
        %v1326 = vadd.f32 0.0, %v1325
        %v1327 = vpop.f32.mrb[0].mxu0
        %v1328 = vpop.f32.mrb[0].mxu0
        %v1329 = vadd.f32 0.0, %v1328
        %v1330 = vpop.f32.mrb[0].mxu0
        %1331 = vmatprep.mubr.bf16.mxu0 0
        %1332 = vmatmul.mubr.bf16.gmra.mrb[0].mxu0 %v853
        %v1333 = vpop.f32.mrb[0].mxu0
        %v1334 = vadd.f32 0.0, %v1333
        %v1335 = vpop.f32.mrb[0].mxu0
        %v1336 = vpop.f32.mrb[0].mxu0
        %v1337 = vadd.f32 0.0, %v1336
        %v1338 = vpop.f32.mrb[0].mxu0
        %1339 = vmatprep.mubr.bf16.mxu0 0
        %1340 = vmatmul.mubr.bf16.gmra.mrb[0].mxu0 %v856
        %v1341 = vpop.f32.mrb[0].mxu0
        %v1342 = vadd.f32 0.0, %v1341
        %v1343 = vpop.f32.mrb[0].mxu0
        %v1344 = vpop.f32.mrb[0].mxu0
        %v1345 = vadd.f32 0.0, %v1344
        %v1346 = vpop.f32.mrb[0].mxu0
        %1347 = vmatprep.mubr.bf16.mxu0 0
        %1348 = vmatmul.mubr.bf16.gmra.mrb[0].mxu0 %v859
        %v1349 = vpop.f32.mrb[0].mxu0
        %v1350 = vadd.f32 0.0, %v1349
        %v1351 = vpop.f32.mrb[0].mxu0
        %v1352 = vpop.f32.mrb[0].mxu0
        %v1353 = vadd.f32 0.0, %v1352
        %v1354 = vpop.f32.mrb[0].mxu0
        %1355 = vmatprep.mubr.bf16.mxu0 0
        %1356 = vmatmul.mubr.bf16.gmra.mrb[0].mxu0 %v862
        %v1357 = vpop.f32.mrb[0].mxu0
        %v1358 = vadd.f32 0.0, %v1357
        %v1359 = vpop.f32.mrb[0].mxu0
        %v1360 = vpop.f32.mrb[0].mxu0
        %v1361 = vadd.f32 0.0, %v1360
        %v1362 = vpop.f32.mrb[0].mxu0
        %1363 = vmatprep.mubr.bf16.mxu0 0
        %1364 = vmatmul.mubr.bf16.gmra.mrb[0].mxu0 %v865
        %v1365 = vpop.f32.mrb[0].mxu0
        %v1366 = vadd.f32 0.0, %v1365
        %v1367 = vpop.f32.mrb[0].mxu0
        %v1368 = vpop.f32.mrb[0].mxu0
        %v1369 = vadd.f32 0.0, %v1368
        %v1370 = vpop.f32.mrb[0].mxu0
        %1371 = vmatprep.mubr.bf16.mxu0 0
        %1372 = vmatmul.mubr.bf16.gmra.mrb[0].mxu0 %v868
        %v1373 = vpop.f32.mrb[0].mxu0
        %v1374 = vadd.f32 0.0, %v1373
        %v1375 = vpop.f32.mrb[0].mxu0
        %v1376 = vpop.f32.mrb[0].mxu0
        %v1377 = vadd.f32 0.0, %v1376
        %v1378 = vpop.f32.mrb[0].mxu0
        %1379 = vmatprep.mubr.bf16.mxu0 0
        %1380 = vmatmul.mubr.bf16.gmra.mrb[0].mxu0 %v871
        %v1381 = vpop.f32.mrb[0].mxu0
        %v1382 = vadd.f32 0.0, %v1381
        %v1383 = vpop.f32.mrb[0].mxu0
        %v1384 = vpop.f32.mrb[0].mxu0
        %v1385 = vadd.f32 0.0, %v1384
        %v1386 = vpop.f32.mrb[0].mxu0
        %1387 = vmatprep.mubr.bf16.mxu0 0
        %1388 = vmatmul.mubr.bf16.gmra.mrb[0].mxu0 %v874
        %v1389 = vpop.f32.mrb[0].mxu0
        %v1390 = vadd.f32 0.0, %v1389
        %v1391 = vpop.f32.mrb[0].mxu0
        %v1392 = vpop.f32.mrb[0].mxu0
        %v1393 = vadd.f32 0.0, %v1392
        %v1394 = vpop.f32.mrb[0].mxu0
        %1395 = vmatprep.mubr.bf16.mxu0 0
        %1396 = vmatmul.mubr.bf16.gmra.mrb[0].mxu0 %v877
        %v1397 = vpop.f32.mrb[0].mxu0
        %v1398 = vadd.f32 0.0, %v1397
        %v1399 = vpop.f32.mrb[0].mxu0
        %v1400 = vpop.f32.mrb[0].mxu0
        %v1401 = vadd.f32 0.0, %v1400
        %v1402 = vpop.f32.mrb[0].mxu0
        %1403 = vmatprep.mubr.bf16.mxu0 0
        %1404 = vmatmul.mubr.bf16.gmra.mrb[0].mxu0 %v880
        %v1405 = vpop.f32.mrb[0].mxu0
        %v1406 = vadd.f32 0.0, %v1405
        %v1407 = vpop.f32.mrb[0].mxu0
        %v1408 = vpop.f32.mrb[0].mxu0
        %v1409 = vadd.f32 0.0, %v1408
        %v1410 = vpop.f32.mrb[0].mxu0
        %1411 = vmatprep.mubr.bf16.mxu0 0
        %1412 = vmatmul.mubr.bf16.gmra.mrb[0].mxu0 %v883
        %v1413 = vpop.f32.mrb[0].mxu0
        %v1414 = vadd.f32 0.0, %v1413
        %v1415 = vpop.f32.mrb[0].mxu0
        %v1416 = vpop.f32.mrb[0].mxu0
        %v1417 = vadd.f32 0.0, %v1416
        %v1418 = vpop.f32.mrb[0].mxu0
        %1419 = vmatprep.mubr.bf16.mxu0 0
        %1420 = vmatmul.mubr.bf16.gmra.mrb[0].mxu0 %v886
        %v1421 = vpop.f32.mrb[0].mxu0
        %v1422 = vadd.f32 0.0, %v1421
        %v1423 = vpop.f32.mrb[0].mxu0
        %v1424 = vpop.f32.mrb[0].mxu0
        %v1425 = vadd.f32 0.0, %v1424
        %v1426 = vpop.f32.mrb[0].mxu0
        %1427 = vmatprep.mubr.bf16.mxu0 0
        %1428 = vmatmul.mubr.bf16.gmra.mrb[0].mxu0 %v889
        %v1429 = vpop.f32.mrb[0].mxu0
        %v1430 = vadd.f32 0.0, %v1429
        %v1431 = vpop.f32.mrb[0].mxu0
        %v1432 = vpop.f32.mrb[0].mxu0
        %v1433 = vadd.f32 0.0, %v1432
        %v1434 = vpop.f32.mrb[0].mxu0
        %1435 = vdwg.mxu0
        %v1436 = vld [vmem:[#allocation4] sm:$0x1]
        %v1437 = vld [vmem:[#allocation6] sm:$0x1]
        %v1439 = vlaneseq
        %v1440 = vshrl.u32 %v1439, 7
        %v1441 = vsub.s32 0, %v1440
        %v1442 = vrot.slane %v1436, %v1441
        %v1444 = vmul.f32 %v926, %v1442
        %v1445 = vmul.f32 %v929, %v1442
        %v1446 = vmul.f32 %v934, %v1442
        %v1447 = vmul.f32 %v937, %v1442
        %v1448 = vmul.f32 %v942, %v1442
        %v1449 = vmul.f32 %v945, %v1442
        %v1450 = vmul.f32 %v950, %v1442
        %v1451 = vmul.f32 %v953, %v1442
        %v1452 = vmul.f32 %v958, %v1442
        %v1453 = vmul.f32 %v961, %v1442
        %v1454 = vmul.f32 %v966, %v1442
        %v1455 = vmul.f32 %v969, %v1442
        %v1456 = vmul.f32 %v974, %v1442
        %v1457 = vmul.f32 %v977, %v1442
        %v1458 = vmul.f32 %v982, %v1442
        %v1459 = vmul.f32 %v985, %v1442
        %v1460 = vmul.f32 %v990, %v1442
        %v1461 = vmul.f32 %v993, %v1442
        %v1462 = vmul.f32 %v998, %v1442
        %v1463 = vmul.f32 %v1001, %v1442
        %v1464 = vmul.f32 %v1006, %v1442
        %v1465 = vmul.f32 %v1009, %v1442
        %v1466 = vmul.f32 %v1014, %v1442
        %v1467 = vmul.f32 %v1017, %v1442
        %v1468 = vmul.f32 %v1022, %v1442
        %v1469 = vmul.f32 %v1025, %v1442
        %v1470 = vmul.f32 %v1030, %v1442
        %v1471 = vmul.f32 %v1033, %v1442
        %v1472 = vmul.f32 %v1038, %v1442
        %v1473 = vmul.f32 %v1041, %v1442
        %v1474 = vmul.f32 %v1046, %v1442
        %v1475 = vmul.f32 %v1049, %v1442
        %v1476 = vmul.f32 %v1054, %v1442
        %v1477 = vmul.f32 %v1057, %v1442
        %v1478 = vmul.f32 %v1062, %v1442
        %v1479 = vmul.f32 %v1065, %v1442
        %v1480 = vmul.f32 %v1070, %v1442
        %v1481 = vmul.f32 %v1073, %v1442
        %v1482 = vmul.f32 %v1078, %v1442
        %v1483 = vmul.f32 %v1081, %v1442
        %v1484 = vmul.f32 %v1086, %v1442
        %v1485 = vmul.f32 %v1089, %v1442
        %v1486 = vmul.f32 %v1094, %v1442
        %v1487 = vmul.f32 %v1097, %v1442
        %v1488 = vmul.f32 %v1102, %v1442
        %v1489 = vmul.f32 %v1105, %v1442
        %v1490 = vmul.f32 %v1110, %v1442
        %v1491 = vmul.f32 %v1113, %v1442
        %v1492 = vmul.f32 %v1118, %v1442
        %v1493 = vmul.f32 %v1121, %v1442
        %v1494 = vmul.f32 %v1126, %v1442
        %v1495 = vmul.f32 %v1129, %v1442
        %v1496 = vmul.f32 %v1134, %v1442
        %v1497 = vmul.f32 %v1137, %v1442
        %v1498 = vmul.f32 %v1142, %v1442
        %v1499 = vmul.f32 %v1145, %v1442
        %v1500 = vmul.f32 %v1150, %v1442
        %v1501 = vmul.f32 %v1153, %v1442
        %v1502 = vmul.f32 %v1158, %v1442
        %v1503 = vmul.f32 %v1161, %v1442
        %v1504 = vmul.f32 %v1166, %v1442
        %v1505 = vmul.f32 %v1169, %v1442
        %v1506 = vmul.f32 %v1174, %v1442
        %v1507 = vmul.f32 %v1177, %v1442
        %v1508 = vmul.f32 %v1182, %v1442
        %v1509 = vmul.f32 %v1185, %v1442
        %v1510 = vmul.f32 %v1190, %v1442
        %v1511 = vmul.f32 %v1193, %v1442
        %v1512 = vmul.f32 %v1198, %v1442
        %v1513 = vmul.f32 %v1201, %v1442
        %v1514 = vmul.f32 %v1206, %v1442
        %v1515 = vmul.f32 %v1209, %v1442
        %v1516 = vmul.f32 %v1214, %v1442
        %v1517 = vmul.f32 %v1217, %v1442
        %v1518 = vmul.f32 %v1222, %v1442
        %v1519 = vmul.f32 %v1225, %v1442
        %v1520 = vmul.f32 %v1230, %v1442
        %v1521 = vmul.f32 %v1233, %v1442
        %v1522 = vmul.f32 %v1238, %v1442
        %v1523 = vmul.f32 %v1241, %v1442
        %v1524 = vmul.f32 %v1246, %v1442
        %v1525 = vmul.f32 %v1249, %v1442
        %v1526 = vmul.f32 %v1254, %v1442
        %v1527 = vmul.f32 %v1257, %v1442
        %v1528 = vmul.f32 %v1262, %v1442
        %v1529 = vmul.f32 %v1265, %v1442
        %v1530 = vmul.f32 %v1270, %v1442
        %v1531 = vmul.f32 %v1273, %v1442
        %v1532 = vmul.f32 %v1278, %v1442
        %v1533 = vmul.f32 %v1281, %v1442
        %v1534 = vmul.f32 %v1286, %v1442
        %v1535 = vmul.f32 %v1289, %v1442
        %v1536 = vmul.f32 %v1294, %v1442
        %v1537 = vmul.f32 %v1297, %v1442
        %v1538 = vmul.f32 %v1302, %v1442
        %v1539 = vmul.f32 %v1305, %v1442
        %v1540 = vmul.f32 %v1310, %v1442
        %v1541 = vmul.f32 %v1313, %v1442
        %v1542 = vmul.f32 %v1318, %v1442
        %v1543 = vmul.f32 %v1321, %v1442
        %v1544 = vmul.f32 %v1326, %v1442
        %v1545 = vmul.f32 %v1329, %v1442
        %v1546 = vmul.f32 %v1334, %v1442
        %v1547 = vmul.f32 %v1337, %v1442
        %v1548 = vmul.f32 %v1342, %v1442
        %v1549 = vmul.f32 %v1345, %v1442
        %v1550 = vmul.f32 %v1350, %v1442
        %v1551 = vmul.f32 %v1353, %v1442
        %v1552 = vmul.f32 %v1358, %v1442
        %v1553 = vmul.f32 %v1361, %v1442
        %v1554 = vmul.f32 %v1366, %v1442
        %v1555 = vmul.f32 %v1369, %v1442
        %v1556 = vmul.f32 %v1374, %v1442
        %v1557 = vmul.f32 %v1377, %v1442
        %v1558 = vmul.f32 %v1382, %v1442
        %v1559 = vmul.f32 %v1385, %v1442
        %v1560 = vmul.f32 %v1390, %v1442
        %v1561 = vmul.f32 %v1393, %v1442
        %v1562 = vmul.f32 %v1398, %v1442
        %v1563 = vmul.f32 %v1401, %v1442
        %v1564 = vmul.f32 %v1406, %v1442
        %v1565 = vmul.f32 %v1409, %v1442
        %v1566 = vmul.f32 %v1414, %v1442
        %v1567 = vmul.f32 %v1417, %v1442
        %v1568 = vmul.f32 %v1422, %v1442
        %v1569 = vmul.f32 %v1425, %v1442
        %v1570 = vmul.f32 %v1430, %v1442
        %v1571 = vmul.f32 %v1433, %v1442
        %v1573 = vlaneseq
        %v1574 = vshrl.u32 %v1573, 7
        %v1575 = vsub.s32 0, %v1574
        %v1576 = vrot.slane %v1437, %v1575
        %v1578 = vadd.f32 %v1444, %v1576
        %v1579 = vadd.f32 %v1445, %v1576
        %v1580 = vadd.f32 %v1446, %v1576
        %v1581 = vadd.f32 %v1447, %v1576
        %v1582 = vadd.f32 %v1448, %v1576
        %v1583 = vadd.f32 %v1449, %v1576
        %v1584 = vadd.f32 %v1450, %v1576
        %v1585 = vadd.f32 %v1451, %v1576
        %v1586 = vadd.f32 %v1452, %v1576
        %v1587 = vadd.f32 %v1453, %v1576
        %v1588 = vadd.f32 %v1454, %v1576
        %v1589 = vadd.f32 %v1455, %v1576
        %v1590 = vadd.f32 %v1456, %v1576
        %v1591 = vadd.f32 %v1457, %v1576
        %v1592 = vadd.f32 %v1458, %v1576
        %v1593 = vadd.f32 %v1459, %v1576
        %v1594 = vadd.f32 %v1460, %v1576
        %v1595 = vadd.f32 %v1461, %v1576
        %v1596 = vadd.f32 %v1462, %v1576
        %v1597 = vadd.f32 %v1463, %v1576
        %v1598 = vadd.f32 %v1464, %v1576
        %v1599 = vadd.f32 %v1465, %v1576
        %v1600 = vadd.f32 %v1466, %v1576
        %v1601 = vadd.f32 %v1467, %v1576
        %v1602 = vadd.f32 %v1468, %v1576
        %v1603 = vadd.f32 %v1469, %v1576
        %v1604 = vadd.f32 %v1470, %v1576
        %v1605 = vadd.f32 %v1471, %v1576
        %v1606 = vadd.f32 %v1472, %v1576
        %v1607 = vadd.f32 %v1473, %v1576
        %v1608 = vadd.f32 %v1474, %v1576
        %v1609 = vadd.f32 %v1475, %v1576
        %v1610 = vadd.f32 %v1476, %v1576
        %v1611 = vadd.f32 %v1477, %v1576
        %v1612 = vadd.f32 %v1478, %v1576
        %v1613 = vadd.f32 %v1479, %v1576
        %v1614 = vadd.f32 %v1480, %v1576
        %v1615 = vadd.f32 %v1481, %v1576
        %v1616 = vadd.f32 %v1482, %v1576
        %v1617 = vadd.f32 %v1483, %v1576
        %v1618 = vadd.f32 %v1484, %v1576
        %v1619 = vadd.f32 %v1485, %v1576
        %v1620 = vadd.f32 %v1486, %v1576
        %v1621 = vadd.f32 %v1487, %v1576
        %v1622 = vadd.f32 %v1488, %v1576
        %v1623 = vadd.f32 %v1489, %v1576
        %v1624 = vadd.f32 %v1490, %v1576
        %v1625 = vadd.f32 %v1491, %v1576
        %v1626 = vadd.f32 %v1492, %v1576
        %v1627 = vadd.f32 %v1493, %v1576
        %v1628 = vadd.f32 %v1494, %v1576
        %v1629 = vadd.f32 %v1495, %v1576
        %v1630 = vadd.f32 %v1496, %v1576
        %v1631 = vadd.f32 %v1497, %v1576
        %v1632 = vadd.f32 %v1498, %v1576
        %v1633 = vadd.f32 %v1499, %v1576
        %v1634 = vadd.f32 %v1500, %v1576
        %v1635 = vadd.f32 %v1501, %v1576
        %v1636 = vadd.f32 %v1502, %v1576
        %v1637 = vadd.f32 %v1503, %v1576
        %v1638 = vadd.f32 %v1504, %v1576
        %v1639 = vadd.f32 %v1505, %v1576
        %v1640 = vadd.f32 %v1506, %v1576
        %v1641 = vadd.f32 %v1507, %v1576
        %v1642 = vadd.f32 %v1508, %v1576
        %v1643 = vadd.f32 %v1509, %v1576
        %v1644 = vadd.f32 %v1510, %v1576
        %v1645 = vadd.f32 %v1511, %v1576
        %v1646 = vadd.f32 %v1512, %v1576
        %v1647 = vadd.f32 %v1513, %v1576
        %v1648 = vadd.f32 %v1514, %v1576
        %v1649 = vadd.f32 %v1515, %v1576
        %v1650 = vadd.f32 %v1516, %v1576
        %v1651 = vadd.f32 %v1517, %v1576
        %v1652 = vadd.f32 %v1518, %v1576
        %v1653 = vadd.f32 %v1519, %v1576
        %v1654 = vadd.f32 %v1520, %v1576
        %v1655 = vadd.f32 %v1521, %v1576
        %v1656 = vadd.f32 %v1522, %v1576
        %v1657 = vadd.f32 %v1523, %v1576
        %v1658 = vadd.f32 %v1524, %v1576
        %v1659 = vadd.f32 %v1525, %v1576
        %v1660 = vadd.f32 %v1526, %v1576
        %v1661 = vadd.f32 %v1527, %v1576
        %v1662 = vadd.f32 %v1528, %v1576
        %v1663 = vadd.f32 %v1529, %v1576
        %v1664 = vadd.f32 %v1530, %v1576
        %v1665 = vadd.f32 %v1531, %v1576
        %v1666 = vadd.f32 %v1532, %v1576
        %v1667 = vadd.f32 %v1533, %v1576
        %v1668 = vadd.f32 %v1534, %v1576
        %v1669 = vadd.f32 %v1535, %v1576
        %v1670 = vadd.f32 %v1536, %v1576
        %v1671 = vadd.f32 %v1537, %v1576
        %v1672 = vadd.f32 %v1538, %v1576
        %v1673 = vadd.f32 %v1539, %v1576
        %v1674 = vadd.f32 %v1540, %v1576
        %v1675 = vadd.f32 %v1541, %v1576
        %v1676 = vadd.f32 %v1542, %v1576
        %v1677 = vadd.f32 %v1543, %v1576
        %v1678 = vadd.f32 %v1544, %v1576
        %v1679 = vadd.f32 %v1545, %v1576
        %v1680 = vadd.f32 %v1546, %v1576
        %v1681 = vadd.f32 %v1547, %v1576
        %v1682 = vadd.f32 %v1548, %v1576
        %v1683 = vadd.f32 %v1549, %v1576
        %v1684 = vadd.f32 %v1550, %v1576
        %v1685 = vadd.f32 %v1551, %v1576
        %v1686 = vadd.f32 %v1552, %v1576
        %v1687 = vadd.f32 %v1553, %v1576
        %v1688 = vadd.f32 %v1554, %v1576
        %v1689 = vadd.f32 %v1555, %v1576
        %v1690 = vadd.f32 %v1556, %v1576
        %v1691 = vadd.f32 %v1557, %v1576
        %v1692 = vadd.f32 %v1558, %v1576
        %v1693 = vadd.f32 %v1559, %v1576
        %v1694 = vadd.f32 %v1560, %v1576
        %v1695 = vadd.f32 %v1561, %v1576
        %v1696 = vadd.f32 %v1562, %v1576
        %v1697 = vadd.f32 %v1563, %v1576
        %v1698 = vadd.f32 %v1564, %v1576
        %v1699 = vadd.f32 %v1565, %v1576
        %v1700 = vadd.f32 %v1566, %v1576
        %v1701 = vadd.f32 %v1567, %v1576
        %v1702 = vadd.f32 %v1568, %v1576
        %v1703 = vadd.f32 %v1569, %v1576
        %v1704 = vadd.f32 %v1570, %v1576
        %v1705 = vadd.f32 %v1571, %v1576
        %vm1706 = vcmp.ge.f32.partialorder %v1578, 0.0
        %vm1707 = vcmp.ge.f32.partialorder %v1579, 0.0
        %vm1708 = vcmp.ge.f32.partialorder %v1580, 0.0
        %vm1709 = vcmp.ge.f32.partialorder %v1581, 0.0
        %vm1710 = vcmp.ge.f32.partialorder %v1582, 0.0
        %vm1711 = vcmp.ge.f32.partialorder %v1583, 0.0
        %vm1712 = vcmp.ge.f32.partialorder %v1584, 0.0
        %vm1713 = vcmp.ge.f32.partialorder %v1585, 0.0
        %vm1714 = vcmp.ge.f32.partialorder %v1586, 0.0
        %vm1715 = vcmp.ge.f32.partialorder %v1587, 0.0
        %vm1716 = vcmp.ge.f32.partialorder %v1588, 0.0
        %vm1717 = vcmp.ge.f32.partialorder %v1589, 0.0
        %vm1718 = vcmp.ge.f32.partialorder %v1590, 0.0
        %vm1719 = vcmp.ge.f32.partialorder %v1591, 0.0
        %vm1720 = vcmp.ge.f32.partialorder %v1592, 0.0
        %vm1721 = vcmp.ge.f32.partialorder %v1593, 0.0
        %vm1722 = vcmp.ge.f32.partialorder %v1594, 0.0
        %vm1723 = vcmp.ge.f32.partialorder %v1595, 0.0
        %vm1724 = vcmp.ge.f32.partialorder %v1596, 0.0
        %vm1725 = vcmp.ge.f32.partialorder %v1597, 0.0
        %vm1726 = vcmp.ge.f32.partialorder %v1598, 0.0
        %vm1727 = vcmp.ge.f32.partialorder %v1599, 0.0
        %vm1728 = vcmp.ge.f32.partialorder %v1600, 0.0
        %vm1729 = vcmp.ge.f32.partialorder %v1601, 0.0
        %vm1730 = vcmp.ge.f32.partialorder %v1602, 0.0
        %vm1731 = vcmp.ge.f32.partialorder %v1603, 0.0
        %vm1732 = vcmp.ge.f32.partialorder %v1604, 0.0
        %vm1733 = vcmp.ge.f32.partialorder %v1605, 0.0
        %vm1734 = vcmp.ge.f32.partialorder %v1606, 0.0
        %vm1735 = vcmp.ge.f32.partialorder %v1607, 0.0
        %vm1736 = vcmp.ge.f32.partialorder %v1608, 0.0
        %vm1737 = vcmp.ge.f32.partialorder %v1609, 0.0
        %vm1738 = vcmp.ge.f32.partialorder %v1610, 0.0
        %vm1739 = vcmp.ge.f32.partialorder %v1611, 0.0
        %vm1740 = vcmp.ge.f32.partialorder %v1612, 0.0
        %vm1741 = vcmp.ge.f32.partialorder %v1613, 0.0
        %vm1742 = vcmp.ge.f32.partialorder %v1614, 0.0
        %vm1743 = vcmp.ge.f32.partialorder %v1615, 0.0
        %vm1744 = vcmp.ge.f32.partialorder %v1616, 0.0
        %vm1745 = vcmp.ge.f32.partialorder %v1617, 0.0
        %vm1746 = vcmp.ge.f32.partialorder %v1618, 0.0
        %vm1747 = vcmp.ge.f32.partialorder %v1619, 0.0
        %vm1748 = vcmp.ge.f32.partialorder %v1620, 0.0
        %vm1749 = vcmp.ge.f32.partialorder %v1621, 0.0
        %vm1750 = vcmp.ge.f32.partialorder %v1622, 0.0
        %vm1751 = vcmp.ge.f32.partialorder %v1623, 0.0
        %vm1752 = vcmp.ge.f32.partialorder %v1624, 0.0
        %vm1753 = vcmp.ge.f32.partialorder %v1625, 0.0
        %vm1754 = vcmp.ge.f32.partialorder %v1626, 0.0
        %vm1755 = vcmp.ge.f32.partialorder %v1627, 0.0
        %vm1756 = vcmp.ge.f32.partialorder %v1628, 0.0
        %vm1757 = vcmp.ge.f32.partialorder %v1629, 0.0
        %vm1758 = vcmp.ge.f32.partialorder %v1630, 0.0
        %vm1759 = vcmp.ge.f32.partialorder %v1631, 0.0
        %vm1760 = vcmp.ge.f32.partialorder %v1632, 0.0
        %vm1761 = vcmp.ge.f32.partialorder %v1633, 0.0
        %vm1762 = vcmp.ge.f32.partialorder %v1634, 0.0
        %vm1763 = vcmp.ge.f32.partialorder %v1635, 0.0
        %vm1764 = vcmp.ge.f32.partialorder %v1636, 0.0
        %vm1765 = vcmp.ge.f32.partialorder %v1637, 0.0
        %vm1766 = vcmp.ge.f32.partialorder %v1638, 0.0
        %vm1767 = vcmp.ge.f32.partialorder %v1639, 0.0
        %vm1768 = vcmp.ge.f32.partialorder %v1640, 0.0
        %vm1769 = vcmp.ge.f32.partialorder %v1641, 0.0
        %vm1770 = vcmp.ge.f32.partialorder %v1642, 0.0
        %vm1771 = vcmp.ge.f32.partialorder %v1643, 0.0
        %vm1772 = vcmp.ge.f32.partialorder %v1644, 0.0
        %vm1773 = vcmp.ge.f32.partialorder %v1645, 0.0
        %vm1774 = vcmp.ge.f32.partialorder %v1646, 0.0
        %vm1775 = vcmp.ge.f32.partialorder %v1647, 0.0
        %vm1776 = vcmp.ge.f32.partialorder %v1648, 0.0
        %vm1777 = vcmp.ge.f32.partialorder %v1649, 0.0
        %vm1778 = vcmp.ge.f32.partialorder %v1650, 0.0
        %vm1779 = vcmp.ge.f32.partialorder %v1651, 0.0
        %vm1780 = vcmp.ge.f32.partialorder %v1652, 0.0
        %vm1781 = vcmp.ge.f32.partialorder %v1653, 0.0
        %vm1782 = vcmp.ge.f32.partialorder %v1654, 0.0
        %vm1783 = vcmp.ge.f32.partialorder %v1655, 0.0
        %vm1784 = vcmp.ge.f32.partialorder %v1656, 0.0
        %vm1785 = vcmp.ge.f32.partialorder %v1657, 0.0
        %vm1786 = vcmp.ge.f32.partialorder %v1658, 0.0
        %vm1787 = vcmp.ge.f32.partialorder %v1659, 0.0
        %vm1788 = vcmp.ge.f32.partialorder %v1660, 0.0
        %vm1789 = vcmp.ge.f32.partialorder %v1661, 0.0
        %vm1790 = vcmp.ge.f32.partialorder %v1662, 0.0
        %vm1791 = vcmp.ge.f32.partialorder %v1663, 0.0
        %vm1792 = vcmp.ge.f32.partialorder %v1664, 0.0
        %vm1793 = vcmp.ge.f32.partialorder %v1665, 0.0
        %vm1794 = vcmp.ge.f32.partialorder %v1666, 0.0
        %vm1795 = vcmp.ge.f32.partialorder %v1667, 0.0
        %vm1796 = vcmp.ge.f32.partialorder %v1668, 0.0
        %vm1797 = vcmp.ge.f32.partialorder %v1669, 0.0
        %vm1798 = vcmp.ge.f32.partialorder %v1670, 0.0
        %vm1799 = vcmp.ge.f32.partialorder %v1671, 0.0
        %vm1800 = vcmp.ge.f32.partialorder %v1672, 0.0
        %vm1801 = vcmp.ge.f32.partialorder %v1673, 0.0
        %vm1802 = vcmp.ge.f32.partialorder %v1674, 0.0
        %vm1803 = vcmp.ge.f32.partialorder %v1675, 0.0
        %vm1804 = vcmp.ge.f32.partialorder %v1676, 0.0
        %vm1805 = vcmp.ge.f32.partialorder %v1677, 0.0
        %vm1806 = vcmp.ge.f32.partialorder %v1678, 0.0
        %vm1807 = vcmp.ge.f32.partialorder %v1679, 0.0
        %vm1808 = vcmp.ge.f32.partialorder %v1680, 0.0
        %vm1809 = vcmp.ge.f32.partialorder %v1681, 0.0
        %vm1810 = vcmp.ge.f32.partialorder %v1682, 0.0
        %vm1811 = vcmp.ge.f32.partialorder %v1683, 0.0
        %vm1812 = vcmp.ge.f32.partialorder %v1684, 0.0
        %vm1813 = vcmp.ge.f32.partialorder %v1685, 0.0
        %vm1814 = vcmp.ge.f32.partialorder %v1686, 0.0
        %vm1815 = vcmp.ge.f32.partialorder %v1687, 0.0
        %vm1816 = vcmp.ge.f32.partialorder %v1688, 0.0
        %vm1817 = vcmp.ge.f32.partialorder %v1689, 0.0
        %vm1818 = vcmp.ge.f32.partialorder %v1690, 0.0
        %vm1819 = vcmp.ge.f32.partialorder %v1691, 0.0
        %vm1820 = vcmp.ge.f32.partialorder %v1692, 0.0
        %vm1821 = vcmp.ge.f32.partialorder %v1693, 0.0
        %vm1822 = vcmp.ge.f32.partialorder %v1694, 0.0
        %vm1823 = vcmp.ge.f32.partialorder %v1695, 0.0
        %vm1824 = vcmp.ge.f32.partialorder %v1696, 0.0
        %vm1825 = vcmp.ge.f32.partialorder %v1697, 0.0
        %vm1826 = vcmp.ge.f32.partialorder %v1698, 0.0
        %vm1827 = vcmp.ge.f32.partialorder %v1699, 0.0
        %vm1828 = vcmp.ge.f32.partialorder %v1700, 0.0
        %vm1829 = vcmp.ge.f32.partialorder %v1701, 0.0
        %vm1830 = vcmp.ge.f32.partialorder %v1702, 0.0
        %vm1831 = vcmp.ge.f32.partialorder %v1703, 0.0
        %vm1832 = vcmp.ge.f32.partialorder %v1704, 0.0
        %vm1833 = vcmp.ge.f32.partialorder %v1705, 0.0
        %v1834 = vmul.f32 %v1578, 0.2
        %v1835 = vmul.f32 %v1579, 0.2
        %v1836 = vmul.f32 %v1580, 0.2
        %v1837 = vmul.f32 %v1581, 0.2
        %v1838 = vmul.f32 %v1582, 0.2
        %v1839 = vmul.f32 %v1583, 0.2
        %v1840 = vmul.f32 %v1584, 0.2
        %v1841 = vmul.f32 %v1585, 0.2
        %v1842 = vmul.f32 %v1586, 0.2
        %v1843 = vmul.f32 %v1587, 0.2
        %v1844 = vmul.f32 %v1588, 0.2
        %v1845 = vmul.f32 %v1589, 0.2
        %v1846 = vmul.f32 %v1590, 0.2
        %v1847 = vmul.f32 %v1591, 0.2
        %v1848 = vmul.f32 %v1592, 0.2
        %v1849 = vmul.f32 %v1593, 0.2
        %v1850 = vmul.f32 %v1594, 0.2
        %v1851 = vmul.f32 %v1595, 0.2
        %v1852 = vmul.f32 %v1596, 0.2
        %v1853 = vmul.f32 %v1597, 0.2
        %v1854 = vmul.f32 %v1598, 0.2
        %v1855 = vmul.f32 %v1599, 0.2
        %v1856 = vmul.f32 %v1600, 0.2
        %v1857 = vmul.f32 %v1601, 0.2
        %v1858 = vmul.f32 %v1602, 0.2
        %v1859 = vmul.f32 %v1603, 0.2
        %v1860 = vmul.f32 %v1604, 0.2
        %v1861 = vmul.f32 %v1605, 0.2
        %v1862 = vmul.f32 %v1606, 0.2
        %v1863 = vmul.f32 %v1607, 0.2
        %v1864 = vmul.f32 %v1608, 0.2
        %v1865 = vmul.f32 %v1609, 0.2
        %v1866 = vmul.f32 %v1610, 0.2
        %v1867 = vmul.f32 %v1611, 0.2
        %v1868 = vmul.f32 %v1612, 0.2
        %v1869 = vmul.f32 %v1613, 0.2
        %v1870 = vmul.f32 %v1614, 0.2
        %v1871 = vmul.f32 %v1615, 0.2
        %v1872 = vmul.f32 %v1616, 0.2
        %v1873 = vmul.f32 %v1617, 0.2
        %v1874 = vmul.f32 %v1618, 0.2
        %v1875 = vmul.f32 %v1619, 0.2
        %v1876 = vmul.f32 %v1620, 0.2
        %v1877 = vmul.f32 %v1621, 0.2
        %v1878 = vmul.f32 %v1622, 0.2
        %v1879 = vmul.f32 %v1623, 0.2
        %v1880 = vmul.f32 %v1624, 0.2
        %v1881 = vmul.f32 %v1625, 0.2
        %v1882 = vmul.f32 %v1626, 0.2
        %v1883 = vmul.f32 %v1627, 0.2
        %v1884 = vmul.f32 %v1628, 0.2
        %v1885 = vmul.f32 %v1629, 0.2
        %v1886 = vmul.f32 %v1630, 0.2
        %v1887 = vmul.f32 %v1631, 0.2
        %v1888 = vmul.f32 %v1632, 0.2
        %v1889 = vmul.f32 %v1633, 0.2
        %v1890 = vmul.f32 %v1634, 0.2
        %v1891 = vmul.f32 %v1635, 0.2
        %v1892 = vmul.f32 %v1636, 0.2
        %v1893 = vmul.f32 %v1637, 0.2
        %v1894 = vmul.f32 %v1638, 0.2
        %v1895 = vmul.f32 %v1639, 0.2
        %v1896 = vmul.f32 %v1640, 0.2
        %v1897 = vmul.f32 %v1641, 0.2
        %v1898 = vmul.f32 %v1642, 0.2
        %v1899 = vmul.f32 %v1643, 0.2
        %v1900 = vmul.f32 %v1644, 0.2
        %v1901 = vmul.f32 %v1645, 0.2
        %v1902 = vmul.f32 %v1646, 0.2
        %v1903 = vmul.f32 %v1647, 0.2
        %v1904 = vmul.f32 %v1648, 0.2
        %v1905 = vmul.f32 %v1649, 0.2
        %v1906 = vmul.f32 %v1650, 0.2
        %v1907 = vmul.f32 %v1651, 0.2
        %v1908 = vmul.f32 %v1652, 0.2
        %v1909 = vmul.f32 %v1653, 0.2
        %v1910 = vmul.f32 %v1654, 0.2
        %v1911 = vmul.f32 %v1655, 0.2
        %v1912 = vmul.f32 %v1656, 0.2
        %v1913 = vmul.f32 %v1657, 0.2
        %v1914 = vmul.f32 %v1658, 0.2
        %v1915 = vmul.f32 %v1659, 0.2
        %v1916 = vmul.f32 %v1660, 0.2
        %v1917 = vmul.f32 %v1661, 0.2
        %v1918 = vmul.f32 %v1662, 0.2
        %v1919 = vmul.f32 %v1663, 0.2
        %v1920 = vmul.f32 %v1664, 0.2
        %v1921 = vmul.f32 %v1665, 0.2
        %v1922 = vmul.f32 %v1666, 0.2
        %v1923 = vmul.f32 %v1667, 0.2
        %v1924 = vmul.f32 %v1668, 0.2
        %v1925 = vmul.f32 %v1669, 0.2
        %v1926 = vmul.f32 %v1670, 0.2
        %v1927 = vmul.f32 %v1671, 0.2
        %v1928 = vmul.f32 %v1672, 0.2
        %v1929 = vmul.f32 %v1673, 0.2
        %v1930 = vmul.f32 %v1674, 0.2
        %v1931 = vmul.f32 %v1675, 0.2
        %v1932 = vmul.f32 %v1676, 0.2
        %v1933 = vmul.f32 %v1677, 0.2
        %v1934 = vmul.f32 %v1678, 0.2
        %v1935 = vmul.f32 %v1679, 0.2
        %v1936 = vmul.f32 %v1680, 0.2
        %v1937 = vmul.f32 %v1681, 0.2
        %v1938 = vmul.f32 %v1682, 0.2
        %v1939 = vmul.f32 %v1683, 0.2
        %v1940 = vmul.f32 %v1684, 0.2
        %v1941 = vmul.f32 %v1685, 0.2
        %v1942 = vmul.f32 %v1686, 0.2
        %v1943 = vmul.f32 %v1687, 0.2
        %v1944 = vmul.f32 %v1688, 0.2
        %v1945 = vmul.f32 %v1689, 0.2
        %v1946 = vmul.f32 %v1690, 0.2
        %v1947 = vmul.f32 %v1691, 0.2
        %v1948 = vmul.f32 %v1692, 0.2
        %v1949 = vmul.f32 %v1693, 0.2
        %v1950 = vmul.f32 %v1694, 0.2
        %v1951 = vmul.f32 %v1695, 0.2
        %v1952 = vmul.f32 %v1696, 0.2
        %v1953 = vmul.f32 %v1697, 0.2
        %v1954 = vmul.f32 %v1698, 0.2
        %v1955 = vmul.f32 %v1699, 0.2
        %v1956 = vmul.f32 %v1700, 0.2
        %v1957 = vmul.f32 %v1701, 0.2
        %v1958 = vmul.f32 %v1702, 0.2
        %v1959 = vmul.f32 %v1703, 0.2
        %v1960 = vmul.f32 %v1704, 0.2
        %v1961 = vmul.f32 %v1705, 0.2
        %v1962 = vsel %vm1706, %v1578, %v1834
        %v1963 = vsel %vm1707, %v1579, %v1835
        %v1964 = vsel %vm1708, %v1580, %v1836
        %v1965 = vsel %vm1709, %v1581, %v1837
        %v1966 = vsel %vm1710, %v1582, %v1838
        %v1967 = vsel %vm1711, %v1583, %v1839
        %v1968 = vsel %vm1712, %v1584, %v1840
        %v1969 = vsel %vm1713, %v1585, %v1841
        %v1970 = vsel %vm1714, %v1586, %v1842
        %v1971 = vsel %vm1715, %v1587, %v1843
        %v1972 = vsel %vm1716, %v1588, %v1844
        %v1973 = vsel %vm1717, %v1589, %v1845
        %v1974 = vsel %vm1718, %v1590, %v1846
        %v1975 = vsel %vm1719, %v1591, %v1847
        %v1976 = vsel %vm1720, %v1592, %v1848
        %v1977 = vsel %vm1721, %v1593, %v1849
        %v1978 = vsel %vm1722, %v1594, %v1850
        %v1979 = vsel %vm1723, %v1595, %v1851
        %v1980 = vsel %vm1724, %v1596, %v1852
        %v1981 = vsel %vm1725, %v1597, %v1853
        %v1982 = vsel %vm1726, %v1598, %v1854
        %v1983 = vsel %vm1727, %v1599, %v1855
        %v1984 = vsel %vm1728, %v1600, %v1856
        %v1985 = vsel %vm1729, %v1601, %v1857
        %v1986 = vsel %vm1730, %v1602, %v1858
        %v1987 = vsel %vm1731, %v1603, %v1859
        %v1988 = vsel %vm1732, %v1604, %v1860
        %v1989 = vsel %vm1733, %v1605, %v1861
        %v1990 = vsel %vm1734, %v1606, %v1862
        %v1991 = vsel %vm1735, %v1607, %v1863
        %v1992 = vsel %vm1736, %v1608, %v1864
        %v1993 = vsel %vm1737, %v1609, %v1865
        %v1994 = vsel %vm1738, %v1610, %v1866
        %v1995 = vsel %vm1739, %v1611, %v1867
        %v1996 = vsel %vm1740, %v1612, %v1868
        %v1997 = vsel %vm1741, %v1613, %v1869
        %v1998 = vsel %vm1742, %v1614, %v1870
        %v1999 = vsel %vm1743, %v1615, %v1871
        %v2000 = vsel %vm1744, %v1616, %v1872
        %v2001 = vsel %vm1745, %v1617, %v1873
        %v2002 = vsel %vm1746, %v1618, %v1874
        %v2003 = vsel %vm1747, %v1619, %v1875
        %v2004 = vsel %vm1748, %v1620, %v1876
        %v2005 = vsel %vm1749, %v1621, %v1877
        %v2006 = vsel %vm1750, %v1622, %v1878
        %v2007 = vsel %vm1751, %v1623, %v1879
        %v2008 = vsel %vm1752, %v1624, %v1880
        %v2009 = vsel %vm1753, %v1625, %v1881
        %v2010 = vsel %vm1754, %v1626, %v1882
        %v2011 = vsel %vm1755, %v1627, %v1883
        %v2012 = vsel %vm1756, %v1628, %v1884
        %v2013 = vsel %vm1757, %v1629, %v1885
        %v2014 = vsel %vm1758, %v1630, %v1886
        %v2015 = vsel %vm1759, %v1631, %v1887
        %v2016 = vsel %vm1760, %v1632, %v1888
        %v2017 = vsel %vm1761, %v1633, %v1889
        %v2018 = vsel %vm1762, %v1634, %v1890
        %v2019 = vsel %vm1763, %v1635, %v1891
        %v2020 = vsel %vm1764, %v1636, %v1892
        %v2021 = vsel %vm1765, %v1637, %v1893
        %v2022 = vsel %vm1766, %v1638, %v1894
        %v2023 = vsel %vm1767, %v1639, %v1895
        %v2024 = vsel %vm1768, %v1640, %v1896
        %v2025 = vsel %vm1769, %v1641, %v1897
        %v2026 = vsel %vm1770, %v1642, %v1898
        %v2027 = vsel %vm1771, %v1643, %v1899
        %v2028 = vsel %vm1772, %v1644, %v1900
        %v2029 = vsel %vm1773, %v1645, %v1901
        %v2030 = vsel %vm1774, %v1646, %v1902
        %v2031 = vsel %vm1775, %v1647, %v1903
        %v2032 = vsel %vm1776, %v1648, %v1904
        %v2033 = vsel %vm1777, %v1649, %v1905
        %v2034 = vsel %vm1778, %v1650, %v1906
        %v2035 = vsel %vm1779, %v1651, %v1907
        %v2036 = vsel %vm1780, %v1652, %v1908
        %v2037 = vsel %vm1781, %v1653, %v1909
        %v2038 = vsel %vm1782, %v1654, %v1910
        %v2039 = vsel %vm1783, %v1655, %v1911
        %v2040 = vsel %vm1784, %v1656, %v1912
        %v2041 = vsel %vm1785, %v1657, %v1913
        %v2042 = vsel %vm1786, %v1658, %v1914
        %v2043 = vsel %vm1787, %v1659, %v1915
        %v2044 = vsel %vm1788, %v1660, %v1916
        %v2045 = vsel %vm1789, %v1661, %v1917
        %v2046 = vsel %vm1790, %v1662, %v1918
        %v2047 = vsel %vm1791, %v1663, %v1919
        %v2048 = vsel %vm1792, %v1664, %v1920
        %v2049 = vsel %vm1793, %v1665, %v1921
        %v2050 = vsel %vm1794, %v1666, %v1922
        %v2051 = vsel %vm1795, %v1667, %v1923
        %v2052 = vsel %vm1796, %v1668, %v1924
        %v2053 = vsel %vm1797, %v1669, %v1925
        %v2054 = vsel %vm1798, %v1670, %v1926
        %v2055 = vsel %vm1799, %v1671, %v1927
        %v2056 = vsel %vm1800, %v1672, %v1928
        %v2057 = vsel %vm1801, %v1673, %v1929
        %v2058 = vsel %vm1802, %v1674, %v1930
        %v2059 = vsel %vm1803, %v1675, %v1931
        %v2060 = vsel %vm1804, %v1676, %v1932
        %v2061 = vsel %vm1805, %v1677, %v1933
        %v2062 = vsel %vm1806, %v1678, %v1934
        %v2063 = vsel %vm1807, %v1679, %v1935
        %v2064 = vsel %vm1808, %v1680, %v1936
        %v2065 = vsel %vm1809, %v1681, %v1937
        %v2066 = vsel %vm1810, %v1682, %v1938
        %v2067 = vsel %vm1811, %v1683, %v1939
        %v2068 = vsel %vm1812, %v1684, %v1940
        %v2069 = vsel %vm1813, %v1685, %v1941
        %v2070 = vsel %vm1814, %v1686, %v1942
        %v2071 = vsel %vm1815, %v1687, %v1943
        %v2072 = vsel %vm1816, %v1688, %v1944
        %v2073 = vsel %vm1817, %v1689, %v1945
        %v2074 = vsel %vm1818, %v1690, %v1946
        %v2075 = vsel %vm1819, %v1691, %v1947
        %v2076 = vsel %vm1820, %v1692, %v1948
        %v2077 = vsel %vm1821, %v1693, %v1949
        %v2078 = vsel %vm1822, %v1694, %v1950
        %v2079 = vsel %vm1823, %v1695, %v1951
        %v2080 = vsel %vm1824, %v1696, %v1952
        %v2081 = vsel %vm1825, %v1697, %v1953
        %v2082 = vsel %vm1826, %v1698, %v1954
        %v2083 = vsel %vm1827, %v1699, %v1955
        %v2084 = vsel %vm1828, %v1700, %v1956
        %v2085 = vsel %vm1829, %v1701, %v1957
        %v2086 = vsel %vm1830, %v1702, %v1958
        %v2087 = vsel %vm1831, %v1703, %v1959
        %v2088 = vsel %vm1832, %v1704, %v1960
        %v2089 = vsel %vm1833, %v1705, %v1961
        %v2090 = vpack.c.bf16 %v1963, %v1962
        %v2091 = vpack.c.bf16 %v1965, %v1964
        %v2092 = vpack.c.bf16 %v1967, %v1966
        %v2093 = vpack.c.bf16 %v1969, %v1968
        %v2094 = vpack.c.bf16 %v1971, %v1970
        %v2095 = vpack.c.bf16 %v1973, %v1972
        %v2096 = vpack.c.bf16 %v1975, %v1974
        %v2097 = vpack.c.bf16 %v1977, %v1976
        %v2098 = vpack.c.bf16 %v1979, %v1978
        %v2099 = vpack.c.bf16 %v1981, %v1980
        %v2100 = vpack.c.bf16 %v1983, %v1982
        %v2101 = vpack.c.bf16 %v1985, %v1984
        %v2102 = vpack.c.bf16 %v1987, %v1986
        %v2103 = vpack.c.bf16 %v1989, %v1988
        %v2104 = vpack.c.bf16 %v1991, %v1990
        %v2105 = vpack.c.bf16 %v1993, %v1992
        %v2106 = vpack.c.bf16 %v1995, %v1994
        %v2107 = vpack.c.bf16 %v1997, %v1996
        %v2108 = vpack.c.bf16 %v1999, %v1998
        %v2109 = vpack.c.bf16 %v2001, %v2000
        %v2110 = vpack.c.bf16 %v2003, %v2002
        %v2111 = vpack.c.bf16 %v2005, %v2004
        %v2112 = vpack.c.bf16 %v2007, %v2006
        %v2113 = vpack.c.bf16 %v2009, %v2008
        %v2114 = vpack.c.bf16 %v2011, %v2010
        %v2115 = vpack.c.bf16 %v2013, %v2012
        %v2116 = vpack.c.bf16 %v2015, %v2014
        %v2117 = vpack.c.bf16 %v2017, %v2016
        %v2118 = vpack.c.bf16 %v2019, %v2018
        %v2119 = vpack.c.bf16 %v2021, %v2020
        %v2120 = vpack.c.bf16 %v2023, %v2022
        %v2121 = vpack.c.bf16 %v2025, %v2024
        %v2122 = vpack.c.bf16 %v2027, %v2026
        %v2123 = vpack.c.bf16 %v2029, %v2028
        %v2124 = vpack.c.bf16 %v2031, %v2030
        %v2125 = vpack.c.bf16 %v2033, %v2032
        %v2126 = vpack.c.bf16 %v2035, %v2034
        %v2127 = vpack.c.bf16 %v2037, %v2036
        %v2128 = vpack.c.bf16 %v2039, %v2038
        %v2129 = vpack.c.bf16 %v2041, %v2040
        %v2130 = vpack.c.bf16 %v2043, %v2042
        %v2131 = vpack.c.bf16 %v2045, %v2044
        %v2132 = vpack.c.bf16 %v2047, %v2046
        %v2133 = vpack.c.bf16 %v2049, %v2048
        %v2134 = vpack.c.bf16 %v2051, %v2050
        %v2135 = vpack.c.bf16 %v2053, %v2052
        %v2136 = vpack.c.bf16 %v2055, %v2054
        %v2137 = vpack.c.bf16 %v2057, %v2056
        %v2138 = vpack.c.bf16 %v2059, %v2058
        %v2139 = vpack.c.bf16 %v2061, %v2060
        %v2140 = vpack.c.bf16 %v2063, %v2062
        %v2141 = vpack.c.bf16 %v2065, %v2064
        %v2142 = vpack.c.bf16 %v2067, %v2066
        %v2143 = vpack.c.bf16 %v2069, %v2068
        %v2144 = vpack.c.bf16 %v2071, %v2070
        %v2145 = vpack.c.bf16 %v2073, %v2072
        %v2146 = vpack.c.bf16 %v2075, %v2074
        %v2147 = vpack.c.bf16 %v2077, %v2076
        %v2148 = vpack.c.bf16 %v2079, %v2078
        %v2149 = vpack.c.bf16 %v2081, %v2080
        %v2150 = vpack.c.bf16 %v2083, %v2082
        %v2151 = vpack.c.bf16 %v2085, %v2084
        %v2152 = vpack.c.bf16 %v2087, %v2086
        %v2153 = vpack.c.bf16 %v2089, %v2088
        %v2218 = vunpack.c.l.b16 %v2090
        %v2219 = vunpack.c.h.b16 %v2090
        %v2220 = vunpack.c.l.b16 %v2091
        %v2221 = vunpack.c.h.b16 %v2091
        %v2222 = vunpack.c.l.b16 %v2092
        %v2223 = vunpack.c.h.b16 %v2092
        %v2224 = vunpack.c.l.b16 %v2093
        %v2225 = vunpack.c.h.b16 %v2093
        %v2226 = vunpack.c.l.b16 %v2094
        %v2227 = vunpack.c.h.b16 %v2094
        %v2228 = vunpack.c.l.b16 %v2095
        %v2229 = vunpack.c.h.b16 %v2095
        %v2230 = vunpack.c.l.b16 %v2096
        %v2231 = vunpack.c.h.b16 %v2096
        %v2232 = vunpack.c.l.b16 %v2097
        %v2233 = vunpack.c.h.b16 %v2097
        %v2234 = vunpack.c.l.b16 %v2098
        %v2235 = vunpack.c.h.b16 %v2098
        %v2236 = vunpack.c.l.b16 %v2099
        %v2237 = vunpack.c.h.b16 %v2099
        %v2238 = vunpack.c.l.b16 %v2100
        %v2239 = vunpack.c.h.b16 %v2100
        %v2240 = vunpack.c.l.b16 %v2101
        %v2241 = vunpack.c.h.b16 %v2101
        %v2242 = vunpack.c.l.b16 %v2102
        %v2243 = vunpack.c.h.b16 %v2102
        %v2244 = vunpack.c.l.b16 %v2103
        %v2245 = vunpack.c.h.b16 %v2103
        %v2246 = vunpack.c.l.b16 %v2104
        %v2247 = vunpack.c.h.b16 %v2104
        %v2248 = vunpack.c.l.b16 %v2105
        %v2249 = vunpack.c.h.b16 %v2105
        %v2250 = vunpack.c.l.b16 %v2106
        %v2251 = vunpack.c.h.b16 %v2106
        %v2252 = vunpack.c.l.b16 %v2107
        %v2253 = vunpack.c.h.b16 %v2107
        %v2254 = vunpack.c.l.b16 %v2108
        %v2255 = vunpack.c.h.b16 %v2108
        %v2256 = vunpack.c.l.b16 %v2109
        %v2257 = vunpack.c.h.b16 %v2109
        %v2258 = vunpack.c.l.b16 %v2110
        %v2259 = vunpack.c.h.b16 %v2110
        %v2260 = vunpack.c.l.b16 %v2111
        %v2261 = vunpack.c.h.b16 %v2111
        %v2262 = vunpack.c.l.b16 %v2112
        %v2263 = vunpack.c.h.b16 %v2112
        %v2264 = vunpack.c.l.b16 %v2113
        %v2265 = vunpack.c.h.b16 %v2113
        %v2266 = vunpack.c.l.b16 %v2114
        %v2267 = vunpack.c.h.b16 %v2114
        %v2268 = vunpack.c.l.b16 %v2115
        %v2269 = vunpack.c.h.b16 %v2115
        %v2270 = vunpack.c.l.b16 %v2116
        %v2271 = vunpack.c.h.b16 %v2116
        %v2272 = vunpack.c.l.b16 %v2117
        %v2273 = vunpack.c.h.b16 %v2117
        %v2274 = vunpack.c.l.b16 %v2118
        %v2275 = vunpack.c.h.b16 %v2118
        %v2276 = vunpack.c.l.b16 %v2119
        %v2277 = vunpack.c.h.b16 %v2119
        %v2278 = vunpack.c.l.b16 %v2120
        %v2279 = vunpack.c.h.b16 %v2120
        %v2280 = vunpack.c.l.b16 %v2121
        %v2281 = vunpack.c.h.b16 %v2121
        %v2282 = vunpack.c.l.b16 %v2122
        %v2283 = vunpack.c.h.b16 %v2122
        %v2284 = vunpack.c.l.b16 %v2123
        %v2285 = vunpack.c.h.b16 %v2123
        %v2286 = vunpack.c.l.b16 %v2124
        %v2287 = vunpack.c.h.b16 %v2124
        %v2288 = vunpack.c.l.b16 %v2125
        %v2289 = vunpack.c.h.b16 %v2125
        %v2290 = vunpack.c.l.b16 %v2126
        %v2291 = vunpack.c.h.b16 %v2126
        %v2292 = vunpack.c.l.b16 %v2127
        %v2293 = vunpack.c.h.b16 %v2127
        %v2294 = vunpack.c.l.b16 %v2128
        %v2295 = vunpack.c.h.b16 %v2128
        %v2296 = vunpack.c.l.b16 %v2129
        %v2297 = vunpack.c.h.b16 %v2129
        %v2298 = vunpack.c.l.b16 %v2130
        %v2299 = vunpack.c.h.b16 %v2130
        %v2300 = vunpack.c.l.b16 %v2131
        %v2301 = vunpack.c.h.b16 %v2131
        %v2302 = vunpack.c.l.b16 %v2132
        %v2303 = vunpack.c.h.b16 %v2132
        %v2304 = vunpack.c.l.b16 %v2133
        %v2305 = vunpack.c.h.b16 %v2133
        %v2306 = vunpack.c.l.b16 %v2134
        %v2307 = vunpack.c.h.b16 %v2134
        %v2308 = vunpack.c.l.b16 %v2135
        %v2309 = vunpack.c.h.b16 %v2135
        %v2310 = vunpack.c.l.b16 %v2136
        %v2311 = vunpack.c.h.b16 %v2136
        %v2312 = vunpack.c.l.b16 %v2137
        %v2313 = vunpack.c.h.b16 %v2137
        %v2314 = vunpack.c.l.b16 %v2138
        %v2315 = vunpack.c.h.b16 %v2138
        %v2316 = vunpack.c.l.b16 %v2139
        %v2317 = vunpack.c.h.b16 %v2139
        %v2318 = vunpack.c.l.b16 %v2140
        %v2319 = vunpack.c.h.b16 %v2140
        %v2320 = vunpack.c.l.b16 %v2141
        %v2321 = vunpack.c.h.b16 %v2141
        %v2322 = vunpack.c.l.b16 %v2142
        %v2323 = vunpack.c.h.b16 %v2142
        %v2324 = vunpack.c.l.b16 %v2143
        %v2325 = vunpack.c.h.b16 %v2143
        %v2326 = vunpack.c.l.b16 %v2144
        %v2327 = vunpack.c.h.b16 %v2144
        %v2328 = vunpack.c.l.b16 %v2145
        %v2329 = vunpack.c.h.b16 %v2145
        %v2330 = vunpack.c.l.b16 %v2146
        %v2331 = vunpack.c.h.b16 %v2146
        %v2332 = vunpack.c.l.b16 %v2147
        %v2333 = vunpack.c.h.b16 %v2147
        %v2334 = vunpack.c.l.b16 %v2148
        %v2335 = vunpack.c.h.b16 %v2148
        %v2336 = vunpack.c.l.b16 %v2149
        %v2337 = vunpack.c.h.b16 %v2149
        %v2338 = vunpack.c.l.b16 %v2150
        %v2339 = vunpack.c.h.b16 %v2150
        %v2340 = vunpack.c.l.b16 %v2151
        %v2341 = vunpack.c.h.b16 %v2151
        %v2342 = vunpack.c.l.b16 %v2152
        %v2343 = vunpack.c.h.b16 %v2152
        %v2344 = vunpack.c.l.b16 %v2153
        %v2345 = vunpack.c.h.b16 %v2153
        %v2346 = vpack.c.b16 %v2218, %v2218
        %v2347 = vpack.c.b16 %v2219, %v2219
        %v2348 = vpack.c.b16 %v2220, %v2220
        %v2349 = vpack.c.b16 %v2221, %v2221
        %v2350 = vpack.c.b16 %v2222, %v2222
        %v2351 = vpack.c.b16 %v2223, %v2223
        %v2352 = vpack.c.b16 %v2224, %v2224
        %v2353 = vpack.c.b16 %v2225, %v2225
        %v2354 = vpack.c.b16 %v2226, %v2226
        %v2355 = vpack.c.b16 %v2227, %v2227
        %v2356 = vpack.c.b16 %v2228, %v2228
        %v2357 = vpack.c.b16 %v2229, %v2229
        %v2358 = vpack.c.b16 %v2230, %v2230
        %v2359 = vpack.c.b16 %v2231, %v2231
        %v2360 = vpack.c.b16 %v2232, %v2232
        %v2361 = vpack.c.b16 %v2233, %v2233
        %v2362 = vpack.c.b16 %v2234, %v2234
        %v2363 = vpack.c.b16 %v2235, %v2235
        %v2364 = vpack.c.b16 %v2236, %v2236
        %v2365 = vpack.c.b16 %v2237, %v2237
        %v2366 = vpack.c.b16 %v2238, %v2238
        %v2367 = vpack.c.b16 %v2239, %v2239
        %v2368 = vpack.c.b16 %v2240, %v2240
        %v2369 = vpack.c.b16 %v2241, %v2241
        %v2370 = vpack.c.b16 %v2242, %v2242
        %v2371 = vpack.c.b16 %v2243, %v2243
        %v2372 = vpack.c.b16 %v2244, %v2244
        %v2373 = vpack.c.b16 %v2245, %v2245
        %v2374 = vpack.c.b16 %v2246, %v2246
        %v2375 = vpack.c.b16 %v2247, %v2247
        %v2376 = vpack.c.b16 %v2248, %v2248
        %v2377 = vpack.c.b16 %v2249, %v2249
        %v2378 = vpack.c.b16 %v2250, %v2250
        %v2379 = vpack.c.b16 %v2251, %v2251
        %v2380 = vpack.c.b16 %v2252, %v2252
        %v2381 = vpack.c.b16 %v2253, %v2253
        %v2382 = vpack.c.b16 %v2254, %v2254
        %v2383 = vpack.c.b16 %v2255, %v2255
        %v2384 = vpack.c.b16 %v2256, %v2256
        %v2385 = vpack.c.b16 %v2257, %v2257
        %v2386 = vpack.c.b16 %v2258, %v2258
        %v2387 = vpack.c.b16 %v2259, %v2259
        %v2388 = vpack.c.b16 %v2260, %v2260
        %v2389 = vpack.c.b16 %v2261, %v2261
        %v2390 = vpack.c.b16 %v2262, %v2262
        %v2391 = vpack.c.b16 %v2263, %v2263
        %v2392 = vpack.c.b16 %v2264, %v2264
        %v2393 = vpack.c.b16 %v2265, %v2265
        %v2394 = vpack.c.b16 %v2266, %v2266
        %v2395 = vpack.c.b16 %v2267, %v2267
        %v2396 = vpack.c.b16 %v2268, %v2268
        %v2397 = vpack.c.b16 %v2269, %v2269
        %v2398 = vpack.c.b16 %v2270, %v2270
        %v2399 = vpack.c.b16 %v2271, %v2271
        %v2400 = vpack.c.b16 %v2272, %v2272
        %v2401 = vpack.c.b16 %v2273, %v2273
        %v2402 = vpack.c.b16 %v2274, %v2274
        %v2403 = vpack.c.b16 %v2275, %v2275
        %v2404 = vpack.c.b16 %v2276, %v2276
        %v2405 = vpack.c.b16 %v2277, %v2277
        %v2406 = vpack.c.b16 %v2278, %v2278
        %v2407 = vpack.c.b16 %v2279, %v2279
        %v2408 = vpack.c.b16 %v2280, %v2280
        %v2409 = vpack.c.b16 %v2281, %v2281
        %v2410 = vpack.c.b16 %v2282, %v2282
        %v2411 = vpack.c.b16 %v2283, %v2283
        %v2412 = vpack.c.b16 %v2284, %v2284
        %v2413 = vpack.c.b16 %v2285, %v2285
        %v2414 = vpack.c.b16 %v2286, %v2286
        %v2415 = vpack.c.b16 %v2287, %v2287
        %v2416 = vpack.c.b16 %v2288, %v2288
        %v2417 = vpack.c.b16 %v2289, %v2289
        %v2418 = vpack.c.b16 %v2290, %v2290
        %v2419 = vpack.c.b16 %v2291, %v2291
        %v2420 = vpack.c.b16 %v2292, %v2292
        %v2421 = vpack.c.b16 %v2293, %v2293
        %v2422 = vpack.c.b16 %v2294, %v2294
        %v2423 = vpack.c.b16 %v2295, %v2295
        %v2424 = vpack.c.b16 %v2296, %v2296
        %v2425 = vpack.c.b16 %v2297, %v2297
        %v2426 = vpack.c.b16 %v2298, %v2298
        %v2427 = vpack.c.b16 %v2299, %v2299
        %v2428 = vpack.c.b16 %v2300, %v2300
        %v2429 = vpack.c.b16 %v2301, %v2301
        %v2430 = vpack.c.b16 %v2302, %v2302
        %v2431 = vpack.c.b16 %v2303, %v2303
        %v2432 = vpack.c.b16 %v2304, %v2304
        %v2433 = vpack.c.b16 %v2305, %v2305
        %v2434 = vpack.c.b16 %v2306, %v2306
        %v2435 = vpack.c.b16 %v2307, %v2307
        %v2436 = vpack.c.b16 %v2308, %v2308
        %v2437 = vpack.c.b16 %v2309, %v2309
        %v2438 = vpack.c.b16 %v2310, %v2310
        %v2439 = vpack.c.b16 %v2311, %v2311
        %v2440 = vpack.c.b16 %v2312, %v2312
        %v2441 = vpack.c.b16 %v2313, %v2313
        %v2442 = vpack.c.b16 %v2314, %v2314
        %v2443 = vpack.c.b16 %v2315, %v2315
        %v2444 = vpack.c.b16 %v2316, %v2316
        %v2445 = vpack.c.b16 %v2317, %v2317
        %v2446 = vpack.c.b16 %v2318, %v2318
        %v2447 = vpack.c.b16 %v2319, %v2319
        %v2448 = vpack.c.b16 %v2320, %v2320
        %v2449 = vpack.c.b16 %v2321, %v2321
        %v2450 = vpack.c.b16 %v2322, %v2322
        %v2451 = vpack.c.b16 %v2323, %v2323
        %v2452 = vpack.c.b16 %v2324, %v2324
        %v2453 = vpack.c.b16 %v2325, %v2325
        %v2454 = vpack.c.b16 %v2326, %v2326
        %v2455 = vpack.c.b16 %v2327, %v2327
        %v2456 = vpack.c.b16 %v2328, %v2328
        %v2457 = vpack.c.b16 %v2329, %v2329
        %v2458 = vpack.c.b16 %v2330, %v2330
        %v2459 = vpack.c.b16 %v2331, %v2331
        %v2460 = vpack.c.b16 %v2332, %v2332
        %v2461 = vpack.c.b16 %v2333, %v2333
        %v2462 = vpack.c.b16 %v2334, %v2334
        %v2463 = vpack.c.b16 %v2335, %v2335
        %v2464 = vpack.c.b16 %v2336, %v2336
        %v2465 = vpack.c.b16 %v2337, %v2337
        %v2466 = vpack.c.b16 %v2338, %v2338
        %v2467 = vpack.c.b16 %v2339, %v2339
        %v2468 = vpack.c.b16 %v2340, %v2340
        %v2469 = vpack.c.b16 %v2341, %v2341
        %v2470 = vpack.c.b16 %v2342, %v2342
        %v2471 = vpack.c.b16 %v2343, %v2343
        %v2472 = vpack.c.b16 %v2344, %v2344
        %v2473 = vpack.c.b16 %v2345, %v2345
        %vm2602 = vcmask 519168
        %2603 = vst.msk [vmem:[%s239] sm:$0xf] %vm2602, %v2346
        %2604 = vst.msk [vmem:[%s239 + $0x4] sm:$0xf] %vm2602, %v2347
        %2605 = vst.msk [vmem:[%s239 + $0x8] sm:$0xf] %vm2602, %v2348
        %2606 = vst.msk [vmem:[%s239 + $0xc] sm:$0xf] %vm2602, %v2349
        %2607 = vst.msk [vmem:[%s239 + $0x10] sm:$0xf] %vm2602, %v2350
        %2608 = vst.msk [vmem:[%s239 + $0x14] sm:$0xf] %vm2602, %v2351
        %2609 = vst.msk [vmem:[%s239 + $0x18] sm:$0xf] %vm2602, %v2352
        %2610 = vst.msk [vmem:[%s239 + $0x1c] sm:$0xf] %vm2602, %v2353
        %2611 = vst.msk [vmem:[%s239 + $0x20] sm:$0xf] %vm2602, %v2354
        %2612 = vst.msk [vmem:[%s239 + $0x24] sm:$0xf] %vm2602, %v2355
        %2613 = vst.msk [vmem:[%s239 + $0x28] sm:$0xf] %vm2602, %v2356
        %2614 = vst.msk [vmem:[%s239 + $0x2c] sm:$0xf] %vm2602, %v2357
        %2615 = vst.msk [vmem:[%s239 + $0x30] sm:$0xf] %vm2602, %v2358
        %2616 = vst.msk [vmem:[%s239 + $0x34] sm:$0xf] %vm2602, %v2359
        %2617 = vst.msk [vmem:[%s239 + $0x38] sm:$0xf] %vm2602, %v2360
        %2618 = vst.msk [vmem:[%s239 + $0x3c] sm:$0xf] %vm2602, %v2361
        %2619 = vst.msk [vmem:[%s239 + $0x40] sm:$0xf] %vm2602, %v2362
        %2620 = vst.msk [vmem:[%s239 + $0x44] sm:$0xf] %vm2602, %v2363
        %2621 = vst.msk [vmem:[%s239 + $0x48] sm:$0xf] %vm2602, %v2364
        %2622 = vst.msk [vmem:[%s239 + $0x4c] sm:$0xf] %vm2602, %v2365
        %2623 = vst.msk [vmem:[%s239 + $0x50] sm:$0xf] %vm2602, %v2366
        %2624 = vst.msk [vmem:[%s239 + $0x54] sm:$0xf] %vm2602, %v2367
        %2625 = vst.msk [vmem:[%s239 + $0x58] sm:$0xf] %vm2602, %v2368
        %2626 = vst.msk [vmem:[%s239 + $0x5c] sm:$0xf] %vm2602, %v2369
        %2627 = vst.msk [vmem:[%s239 + $0x60] sm:$0xf] %vm2602, %v2370
        %2628 = vst.msk [vmem:[%s239 + $0x64] sm:$0xf] %vm2602, %v2371
        %2629 = vst.msk [vmem:[%s239 + $0x68] sm:$0xf] %vm2602, %v2372
        %2630 = vst.msk [vmem:[%s239 + $0x6c] sm:$0xf] %vm2602, %v2373
        %2631 = vst.msk [vmem:[%s239 + $0x70] sm:$0xf] %vm2602, %v2374
        %2632 = vst.msk [vmem:[%s239 + $0x74] sm:$0xf] %vm2602, %v2375
        %2633 = vst.msk [vmem:[%s239 + $0x78] sm:$0xf] %vm2602, %v2376
        %2634 = vst.msk [vmem:[%s239 + $0x7c] sm:$0xf] %vm2602, %v2377
        %2635 = vst.msk [vmem:[%s239 + $0x80] sm:$0xf] %vm2602, %v2378
        %2636 = vst.msk [vmem:[%s239 + $0x84] sm:$0xf] %vm2602, %v2379
        %2637 = vst.msk [vmem:[%s239 + $0x88] sm:$0xf] %vm2602, %v2380
        %2638 = vst.msk [vmem:[%s239 + $0x8c] sm:$0xf] %vm2602, %v2381
        %2639 = vst.msk [vmem:[%s239 + $0x90] sm:$0xf] %vm2602, %v2382
        %2640 = vst.msk [vmem:[%s239 + $0x94] sm:$0xf] %vm2602, %v2383
        %2641 = vst.msk [vmem:[%s239 + $0x98] sm:$0xf] %vm2602, %v2384
        %2642 = vst.msk [vmem:[%s239 + $0x9c] sm:$0xf] %vm2602, %v2385
        %2643 = vst.msk [vmem:[%s239 + $0xa0] sm:$0xf] %vm2602, %v2386
        %2644 = vst.msk [vmem:[%s239 + $0xa4] sm:$0xf] %vm2602, %v2387
        %2645 = vst.msk [vmem:[%s239 + $0xa8] sm:$0xf] %vm2602, %v2388
        %2646 = vst.msk [vmem:[%s239 + $0xac] sm:$0xf] %vm2602, %v2389
        %2647 = vst.msk [vmem:[%s239 + $0xb0] sm:$0xf] %vm2602, %v2390
        %2648 = vst.msk [vmem:[%s239 + $0xb4] sm:$0xf] %vm2602, %v2391
        %2649 = vst.msk [vmem:[%s239 + $0xb8] sm:$0xf] %vm2602, %v2392
        %2650 = vst.msk [vmem:[%s239 + $0xbc] sm:$0xf] %vm2602, %v2393
        %2651 = vst.msk [vmem:[%s239 + $0xc0] sm:$0xf] %vm2602, %v2394
        %2652 = vst.msk [vmem:[%s239 + $0xc4] sm:$0xf] %vm2602, %v2395
        %2653 = vst.msk [vmem:[%s239 + $0xc8] sm:$0xf] %vm2602, %v2396
        %2654 = vst.msk [vmem:[%s239 + $0xcc] sm:$0xf] %vm2602, %v2397
        %2655 = vst.msk [vmem:[%s239 + $0xd0] sm:$0xf] %vm2602, %v2398
        %2656 = vst.msk [vmem:[%s239 + $0xd4] sm:$0xf] %vm2602, %v2399
        %2657 = vst.msk [vmem:[%s239 + $0xd8] sm:$0xf] %vm2602, %v2400
        %2658 = vst.msk [vmem:[%s239 + $0xdc] sm:$0xf] %vm2602, %v2401
        %2659 = vst.msk [vmem:[%s239 + $0xe0] sm:$0xf] %vm2602, %v2402
        %2660 = vst.msk [vmem:[%s239 + $0xe4] sm:$0xf] %vm2602, %v2403
        %2661 = vst.msk [vmem:[%s239 + $0xe8] sm:$0xf] %vm2602, %v2404
        %2662 = vst.msk [vmem:[%s239 + $0xec] sm:$0xf] %vm2602, %v2405
        %2663 = vst.msk [vmem:[%s239 + $0xf0] sm:$0xf] %vm2602, %v2406
        %2664 = vst.msk [vmem:[%s239 + $0xf4] sm:$0xf] %vm2602, %v2407
        %2665 = vst.msk [vmem:[%s239 + $0xf8] sm:$0xf] %vm2602, %v2408
        %2666 = vst.msk [vmem:[%s239 + $0xfc] sm:$0xf] %vm2602, %v2409
        %2667 = vst.msk [vmem:[%s239 + $0x100] sm:$0xf] %vm2602, %v2410
        %2668 = vst.msk [vmem:[%s239 + $0x104] sm:$0xf] %vm2602, %v2411
        %2669 = vst.msk [vmem:[%s239 + $0x108] sm:$0xf] %vm2602, %v2412
        %2670 = vst.msk [vmem:[%s239 + $0x10c] sm:$0xf] %vm2602, %v2413
        %2671 = vst.msk [vmem:[%s239 + $0x110] sm:$0xf] %vm2602, %v2414
        %2672 = vst.msk [vmem:[%s239 + $0x114] sm:$0xf] %vm2602, %v2415
        %2673 = vst.msk [vmem:[%s239 + $0x118] sm:$0xf] %vm2602, %v2416
        %2674 = vst.msk [vmem:[%s239 + $0x11c] sm:$0xf] %vm2602, %v2417
        %2675 = vst.msk [vmem:[%s239 + $0x120] sm:$0xf] %vm2602, %v2418
        %2676 = vst.msk [vmem:[%s239 + $0x124] sm:$0xf] %vm2602, %v2419
        %2677 = vst.msk [vmem:[%s239 + $0x128] sm:$0xf] %vm2602, %v2420
        %2678 = vst.msk [vmem:[%s239 + $0x12c] sm:$0xf] %vm2602, %v2421
        %2679 = vst.msk [vmem:[%s239 + $0x130] sm:$0xf] %vm2602, %v2422
        %2680 = vst.msk [vmem:[%s239 + $0x134] sm:$0xf] %vm2602, %v2423
        %2681 = vst.msk [vmem:[%s239 + $0x138] sm:$0xf] %vm2602, %v2424
        %2682 = vst.msk [vmem:[%s239 + $0x13c] sm:$0xf] %vm2602, %v2425
        %2683 = vst.msk [vmem:[%s239 + $0x140] sm:$0xf] %vm2602, %v2426
        %2684 = vst.msk [vmem:[%s239 + $0x144] sm:$0xf] %vm2602, %v2427
        %2685 = vst.msk [vmem:[%s239 + $0x148] sm:$0xf] %vm2602, %v2428
        %2686 = vst.msk [vmem:[%s239 + $0x14c] sm:$0xf] %vm2602, %v2429
        %2687 = vst.msk [vmem:[%s239 + $0x150] sm:$0xf] %vm2602, %v2430
        %2688 = vst.msk [vmem:[%s239 + $0x154] sm:$0xf] %vm2602, %v2431
        %2689 = vst.msk [vmem:[%s239 + $0x158] sm:$0xf] %vm2602, %v2432
        %2690 = vst.msk [vmem:[%s239 + $0x15c] sm:$0xf] %vm2602, %v2433
        %2691 = vst.msk [vmem:[%s239 + $0x160] sm:$0xf] %vm2602, %v2434
        %2692 = vst.msk [vmem:[%s239 + $0x164] sm:$0xf] %vm2602, %v2435
        %2693 = vst.msk [vmem:[%s239 + $0x168] sm:$0xf] %vm2602, %v2436
        %2694 = vst.msk [vmem:[%s239 + $0x16c] sm:$0xf] %vm2602, %v2437
        %2695 = vst.msk [vmem:[%s239 + $0x170] sm:$0xf] %vm2602, %v2438
        %2696 = vst.msk [vmem:[%s239 + $0x174] sm:$0xf] %vm2602, %v2439
        %2697 = vst.msk [vmem:[%s239 + $0x178] sm:$0xf] %vm2602, %v2440
        %2698 = vst.msk [vmem:[%s239 + $0x17c] sm:$0xf] %vm2602, %v2441
        %2699 = vst.msk [vmem:[%s239 + $0x180] sm:$0xf] %vm2602, %v2442
        %2700 = vst.msk [vmem:[%s239 + $0x184] sm:$0xf] %vm2602, %v2443
        %2701 = vst.msk [vmem:[%s239 + $0x188] sm:$0xf] %vm2602, %v2444
        %2702 = vst.msk [vmem:[%s239 + $0x18c] sm:$0xf] %vm2602, %v2445
        %2703 = vst.msk [vmem:[%s239 + $0x190] sm:$0xf] %vm2602, %v2446
        %2704 = vst.msk [vmem:[%s239 + $0x194] sm:$0xf] %vm2602, %v2447
        %2705 = vst.msk [vmem:[%s239 + $0x198] sm:$0xf] %vm2602, %v2448
        %2706 = vst.msk [vmem:[%s239 + $0x19c] sm:$0xf] %vm2602, %v2449
        %2707 = vst.msk [vmem:[%s239 + $0x1a0] sm:$0xf] %vm2602, %v2450
        %2708 = vst.msk [vmem:[%s239 + $0x1a4] sm:$0xf] %vm2602, %v2451
        %2709 = vst.msk [vmem:[%s239 + $0x1a8] sm:$0xf] %vm2602, %v2452
        %2710 = vst.msk [vmem:[%s239 + $0x1ac] sm:$0xf] %vm2602, %v2453
        %2711 = vst.msk [vmem:[%s239 + $0x1b0] sm:$0xf] %vm2602, %v2454
        %2712 = vst.msk [vmem:[%s239 + $0x1b4] sm:$0xf] %vm2602, %v2455
        %2713 = vst.msk [vmem:[%s239 + $0x1b8] sm:$0xf] %vm2602, %v2456
        %2714 = vst.msk [vmem:[%s239 + $0x1bc] sm:$0xf] %vm2602, %v2457
        %2715 = vst.msk [vmem:[%s239 + $0x1c0] sm:$0xf] %vm2602, %v2458
        %2716 = vst.msk [vmem:[%s239 + $0x1c4] sm:$0xf] %vm2602, %v2459
        %2717 = vst.msk [vmem:[%s239 + $0x1c8] sm:$0xf] %vm2602, %v2460
        %2718 = vst.msk [vmem:[%s239 + $0x1cc] sm:$0xf] %vm2602, %v2461
        %2719 = vst.msk [vmem:[%s239 + $0x1d0] sm:$0xf] %vm2602, %v2462
        %2720 = vst.msk [vmem:[%s239 + $0x1d4] sm:$0xf] %vm2602, %v2463
        %2721 = vst.msk [vmem:[%s239 + $0x1d8] sm:$0xf] %vm2602, %v2464
        %2722 = vst.msk [vmem:[%s239 + $0x1dc] sm:$0xf] %vm2602, %v2465
        %2723 = vst.msk [vmem:[%s239 + $0x1e0] sm:$0xf] %vm2602, %v2466
        %2724 = vst.msk [vmem:[%s239 + $0x1e4] sm:$0xf] %vm2602, %v2467
        %2725 = vst.msk [vmem:[%s239 + $0x1e8] sm:$0xf] %vm2602, %v2468
        %2726 = vst.msk [vmem:[%s239 + $0x1ec] sm:$0xf] %vm2602, %v2469
        %2727 = vst.msk [vmem:[%s239 + $0x1f0] sm:$0xf] %vm2602, %v2470
        %2728 = vst.msk [vmem:[%s239 + $0x1f4] sm:$0xf] %vm2602, %v2471
        %2729 = vst.msk [vmem:[%s239 + $0x1f8] sm:$0xf] %vm2602, %v2472
        %2730 = vst.msk [vmem:[%s239 + $0x1fc] sm:$0xf] %vm2602, %v2473
        %s2731 = smul.u32 128, %s17
        %p2732 = scmp.lt.s32.totalorder %s2731, 255
        %s2733 = scalar_select %p2732, %s2731, 255
        %s2734 = smul.addr %s2733, 4
        %s2735 = scalar_lea.vmem %s4, %s2734
        // Predicated region
        $region49: #{qnet_forward.4} parent=35 // pred_check
          %p2736 = pneg %p124
        $region50: #{qnet_forward.4} parent=35 // pred_check_branch
          %2738 = sbr.rel (%p2736) target = $region52
        $region51: #{qnet_forward.4} parent=35 // pred_region
          %s2739 = smul.u32 128, %s17
        $region52: #{qnet_forward.4} parent=35 // pred_fallthru
          _
      $region36: #{qnet_forward.4} parent=5 // pred_fallthru
        _
      %p2740 = scmp.le.s32.totalorder 2, %s12
      // Predicated region
      $region53: #{qnet_forward.4} parent=5 // pred_check
        %p2741 = pneg %p2740
      $region54: #{qnet_forward.4} parent=5 // pred_check_branch
        %2743 = sbr.rel (%p2741) target = $region56
      $region55: #{qnet_forward.4} parent=5 // pred_region
        %s2744 = ssub.s32 %s12, 2
        // Predicated region
        $region57: #{qnet_forward.4} parent=55 // pred_check
          %p2745 = pneg %p130
        $region58: #{qnet_forward.4} parent=55 // pred_check_branch
          %2747 = sbr.rel (%p2745) target = $region60
        $region59: #{qnet_forward.4} parent=55 // pred_region
          %s2748 = smul.u32 128, %s18
          %p2749 = scmp.lt.s32.totalorder %s2748, 255
          %s2750 = scalar_select %p2749, %s2748, 255
          %s2751 = smul.addr %s2750, 4
          %s2752 = scalar_lea.vmem %s4, %s2751
        $region60: #{qnet_forward.4} parent=55 // pred_fallthru
          _
      $region56: #{qnet_forward.4} parent=5 // pred_fallthru
        _
    $region6: #{qnet_forward.4} parent=1 // loop_footer
      %s16 = sadd.s32 1, %s12
    $region7: #{qnet_forward.4} parent=1 // loop_footer_branch
      %11 = sbr.rel target = $region3
    $region8: #{qnet_forward.4} parent=1 // loop_exit
      _
    %2753 = vsyncpa [#allocation3], 1
    %s2754 = scalar_lea.sflag [#allocation3], 1
    %2755 = vsyncpa %s2754, 1
    %2756 = vsyncpa [#allocation5], 1

// kernel: qnet_forward.5
$region0: #{qnet_forward.5}
  #allocation0 [shape = 'u32[]', space=smem, size = 0x4, offset = 0x4, fixed_abs, tag = 'smem constant byte address 0x4 - core index']
  #allocation1 [shape = 'u32[144,128]{1,0:T(1,128)}', space=vmem, size = 0x12000, scoped, tag = 'internal scratch']
  %s0 = inlined_call_operand.vmem [shape: bf16[512,1024], index: 0, kind: input, shape index: {}]
  %s1 = inlined_call_operand.vmem [shape: bf16[1024,32], index: 1, kind: input, shape index: {}]
  %s2 = inlined_call_operand.vmem [shape: f32[1,32], index: 2, kind: input, shape index: {}]
  %s3 = inlined_call_operand.vmem [shape: f32[1,32], index: 3, kind: input, shape index: {}]
  %s4 = inlined_call_operand.vmem [shape: f32[256,32], index: 4, kind: input, shape index: {}]
  %s5 = inlined_call_operand.vmem [shape: f32[256,32], index: 5, kind: input, shape index: {}]
  %s6 = inlined_call_operand.vmem [shape: f32[1,2], index: 6, kind: input, shape index: {}]
  %s7 = inlined_call_operand.vmem [shape: bf16[512,32], index: 7, kind: output, shape index: {0}]
  %s8 = inlined_call_operand.vmem [shape: f32[2,1], index: 8, kind: output, shape index: {1}]
  %s9 = inlined_call_operand.vmem [shape: f32[2,1], index: 9, kind: output, shape index: {2}]
  %10 = xla_tuple %s7, %s8, %s9
  %s11 = sld [smem:[#allocation0]]
  $region54: #{qnet_forward.5} parent=0
    _
  %s13 = ssub.s32 1, %s11
  %s14 = scalar_select 0, %s13, %s11
  // Predicated region
  $region2: #{qnet_forward.5} parent=0 // pred_check
    _
  $region3: #{qnet_forward.5} parent=0 // pred_check_branch
    %16 = sbr.rel (0) target = $region5
  $region4: #{qnet_forward.5} parent=0 // pred_region
    _
  $region5: #{qnet_forward.5} parent=0 // pred_fallthru
    _
  // Predicated region
  $region6: #{qnet_forward.5} parent=0 // pred_check
    _
  $region7: #{qnet_forward.5} parent=0 // pred_check_branch
    %18 = sbr.rel (0) target = $region9
  $region8: #{qnet_forward.5} parent=0 // pred_region
    _
  $region9: #{qnet_forward.5} parent=0 // pred_fallthru
    _
  // Predicated region
  $region10: #{qnet_forward.5} parent=0 // pred_check
    _
  $region11: #{qnet_forward.5} parent=0 // pred_check_branch
    %20 = sbr.rel (0) target = $region13
  $region12: #{qnet_forward.5} parent=0 // pred_region
    _
  $region13: #{qnet_forward.5} parent=0 // pred_fallthru
    _
  // Predicated region
  $region14: #{qnet_forward.5} parent=0 // pred_check
    _
  $region15: #{qnet_forward.5} parent=0 // pred_check_branch
    %22 = sbr.rel (0) target = $region17
  $region16: #{qnet_forward.5} parent=0 // pred_region
    _
  $region17: #{qnet_forward.5} parent=0 // pred_fallthru
    _
  // Predicated region
  $region18: #{qnet_forward.5} parent=0 // pred_check
    _
  $region19: #{qnet_forward.5} parent=0 // pred_check_branch
    %24 = sbr.rel (0) target = $region21
  $region20: #{qnet_forward.5} parent=0 // pred_region
    _
  $region21: #{qnet_forward.5} parent=0 // pred_fallthru
    _
  // Predicated region
  $region22: #{qnet_forward.5} parent=0 // pred_check
    _
  $region23: #{qnet_forward.5} parent=0 // pred_check_branch
    %26 = sbr.rel (0) target = $region25
  $region24: #{qnet_forward.5} parent=0 // pred_region
    _
  $region25: #{qnet_forward.5} parent=0 // pred_fallthru
    _
  // Predicated region
  $region26: #{qnet_forward.5} parent=0 // pred_check
    _
  $region27: #{qnet_forward.5} parent=0 // pred_check_branch
    %28 = sbr.rel (0) target = $region29
  $region28: #{qnet_forward.5} parent=0 // pred_region
    _
  $region29: #{qnet_forward.5} parent=0 // pred_fallthru
    _
  %v30 = vld [vmem:[%s0] sm:$0xff]
  %v31 = vld [vmem:[%s0 + $0x8] sm:$0xff]
  %v32 = vld [vmem:[%s0 + $0x10] sm:$0xff]
  %v33 = vld [vmem:[%s0 + $0x18] sm:$0xff]
  %v34 = vld [vmem:[%s0 + $0x20] sm:$0xff]
  %v35 = vld [vmem:[%s0 + $0x28] sm:$0xff]
  %v36 = vld [vmem:[%s0 + $0x30] sm:$0xff]
  %v37 = vld [vmem:[%s0 + $0x38] sm:$0xff]
  %v38 = vld [vmem:[%s0 + $0x40] sm:$0xff]
  %v39 = vld [vmem:[%s0 + $0x48] sm:$0xff]
  %v40 = vld [vmem:[%s0 + $0x50] sm:$0xff]
  %v41 = vld [vmem:[%s0 + $0x58] sm:$0xff]
  %v42 = vld [vmem:[%s0 + $0x60] sm:$0xff]
  %v43 = vld [vmem:[%s0 + $0x68] sm:$0xff]
  %v44 = vld [vmem:[%s0 + $0x70] sm:$0xff]
  %v45 = vld [vmem:[%s0 + $0x78] sm:$0xff]
  %v46 = vld [vmem:[%s0 + $0x80] sm:$0xff]
  %v47 = vld [vmem:[%s0 + $0x88] sm:$0xff]
  %v48 = vld [vmem:[%s0 + $0x90] sm:$0xff]
  %v49 = vld [vmem:[%s0 + $0x98] sm:$0xff]
  %v50 = vld [vmem:[%s0 + $0xa0] sm:$0xff]
  %v51 = vld [vmem:[%s0 + $0xa8] sm:$0xff]
  %v52 = vld [vmem:[%s0 + $0xb0] sm:$0xff]
  %v53 = vld [vmem:[%s0 + $0xb8] sm:$0xff]
  %v54 = vld [vmem:[%s0 + $0xc0] sm:$0xff]
  %v55 = vld [vmem:[%s0 + $0xc8] sm:$0xff]
  %v56 = vld [vmem:[%s0 + $0xd0] sm:$0xff]
  %v57 = vld [vmem:[%s0 + $0xd8] sm:$0xff]
  %v58 = vld [vmem:[%s0 + $0xe0] sm:$0xff]
  %v59 = vld [vmem:[%s0 + $0xe8] sm:$0xff]
  %v60 = vld [vmem:[%s0 + $0xf0] sm:$0xff]
  %v61 = vld [vmem:[%s0 + $0xf8] sm:$0xff]
  %v62 = vld [vmem:[%s0 + $0x100] sm:$0xff]
  %v63 = vld [vmem:[%s0 + $0x108] sm:$0xff]
  %v64 = vld [vmem:[%s0 + $0x110] sm:$0xff]
  %v65 = vld [vmem:[%s0 + $0x118] sm:$0xff]
  %v66 = vld [vmem:[%s0 + $0x120] sm:$0xff]
  %v67 = vld [vmem:[%s0 + $0x128] sm:$0xff]
  %v68 = vld [vmem:[%s0 + $0x130] sm:$0xff]
  %v69 = vld [vmem:[%s0 + $0x138] sm:$0xff]
  %v70 = vld [vmem:[%s0 + $0x140] sm:$0xff]
  %v71 = vld [vmem:[%s0 + $0x148] sm:$0xff]
  %v72 = vld [vmem:[%s0 + $0x150] sm:$0xff]
  %v73 = vld [vmem:[%s0 + $0x158] sm:$0xff]
  %v74 = vld [vmem:[%s0 + $0x160] sm:$0xff]
  %v75 = vld [vmem:[%s0 + $0x168] sm:$0xff]
  %v76 = vld [vmem:[%s0 + $0x170] sm:$0xff]
  %v77 = vld [vmem:[%s0 + $0x178] sm:$0xff]
  %v78 = vld [vmem:[%s0 + $0x180] sm:$0xff]
  %v79 = vld [vmem:[%s0 + $0x188] sm:$0xff]
  %v80 = vld [vmem:[%s0 + $0x190] sm:$0xff]
  %v81 = vld [vmem:[%s0 + $0x198] sm:$0xff]
  %v82 = vld [vmem:[%s0 + $0x1a0] sm:$0xff]
  %v83 = vld [vmem:[%s0 + $0x1a8] sm:$0xff]
  %v84 = vld [vmem:[%s0 + $0x1b0] sm:$0xff]
  %v85 = vld [vmem:[%s0 + $0x1b8] sm:$0xff]
  %v86 = vld [vmem:[%s0 + $0x1c0] sm:$0xff]
  %v87 = vld [vmem:[%s0 + $0x1c8] sm:$0xff]
  %v88 = vld [vmem:[%s0 + $0x1d0] sm:$0xff]
  %v89 = vld [vmem:[%s0 + $0x1d8] sm:$0xff]
  %v90 = vld [vmem:[%s0 + $0x1e0] sm:$0xff]
  %v91 = vld [vmem:[%s0 + $0x1e8] sm:$0xff]
  %v92 = vld [vmem:[%s0 + $0x1f0] sm:$0xff]
  %v93 = vld [vmem:[%s0 + $0x1f8] sm:$0xff]
  %v94 = vld [vmem:[%s0 + $0x200] sm:$0xff]
  %v95 = vld [vmem:[%s0 + $0x208] sm:$0xff]
  %v96 = vld [vmem:[%s0 + $0x210] sm:$0xff]
  %v97 = vld [vmem:[%s0 + $0x218] sm:$0xff]
  %v98 = vld [vmem:[%s0 + $0x220] sm:$0xff]
  %v99 = vld [vmem:[%s0 + $0x228] sm:$0xff]
  %v100 = vld [vmem:[%s0 + $0x230] sm:$0xff]
  %v101 = vld [vmem:[%s0 + $0x238] sm:$0xff]
  %v102 = vld [vmem:[%s0 + $0x240] sm:$0xff]
  %v103 = vld [vmem:[%s0 + $0x248] sm:$0xff]
  %v104 = vld [vmem:[%s0 + $0x250] sm:$0xff]
  %v105 = vld [vmem:[%s0 + $0x258] sm:$0xff]
  %v106 = vld [vmem:[%s0 + $0x260] sm:$0xff]
  %v107 = vld [vmem:[%s0 + $0x268] sm:$0xff]
  %v108 = vld [vmem:[%s0 + $0x270] sm:$0xff]
  %v109 = vld [vmem:[%s0 + $0x278] sm:$0xff]
  %v110 = vld [vmem:[%s0 + $0x280] sm:$0xff]
  %v111 = vld [vmem:[%s0 + $0x288] sm:$0xff]
  %v112 = vld [vmem:[%s0 + $0x290] sm:$0xff]
  %v113 = vld [vmem:[%s0 + $0x298] sm:$0xff]
  %v114 = vld [vmem:[%s0 + $0x2a0] sm:$0xff]
  %v115 = vld [vmem:[%s0 + $0x2a8] sm:$0xff]
  %v116 = vld [vmem:[%s0 + $0x2b0] sm:$0xff]
  %v117 = vld [vmem:[%s0 + $0x2b8] sm:$0xff]
  %v118 = vld [vmem:[%s0 + $0x2c0] sm:$0xff]
  %v119 = vld [vmem:[%s0 + $0x2c8] sm:$0xff]
  %v120 = vld [vmem:[%s0 + $0x2d0] sm:$0xff]
  %v121 = vld [vmem:[%s0 + $0x2d8] sm:$0xff]
  %v122 = vld [vmem:[%s0 + $0x2e0] sm:$0xff]
  %v123 = vld [vmem:[%s0 + $0x2e8] sm:$0xff]
  %v124 = vld [vmem:[%s0 + $0x2f0] sm:$0xff]
  %v125 = vld [vmem:[%s0 + $0x2f8] sm:$0xff]
  %v126 = vld [vmem:[%s0 + $0x300] sm:$0xff]
  %v127 = vld [vmem:[%s0 + $0x308] sm:$0xff]
  %v128 = vld [vmem:[%s0 + $0x310] sm:$0xff]
  %v129 = vld [vmem:[%s0 + $0x318] sm:$0xff]
  %v130 = vld [vmem:[%s0 + $0x320] sm:$0xff]
  %v131 = vld [vmem:[%s0 + $0x328] sm:$0xff]
  %v132 = vld [vmem:[%s0 + $0x330] sm:$0xff]
  %v133 = vld [vmem:[%s0 + $0x338] sm:$0xff]
  %v134 = vld [vmem:[%s0 + $0x340] sm:$0xff]
  %v135 = vld [vmem:[%s0 + $0x348] sm:$0xff]
  %v136 = vld [vmem:[%s0 + $0x350] sm:$0xff]
  %v137 = vld [vmem:[%s0 + $0x358] sm:$0xff]
  %v138 = vld [vmem:[%s0 + $0x360] sm:$0xff]
  %v139 = vld [vmem:[%s0 + $0x368] sm:$0xff]
  %v140 = vld [vmem:[%s0 + $0x370] sm:$0xff]
  %v141 = vld [vmem:[%s0 + $0x378] sm:$0xff]
  %v142 = vld [vmem:[%s0 + $0x380] sm:$0xff]
  %v143 = vld [vmem:[%s0 + $0x388] sm:$0xff]
  %v144 = vld [vmem:[%s0 + $0x390] sm:$0xff]
  %v145 = vld [vmem:[%s0 + $0x398] sm:$0xff]
  %v146 = vld [vmem:[%s0 + $0x3a0] sm:$0xff]
  %v147 = vld [vmem:[%s0 + $0x3a8] sm:$0xff]
  %v148 = vld [vmem:[%s0 + $0x3b0] sm:$0xff]
  %v149 = vld [vmem:[%s0 + $0x3b8] sm:$0xff]
  %v150 = vld [vmem:[%s0 + $0x3c0] sm:$0xff]
  %v151 = vld [vmem:[%s0 + $0x3c8] sm:$0xff]
  %v152 = vld [vmem:[%s0 + $0x3d0] sm:$0xff]
  %v153 = vld [vmem:[%s0 + $0x3d8] sm:$0xff]
  %v154 = vld [vmem:[%s0 + $0x3e0] sm:$0xff]
  %v155 = vld [vmem:[%s0 + $0x3e8] sm:$0xff]
  %v156 = vld [vmem:[%s0 + $0x3f0] sm:$0xff]
  %v157 = vld [vmem:[%s0 + $0x3f8] sm:$0xff]
  %v158 = vld [vmem:[%s0 + $0x400] sm:$0xff]
  %v159 = vld [vmem:[%s0 + $0x408] sm:$0xff]
  %v160 = vld [vmem:[%s0 + $0x410] sm:$0xff]
  %v161 = vld [vmem:[%s0 + $0x418] sm:$0xff]
  %v162 = vld [vmem:[%s0 + $0x420] sm:$0xff]
  %v163 = vld [vmem:[%s0 + $0x428] sm:$0xff]
  %v164 = vld [vmem:[%s0 + $0x430] sm:$0xff]
  %v165 = vld [vmem:[%s0 + $0x438] sm:$0xff]
  %v166 = vld [vmem:[%s0 + $0x440] sm:$0xff]
  %v167 = vld [vmem:[%s0 + $0x448] sm:$0xff]
  %v168 = vld [vmem:[%s0 + $0x450] sm:$0xff]
  %v169 = vld [vmem:[%s0 + $0x458] sm:$0xff]
  %v170 = vld [vmem:[%s0 + $0x460] sm:$0xff]
  %v171 = vld [vmem:[%s0 + $0x468] sm:$0xff]
  %v172 = vld [vmem:[%s0 + $0x470] sm:$0xff]
  %v173 = vld [vmem:[%s0 + $0x478] sm:$0xff]
  %v174 = vld [vmem:[%s0 + $0x480] sm:$0xff]
  %v175 = vld [vmem:[%s0 + $0x488] sm:$0xff]
  %v176 = vld [vmem:[%s0 + $0x490] sm:$0xff]
  %v177 = vld [vmem:[%s0 + $0x498] sm:$0xff]
  %v178 = vld [vmem:[%s0 + $0x4a0] sm:$0xff]
  %v179 = vld [vmem:[%s0 + $0x4a8] sm:$0xff]
  %v180 = vld [vmem:[%s0 + $0x4b0] sm:$0xff]
  %v181 = vld [vmem:[%s0 + $0x4b8] sm:$0xff]
  %v182 = vld [vmem:[%s0 + $0x4c0] sm:$0xff]
  %v183 = vld [vmem:[%s0 + $0x4c8] sm:$0xff]
  %v184 = vld [vmem:[%s0 + $0x4d0] sm:$0xff]
  %v185 = vld [vmem:[%s0 + $0x4d8] sm:$0xff]
  %v186 = vld [vmem:[%s0 + $0x4e0] sm:$0xff]
  %v187 = vld [vmem:[%s0 + $0x4e8] sm:$0xff]
  %v188 = vld [vmem:[%s0 + $0x4f0] sm:$0xff]
  %v189 = vld [vmem:[%s0 + $0x4f8] sm:$0xff]
  %v190 = vld [vmem:[%s0 + $0x500] sm:$0xff]
  %v191 = vld [vmem:[%s0 + $0x508] sm:$0xff]
  %v192 = vld [vmem:[%s0 + $0x510] sm:$0xff]
  %v193 = vld [vmem:[%s0 + $0x518] sm:$0xff]
  %v194 = vld [vmem:[%s0 + $0x520] sm:$0xff]
  %v195 = vld [vmem:[%s0 + $0x528] sm:$0xff]
  %v196 = vld [vmem:[%s0 + $0x530] sm:$0xff]
  %v197 = vld [vmem:[%s0 + $0x538] sm:$0xff]
  %v198 = vld [vmem:[%s0 + $0x540] sm:$0xff]
  %v199 = vld [vmem:[%s0 + $0x548] sm:$0xff]
  %v200 = vld [vmem:[%s0 + $0x550] sm:$0xff]
  %v201 = vld [vmem:[%s0 + $0x558] sm:$0xff]
  %v202 = vld [vmem:[%s0 + $0x560] sm:$0xff]
  %v203 = vld [vmem:[%s0 + $0x568] sm:$0xff]
  %v204 = vld [vmem:[%s0 + $0x570] sm:$0xff]
  %v205 = vld [vmem:[%s0 + $0x578] sm:$0xff]
  %v206 = vld [vmem:[%s0 + $0x580] sm:$0xff]
  %v207 = vld [vmem:[%s0 + $0x588] sm:$0xff]
  %v208 = vld [vmem:[%s0 + $0x590] sm:$0xff]
  %v209 = vld [vmem:[%s0 + $0x598] sm:$0xff]
  %v210 = vld [vmem:[%s0 + $0x5a0] sm:$0xff]
  %v211 = vld [vmem:[%s0 + $0x5a8] sm:$0xff]
  %v212 = vld [vmem:[%s0 + $0x5b0] sm:$0xff]
  %v213 = vld [vmem:[%s0 + $0x5b8] sm:$0xff]
  %v214 = vld [vmem:[%s0 + $0x5c0] sm:$0xff]
  %v215 = vld [vmem:[%s0 + $0x5c8] sm:$0xff]
  %v216 = vld [vmem:[%s0 + $0x5d0] sm:$0xff]
  %v217 = vld [vmem:[%s0 + $0x5d8] sm:$0xff]
  %v218 = vld [vmem:[%s0 + $0x5e0] sm:$0xff]
  %v219 = vld [vmem:[%s0 + $0x5e8] sm:$0xff]
  %v220 = vld [vmem:[%s0 + $0x5f0] sm:$0xff]
  %v221 = vld [vmem:[%s0 + $0x5f8] sm:$0xff]
  %v222 = vld [vmem:[%s0 + $0x600] sm:$0xff]
  %v223 = vld [vmem:[%s0 + $0x608] sm:$0xff]
  %v224 = vld [vmem:[%s0 + $0x610] sm:$0xff]
  %v225 = vld [vmem:[%s0 + $0x618] sm:$0xff]
  %v226 = vld [vmem:[%s0 + $0x620] sm:$0xff]
  %v227 = vld [vmem:[%s0 + $0x628] sm:$0xff]
  %v228 = vld [vmem:[%s0 + $0x630] sm:$0xff]
  %v229 = vld [vmem:[%s0 + $0x638] sm:$0xff]
  %v230 = vld [vmem:[%s0 + $0x640] sm:$0xff]
  %v231 = vld [vmem:[%s0 + $0x648] sm:$0xff]
  %v232 = vld [vmem:[%s0 + $0x650] sm:$0xff]
  %v233 = vld [vmem:[%s0 + $0x658] sm:$0xff]
  %v234 = vld [vmem:[%s0 + $0x660] sm:$0xff]
  %v235 = vld [vmem:[%s0 + $0x668] sm:$0xff]
  %v236 = vld [vmem:[%s0 + $0x670] sm:$0xff]
  %v237 = vld [vmem:[%s0 + $0x678] sm:$0xff]
  %v238 = vld [vmem:[%s0 + $0x680] sm:$0xff]
  %v239 = vld [vmem:[%s0 + $0x688] sm:$0xff]
  %v240 = vld [vmem:[%s0 + $0x690] sm:$0xff]
  %v241 = vld [vmem:[%s0 + $0x698] sm:$0xff]
  %v242 = vld [vmem:[%s0 + $0x6a0] sm:$0xff]
  %v243 = vld [vmem:[%s0 + $0x6a8] sm:$0xff]
  %v244 = vld [vmem:[%s0 + $0x6b0] sm:$0xff]
  %v245 = vld [vmem:[%s0 + $0x6b8] sm:$0xff]
  %v246 = vld [vmem:[%s0 + $0x6c0] sm:$0xff]
  %v247 = vld [vmem:[%s0 + $0x6c8] sm:$0xff]
  %v248 = vld [vmem:[%s0 + $0x6d0] sm:$0xff]
  %v249 = vld [vmem:[%s0 + $0x6d8] sm:$0xff]
  %v250 = vld [vmem:[%s0 + $0x6e0] sm:$0xff]
  %v251 = vld [vmem:[%s0 + $0x6e8] sm:$0xff]
  %v252 = vld [vmem:[%s0 + $0x6f0] sm:$0xff]
  %v253 = vld [vmem:[%s0 + $0x6f8] sm:$0xff]
  %v254 = vld [vmem:[%s0 + $0x700] sm:$0xff]
  %v255 = vld [vmem:[%s0 + $0x708] sm:$0xff]
  %v256 = vld [vmem:[%s0 + $0x710] sm:$0xff]
  %v257 = vld [vmem:[%s0 + $0x718] sm:$0xff]
  %v258 = vld [vmem:[%s0 + $0x720] sm:$0xff]
  %v259 = vld [vmem:[%s0 + $0x728] sm:$0xff]
  %v260 = vld [vmem:[%s0 + $0x730] sm:$0xff]
  %v261 = vld [vmem:[%s0 + $0x738] sm:$0xff]
  %v262 = vld [vmem:[%s0 + $0x740] sm:$0xff]
  %v263 = vld [vmem:[%s0 + $0x748] sm:$0xff]
  %v264 = vld [vmem:[%s0 + $0x750] sm:$0xff]
  %v265 = vld [vmem:[%s0 + $0x758] sm:$0xff]
  %v266 = vld [vmem:[%s0 + $0x760] sm:$0xff]
  %v267 = vld [vmem:[%s0 + $0x768] sm:$0xff]
  %v268 = vld [vmem:[%s0 + $0x770] sm:$0xff]
  %v269 = vld [vmem:[%s0 + $0x778] sm:$0xff]
  %v270 = vld [vmem:[%s0 + $0x780] sm:$0xff]
  %v271 = vld [vmem:[%s0 + $0x788] sm:$0xff]
  %v272 = vld [vmem:[%s0 + $0x790] sm:$0xff]
  %v273 = vld [vmem:[%s0 + $0x798] sm:$0xff]
  %v274 = vld [vmem:[%s0 + $0x7a0] sm:$0xff]
  %v275 = vld [vmem:[%s0 + $0x7a8] sm:$0xff]
  %v276 = vld [vmem:[%s0 + $0x7b0] sm:$0xff]
  %v277 = vld [vmem:[%s0 + $0x7b8] sm:$0xff]
  %v278 = vld [vmem:[%s0 + $0x7c0] sm:$0xff]
  %v279 = vld [vmem:[%s0 + $0x7c8] sm:$0xff]
  %v280 = vld [vmem:[%s0 + $0x7d0] sm:$0xff]
  %v281 = vld [vmem:[%s0 + $0x7d8] sm:$0xff]
  %v282 = vld [vmem:[%s0 + $0x7e0] sm:$0xff]
  %v283 = vld [vmem:[%s0 + $0x7e8] sm:$0xff]
  %v284 = vld [vmem:[%s0 + $0x7f0] sm:$0xff]
  %v285 = vld [vmem:[%s0 + $0x7f8] sm:$0xff]
  %v286 = vld [vmem:[%s1] sm:$0xf]
  %v287 = vld [vmem:[%s1 + $0x4] sm:$0xf]
  %v288 = vld [vmem:[%s1 + $0x8] sm:$0xf]
  %v289 = vld [vmem:[%s1 + $0xc] sm:$0xf]
  %v290 = vld [vmem:[%s1 + $0x10] sm:$0xf]
  %v291 = vld [vmem:[%s1 + $0x14] sm:$0xf]
  %v292 = vld [vmem:[%s1 + $0x18] sm:$0xf]
  %v293 = vld [vmem:[%s1 + $0x1c] sm:$0xf]
  %v294 = vld [vmem:[%s1 + $0x20] sm:$0xf]
  %v295 = vld [vmem:[%s1 + $0x24] sm:$0xf]
  %v296 = vld [vmem:[%s1 + $0x28] sm:$0xf]
  %v297 = vld [vmem:[%s1 + $0x2c] sm:$0xf]
  %v298 = vld [vmem:[%s1 + $0x30] sm:$0xf]
  %v299 = vld [vmem:[%s1 + $0x34] sm:$0xf]
  %v300 = vld [vmem:[%s1 + $0x38] sm:$0xf]
  %v301 = vld [vmem:[%s1 + $0x3c] sm:$0xf]
  %v302 = vld [vmem:[%s1 + $0x40] sm:$0xf]
  %v303 = vld [vmem:[%s1 + $0x44] sm:$0xf]
  %v304 = vld [vmem:[%s1 + $0x48] sm:$0xf]
  %v305 = vld [vmem:[%s1 + $0x4c] sm:$0xf]
  %v306 = vld [vmem:[%s1 + $0x50] sm:$0xf]
  %v307 = vld [vmem:[%s1 + $0x54] sm:$0xf]
  %v308 = vld [vmem:[%s1 + $0x58] sm:$0xf]
  %v309 = vld [vmem:[%s1 + $0x5c] sm:$0xf]
  %v310 = vld [vmem:[%s1 + $0x60] sm:$0xf]
  %v311 = vld [vmem:[%s1 + $0x64] sm:$0xf]
  %v312 = vld [vmem:[%s1 + $0x68] sm:$0xf]
  %v313 = vld [vmem:[%s1 + $0x6c] sm:$0xf]
  %v314 = vld [vmem:[%s1 + $0x70] sm:$0xf]
  %v315 = vld [vmem:[%s1 + $0x74] sm:$0xf]
  %v316 = vld [vmem:[%s1 + $0x78] sm:$0xf]
  %v317 = vld [vmem:[%s1 + $0x7c] sm:$0xf]
  %v318 = vld [vmem:[%s1 + $0x80] sm:$0xf]
  %v319 = vld [vmem:[%s1 + $0x84] sm:$0xf]
  %v320 = vld [vmem:[%s1 + $0x88] sm:$0xf]
  %v321 = vld [vmem:[%s1 + $0x8c] sm:$0xf]
  %v322 = vld [vmem:[%s1 + $0x90] sm:$0xf]
  %v323 = vld [vmem:[%s1 + $0x94] sm:$0xf]
  %v324 = vld [vmem:[%s1 + $0x98] sm:$0xf]
  %v325 = vld [vmem:[%s1 + $0x9c] sm:$0xf]
  %v326 = vld [vmem:[%s1 + $0xa0] sm:$0xf]
  %v327 = vld [vmem:[%s1 + $0xa4] sm:$0xf]
  %v328 = vld [vmem:[%s1 + $0xa8] sm:$0xf]
  %v329 = vld [vmem:[%s1 + $0xac] sm:$0xf]
  %v330 = vld [vmem:[%s1 + $0xb0] sm:$0xf]
  %v331 = vld [vmem:[%s1 + $0xb4] sm:$0xf]
  %v332 = vld [vmem:[%s1 + $0xb8] sm:$0xf]
  %v333 = vld [vmem:[%s1 + $0xbc] sm:$0xf]
  %v334 = vld [vmem:[%s1 + $0xc0] sm:$0xf]
  %v335 = vld [vmem:[%s1 + $0xc4] sm:$0xf]
  %v336 = vld [vmem:[%s1 + $0xc8] sm:$0xf]
  %v337 = vld [vmem:[%s1 + $0xcc] sm:$0xf]
  %v338 = vld [vmem:[%s1 + $0xd0] sm:$0xf]
  %v339 = vld [vmem:[%s1 + $0xd4] sm:$0xf]
  %v340 = vld [vmem:[%s1 + $0xd8] sm:$0xf]
  %v341 = vld [vmem:[%s1 + $0xdc] sm:$0xf]
  %v342 = vld [vmem:[%s1 + $0xe0] sm:$0xf]
  %v343 = vld [vmem:[%s1 + $0xe4] sm:$0xf]
  %v344 = vld [vmem:[%s1 + $0xe8] sm:$0xf]
  %v345 = vld [vmem:[%s1 + $0xec] sm:$0xf]
  %v346 = vld [vmem:[%s1 + $0xf0] sm:$0xf]
  %v347 = vld [vmem:[%s1 + $0xf4] sm:$0xf]
  %v348 = vld [vmem:[%s1 + $0xf8] sm:$0xf]
  %v349 = vld [vmem:[%s1 + $0xfc] sm:$0xf]
  %v350 = vld [vmem:[%s1 + $0x100] sm:$0xf]
  %v351 = vld [vmem:[%s1 + $0x104] sm:$0xf]
  %v352 = vld [vmem:[%s1 + $0x108] sm:$0xf]
  %v353 = vld [vmem:[%s1 + $0x10c] sm:$0xf]
  %v354 = vld [vmem:[%s1 + $0x110] sm:$0xf]
  %v355 = vld [vmem:[%s1 + $0x114] sm:$0xf]
  %v356 = vld [vmem:[%s1 + $0x118] sm:$0xf]
  %v357 = vld [vmem:[%s1 + $0x11c] sm:$0xf]
  %v358 = vld [vmem:[%s1 + $0x120] sm:$0xf]
  %v359 = vld [vmem:[%s1 + $0x124] sm:$0xf]
  %v360 = vld [vmem:[%s1 + $0x128] sm:$0xf]
  %v361 = vld [vmem:[%s1 + $0x12c] sm:$0xf]
  %v362 = vld [vmem:[%s1 + $0x130] sm:$0xf]
  %v363 = vld [vmem:[%s1 + $0x134] sm:$0xf]
  %v364 = vld [vmem:[%s1 + $0x138] sm:$0xf]
  %v365 = vld [vmem:[%s1 + $0x13c] sm:$0xf]
  %v366 = vld [vmem:[%s1 + $0x140] sm:$0xf]
  %v367 = vld [vmem:[%s1 + $0x144] sm:$0xf]
  %v368 = vld [vmem:[%s1 + $0x148] sm:$0xf]
  %v369 = vld [vmem:[%s1 + $0x14c] sm:$0xf]
  %v370 = vld [vmem:[%s1 + $0x150] sm:$0xf]
  %v371 = vld [vmem:[%s1 + $0x154] sm:$0xf]
  %v372 = vld [vmem:[%s1 + $0x158] sm:$0xf]
  %v373 = vld [vmem:[%s1 + $0x15c] sm:$0xf]
  %v374 = vld [vmem:[%s1 + $0x160] sm:$0xf]
  %v375 = vld [vmem:[%s1 + $0x164] sm:$0xf]
  %v376 = vld [vmem:[%s1 + $0x168] sm:$0xf]
  %v377 = vld [vmem:[%s1 + $0x16c] sm:$0xf]
  %v378 = vld [vmem:[%s1 + $0x170] sm:$0xf]
  %v379 = vld [vmem:[%s1 + $0x174] sm:$0xf]
  %v380 = vld [vmem:[%s1 + $0x178] sm:$0xf]
  %v381 = vld [vmem:[%s1 + $0x17c] sm:$0xf]
  %v382 = vld [vmem:[%s1 + $0x180] sm:$0xf]
  %v383 = vld [vmem:[%s1 + $0x184] sm:$0xf]
  %v384 = vld [vmem:[%s1 + $0x188] sm:$0xf]
  %v385 = vld [vmem:[%s1 + $0x18c] sm:$0xf]
  %v386 = vld [vmem:[%s1 + $0x190] sm:$0xf]
  %v387 = vld [vmem:[%s1 + $0x194] sm:$0xf]
  %v388 = vld [vmem:[%s1 + $0x198] sm:$0xf]
  %v389 = vld [vmem:[%s1 + $0x19c] sm:$0xf]
  %v390 = vld [vmem:[%s1 + $0x1a0] sm:$0xf]
  %v391 = vld [vmem:[%s1 + $0x1a4] sm:$0xf]
  %v392 = vld [vmem:[%s1 + $0x1a8] sm:$0xf]
  %v393 = vld [vmem:[%s1 + $0x1ac] sm:$0xf]
  %v394 = vld [vmem:[%s1 + $0x1b0] sm:$0xf]
  %v395 = vld [vmem:[%s1 + $0x1b4] sm:$0xf]
  %v396 = vld [vmem:[%s1 + $0x1b8] sm:$0xf]
  %v397 = vld [vmem:[%s1 + $0x1bc] sm:$0xf]
  %v398 = vld [vmem:[%s1 + $0x1c0] sm:$0xf]
  %v399 = vld [vmem:[%s1 + $0x1c4] sm:$0xf]
  %v400 = vld [vmem:[%s1 + $0x1c8] sm:$0xf]
  %v401 = vld [vmem:[%s1 + $0x1cc] sm:$0xf]
  %v402 = vld [vmem:[%s1 + $0x1d0] sm:$0xf]
  %v403 = vld [vmem:[%s1 + $0x1d4] sm:$0xf]
  %v404 = vld [vmem:[%s1 + $0x1d8] sm:$0xf]
  %v405 = vld [vmem:[%s1 + $0x1dc] sm:$0xf]
  %v406 = vld [vmem:[%s1 + $0x1e0] sm:$0xf]
  %v407 = vld [vmem:[%s1 + $0x1e4] sm:$0xf]
  %v408 = vld [vmem:[%s1 + $0x1e8] sm:$0xf]
  %v409 = vld [vmem:[%s1 + $0x1ec] sm:$0xf]
  %v410 = vld [vmem:[%s1 + $0x1f0] sm:$0xf]
  %v411 = vld [vmem:[%s1 + $0x1f4] sm:$0xf]
  %v412 = vld [vmem:[%s1 + $0x1f8] sm:$0xf]
  %v413 = vld [vmem:[%s1 + $0x1fc] sm:$0xf]
  %v670 = vunpack.c.l.b16 %v30
  %v671 = vunpack.c.h.b16 %v30
  %v672 = vunpack.c.l.b16 %v31
  %v673 = vunpack.c.h.b16 %v31
  %v674 = vunpack.c.l.b16 %v32
  %v675 = vunpack.c.h.b16 %v32
  %v676 = vunpack.c.l.b16 %v33
  %v677 = vunpack.c.h.b16 %v33
  %v678 = vunpack.c.l.b16 %v34
  %v679 = vunpack.c.h.b16 %v34
  %v680 = vunpack.c.l.b16 %v35
  %v681 = vunpack.c.h.b16 %v35
  %v682 = vunpack.c.l.b16 %v36
  %v683 = vunpack.c.h.b16 %v36
  %v684 = vunpack.c.l.b16 %v37
  %v685 = vunpack.c.h.b16 %v37
  %v686 = vunpack.c.l.b16 %v38
  %v687 = vunpack.c.h.b16 %v38
  %v688 = vunpack.c.l.b16 %v39
  %v689 = vunpack.c.h.b16 %v39
  %v690 = vunpack.c.l.b16 %v40
  %v691 = vunpack.c.h.b16 %v40
  %v692 = vunpack.c.l.b16 %v41
  %v693 = vunpack.c.h.b16 %v41
  %v694 = vunpack.c.l.b16 %v42
  %v695 = vunpack.c.h.b16 %v42
  %v696 = vunpack.c.l.b16 %v43
  %v697 = vunpack.c.h.b16 %v43
  %v698 = vunpack.c.l.b16 %v44
  %v699 = vunpack.c.h.b16 %v44
  %v700 = vunpack.c.l.b16 %v45
  %v701 = vunpack.c.h.b16 %v45
  %v702 = vunpack.c.l.b16 %v46
  %v703 = vunpack.c.h.b16 %v46
  %v704 = vunpack.c.l.b16 %v47
  %v705 = vunpack.c.h.b16 %v47
  %v706 = vunpack.c.l.b16 %v48
  %v707 = vunpack.c.h.b16 %v48
  %v708 = vunpack.c.l.b16 %v49
  %v709 = vunpack.c.h.b16 %v49
  %v710 = vunpack.c.l.b16 %v50
  %v711 = vunpack.c.h.b16 %v50
  %v712 = vunpack.c.l.b16 %v51
  %v713 = vunpack.c.h.b16 %v51
  %v714 = vunpack.c.l.b16 %v52
  %v715 = vunpack.c.h.b16 %v52
  %v716 = vunpack.c.l.b16 %v53
  %v717 = vunpack.c.h.b16 %v53
  %v718 = vunpack.c.l.b16 %v54
  %v719 = vunpack.c.h.b16 %v54
  %v720 = vunpack.c.l.b16 %v55
  %v721 = vunpack.c.h.b16 %v55
  %v722 = vunpack.c.l.b16 %v56
  %v723 = vunpack.c.h.b16 %v56
  %v724 = vunpack.c.l.b16 %v57
  %v725 = vunpack.c.h.b16 %v57
  %v726 = vunpack.c.l.b16 %v58
  %v727 = vunpack.c.h.b16 %v58
  %v728 = vunpack.c.l.b16 %v59
  %v729 = vunpack.c.h.b16 %v59
  %v730 = vunpack.c.l.b16 %v60
  %v731 = vunpack.c.h.b16 %v60
  %v732 = vunpack.c.l.b16 %v61
  %v733 = vunpack.c.h.b16 %v61
  %v734 = vunpack.c.l.b16 %v62
  %v735 = vunpack.c.h.b16 %v62
  %v736 = vunpack.c.l.b16 %v63
  %v737 = vunpack.c.h.b16 %v63
  %v738 = vunpack.c.l.b16 %v64
  %v739 = vunpack.c.h.b16 %v64
  %v740 = vunpack.c.l.b16 %v65
  %v741 = vunpack.c.h.b16 %v65
  %v742 = vunpack.c.l.b16 %v66
  %v743 = vunpack.c.h.b16 %v66
  %v744 = vunpack.c.l.b16 %v67
  %v745 = vunpack.c.h.b16 %v67
  %v746 = vunpack.c.l.b16 %v68
  %v747 = vunpack.c.h.b16 %v68
  %v748 = vunpack.c.l.b16 %v69
  %v749 = vunpack.c.h.b16 %v69
  %v750 = vunpack.c.l.b16 %v70
  %v751 = vunpack.c.h.b16 %v70
  %v752 = vunpack.c.l.b16 %v71
  %v753 = vunpack.c.h.b16 %v71
  %v754 = vunpack.c.l.b16 %v72
  %v755 = vunpack.c.h.b16 %v72
  %v756 = vunpack.c.l.b16 %v73
  %v757 = vunpack.c.h.b16 %v73
  %v758 = vunpack.c.l.b16 %v74
  %v759 = vunpack.c.h.b16 %v74
  %v760 = vunpack.c.l.b16 %v75
  %v761 = vunpack.c.h.b16 %v75
  %v762 = vunpack.c.l.b16 %v76
  %v763 = vunpack.c.h.b16 %v76
  %v764 = vunpack.c.l.b16 %v77
  %v765 = vunpack.c.h.b16 %v77
  %v766 = vunpack.c.l.b16 %v78
  %v767 = vunpack.c.h.b16 %v78
  %v768 = vunpack.c.l.b16 %v79
  %v769 = vunpack.c.h.b16 %v79
  %v770 = vunpack.c.l.b16 %v80
  %v771 = vunpack.c.h.b16 %v80
  %v772 = vunpack.c.l.b16 %v81
  %v773 = vunpack.c.h.b16 %v81
  %v774 = vunpack.c.l.b16 %v82
  %v775 = vunpack.c.h.b16 %v82
  %v776 = vunpack.c.l.b16 %v83
  %v777 = vunpack.c.h.b16 %v83
  %v778 = vunpack.c.l.b16 %v84
  %v779 = vunpack.c.h.b16 %v84
  %v780 = vunpack.c.l.b16 %v85
  %v781 = vunpack.c.h.b16 %v85
  %v782 = vunpack.c.l.b16 %v86
  %v783 = vunpack.c.h.b16 %v86
  %v784 = vunpack.c.l.b16 %v87
  %v785 = vunpack.c.h.b16 %v87
  %v786 = vunpack.c.l.b16 %v88
  %v787 = vunpack.c.h.b16 %v88
  %v788 = vunpack.c.l.b16 %v89
  %v789 = vunpack.c.h.b16 %v89
  %v790 = vunpack.c.l.b16 %v90
  %v791 = vunpack.c.h.b16 %v90
  %v792 = vunpack.c.l.b16 %v91
  %v793 = vunpack.c.h.b16 %v91
  %v794 = vunpack.c.l.b16 %v92
  %v795 = vunpack.c.h.b16 %v92
  %v796 = vunpack.c.l.b16 %v93
  %v797 = vunpack.c.h.b16 %v93
  %v798 = vunpack.c.l.b16 %v94
  %v799 = vunpack.c.h.b16 %v94
  %v800 = vunpack.c.l.b16 %v95
  %v801 = vunpack.c.h.b16 %v95
  %v802 = vunpack.c.l.b16 %v96
  %v803 = vunpack.c.h.b16 %v96
  %v804 = vunpack.c.l.b16 %v97
  %v805 = vunpack.c.h.b16 %v97
  %v806 = vunpack.c.l.b16 %v98
  %v807 = vunpack.c.h.b16 %v98
  %v808 = vunpack.c.l.b16 %v99
  %v809 = vunpack.c.h.b16 %v99
  %v810 = vunpack.c.l.b16 %v100
  %v811 = vunpack.c.h.b16 %v100
  %v812 = vunpack.c.l.b16 %v101
  %v813 = vunpack.c.h.b16 %v101
  %v814 = vunpack.c.l.b16 %v102
  %v815 = vunpack.c.h.b16 %v102
  %v816 = vunpack.c.l.b16 %v103
  %v817 = vunpack.c.h.b16 %v103
  %v818 = vunpack.c.l.b16 %v104
  %v819 = vunpack.c.h.b16 %v104
  %v820 = vunpack.c.l.b16 %v105
  %v821 = vunpack.c.h.b16 %v105
  %v822 = vunpack.c.l.b16 %v106
  %v823 = vunpack.c.h.b16 %v106
  %v824 = vunpack.c.l.b16 %v107
  %v825 = vunpack.c.h.b16 %v107
  %v826 = vunpack.c.l.b16 %v108
  %v827 = vunpack.c.h.b16 %v108
  %v828 = vunpack.c.l.b16 %v109
  %v829 = vunpack.c.h.b16 %v109
  %v830 = vunpack.c.l.b16 %v110
  %v831 = vunpack.c.h.b16 %v110
  %v832 = vunpack.c.l.b16 %v111
  %v833 = vunpack.c.h.b16 %v111
  %v834 = vunpack.c.l.b16 %v112
  %v835 = vunpack.c.h.b16 %v112
  %v836 = vunpack.c.l.b16 %v113
  %v837 = vunpack.c.h.b16 %v113
  %v838 = vunpack.c.l.b16 %v114
  %v839 = vunpack.c.h.b16 %v114
  %v840 = vunpack.c.l.b16 %v115
  %v841 = vunpack.c.h.b16 %v115
  %v842 = vunpack.c.l.b16 %v116
  %v843 = vunpack.c.h.b16 %v116
  %v844 = vunpack.c.l.b16 %v117
  %v845 = vunpack.c.h.b16 %v117
  %v846 = vunpack.c.l.b16 %v118
  %v847 = vunpack.c.h.b16 %v118
  %v848 = vunpack.c.l.b16 %v119
  %v849 = vunpack.c.h.b16 %v119
  %v850 = vunpack.c.l.b16 %v120
  %v851 = vunpack.c.h.b16 %v120
  %v852 = vunpack.c.l.b16 %v121
  %v853 = vunpack.c.h.b16 %v121
  %v854 = vunpack.c.l.b16 %v122
  %v855 = vunpack.c.h.b16 %v122
  %v856 = vunpack.c.l.b16 %v123
  %v857 = vunpack.c.h.b16 %v123
  %v858 = vunpack.c.l.b16 %v124
  %v859 = vunpack.c.h.b16 %v124
  %v860 = vunpack.c.l.b16 %v125
  %v861 = vunpack.c.h.b16 %v125
  %v862 = vunpack.c.l.b16 %v126
  %v863 = vunpack.c.h.b16 %v126
  %v864 = vunpack.c.l.b16 %v127
  %v865 = vunpack.c.h.b16 %v127
  %v866 = vunpack.c.l.b16 %v128
  %v867 = vunpack.c.h.b16 %v128
  %v868 = vunpack.c.l.b16 %v129
  %v869 = vunpack.c.h.b16 %v129
  %v870 = vunpack.c.l.b16 %v130
  %v871 = vunpack.c.h.b16 %v130
  %v872 = vunpack.c.l.b16 %v131
  %v873 = vunpack.c.h.b16 %v131
  %v874 = vunpack.c.l.b16 %v132
  %v875 = vunpack.c.h.b16 %v132
  %v876 = vunpack.c.l.b16 %v133
  %v877 = vunpack.c.h.b16 %v133
  %v878 = vunpack.c.l.b16 %v134
  %v879 = vunpack.c.h.b16 %v134
  %v880 = vunpack.c.l.b16 %v135
  %v881 = vunpack.c.h.b16 %v135
  %v882 = vunpack.c.l.b16 %v136
  %v883 = vunpack.c.h.b16 %v136
  %v884 = vunpack.c.l.b16 %v137
  %v885 = vunpack.c.h.b16 %v137
  %v886 = vunpack.c.l.b16 %v138
  %v887 = vunpack.c.h.b16 %v138
  %v888 = vunpack.c.l.b16 %v139
  %v889 = vunpack.c.h.b16 %v139
  %v890 = vunpack.c.l.b16 %v140
  %v891 = vunpack.c.h.b16 %v140
  %v892 = vunpack.c.l.b16 %v141
  %v893 = vunpack.c.h.b16 %v141
  %v894 = vunpack.c.l.b16 %v142
  %v895 = vunpack.c.h.b16 %v142
  %v896 = vunpack.c.l.b16 %v143
  %v897 = vunpack.c.h.b16 %v143
  %v898 = vunpack.c.l.b16 %v144
  %v899 = vunpack.c.h.b16 %v144
  %v900 = vunpack.c.l.b16 %v145
  %v901 = vunpack.c.h.b16 %v145
  %v902 = vunpack.c.l.b16 %v146
  %v903 = vunpack.c.h.b16 %v146
  %v904 = vunpack.c.l.b16 %v147
  %v905 = vunpack.c.h.b16 %v147
  %v906 = vunpack.c.l.b16 %v148
  %v907 = vunpack.c.h.b16 %v148
  %v908 = vunpack.c.l.b16 %v149
  %v909 = vunpack.c.h.b16 %v149
  %v910 = vunpack.c.l.b16 %v150
  %v911 = vunpack.c.h.b16 %v150
  %v912 = vunpack.c.l.b16 %v151
  %v913 = vunpack.c.h.b16 %v151
  %v914 = vunpack.c.l.b16 %v152
  %v915 = vunpack.c.h.b16 %v152
  %v916 = vunpack.c.l.b16 %v153
  %v917 = vunpack.c.h.b16 %v153
  %v918 = vunpack.c.l.b16 %v154
  %v919 = vunpack.c.h.b16 %v154
  %v920 = vunpack.c.l.b16 %v155
  %v921 = vunpack.c.h.b16 %v155
  %v922 = vunpack.c.l.b16 %v156
  %v923 = vunpack.c.h.b16 %v156
  %v924 = vunpack.c.l.b16 %v157
  %v925 = vunpack.c.h.b16 %v157
  %v926 = vunpack.c.l.b16 %v158
  %v927 = vunpack.c.h.b16 %v158
  %v928 = vunpack.c.l.b16 %v159
  %v929 = vunpack.c.h.b16 %v159
  %v930 = vunpack.c.l.b16 %v160
  %v931 = vunpack.c.h.b16 %v160
  %v932 = vunpack.c.l.b16 %v161
  %v933 = vunpack.c.h.b16 %v161
  %v934 = vunpack.c.l.b16 %v162
  %v935 = vunpack.c.h.b16 %v162
  %v936 = vunpack.c.l.b16 %v163
  %v937 = vunpack.c.h.b16 %v163
  %v938 = vunpack.c.l.b16 %v164
  %v939 = vunpack.c.h.b16 %v164
  %v940 = vunpack.c.l.b16 %v165
  %v941 = vunpack.c.h.b16 %v165
  %v942 = vunpack.c.l.b16 %v166
  %v943 = vunpack.c.h.b16 %v166
  %v944 = vunpack.c.l.b16 %v167
  %v945 = vunpack.c.h.b16 %v167
  %v946 = vunpack.c.l.b16 %v168
  %v947 = vunpack.c.h.b16 %v168
  %v948 = vunpack.c.l.b16 %v169
  %v949 = vunpack.c.h.b16 %v169
  %v950 = vunpack.c.l.b16 %v170
  %v951 = vunpack.c.h.b16 %v170
  %v952 = vunpack.c.l.b16 %v171
  %v953 = vunpack.c.h.b16 %v171
  %v954 = vunpack.c.l.b16 %v172
  %v955 = vunpack.c.h.b16 %v172
  %v956 = vunpack.c.l.b16 %v173
  %v957 = vunpack.c.h.b16 %v173
  %v958 = vunpack.c.l.b16 %v174
  %v959 = vunpack.c.h.b16 %v174
  %v960 = vunpack.c.l.b16 %v175
  %v961 = vunpack.c.h.b16 %v175
  %v962 = vunpack.c.l.b16 %v176
  %v963 = vunpack.c.h.b16 %v176
  %v964 = vunpack.c.l.b16 %v177
  %v965 = vunpack.c.h.b16 %v177
  %v966 = vunpack.c.l.b16 %v178
  %v967 = vunpack.c.h.b16 %v178
  %v968 = vunpack.c.l.b16 %v179
  %v969 = vunpack.c.h.b16 %v179
  %v970 = vunpack.c.l.b16 %v180
  %v971 = vunpack.c.h.b16 %v180
  %v972 = vunpack.c.l.b16 %v181
  %v973 = vunpack.c.h.b16 %v181
  %v974 = vunpack.c.l.b16 %v182
  %v975 = vunpack.c.h.b16 %v182
  %v976 = vunpack.c.l.b16 %v183
  %v977 = vunpack.c.h.b16 %v183
  %v978 = vunpack.c.l.b16 %v184
  %v979 = vunpack.c.h.b16 %v184
  %v980 = vunpack.c.l.b16 %v185
  %v981 = vunpack.c.h.b16 %v185
  %v982 = vunpack.c.l.b16 %v186
  %v983 = vunpack.c.h.b16 %v186
  %v984 = vunpack.c.l.b16 %v187
  %v985 = vunpack.c.h.b16 %v187
  %v986 = vunpack.c.l.b16 %v188
  %v987 = vunpack.c.h.b16 %v188
  %v988 = vunpack.c.l.b16 %v189
  %v989 = vunpack.c.h.b16 %v189
  %v990 = vunpack.c.l.b16 %v190
  %v991 = vunpack.c.h.b16 %v190
  %v992 = vunpack.c.l.b16 %v191
  %v993 = vunpack.c.h.b16 %v191
  %v994 = vunpack.c.l.b16 %v192
  %v995 = vunpack.c.h.b16 %v192
  %v996 = vunpack.c.l.b16 %v193
  %v997 = vunpack.c.h.b16 %v193
  %v998 = vunpack.c.l.b16 %v194
  %v999 = vunpack.c.h.b16 %v194
  %v1000 = vunpack.c.l.b16 %v195
  %v1001 = vunpack.c.h.b16 %v195
  %v1002 = vunpack.c.l.b16 %v196
  %v1003 = vunpack.c.h.b16 %v196
  %v1004 = vunpack.c.l.b16 %v197
  %v1005 = vunpack.c.h.b16 %v197
  %v1006 = vunpack.c.l.b16 %v198
  %v1007 = vunpack.c.h.b16 %v198
  %v1008 = vunpack.c.l.b16 %v199
  %v1009 = vunpack.c.h.b16 %v199
  %v1010 = vunpack.c.l.b16 %v200
  %v1011 = vunpack.c.h.b16 %v200
  %v1012 = vunpack.c.l.b16 %v201
  %v1013 = vunpack.c.h.b16 %v201
  %v1014 = vunpack.c.l.b16 %v202
  %v1015 = vunpack.c.h.b16 %v202
  %v1016 = vunpack.c.l.b16 %v203
  %v1017 = vunpack.c.h.b16 %v203
  %v1018 = vunpack.c.l.b16 %v204
  %v1019 = vunpack.c.h.b16 %v204
  %v1020 = vunpack.c.l.b16 %v205
  %v1021 = vunpack.c.h.b16 %v205
  %v1022 = vunpack.c.l.b16 %v206
  %v1023 = vunpack.c.h.b16 %v206
  %v1024 = vunpack.c.l.b16 %v207
  %v1025 = vunpack.c.h.b16 %v207
  %v1026 = vunpack.c.l.b16 %v208
  %v1027 = vunpack.c.h.b16 %v208
  %v1028 = vunpack.c.l.b16 %v209
  %v1029 = vunpack.c.h.b16 %v209
  %v1030 = vunpack.c.l.b16 %v210
  %v1031 = vunpack.c.h.b16 %v210
  %v1032 = vunpack.c.l.b16 %v211
  %v1033 = vunpack.c.h.b16 %v211
  %v1034 = vunpack.c.l.b16 %v212
  %v1035 = vunpack.c.h.b16 %v212
  %v1036 = vunpack.c.l.b16 %v213
  %v1037 = vunpack.c.h.b16 %v213
  %v1038 = vunpack.c.l.b16 %v214
  %v1039 = vunpack.c.h.b16 %v214
  %v1040 = vunpack.c.l.b16 %v215
  %v1041 = vunpack.c.h.b16 %v215
  %v1042 = vunpack.c.l.b16 %v216
  %v1043 = vunpack.c.h.b16 %v216
  %v1044 = vunpack.c.l.b16 %v217
  %v1045 = vunpack.c.h.b16 %v217
  %v1046 = vunpack.c.l.b16 %v218
  %v1047 = vunpack.c.h.b16 %v218
  %v1048 = vunpack.c.l.b16 %v219
  %v1049 = vunpack.c.h.b16 %v219
  %v1050 = vunpack.c.l.b16 %v220
  %v1051 = vunpack.c.h.b16 %v220
  %v1052 = vunpack.c.l.b16 %v221
  %v1053 = vunpack.c.h.b16 %v221
  %v1054 = vunpack.c.l.b16 %v222
  %v1055 = vunpack.c.h.b16 %v222
  %v1056 = vunpack.c.l.b16 %v223
  %v1057 = vunpack.c.h.b16 %v223
  %v1058 = vunpack.c.l.b16 %v224
  %v1059 = vunpack.c.h.b16 %v224
  %v1060 = vunpack.c.l.b16 %v225
  %v1061 = vunpack.c.h.b16 %v225
  %v1062 = vunpack.c.l.b16 %v226
  %v1063 = vunpack.c.h.b16 %v226
  %v1064 = vunpack.c.l.b16 %v227
  %v1065 = vunpack.c.h.b16 %v227
  %v1066 = vunpack.c.l.b16 %v228
  %v1067 = vunpack.c.h.b16 %v228
  %v1068 = vunpack.c.l.b16 %v229
  %v1069 = vunpack.c.h.b16 %v229
  %v1070 = vunpack.c.l.b16 %v230
  %v1071 = vunpack.c.h.b16 %v230
  %v1072 = vunpack.c.l.b16 %v231
  %v1073 = vunpack.c.h.b16 %v231
  %v1074 = vunpack.c.l.b16 %v232
  %v1075 = vunpack.c.h.b16 %v232
  %v1076 = vunpack.c.l.b16 %v233
  %v1077 = vunpack.c.h.b16 %v233
  %v1078 = vunpack.c.l.b16 %v234
  %v1079 = vunpack.c.h.b16 %v234
  %v1080 = vunpack.c.l.b16 %v235
  %v1081 = vunpack.c.h.b16 %v235
  %v1082 = vunpack.c.l.b16 %v236
  %v1083 = vunpack.c.h.b16 %v236
  %v1084 = vunpack.c.l.b16 %v237
  %v1085 = vunpack.c.h.b16 %v237
  %v1086 = vunpack.c.l.b16 %v238
  %v1087 = vunpack.c.h.b16 %v238
  %v1088 = vunpack.c.l.b16 %v239
  %v1089 = vunpack.c.h.b16 %v239
  %v1090 = vunpack.c.l.b16 %v240
  %v1091 = vunpack.c.h.b16 %v240
  %v1092 = vunpack.c.l.b16 %v241
  %v1093 = vunpack.c.h.b16 %v241
  %v1094 = vunpack.c.l.b16 %v242
  %v1095 = vunpack.c.h.b16 %v242
  %v1096 = vunpack.c.l.b16 %v243
  %v1097 = vunpack.c.h.b16 %v243
  %v1098 = vunpack.c.l.b16 %v244
  %v1099 = vunpack.c.h.b16 %v244
  %v1100 = vunpack.c.l.b16 %v245
  %v1101 = vunpack.c.h.b16 %v245
  %v1102 = vunpack.c.l.b16 %v246
  %v1103 = vunpack.c.h.b16 %v246
  %v1104 = vunpack.c.l.b16 %v247
  %v1105 = vunpack.c.h.b16 %v247
  %v1106 = vunpack.c.l.b16 %v248
  %v1107 = vunpack.c.h.b16 %v248
  %v1108 = vunpack.c.l.b16 %v249
  %v1109 = vunpack.c.h.b16 %v249
  %v1110 = vunpack.c.l.b16 %v250
  %v1111 = vunpack.c.h.b16 %v250
  %v1112 = vunpack.c.l.b16 %v251
  %v1113 = vunpack.c.h.b16 %v251
  %v1114 = vunpack.c.l.b16 %v252
  %v1115 = vunpack.c.h.b16 %v252
  %v1116 = vunpack.c.l.b16 %v253
  %v1117 = vunpack.c.h.b16 %v253
  %v1118 = vunpack.c.l.b16 %v254
  %v1119 = vunpack.c.h.b16 %v254
  %v1120 = vunpack.c.l.b16 %v255
  %v1121 = vunpack.c.h.b16 %v255
  %v1122 = vunpack.c.l.b16 %v256
  %v1123 = vunpack.c.h.b16 %v256
  %v1124 = vunpack.c.l.b16 %v257
  %v1125 = vunpack.c.h.b16 %v257
  %v1126 = vunpack.c.l.b16 %v258
  %v1127 = vunpack.c.h.b16 %v258
  %v1128 = vunpack.c.l.b16 %v259
  %v1129 = vunpack.c.h.b16 %v259
  %v1130 = vunpack.c.l.b16 %v260
  %v1131 = vunpack.c.h.b16 %v260
  %v1132 = vunpack.c.l.b16 %v261
  %v1133 = vunpack.c.h.b16 %v261
  %v1134 = vunpack.c.l.b16 %v262
  %v1135 = vunpack.c.h.b16 %v262
  %v1136 = vunpack.c.l.b16 %v263
  %v1137 = vunpack.c.h.b16 %v263
  %v1138 = vunpack.c.l.b16 %v264
  %v1139 = vunpack.c.h.b16 %v264
  %v1140 = vunpack.c.l.b16 %v265
  %v1141 = vunpack.c.h.b16 %v265
  %v1142 = vunpack.c.l.b16 %v266
  %v1143 = vunpack.c.h.b16 %v266
  %v1144 = vunpack.c.l.b16 %v267
  %v1145 = vunpack.c.h.b16 %v267
  %v1146 = vunpack.c.l.b16 %v268
  %v1147 = vunpack.c.h.b16 %v268
  %v1148 = vunpack.c.l.b16 %v269
  %v1149 = vunpack.c.h.b16 %v269
  %v1150 = vunpack.c.l.b16 %v270
  %v1151 = vunpack.c.h.b16 %v270
  %v1152 = vunpack.c.l.b16 %v271
  %v1153 = vunpack.c.h.b16 %v271
  %v1154 = vunpack.c.l.b16 %v272
  %v1155 = vunpack.c.h.b16 %v272
  %v1156 = vunpack.c.l.b16 %v273
  %v1157 = vunpack.c.h.b16 %v273
  %v1158 = vunpack.c.l.b16 %v274
  %v1159 = vunpack.c.h.b16 %v274
  %v1160 = vunpack.c.l.b16 %v275
  %v1161 = vunpack.c.h.b16 %v275
  %v1162 = vunpack.c.l.b16 %v276
  %v1163 = vunpack.c.h.b16 %v276
  %v1164 = vunpack.c.l.b16 %v277
  %v1165 = vunpack.c.h.b16 %v277
  %v1166 = vunpack.c.l.b16 %v278
  %v1167 = vunpack.c.h.b16 %v278
  %v1168 = vunpack.c.l.b16 %v279
  %v1169 = vunpack.c.h.b16 %v279
  %v1170 = vunpack.c.l.b16 %v280
  %v1171 = vunpack.c.h.b16 %v280
  %v1172 = vunpack.c.l.b16 %v281
  %v1173 = vunpack.c.h.b16 %v281
  %v1174 = vunpack.c.l.b16 %v282
  %v1175 = vunpack.c.h.b16 %v282
  %v1176 = vunpack.c.l.b16 %v283
  %v1177 = vunpack.c.h.b16 %v283
  %v1178 = vunpack.c.l.b16 %v284
  %v1179 = vunpack.c.h.b16 %v284
  %v1180 = vunpack.c.l.b16 %v285
  %v1181 = vunpack.c.h.b16 %v285
  %v1182 = vpack.c.b16 %v678, %v670
  %v1183 = vpack.c.b16 %v679, %v671
  %v1184 = vpack.c.b16 %v680, %v672
  %v1185 = vpack.c.b16 %v681, %v673
  %v1186 = vpack.c.b16 %v682, %v674
  %v1187 = vpack.c.b16 %v683, %v675
  %v1188 = vpack.c.b16 %v684, %v676
  %v1189 = vpack.c.b16 %v685, %v677
  %v1190 = vpack.c.b16 %v694, %v686
  %v1191 = vpack.c.b16 %v695, %v687
  %v1192 = vpack.c.b16 %v696, %v688
  %v1193 = vpack.c.b16 %v697, %v689
  %v1194 = vpack.c.b16 %v698, %v690
  %v1195 = vpack.c.b16 %v699, %v691
  %v1196 = vpack.c.b16 %v700, %v692
  %v1197 = vpack.c.b16 %v701, %v693
  %v1198 = vpack.c.b16 %v710, %v702
  %v1199 = vpack.c.b16 %v711, %v703
  %v1200 = vpack.c.b16 %v712, %v704
  %v1201 = vpack.c.b16 %v713, %v705
  %v1202 = vpack.c.b16 %v714, %v706
  %v1203 = vpack.c.b16 %v715, %v707
  %v1204 = vpack.c.b16 %v716, %v708
  %v1205 = vpack.c.b16 %v717, %v709
  %v1206 = vpack.c.b16 %v726, %v718
  %v1207 = vpack.c.b16 %v727, %v719
  %v1208 = vpack.c.b16 %v728, %v720
  %v1209 = vpack.c.b16 %v729, %v721
  %v1210 = vpack.c.b16 %v730, %v722
  %v1211 = vpack.c.b16 %v731, %v723
  %v1212 = vpack.c.b16 %v732, %v724
  %v1213 = vpack.c.b16 %v733, %v725
  %v1214 = vpack.c.b16 %v742, %v734
  %v1215 = vpack.c.b16 %v743, %v735
  %v1216 = vpack.c.b16 %v744, %v736
  %v1217 = vpack.c.b16 %v745, %v737
  %v1218 = vpack.c.b16 %v746, %v738
  %v1219 = vpack.c.b16 %v747, %v739
  %v1220 = vpack.c.b16 %v748, %v740
  %v1221 = vpack.c.b16 %v749, %v741
  %v1222 = vpack.c.b16 %v758, %v750
  %v1223 = vpack.c.b16 %v759, %v751
  %v1224 = vpack.c.b16 %v760, %v752
  %v1225 = vpack.c.b16 %v761, %v753
  %v1226 = vpack.c.b16 %v762, %v754
  %v1227 = vpack.c.b16 %v763, %v755
  %v1228 = vpack.c.b16 %v764, %v756
  %v1229 = vpack.c.b16 %v765, %v757
  %v1230 = vpack.c.b16 %v774, %v766
  %v1231 = vpack.c.b16 %v775, %v767
  %v1232 = vpack.c.b16 %v776, %v768
  %v1233 = vpack.c.b16 %v777, %v769
  %v1234 = vpack.c.b16 %v778, %v770
  %v1235 = vpack.c.b16 %v779, %v771
  %v1236 = vpack.c.b16 %v780, %v772
  %v1237 = vpack.c.b16 %v781, %v773
  %v1238 = vpack.c.b16 %v790, %v782
  %v1239 = vpack.c.b16 %v791, %v783
  %v1240 = vpack.c.b16 %v792, %v784
  %v1241 = vpack.c.b16 %v793, %v785
  %v1242 = vpack.c.b16 %v794, %v786
  %v1243 = vpack.c.b16 %v795, %v787
  %v1244 = vpack.c.b16 %v796, %v788
  %v1245 = vpack.c.b16 %v797, %v789
  %v1246 = vpack.c.b16 %v806, %v798
  %v1247 = vpack.c.b16 %v807, %v799
  %v1248 = vpack.c.b16 %v808, %v800
  %v1249 = vpack.c.b16 %v809, %v801
  %v1250 = vpack.c.b16 %v810, %v802
  %v1251 = vpack.c.b16 %v811, %v803
  %v1252 = vpack.c.b16 %v812, %v804
  %v1253 = vpack.c.b16 %v813, %v805
  %v1254 = vpack.c.b16 %v822, %v814
  %v1255 = vpack.c.b16 %v823, %v815
  %v1256 = vpack.c.b16 %v824, %v816
  %v1257 = vpack.c.b16 %v825, %v817
  %v1258 = vpack.c.b16 %v826, %v818
  %v1259 = vpack.c.b16 %v827, %v819
  %v1260 = vpack.c.b16 %v828, %v820
  %v1261 = vpack.c.b16 %v829, %v821
  %v1262 = vpack.c.b16 %v838, %v830
  %v1263 = vpack.c.b16 %v839, %v831
  %v1264 = vpack.c.b16 %v840, %v832
  %v1265 = vpack.c.b16 %v841, %v833
  %v1266 = vpack.c.b16 %v842, %v834
  %v1267 = vpack.c.b16 %v843, %v835
  %v1268 = vpack.c.b16 %v844, %v836
  %v1269 = vpack.c.b16 %v845, %v837
  %v1270 = vpack.c.b16 %v854, %v846
  %v1271 = vpack.c.b16 %v855, %v847
  %v1272 = vpack.c.b16 %v856, %v848
  %v1273 = vpack.c.b16 %v857, %v849
  %v1274 = vpack.c.b16 %v858, %v850
  %v1275 = vpack.c.b16 %v859, %v851
  %v1276 = vpack.c.b16 %v860, %v852
  %v1277 = vpack.c.b16 %v861, %v853
  %v1278 = vpack.c.b16 %v870, %v862
  %v1279 = vpack.c.b16 %v871, %v863
  %v1280 = vpack.c.b16 %v872, %v864
  %v1281 = vpack.c.b16 %v873, %v865
  %v1282 = vpack.c.b16 %v874, %v866
  %v1283 = vpack.c.b16 %v875, %v867
  %v1284 = vpack.c.b16 %v876, %v868
  %v1285 = vpack.c.b16 %v877, %v869
  %v1286 = vpack.c.b16 %v886, %v878
  %v1287 = vpack.c.b16 %v887, %v879
  %v1288 = vpack.c.b16 %v888, %v880
  %v1289 = vpack.c.b16 %v889, %v881
  %v1290 = vpack.c.b16 %v890, %v882
  %v1291 = vpack.c.b16 %v891, %v883
  %v1292 = vpack.c.b16 %v892, %v884
  %v1293 = vpack.c.b16 %v893, %v885
  %v1294 = vpack.c.b16 %v902, %v894
  %v1295 = vpack.c.b16 %v903, %v895
  %v1296 = vpack.c.b16 %v904, %v896
  %v1297 = vpack.c.b16 %v905, %v897
  %v1298 = vpack.c.b16 %v906, %v898
  %v1299 = vpack.c.b16 %v907, %v899
  %v1300 = vpack.c.b16 %v908, %v900
  %v1301 = vpack.c.b16 %v909, %v901
  %v1302 = vpack.c.b16 %v918, %v910
  %v1303 = vpack.c.b16 %v919, %v911
  %v1304 = vpack.c.b16 %v920, %v912
  %v1305 = vpack.c.b16 %v921, %v913
  %v1306 = vpack.c.b16 %v922, %v914
  %v1307 = vpack.c.b16 %v923, %v915
  %v1308 = vpack.c.b16 %v924, %v916
  %v1309 = vpack.c.b16 %v925, %v917
  %v1310 = vpack.c.b16 %v934, %v926
  %v1311 = vpack.c.b16 %v935, %v927
  %v1312 = vpack.c.b16 %v936, %v928
  %v1313 = vpack.c.b16 %v937, %v929
  %v1314 = vpack.c.b16 %v938, %v930
  %v1315 = vpack.c.b16 %v939, %v931
  %v1316 = vpack.c.b16 %v940, %v932
  %v1317 = vpack.c.b16 %v941, %v933
  %v1318 = vpack.c.b16 %v950, %v942
  %v1319 = vpack.c.b16 %v951, %v943
  %v1320 = vpack.c.b16 %v952, %v944
  %v1321 = vpack.c.b16 %v953, %v945
  %v1322 = vpack.c.b16 %v954, %v946
  %v1323 = vpack.c.b16 %v955, %v947
  %v1324 = vpack.c.b16 %v956, %v948
  %v1325 = vpack.c.b16 %v957, %v949
  %v1326 = vpack.c.b16 %v966, %v958
  %v1327 = vpack.c.b16 %v967, %v959
  %v1328 = vpack.c.b16 %v968, %v960
  %v1329 = vpack.c.b16 %v969, %v961
  %v1330 = vpack.c.b16 %v970, %v962
  %v1331 = vpack.c.b16 %v971, %v963
  %v1332 = vpack.c.b16 %v972, %v964
  %v1333 = vpack.c.b16 %v973, %v965
  %v1334 = vpack.c.b16 %v982, %v974
  %v1335 = vpack.c.b16 %v983, %v975
  %v1336 = vpack.c.b16 %v984, %v976
  %v1337 = vpack.c.b16 %v985, %v977
  %v1338 = vpack.c.b16 %v986, %v978
  %v1339 = vpack.c.b16 %v987, %v979
  %v1340 = vpack.c.b16 %v988, %v980
  %v1341 = vpack.c.b16 %v989, %v981
  %v1342 = vpack.c.b16 %v998, %v990
  %v1343 = vpack.c.b16 %v999, %v991
  %v1344 = vpack.c.b16 %v1000, %v992
  %v1345 = vpack.c.b16 %v1001, %v993
  %v1346 = vpack.c.b16 %v1002, %v994
  %v1347 = vpack.c.b16 %v1003, %v995
  %v1348 = vpack.c.b16 %v1004, %v996
  %v1349 = vpack.c.b16 %v1005, %v997
  %v1350 = vpack.c.b16 %v1014, %v1006
  %v1351 = vpack.c.b16 %v1015, %v1007
  %v1352 = vpack.c.b16 %v1016, %v1008
  %v1353 = vpack.c.b16 %v1017, %v1009
  %v1354 = vpack.c.b16 %v1018, %v1010
  %v1355 = vpack.c.b16 %v1019, %v1011
  %v1356 = vpack.c.b16 %v1020, %v1012
  %v1357 = vpack.c.b16 %v1021, %v1013
  %v1358 = vpack.c.b16 %v1030, %v1022
  %v1359 = vpack.c.b16 %v1031, %v1023
  %v1360 = vpack.c.b16 %v1032, %v1024
  %v1361 = vpack.c.b16 %v1033, %v1025
  %v1362 = vpack.c.b16 %v1034, %v1026
  %v1363 = vpack.c.b16 %v1035, %v1027
  %v1364 = vpack.c.b16 %v1036, %v1028
  %v1365 = vpack.c.b16 %v1037, %v1029
  %v1366 = vpack.c.b16 %v1046, %v1038
  %v1367 = vpack.c.b16 %v1047, %v1039
  %v1368 = vpack.c.b16 %v1048, %v1040
  %v1369 = vpack.c.b16 %v1049, %v1041
  %v1370 = vpack.c.b16 %v1050, %v1042
  %v1371 = vpack.c.b16 %v1051, %v1043
  %v1372 = vpack.c.b16 %v1052, %v1044
  %v1373 = vpack.c.b16 %v1053, %v1045
  %v1374 = vpack.c.b16 %v1062, %v1054
  %v1375 = vpack.c.b16 %v1063, %v1055
  %v1376 = vpack.c.b16 %v1064, %v1056
  %v1377 = vpack.c.b16 %v1065, %v1057
  %v1378 = vpack.c.b16 %v1066, %v1058
  %v1379 = vpack.c.b16 %v1067, %v1059
  %v1380 = vpack.c.b16 %v1068, %v1060
  %v1381 = vpack.c.b16 %v1069, %v1061
  %v1382 = vpack.c.b16 %v1078, %v1070
  %v1383 = vpack.c.b16 %v1079, %v1071
  %v1384 = vpack.c.b16 %v1080, %v1072
  %v1385 = vpack.c.b16 %v1081, %v1073
  %v1386 = vpack.c.b16 %v1082, %v1074
  %v1387 = vpack.c.b16 %v1083, %v1075
  %v1388 = vpack.c.b16 %v1084, %v1076
  %v1389 = vpack.c.b16 %v1085, %v1077
  %v1390 = vpack.c.b16 %v1094, %v1086
  %v1391 = vpack.c.b16 %v1095, %v1087
  %v1392 = vpack.c.b16 %v1096, %v1088
  %v1393 = vpack.c.b16 %v1097, %v1089
  %v1394 = vpack.c.b16 %v1098, %v1090
  %v1395 = vpack.c.b16 %v1099, %v1091
  %v1396 = vpack.c.b16 %v1100, %v1092
  %v1397 = vpack.c.b16 %v1101, %v1093
  %v1398 = vpack.c.b16 %v1110, %v1102
  %v1399 = vpack.c.b16 %v1111, %v1103
  %v1400 = vpack.c.b16 %v1112, %v1104
  %v1401 = vpack.c.b16 %v1113, %v1105
  %v1402 = vpack.c.b16 %v1114, %v1106
  %v1403 = vpack.c.b16 %v1115, %v1107
  %v1404 = vpack.c.b16 %v1116, %v1108
  %v1405 = vpack.c.b16 %v1117, %v1109
  %v1406 = vpack.c.b16 %v1126, %v1118
  %v1407 = vpack.c.b16 %v1127, %v1119
  %v1408 = vpack.c.b16 %v1128, %v1120
  %v1409 = vpack.c.b16 %v1129, %v1121
  %v1410 = vpack.c.b16 %v1130, %v1122
  %v1411 = vpack.c.b16 %v1131, %v1123
  %v1412 = vpack.c.b16 %v1132, %v1124
  %v1413 = vpack.c.b16 %v1133, %v1125
  %v1414 = vpack.c.b16 %v1142, %v1134
  %v1415 = vpack.c.b16 %v1143, %v1135
  %v1416 = vpack.c.b16 %v1144, %v1136
  %v1417 = vpack.c.b16 %v1145, %v1137
  %v1418 = vpack.c.b16 %v1146, %v1138
  %v1419 = vpack.c.b16 %v1147, %v1139
  %v1420 = vpack.c.b16 %v1148, %v1140
  %v1421 = vpack.c.b16 %v1149, %v1141
  %v1422 = vpack.c.b16 %v1158, %v1150
  %v1423 = vpack.c.b16 %v1159, %v1151
  %v1424 = vpack.c.b16 %v1160, %v1152
  %v1425 = vpack.c.b16 %v1161, %v1153
  %v1426 = vpack.c.b16 %v1162, %v1154
  %v1427 = vpack.c.b16 %v1163, %v1155
  %v1428 = vpack.c.b16 %v1164, %v1156
  %v1429 = vpack.c.b16 %v1165, %v1157
  %v1430 = vpack.c.b16 %v1174, %v1166
  %v1431 = vpack.c.b16 %v1175, %v1167
  %v1432 = vpack.c.b16 %v1176, %v1168
  %v1433 = vpack.c.b16 %v1177, %v1169
  %v1434 = vpack.c.b16 %v1178, %v1170
  %v1435 = vpack.c.b16 %v1179, %v1171
  %v1436 = vpack.c.b16 %v1180, %v1172
  %v1437 = vpack.c.b16 %v1181, %v1173
  %v1822 = vunpack.c.l.b16 %v286
  %v1823 = vunpack.c.l.b16 %v287
  %v1824 = vunpack.c.l.b16 %v288
  %v1825 = vunpack.c.l.b16 %v289
  %v1826 = vunpack.c.l.b16 %v290
  %v1827 = vunpack.c.l.b16 %v291
  %v1828 = vunpack.c.l.b16 %v292
  %v1829 = vunpack.c.l.b16 %v293
  %v1830 = vunpack.c.l.b16 %v294
  %v1831 = vunpack.c.l.b16 %v295
  %v1832 = vunpack.c.l.b16 %v296
  %v1833 = vunpack.c.l.b16 %v297
  %v1834 = vunpack.c.l.b16 %v298
  %v1835 = vunpack.c.l.b16 %v299
  %v1836 = vunpack.c.l.b16 %v300
  %v1837 = vunpack.c.l.b16 %v301
  %v1838 = vunpack.c.l.b16 %v302
  %v1839 = vunpack.c.l.b16 %v303
  %v1840 = vunpack.c.l.b16 %v304
  %v1841 = vunpack.c.l.b16 %v305
  %v1842 = vunpack.c.l.b16 %v306
  %v1843 = vunpack.c.l.b16 %v307
  %v1844 = vunpack.c.l.b16 %v308
  %v1845 = vunpack.c.l.b16 %v309
  %v1846 = vunpack.c.l.b16 %v310
  %v1847 = vunpack.c.l.b16 %v311
  %v1848 = vunpack.c.l.b16 %v312
  %v1849 = vunpack.c.l.b16 %v313
  %v1850 = vunpack.c.l.b16 %v314
  %v1851 = vunpack.c.l.b16 %v315
  %v1852 = vunpack.c.l.b16 %v316
  %v1853 = vunpack.c.l.b16 %v317
  %v1854 = vunpack.c.l.b16 %v318
  %v1855 = vunpack.c.l.b16 %v319
  %v1856 = vunpack.c.l.b16 %v320
  %v1857 = vunpack.c.l.b16 %v321
  %v1858 = vunpack.c.l.b16 %v322
  %v1859 = vunpack.c.l.b16 %v323
  %v1860 = vunpack.c.l.b16 %v324
  %v1861 = vunpack.c.l.b16 %v325
  %v1862 = vunpack.c.l.b16 %v326
  %v1863 = vunpack.c.l.b16 %v327
  %v1864 = vunpack.c.l.b16 %v328
  %v1865 = vunpack.c.l.b16 %v329
  %v1866 = vunpack.c.l.b16 %v330
  %v1867 = vunpack.c.l.b16 %v331
  %v1868 = vunpack.c.l.b16 %v332
  %v1869 = vunpack.c.l.b16 %v333
  %v1870 = vunpack.c.l.b16 %v334
  %v1871 = vunpack.c.l.b16 %v335
  %v1872 = vunpack.c.l.b16 %v336
  %v1873 = vunpack.c.l.b16 %v337
  %v1874 = vunpack.c.l.b16 %v338
  %v1875 = vunpack.c.l.b16 %v339
  %v1876 = vunpack.c.l.b16 %v340
  %v1877 = vunpack.c.l.b16 %v341
  %v1878 = vunpack.c.l.b16 %v342
  %v1879 = vunpack.c.l.b16 %v343
  %v1880 = vunpack.c.l.b16 %v344
  %v1881 = vunpack.c.l.b16 %v345
  %v1882 = vunpack.c.l.b16 %v346
  %v1883 = vunpack.c.l.b16 %v347
  %v1884 = vunpack.c.l.b16 %v348
  %v1885 = vunpack.c.l.b16 %v349
  %v1886 = vunpack.c.l.b16 %v350
  %v1887 = vunpack.c.l.b16 %v351
  %v1888 = vunpack.c.l.b16 %v352
  %v1889 = vunpack.c.l.b16 %v353
  %v1890 = vunpack.c.l.b16 %v354
  %v1891 = vunpack.c.l.b16 %v355
  %v1892 = vunpack.c.l.b16 %v356
  %v1893 = vunpack.c.l.b16 %v357
  %v1894 = vunpack.c.l.b16 %v358
  %v1895 = vunpack.c.l.b16 %v359
  %v1896 = vunpack.c.l.b16 %v360
  %v1897 = vunpack.c.l.b16 %v361
  %v1898 = vunpack.c.l.b16 %v362
  %v1899 = vunpack.c.l.b16 %v363
  %v1900 = vunpack.c.l.b16 %v364
  %v1901 = vunpack.c.l.b16 %v365
  %v1902 = vunpack.c.l.b16 %v366
  %v1903 = vunpack.c.l.b16 %v367
  %v1904 = vunpack.c.l.b16 %v368
  %v1905 = vunpack.c.l.b16 %v369
  %v1906 = vunpack.c.l.b16 %v370
  %v1907 = vunpack.c.l.b16 %v371
  %v1908 = vunpack.c.l.b16 %v372
  %v1909 = vunpack.c.l.b16 %v373
  %v1910 = vunpack.c.l.b16 %v374
  %v1911 = vunpack.c.l.b16 %v375
  %v1912 = vunpack.c.l.b16 %v376
  %v1913 = vunpack.c.l.b16 %v377
  %v1914 = vunpack.c.l.b16 %v378
  %v1915 = vunpack.c.l.b16 %v379
  %v1916 = vunpack.c.l.b16 %v380
  %v1917 = vunpack.c.l.b16 %v381
  %v1918 = vunpack.c.l.b16 %v382
  %v1919 = vunpack.c.l.b16 %v383
  %v1920 = vunpack.c.l.b16 %v384
  %v1921 = vunpack.c.l.b16 %v385
  %v1922 = vunpack.c.l.b16 %v386
  %v1923 = vunpack.c.l.b16 %v387
  %v1924 = vunpack.c.l.b16 %v388
  %v1925 = vunpack.c.l.b16 %v389
  %v1926 = vunpack.c.l.b16 %v390
  %v1927 = vunpack.c.l.b16 %v391
  %v1928 = vunpack.c.l.b16 %v392
  %v1929 = vunpack.c.l.b16 %v393
  %v1930 = vunpack.c.l.b16 %v394
  %v1931 = vunpack.c.l.b16 %v395
  %v1932 = vunpack.c.l.b16 %v396
  %v1933 = vunpack.c.l.b16 %v397
  %v1934 = vunpack.c.l.b16 %v398
  %v1935 = vunpack.c.l.b16 %v399
  %v1936 = vunpack.c.l.b16 %v400
  %v1937 = vunpack.c.l.b16 %v401
  %v1938 = vunpack.c.l.b16 %v402
  %v1939 = vunpack.c.l.b16 %v403
  %v1940 = vunpack.c.l.b16 %v404
  %v1941 = vunpack.c.l.b16 %v405
  %v1942 = vunpack.c.l.b16 %v406
  %v1943 = vunpack.c.l.b16 %v407
  %v1944 = vunpack.c.l.b16 %v408
  %v1945 = vunpack.c.l.b16 %v409
  %v1946 = vunpack.c.l.b16 %v410
  %v1947 = vunpack.c.l.b16 %v411
  %v1948 = vunpack.c.l.b16 %v412
  %v1949 = vunpack.c.l.b16 %v413
  %v1950 = vpack.c.b16 %v1823, %v1822
  %v1951 = vpack.c.b16 %v1825, %v1824
  %v1952 = vpack.c.b16 %v1827, %v1826
  %v1953 = vpack.c.b16 %v1829, %v1828
  %v1954 = vpack.c.b16 %v1831, %v1830
  %v1955 = vpack.c.b16 %v1833, %v1832
  %v1956 = vpack.c.b16 %v1835, %v1834
  %v1957 = vpack.c.b16 %v1837, %v1836
  %v1958 = vpack.c.b16 %v1839, %v1838
  %v1959 = vpack.c.b16 %v1841, %v1840
  %v1960 = vpack.c.b16 %v1843, %v1842
  %v1961 = vpack.c.b16 %v1845, %v1844
  %v1962 = vpack.c.b16 %v1847, %v1846
  %v1963 = vpack.c.b16 %v1849, %v1848
  %v1964 = vpack.c.b16 %v1851, %v1850
  %v1965 = vpack.c.b16 %v1853, %v1852
  %v1966 = vpack.c.b16 %v1855, %v1854
  %v1967 = vpack.c.b16 %v1857, %v1856
  %v1968 = vpack.c.b16 %v1859, %v1858
  %v1969 = vpack.c.b16 %v1861, %v1860
  %v1970 = vpack.c.b16 %v1863, %v1862
  %v1971 = vpack.c.b16 %v1865, %v1864
  %v1972 = vpack.c.b16 %v1867, %v1866
  %v1973 = vpack.c.b16 %v1869, %v1868
  %v1974 = vpack.c.b16 %v1871, %v1870
  %v1975 = vpack.c.b16 %v1873, %v1872
  %v1976 = vpack.c.b16 %v1875, %v1874
  %v1977 = vpack.c.b16 %v1877, %v1876
  %v1978 = vpack.c.b16 %v1879, %v1878
  %v1979 = vpack.c.b16 %v1881, %v1880
  %v1980 = vpack.c.b16 %v1883, %v1882
  %v1981 = vpack.c.b16 %v1885, %v1884
  %v1982 = vpack.c.b16 %v1887, %v1886
  %v1983 = vpack.c.b16 %v1889, %v1888
  %v1984 = vpack.c.b16 %v1891, %v1890
  %v1985 = vpack.c.b16 %v1893, %v1892
  %v1986 = vpack.c.b16 %v1895, %v1894
  %v1987 = vpack.c.b16 %v1897, %v1896
  %v1988 = vpack.c.b16 %v1899, %v1898
  %v1989 = vpack.c.b16 %v1901, %v1900
  %v1990 = vpack.c.b16 %v1903, %v1902
  %v1991 = vpack.c.b16 %v1905, %v1904
  %v1992 = vpack.c.b16 %v1907, %v1906
  %v1993 = vpack.c.b16 %v1909, %v1908
  %v1994 = vpack.c.b16 %v1911, %v1910
  %v1995 = vpack.c.b16 %v1913, %v1912
  %v1996 = vpack.c.b16 %v1915, %v1914
  %v1997 = vpack.c.b16 %v1917, %v1916
  %v1998 = vpack.c.b16 %v1919, %v1918
  %v1999 = vpack.c.b16 %v1921, %v1920
  %v2000 = vpack.c.b16 %v1923, %v1922
  %v2001 = vpack.c.b16 %v1925, %v1924
  %v2002 = vpack.c.b16 %v1927, %v1926
  %v2003 = vpack.c.b16 %v1929, %v1928
  %v2004 = vpack.c.b16 %v1931, %v1930
  %v2005 = vpack.c.b16 %v1933, %v1932
  %v2006 = vpack.c.b16 %v1935, %v1934
  %v2007 = vpack.c.b16 %v1937, %v1936
  %v2008 = vpack.c.b16 %v1939, %v1938
  %v2009 = vpack.c.b16 %v1941, %v1940
  %v2010 = vpack.c.b16 %v1943, %v1942
  %v2011 = vpack.c.b16 %v1945, %v1944
  %v2012 = vpack.c.b16 %v1947, %v1946
  %v2013 = vpack.c.b16 %v1949, %v1948
  %2078 = vmatprep.subr.bf16.mxu0 0
  %2079 = vmatpush1.bf16.msra.mxu0 %v1950
  %2080 = vmatprep.subr.bf16.mxu0 0
  %2081 = vmatpush1.bf16.msra.mxu0 %v1951
  %2082 = vmatprep.subr.bf16.mxu0 0
  %2083 = vmatpush1.bf16.msra.mxu0 %v1952
  %2084 = vmatprep.subr.bf16.mxu0 0
  %2085 = vmatpush1.bf16.msra.mxu0 %v1953
  %2086 = vmatprep.subr.bf16.mxu0 0
  %2087 = vmatpush1.bf16.msra.mxu0 %v1954
  %2088 = vmatprep.subr.bf16.mxu0 0
  %2089 = vmatpush1.bf16.msra.mxu0 %v1955
  %2090 = vmatprep.subr.bf16.mxu0 0
  %2091 = vmatpush1.bf16.msra.mxu0 %v1956
  %2092 = vmatprep.subr.bf16.mxu0 0
  %2093 = vmatpush1.bf16.msra.mxu0 %v1957
  %2094 = vmatprep.subr.bf16.mxu0 0
  %2095 = vmatpush1.bf16.msra.mxu0 %v1958
  %2096 = vmatprep.subr.bf16.mxu0 0
  %2097 = vmatpush1.bf16.msra.mxu0 %v1959
  %2098 = vmatprep.subr.bf16.mxu0 0
  %2099 = vmatpush1.bf16.msra.mxu0 %v1960
  %2100 = vmatprep.subr.bf16.mxu0 0
  %2101 = vmatpush1.bf16.msra.mxu0 %v1961
  %2102 = vmatprep.subr.bf16.mxu0 0
  %2103 = vmatpush1.bf16.msra.mxu0 %v1962
  %2104 = vmatprep.subr.bf16.mxu0 0
  %2105 = vmatpush1.bf16.msra.mxu0 %v1963
  %2106 = vmatprep.subr.bf16.mxu0 0
  %2107 = vmatpush1.bf16.msra.mxu0 %v1964
  %2108 = vmatprep.subr.bf16.mxu0 0
  %2109 = vmatpush1.bf16.msra.mxu0 %v1965
  %2110 = vmatprep.mubr.bf16.mxu0 %v1183
  %2111 = vmatmul.mubr.bf16.gmra.mrb[0].mxu0 %v1182
  %v2112 = vpop.f32.mrb[0].mxu0
  %v2113 = vadd.f32 0.0, %v2112
  %v2114 = vpop.f32.mrb[0].mxu0
  %v2115 = vpop.f32.mrb[0].mxu0
  %v2116 = vadd.f32 0.0, %v2115
  %v2117 = vpop.f32.mrb[0].mxu0
  %2118 = vmatprep.mubr.bf16.mxu0 %v1191
  %2119 = vmatmul.mubr.bf16.gmra.mrb[0].mxu0 %v1190
  %v2120 = vpop.f32.mrb[0].mxu0
  %v2121 = vadd.f32 0.0, %v2120
  %v2122 = vpop.f32.mrb[0].mxu0
  %v2123 = vpop.f32.mrb[0].mxu0
  %v2124 = vadd.f32 0.0, %v2123
  %v2125 = vpop.f32.mrb[0].mxu0
  %2126 = vmatprep.mubr.bf16.mxu0 %v1199
  %2127 = vmatmul.mubr.bf16.gmra.mrb[0].mxu0 %v1198
  %v2128 = vpop.f32.mrb[0].mxu0
  %v2129 = vadd.f32 0.0, %v2128
  %v2130 = vpop.f32.mrb[0].mxu0
  %v2131 = vpop.f32.mrb[0].mxu0
  %v2132 = vadd.f32 0.0, %v2131
  %v2133 = vpop.f32.mrb[0].mxu0
  %2134 = vmatprep.mubr.bf16.mxu0 %v1207
  %2135 = vmatmul.mubr.bf16.gmra.mrb[0].mxu0 %v1206
  %v2136 = vpop.f32.mrb[0].mxu0
  %v2137 = vadd.f32 0.0, %v2136
  %v2138 = vpop.f32.mrb[0].mxu0
  %v2139 = vpop.f32.mrb[0].mxu0
  %v2140 = vadd.f32 0.0, %v2139
  %v2141 = vpop.f32.mrb[0].mxu0
  %2142 = vmatprep.mubr.bf16.mxu0 %v1215
  %2143 = vmatmul.mubr.bf16.gmra.mrb[0].mxu0 %v1214
  %v2144 = vpop.f32.mrb[0].mxu0
  %v2145 = vadd.f32 0.0, %v2144
  %v2146 = vpop.f32.mrb[0].mxu0
  %v2147 = vpop.f32.mrb[0].mxu0
  %v2148 = vadd.f32 0.0, %v2147
  %v2149 = vpop.f32.mrb[0].mxu0
  %2150 = vmatprep.mubr.bf16.mxu0 %v1223
  %2151 = vmatmul.mubr.bf16.gmra.mrb[0].mxu0 %v1222
  %v2152 = vpop.f32.mrb[0].mxu0
  %v2153 = vadd.f32 0.0, %v2152
  %v2154 = vpop.f32.mrb[0].mxu0
  %v2155 = vpop.f32.mrb[0].mxu0
  %v2156 = vadd.f32 0.0, %v2155
  %v2157 = vpop.f32.mrb[0].mxu0
  %2158 = vmatprep.mubr.bf16.mxu0 %v1231
  %2159 = vmatmul.mubr.bf16.gmra.mrb[0].mxu0 %v1230
  %v2160 = vpop.f32.mrb[0].mxu0
  %v2161 = vadd.f32 0.0, %v2160
  %v2162 = vpop.f32.mrb[0].mxu0
  %v2163 = vpop.f32.mrb[0].mxu0
  %v2164 = vadd.f32 0.0, %v2163
  %v2165 = vpop.f32.mrb[0].mxu0
  %2166 = vmatprep.mubr.bf16.mxu0 %v1239
  %2167 = vmatmul.mubr.bf16.gmra.mrb[0].mxu0 %v1238
  %v2168 = vpop.f32.mrb[0].mxu0
  %v2169 = vadd.f32 0.0, %v2168
  %v2170 = vpop.f32.mrb[0].mxu0
  %v2171 = vpop.f32.mrb[0].mxu0
  %v2172 = vadd.f32 0.0, %v2171
  %v2173 = vpop.f32.mrb[0].mxu0
  %2174 = vmatprep.mubr.bf16.mxu0 %v1247
  %2175 = vmatmul.mubr.bf16.gmra.mrb[0].mxu0 %v1246
  %v2176 = vpop.f32.mrb[0].mxu0
  %v2177 = vadd.f32 0.0, %v2176
  %v2178 = vpop.f32.mrb[0].mxu0
  %v2179 = vpop.f32.mrb[0].mxu0
  %v2180 = vadd.f32 0.0, %v2179
  %v2181 = vpop.f32.mrb[0].mxu0
  %2182 = vmatprep.mubr.bf16.mxu0 %v1255
  %2183 = vmatmul.mubr.bf16.gmra.mrb[0].mxu0 %v1254
  %v2184 = vpop.f32.mrb[0].mxu0
  %v2185 = vadd.f32 0.0, %v2184
  %v2186 = vpop.f32.mrb[0].mxu0
  %v2187 = vpop.f32.mrb[0].mxu0
  %v2188 = vadd.f32 0.0, %v2187
  %v2189 = vpop.f32.mrb[0].mxu0
  %2190 = vmatprep.mubr.bf16.mxu0 %v1263
  %2191 = vmatmul.mubr.bf16.gmra.mrb[0].mxu0 %v1262
  %v2192 = vpop.f32.mrb[0].mxu0
  %v2193 = vadd.f32 0.0, %v2192
  %v2194 = vpop.f32.mrb[0].mxu0
  %v2195 = vpop.f32.mrb[0].mxu0
  %v2196 = vadd.f32 0.0, %v2195
  %v2197 = vpop.f32.mrb[0].mxu0
  %2198 = vmatprep.mubr.bf16.mxu0 %v1271
  %2199 = vmatmul.mubr.bf16.gmra.mrb[0].mxu0 %v1270
  %v2200 = vpop.f32.mrb[0].mxu0
  %v2201 = vadd.f32 0.0, %v2200
  %v2202 = vpop.f32.mrb[0].mxu0
  %v2203 = vpop.f32.mrb[0].mxu0
  %v2204 = vadd.f32 0.0, %v2203
  %v2205 = vpop.f32.mrb[0].mxu0
  %2206 = vmatprep.mubr.bf16.mxu0 %v1279
  %2207 = vmatmul.mubr.bf16.gmra.mrb[0].mxu0 %v1278
  %v2208 = vpop.f32.mrb[0].mxu0
  %v2209 = vadd.f32 0.0, %v2208
  %v2210 = vpop.f32.mrb[0].mxu0
  %v2211 = vpop.f32.mrb[0].mxu0
  %v2212 = vadd.f32 0.0, %v2211
  %v2213 = vpop.f32.mrb[0].mxu0
  %2214 = vmatprep.mubr.bf16.mxu0 %v1287
  %2215 = vmatmul.mubr.bf16.gmra.mrb[0].mxu0 %v1286
  %v2216 = vpop.f32.mrb[0].mxu0
  %v2217 = vadd.f32 0.0, %v2216
  %v2218 = vpop.f32.mrb[0].mxu0
  %v2219 = vpop.f32.mrb[0].mxu0
  %v2220 = vadd.f32 0.0, %v2219
  %v2221 = vpop.f32.mrb[0].mxu0
  %2222 = vmatprep.mubr.bf16.mxu0 %v1295
  %2223 = vmatmul.mubr.bf16.gmra.mrb[0].mxu0 %v1294
  %v2224 = vpop.f32.mrb[0].mxu0
  %v2225 = vadd.f32 0.0, %v2224
  %v2226 = vpop.f32.mrb[0].mxu0
  %v2227 = vpop.f32.mrb[0].mxu0
  %v2228 = vadd.f32 0.0, %v2227
  %v2229 = vpop.f32.mrb[0].mxu0
  %2230 = vmatprep.mubr.bf16.mxu0 %v1303
  %2231 = vmatmul.mubr.bf16.gmra.mrb[0].mxu0 %v1302
  %v2232 = vpop.f32.mrb[0].mxu0
  %v2233 = vadd.f32 0.0, %v2232
  %v2234 = vpop.f32.mrb[0].mxu0
  %v2235 = vpop.f32.mrb[0].mxu0
  %v2236 = vadd.f32 0.0, %v2235
  %v2237 = vpop.f32.mrb[0].mxu0
  %2238 = vmatprep.mubr.bf16.mxu0 %v1311
  %2239 = vmatmul.mubr.bf16.gmra.mrb[0].mxu0 %v1310
  %v2240 = vpop.f32.mrb[0].mxu0
  %v2241 = vadd.f32 0.0, %v2240
  %v2242 = vpop.f32.mrb[0].mxu0
  %v2243 = vpop.f32.mrb[0].mxu0
  %v2244 = vadd.f32 0.0, %v2243
  %v2245 = vpop.f32.mrb[0].mxu0
  %2246 = vmatprep.mubr.bf16.mxu0 %v1319
  %2247 = vmatmul.mubr.bf16.gmra.mrb[0].mxu0 %v1318
  %v2248 = vpop.f32.mrb[0].mxu0
  %v2249 = vadd.f32 0.0, %v2248
  %v2250 = vpop.f32.mrb[0].mxu0
  %v2251 = vpop.f32.mrb[0].mxu0
  %v2252 = vadd.f32 0.0, %v2251
  %v2253 = vpop.f32.mrb[0].mxu0
  %2254 = vmatprep.mubr.bf16.mxu0 %v1327
  %2255 = vmatmul.mubr.bf16.gmra.mrb[0].mxu0 %v1326
  %v2256 = vpop.f32.mrb[0].mxu0
  %v2257 = vadd.f32 0.0, %v2256
  %v2258 = vpop.f32.mrb[0].mxu0
  %v2259 = vpop.f32.mrb[0].mxu0
  %v2260 = vadd.f32 0.0, %v2259
  %v2261 = vpop.f32.mrb[0].mxu0
  %2262 = vmatprep.mubr.bf16.mxu0 %v1335
  %2263 = vmatmul.mubr.bf16.gmra.mrb[0].mxu0 %v1334
  %v2264 = vpop.f32.mrb[0].mxu0
  %v2265 = vadd.f32 0.0, %v2264
  %v2266 = vpop.f32.mrb[0].mxu0
  %v2267 = vpop.f32.mrb[0].mxu0
  %v2268 = vadd.f32 0.0, %v2267
  %v2269 = vpop.f32.mrb[0].mxu0
  %2270 = vmatprep.mubr.bf16.mxu0 %v1343
  %2271 = vmatmul.mubr.bf16.gmra.mrb[0].mxu0 %v1342
  %v2272 = vpop.f32.mrb[0].mxu0
  %v2273 = vadd.f32 0.0, %v2272
  %v2274 = vpop.f32.mrb[0].mxu0
  %v2275 = vpop.f32.mrb[0].mxu0
  %v2276 = vadd.f32 0.0, %v2275
  %v2277 = vpop.f32.mrb[0].mxu0
  %2278 = vmatprep.mubr.bf16.mxu0 %v1351
  %2279 = vmatmul.mubr.bf16.gmra.mrb[0].mxu0 %v1350
  %v2280 = vpop.f32.mrb[0].mxu0
  %v2281 = vadd.f32 0.0, %v2280
  %v2282 = vpop.f32.mrb[0].mxu0
  %v2283 = vpop.f32.mrb[0].mxu0
  %v2284 = vadd.f32 0.0, %v2283
  %v2285 = vpop.f32.mrb[0].mxu0
  %2286 = vmatprep.mubr.bf16.mxu0 %v1359
  %2287 = vmatmul.mubr.bf16.gmra.mrb[0].mxu0 %v1358
  %v2288 = vpop.f32.mrb[0].mxu0
  %v2289 = vadd.f32 0.0, %v2288
  %v2290 = vpop.f32.mrb[0].mxu0
  %v2291 = vpop.f32.mrb[0].mxu0
  %v2292 = vadd.f32 0.0, %v2291
  %v2293 = vpop.f32.mrb[0].mxu0
  %2294 = vmatprep.mubr.bf16.mxu0 %v1367
  %2295 = vmatmul.mubr.bf16.gmra.mrb[0].mxu0 %v1366
  %v2296 = vpop.f32.mrb[0].mxu0
  %v2297 = vadd.f32 0.0, %v2296
  %v2298 = vpop.f32.mrb[0].mxu0
  %v2299 = vpop.f32.mrb[0].mxu0
  %v2300 = vadd.f32 0.0, %v2299
  %v2301 = vpop.f32.mrb[0].mxu0
  %2302 = vmatprep.mubr.bf16.mxu0 %v1375
  %2303 = vmatmul.mubr.bf16.gmra.mrb[0].mxu0 %v1374
  %v2304 = vpop.f32.mrb[0].mxu0
  %v2305 = vadd.f32 0.0, %v2304
  %v2306 = vpop.f32.mrb[0].mxu0
  %v2307 = vpop.f32.mrb[0].mxu0
  %v2308 = vadd.f32 0.0, %v2307
  %v2309 = vpop.f32.mrb[0].mxu0
  %2310 = vmatprep.mubr.bf16.mxu0 %v1383
  %2311 = vmatmul.mubr.bf16.gmra.mrb[0].mxu0 %v1382
  %v2312 = vpop.f32.mrb[0].mxu0
  %v2313 = vadd.f32 0.0, %v2312
  %v2314 = vpop.f32.mrb[0].mxu0
  %v2315 = vpop.f32.mrb[0].mxu0
  %v2316 = vadd.f32 0.0, %v2315
  %v2317 = vpop.f32.mrb[0].mxu0
  %2318 = vmatprep.mubr.bf16.mxu0 %v1391
  %2319 = vmatmul.mubr.bf16.gmra.mrb[0].mxu0 %v1390
  %v2320 = vpop.f32.mrb[0].mxu0
  %v2321 = vadd.f32 0.0, %v2320
  %v2322 = vpop.f32.mrb[0].mxu0
  %v2323 = vpop.f32.mrb[0].mxu0
  %v2324 = vadd.f32 0.0, %v2323
  %v2325 = vpop.f32.mrb[0].mxu0
  %2326 = vmatprep.mubr.bf16.mxu0 %v1399
  %2327 = vmatmul.mubr.bf16.gmra.mrb[0].mxu0 %v1398
  %v2328 = vpop.f32.mrb[0].mxu0
  %v2329 = vadd.f32 0.0, %v2328
  %v2330 = vpop.f32.mrb[0].mxu0
  %v2331 = vpop.f32.mrb[0].mxu0
  %v2332 = vadd.f32 0.0, %v2331
  %v2333 = vpop.f32.mrb[0].mxu0
  %2334 = vmatprep.mubr.bf16.mxu0 %v1407
  %2335 = vmatmul.mubr.bf16.gmra.mrb[0].mxu0 %v1406
  %v2336 = vpop.f32.mrb[0].mxu0
  %v2337 = vadd.f32 0.0, %v2336
  %v2338 = vpop.f32.mrb[0].mxu0
  %v2339 = vpop.f32.mrb[0].mxu0
  %v2340 = vadd.f32 0.0, %v2339
  %v2341 = vpop.f32.mrb[0].mxu0
  %2342 = vmatprep.mubr.bf16.mxu0 %v1415
  %2343 = vmatmul.mubr.bf16.gmra.mrb[0].mxu0 %v1414
  %v2344 = vpop.f32.mrb[0].mxu0
  %v2345 = vadd.f32 0.0, %v2344
  %v2346 = vpop.f32.mrb[0].mxu0
  %v2347 = vpop.f32.mrb[0].mxu0
  %v2348 = vadd.f32 0.0, %v2347
  %v2349 = vpop.f32.mrb[0].mxu0
  %2350 = vmatprep.mubr.bf16.mxu0 %v1423
  %2351 = vmatmul.mubr.bf16.gmra.mrb[0].mxu0 %v1422
  %v2352 = vpop.f32.mrb[0].mxu0
  %v2353 = vadd.f32 0.0, %v2352
  %v2354 = vpop.f32.mrb[0].mxu0
  %v2355 = vpop.f32.mrb[0].mxu0
  %v2356 = vadd.f32 0.0, %v2355
  %v2357 = vpop.f32.mrb[0].mxu0
  %2358 = vmatprep.mubr.bf16.mxu0 %v1431
  %2359 = vmatmul.mubr.bf16.gmra.mrb[0].mxu0 %v1430
  %v2360 = vpop.f32.mrb[0].mxu0
  %v2361 = vadd.f32 0.0, %v2360
  %v2362 = vpop.f32.mrb[0].mxu0
  %v2363 = vpop.f32.mrb[0].mxu0
  %v2364 = vadd.f32 0.0, %v2363
  %v2365 = vpop.f32.mrb[0].mxu0
  %2366 = vdwg.mxu0
  %2367 = vmatprep.subr.bf16.mxu0 0
  %2368 = vmatpush1.bf16.msra.mxu0 %v1966
  %2369 = vmatprep.subr.bf16.mxu0 0
  %2370 = vmatpush1.bf16.msra.mxu0 %v1967
  %2371 = vmatprep.subr.bf16.mxu0 0
  %2372 = vmatpush1.bf16.msra.mxu0 %v1968
  %2373 = vmatprep.subr.bf16.mxu0 0
  %2374 = vmatpush1.bf16.msra.mxu0 %v1969
  %2375 = vmatprep.subr.bf16.mxu0 0
  %2376 = vmatpush1.bf16.msra.mxu0 %v1970
  %2377 = vmatprep.subr.bf16.mxu0 0
  %2378 = vmatpush1.bf16.msra.mxu0 %v1971
  %2379 = vmatprep.subr.bf16.mxu0 0
  %2380 = vmatpush1.bf16.msra.mxu0 %v1972
  %2381 = vmatprep.subr.bf16.mxu0 0
  %2382 = vmatpush1.bf16.msra.mxu0 %v1973
  %2383 = vmatprep.subr.bf16.mxu0 0
  %2384 = vmatpush1.bf16.msra.mxu0 %v1974
  %2385 = vmatprep.subr.bf16.mxu0 0
  %2386 = vmatpush1.bf16.msra.mxu0 %v1975
  %2387 = vmatprep.subr.bf16.mxu0 0
  %2388 = vmatpush1.bf16.msra.mxu0 %v1976
  %2389 = vmatprep.subr.bf16.mxu0 0
  %2390 = vmatpush1.bf16.msra.mxu0 %v1977
  %2391 = vmatprep.subr.bf16.mxu0 0
  %2392 = vmatpush1.bf16.msra.mxu0 %v1978
  %2393 = vmatprep.subr.bf16.mxu0 0
  %2394 = vmatpush1.bf16.msra.mxu0 %v1979
  %2395 = vmatprep.subr.bf16.mxu0 0
  %2396 = vmatpush1.bf16.msra.mxu0 %v1980
  %2397 = vmatprep.subr.bf16.mxu0 0
  %2398 = vmatpush1.bf16.msra.mxu0 %v1981
  %2399 = vmatprep.mubr.bf16.mxu0 %v1185
  %2400 = vmatmul.mubr.bf16.gmra.mrb[0].mxu0 %v1184
  %v2401 = vpop.f32.mrb[0].mxu0
  %v2402 = vadd.f32 %v2113, %v2401
  %v2403 = vpop.f32.mrb[0].mxu0
  %v2404 = vpop.f32.mrb[0].mxu0
  %v2405 = vadd.f32 %v2116, %v2404
  %v2406 = vpop.f32.mrb[0].mxu0
  %2407 = vmatprep.mubr.bf16.mxu0 %v1193
  %2408 = vmatmul.mubr.bf16.gmra.mrb[0].mxu0 %v1192
  %v2409 = vpop.f32.mrb[0].mxu0
  %v2410 = vadd.f32 %v2121, %v2409
  %v2411 = vpop.f32.mrb[0].mxu0
  %v2412 = vpop.f32.mrb[0].mxu0
  %v2413 = vadd.f32 %v2124, %v2412
  %v2414 = vpop.f32.mrb[0].mxu0
  %2415 = vmatprep.mubr.bf16.mxu0 %v1201
  %2416 = vmatmul.mubr.bf16.gmra.mrb[0].mxu0 %v1200
  %v2417 = vpop.f32.mrb[0].mxu0
  %v2418 = vadd.f32 %v2129, %v2417
  %v2419 = vpop.f32.mrb[0].mxu0
  %v2420 = vpop.f32.mrb[0].mxu0
  %v2421 = vadd.f32 %v2132, %v2420
  %v2422 = vpop.f32.mrb[0].mxu0
  %2423 = vmatprep.mubr.bf16.mxu0 %v1209
  %2424 = vmatmul.mubr.bf16.gmra.mrb[0].mxu0 %v1208
  %v2425 = vpop.f32.mrb[0].mxu0
  %v2426 = vadd.f32 %v2137, %v2425
  %v2427 = vpop.f32.mrb[0].mxu0
  %v2428 = vpop.f32.mrb[0].mxu0
  %v2429 = vadd.f32 %v2140, %v2428
  %v2430 = vpop.f32.mrb[0].mxu0
  %2431 = vmatprep.mubr.bf16.mxu0 %v1217
  %2432 = vmatmul.mubr.bf16.gmra.mrb[0].mxu0 %v1216
  %v2433 = vpop.f32.mrb[0].mxu0
  %v2434 = vadd.f32 %v2145, %v2433
  %v2435 = vpop.f32.mrb[0].mxu0
  %v2436 = vpop.f32.mrb[0].mxu0
  %v2437 = vadd.f32 %v2148, %v2436
  %v2438 = vpop.f32.mrb[0].mxu0
  %2439 = vmatprep.mubr.bf16.mxu0 %v1225
  %2440 = vmatmul.mubr.bf16.gmra.mrb[0].mxu0 %v1224
  %v2441 = vpop.f32.mrb[0].mxu0
  %v2442 = vadd.f32 %v2153, %v2441
  %v2443 = vpop.f32.mrb[0].mxu0
  %v2444 = vpop.f32.mrb[0].mxu0
  %v2445 = vadd.f32 %v2156, %v2444
  %v2446 = vpop.f32.mrb[0].mxu0
  %2447 = vmatprep.mubr.bf16.mxu0 %v1233
  %2448 = vmatmul.mubr.bf16.gmra.mrb[0].mxu0 %v1232
  %v2449 = vpop.f32.mrb[0].mxu0
  %v2450 = vadd.f32 %v2161, %v2449
  %v2451 = vpop.f32.mrb[0].mxu0
  %v2452 = vpop.f32.mrb[0].mxu0
  %v2453 = vadd.f32 %v2164, %v2452
  %v2454 = vpop.f32.mrb[0].mxu0
  %2455 = vmatprep.mubr.bf16.mxu0 %v1241
  %2456 = vmatmul.mubr.bf16.gmra.mrb[0].mxu0 %v1240
  %v2457 = vpop.f32.mrb[0].mxu0
  %v2458 = vadd.f32 %v2169, %v2457
  %v2459 = vpop.f32.mrb[0].mxu0
  %v2460 = vpop.f32.mrb[0].mxu0
  %v2461 = vadd.f32 %v2172, %v2460
  %v2462 = vpop.f32.mrb[0].mxu0
  %2463 = vmatprep.mubr.bf16.mxu0 %v1249
  %2464 = vmatmul.mubr.bf16.gmra.mrb[0].mxu0 %v1248
  %v2465 = vpop.f32.mrb[0].mxu0
  %v2466 = vadd.f32 %v2177, %v2465
  %v2467 = vpop.f32.mrb[0].mxu0
  %v2468 = vpop.f32.mrb[0].mxu0
  %v2469 = vadd.f32 %v2180, %v2468
  %v2470 = vpop.f32.mrb[0].mxu0
  %2471 = vmatprep.mubr.bf16.mxu0 %v1257
  %2472 = vmatmul.mubr.bf16.gmra.mrb[0].mxu0 %v1256
  %v2473 = vpop.f32.mrb[0].mxu0
  %v2474 = vadd.f32 %v2185, %v2473
  %v2475 = vpop.f32.mrb[0].mxu0
  %v2476 = vpop.f32.mrb[0].mxu0
  %v2477 = vadd.f32 %v2188, %v2476
  %v2478 = vpop.f32.mrb[0].mxu0
  %2479 = vmatprep.mubr.bf16.mxu0 %v1265
  %2480 = vmatmul.mubr.bf16.gmra.mrb[0].mxu0 %v1264
  %v2481 = vpop.f32.mrb[0].mxu0
  %v2482 = vadd.f32 %v2193, %v2481
  %v2483 = vpop.f32.mrb[0].mxu0
  %v2484 = vpop.f32.mrb[0].mxu0
  %v2485 = vadd.f32 %v2196, %v2484
  %v2486 = vpop.f32.mrb[0].mxu0
  %2487 = vmatprep.mubr.bf16.mxu0 %v1273
  %2488 = vmatmul.mubr.bf16.gmra.mrb[0].mxu0 %v1272
  %v2489 = vpop.f32.mrb[0].mxu0
  %v2490 = vadd.f32 %v2201, %v2489
  %v2491 = vpop.f32.mrb[0].mxu0
  %v2492 = vpop.f32.mrb[0].mxu0
  %v2493 = vadd.f32 %v2204, %v2492
  %v2494 = vpop.f32.mrb[0].mxu0
  %2495 = vmatprep.mubr.bf16.mxu0 %v1281
  %2496 = vmatmul.mubr.bf16.gmra.mrb[0].mxu0 %v1280
  %v2497 = vpop.f32.mrb[0].mxu0
  %v2498 = vadd.f32 %v2209, %v2497
  %v2499 = vpop.f32.mrb[0].mxu0
  %v2500 = vpop.f32.mrb[0].mxu0
  %v2501 = vadd.f32 %v2212, %v2500
  %v2502 = vpop.f32.mrb[0].mxu0
  %2503 = vmatprep.mubr.bf16.mxu0 %v1289
  %2504 = vmatmul.mubr.bf16.gmra.mrb[0].mxu0 %v1288
  %v2505 = vpop.f32.mrb[0].mxu0
  %v2506 = vadd.f32 %v2217, %v2505
  %v2507 = vpop.f32.mrb[0].mxu0
  %v2508 = vpop.f32.mrb[0].mxu0
  %v2509 = vadd.f32 %v2220, %v2508
  %v2510 = vpop.f32.mrb[0].mxu0
  %2511 = vmatprep.mubr.bf16.mxu0 %v1297
  %2512 = vmatmul.mubr.bf16.gmra.mrb[0].mxu0 %v1296
  %v2513 = vpop.f32.mrb[0].mxu0
  %v2514 = vadd.f32 %v2225, %v2513
  %v2515 = vpop.f32.mrb[0].mxu0
  %v2516 = vpop.f32.mrb[0].mxu0
  %v2517 = vadd.f32 %v2228, %v2516
  %v2518 = vpop.f32.mrb[0].mxu0
  %2519 = vmatprep.mubr.bf16.mxu0 %v1305
  %2520 = vmatmul.mubr.bf16.gmra.mrb[0].mxu0 %v1304
  %v2521 = vpop.f32.mrb[0].mxu0
  %v2522 = vadd.f32 %v2233, %v2521
  %v2523 = vpop.f32.mrb[0].mxu0
  %v2524 = vpop.f32.mrb[0].mxu0
  %v2525 = vadd.f32 %v2236, %v2524
  %v2526 = vpop.f32.mrb[0].mxu0
  %2527 = vmatprep.mubr.bf16.mxu0 %v1313
  %2528 = vmatmul.mubr.bf16.gmra.mrb[0].mxu0 %v1312
  %v2529 = vpop.f32.mrb[0].mxu0
  %v2530 = vadd.f32 %v2241, %v2529
  %v2531 = vpop.f32.mrb[0].mxu0
  %v2532 = vpop.f32.mrb[0].mxu0
  %v2533 = vadd.f32 %v2244, %v2532
  %v2534 = vpop.f32.mrb[0].mxu0
  %2535 = vmatprep.mubr.bf16.mxu0 %v1321
  %2536 = vmatmul.mubr.bf16.gmra.mrb[0].mxu0 %v1320
  %v2537 = vpop.f32.mrb[0].mxu0
  %v2538 = vadd.f32 %v2249, %v2537
  %v2539 = vpop.f32.mrb[0].mxu0
  %v2540 = vpop.f32.mrb[0].mxu0
  %v2541 = vadd.f32 %v2252, %v2540
  %v2542 = vpop.f32.mrb[0].mxu0
  %2543 = vmatprep.mubr.bf16.mxu0 %v1329
  %2544 = vmatmul.mubr.bf16.gmra.mrb[0].mxu0 %v1328
  %v2545 = vpop.f32.mrb[0].mxu0
  %v2546 = vadd.f32 %v2257, %v2545
  %v2547 = vpop.f32.mrb[0].mxu0
  %v2548 = vpop.f32.mrb[0].mxu0
  %v2549 = vadd.f32 %v2260, %v2548
  %v2550 = vpop.f32.mrb[0].mxu0
  %2551 = vmatprep.mubr.bf16.mxu0 %v1337
  %2552 = vmatmul.mubr.bf16.gmra.mrb[0].mxu0 %v1336
  %v2553 = vpop.f32.mrb[0].mxu0
  %v2554 = vadd.f32 %v2265, %v2553
  %v2555 = vpop.f32.mrb[0].mxu0
  %v2556 = vpop.f32.mrb[0].mxu0
  %v2557 = vadd.f32 %v2268, %v2556
  %v2558 = vpop.f32.mrb[0].mxu0
  %2559 = vmatprep.mubr.bf16.mxu0 %v1345
  %2560 = vmatmul.mubr.bf16.gmra.mrb[0].mxu0 %v1344
  %v2561 = vpop.f32.mrb[0].mxu0
  %v2562 = vadd.f32 %v2273, %v2561
  %v2563 = vpop.f32.mrb[0].mxu0
  %v2564 = vpop.f32.mrb[0].mxu0
  %v2565 = vadd.f32 %v2276, %v2564
  %v2566 = vpop.f32.mrb[0].mxu0
  %2567 = vmatprep.mubr.bf16.mxu0 %v1353
  %2568 = vmatmul.mubr.bf16.gmra.mrb[0].mxu0 %v1352
  %v2569 = vpop.f32.mrb[0].mxu0
  %v2570 = vadd.f32 %v2281, %v2569
  %v2571 = vpop.f32.mrb[0].mxu0
  %v2572 = vpop.f32.mrb[0].mxu0
  %v2573 = vadd.f32 %v2284, %v2572
  %v2574 = vpop.f32.mrb[0].mxu0
  %2575 = vmatprep.mubr.bf16.mxu0 %v1361
  %2576 = vmatmul.mubr.bf16.gmra.mrb[0].mxu0 %v1360
  %v2577 = vpop.f32.mrb[0].mxu0
  %v2578 = vadd.f32 %v2289, %v2577
  %v2579 = vpop.f32.mrb[0].mxu0
  %v2580 = vpop.f32.mrb[0].mxu0
  %v2581 = vadd.f32 %v2292, %v2580
  %v2582 = vpop.f32.mrb[0].mxu0
  %2583 = vmatprep.mubr.bf16.mxu0 %v1369
  %2584 = vmatmul.mubr.bf16.gmra.mrb[0].mxu0 %v1368
  %v2585 = vpop.f32.mrb[0].mxu0
  %v2586 = vadd.f32 %v2297, %v2585
  %v2587 = vpop.f32.mrb[0].mxu0
  %v2588 = vpop.f32.mrb[0].mxu0
  %v2589 = vadd.f32 %v2300, %v2588
  %v2590 = vpop.f32.mrb[0].mxu0
  %2591 = vmatprep.mubr.bf16.mxu0 %v1377
  %2592 = vmatmul.mubr.bf16.gmra.mrb[0].mxu0 %v1376
  %v2593 = vpop.f32.mrb[0].mxu0
  %v2594 = vadd.f32 %v2305, %v2593
  %v2595 = vpop.f32.mrb[0].mxu0
  %v2596 = vpop.f32.mrb[0].mxu0
  %v2597 = vadd.f32 %v2308, %v2596
  %v2598 = vpop.f32.mrb[0].mxu0
  %2599 = vmatprep.mubr.bf16.mxu0 %v1385
  %2600 = vmatmul.mubr.bf16.gmra.mrb[0].mxu0 %v1384
  %v2601 = vpop.f32.mrb[0].mxu0
  %v2602 = vadd.f32 %v2313, %v2601
  %v2603 = vpop.f32.mrb[0].mxu0
  %v2604 = vpop.f32.mrb[0].mxu0
  %v2605 = vadd.f32 %v2316, %v2604
  %v2606 = vpop.f32.mrb[0].mxu0
  %2607 = vmatprep.mubr.bf16.mxu0 %v1393
  %2608 = vmatmul.mubr.bf16.gmra.mrb[0].mxu0 %v1392
  %v2609 = vpop.f32.mrb[0].mxu0
  %v2610 = vadd.f32 %v2321, %v2609
  %v2611 = vpop.f32.mrb[0].mxu0
  %v2612 = vpop.f32.mrb[0].mxu0
  %v2613 = vadd.f32 %v2324, %v2612
  %v2614 = vpop.f32.mrb[0].mxu0
  %2615 = vmatprep.mubr.bf16.mxu0 %v1401
  %2616 = vmatmul.mubr.bf16.gmra.mrb[0].mxu0 %v1400
  %v2617 = vpop.f32.mrb[0].mxu0
  %v2618 = vadd.f32 %v2329, %v2617
  %v2619 = vpop.f32.mrb[0].mxu0
  %v2620 = vpop.f32.mrb[0].mxu0
  %v2621 = vadd.f32 %v2332, %v2620
  %v2622 = vpop.f32.mrb[0].mxu0
  %2623 = vmatprep.mubr.bf16.mxu0 %v1409
  %2624 = vmatmul.mubr.bf16.gmra.mrb[0].mxu0 %v1408
  %v2625 = vpop.f32.mrb[0].mxu0
  %v2626 = vadd.f32 %v2337, %v2625
  %v2627 = vpop.f32.mrb[0].mxu0
  %v2628 = vpop.f32.mrb[0].mxu0
  %v2629 = vadd.f32 %v2340, %v2628
  %v2630 = vpop.f32.mrb[0].mxu0
  %2631 = vmatprep.mubr.bf16.mxu0 %v1417
  %2632 = vmatmul.mubr.bf16.gmra.mrb[0].mxu0 %v1416
  %v2633 = vpop.f32.mrb[0].mxu0
  %v2634 = vadd.f32 %v2345, %v2633
  %v2635 = vpop.f32.mrb[0].mxu0
  %v2636 = vpop.f32.mrb[0].mxu0
  %v2637 = vadd.f32 %v2348, %v2636
  %v2638 = vpop.f32.mrb[0].mxu0
  %2639 = vmatprep.mubr.bf16.mxu0 %v1425
  %2640 = vmatmul.mubr.bf16.gmra.mrb[0].mxu0 %v1424
  %v2641 = vpop.f32.mrb[0].mxu0
  %v2642 = vadd.f32 %v2353, %v2641
  %v2643 = vpop.f32.mrb[0].mxu0
  %v2644 = vpop.f32.mrb[0].mxu0
  %v2645 = vadd.f32 %v2356, %v2644
  %v2646 = vpop.f32.mrb[0].mxu0
  %2647 = vmatprep.mubr.bf16.mxu0 %v1433
  %2648 = vmatmul.mubr.bf16.gmra.mrb[0].mxu0 %v1432
  %v2649 = vpop.f32.mrb[0].mxu0
  %v2650 = vadd.f32 %v2361, %v2649
  %v2651 = vpop.f32.mrb[0].mxu0
  %v2652 = vpop.f32.mrb[0].mxu0
  %v2653 = vadd.f32 %v2364, %v2652
  %v2654 = vpop.f32.mrb[0].mxu0
  %2655 = vdwg.mxu0
  %2656 = vmatprep.subr.bf16.mxu0 0
  %2657 = vmatpush1.bf16.msra.mxu0 %v1982
  %2658 = vmatprep.subr.bf16.mxu0 0
  %2659 = vmatpush1.bf16.msra.mxu0 %v1983
  %2660 = vmatprep.subr.bf16.mxu0 0
  %2661 = vmatpush1.bf16.msra.mxu0 %v1984
  %2662 = vmatprep.subr.bf16.mxu0 0
  %2663 = vmatpush1.bf16.msra.mxu0 %v1985
  %2664 = vmatprep.subr.bf16.mxu0 0
  %2665 = vmatpush1.bf16.msra.mxu0 %v1986
  %2666 = vmatprep.subr.bf16.mxu0 0
  %2667 = vmatpush1.bf16.msra.mxu0 %v1987
  %2668 = vmatprep.subr.bf16.mxu0 0
  %2669 = vmatpush1.bf16.msra.mxu0 %v1988
  %2670 = vmatprep.subr.bf16.mxu0 0
  %2671 = vmatpush1.bf16.msra.mxu0 %v1989
  %2672 = vmatprep.subr.bf16.mxu0 0
  %2673 = vmatpush1.bf16.msra.mxu0 %v1990
  %2674 = vmatprep.subr.bf16.mxu0 0
  %2675 = vmatpush1.bf16.msra.mxu0 %v1991
  %2676 = vmatprep.subr.bf16.mxu0 0
  %2677 = vmatpush1.bf16.msra.mxu0 %v1992
  %2678 = vmatprep.subr.bf16.mxu0 0
  %2679 = vmatpush1.bf16.msra.mxu0 %v1993
  %2680 = vmatprep.subr.bf16.mxu0 0
  %2681 = vmatpush1.bf16.msra.mxu0 %v1994
  %2682 = vmatprep.subr.bf16.mxu0 0
  %2683 = vmatpush1.bf16.msra.mxu0 %v1995
  %2684 = vmatprep.subr.bf16.mxu0 0
  %2685 = vmatpush1.bf16.msra.mxu0 %v1996
  %2686 = vmatprep.subr.bf16.mxu0 0
  %2687 = vmatpush1.bf16.msra.mxu0 %v1997
  %2688 = vmatprep.mubr.bf16.mxu0 %v1187
  %2689 = vmatmul.mubr.bf16.gmra.mrb[0].mxu0 %v1186
  %v2690 = vpop.f32.mrb[0].mxu0
  %v2691 = vadd.f32 %v2402, %v2690
  %v2692 = vpop.f32.mrb[0].mxu0
  %v2693 = vpop.f32.mrb[0].mxu0
  %v2694 = vadd.f32 %v2405, %v2693
  %v2695 = vpop.f32.mrb[0].mxu0
  %2696 = vmatprep.mubr.bf16.mxu0 %v1195
  %2697 = vmatmul.mubr.bf16.gmra.mrb[0].mxu0 %v1194
  %v2698 = vpop.f32.mrb[0].mxu0
  %v2699 = vadd.f32 %v2410, %v2698
  %v2700 = vpop.f32.mrb[0].mxu0
  %v2701 = vpop.f32.mrb[0].mxu0
  %v2702 = vadd.f32 %v2413, %v2701
  %v2703 = vpop.f32.mrb[0].mxu0
  %2704 = vmatprep.mubr.bf16.mxu0 %v1203
  %2705 = vmatmul.mubr.bf16.gmra.mrb[0].mxu0 %v1202
  %v2706 = vpop.f32.mrb[0].mxu0
  %v2707 = vadd.f32 %v2418, %v2706
  %v2708 = vpop.f32.mrb[0].mxu0
  %v2709 = vpop.f32.mrb[0].mxu0
  %v2710 = vadd.f32 %v2421, %v2709
  %v2711 = vpop.f32.mrb[0].mxu0
  %2712 = vmatprep.mubr.bf16.mxu0 %v1211
  %2713 = vmatmul.mubr.bf16.gmra.mrb[0].mxu0 %v1210
  %v2714 = vpop.f32.mrb[0].mxu0
  %v2715 = vadd.f32 %v2426, %v2714
  %v2716 = vpop.f32.mrb[0].mxu0
  %v2717 = vpop.f32.mrb[0].mxu0
  %v2718 = vadd.f32 %v2429, %v2717
  %v2719 = vpop.f32.mrb[0].mxu0
  %2720 = vmatprep.mubr.bf16.mxu0 %v1219
  %2721 = vmatmul.mubr.bf16.gmra.mrb[0].mxu0 %v1218
  %v2722 = vpop.f32.mrb[0].mxu0
  %v2723 = vadd.f32 %v2434, %v2722
  %v2724 = vpop.f32.mrb[0].mxu0
  %v2725 = vpop.f32.mrb[0].mxu0
  %v2726 = vadd.f32 %v2437, %v2725
  %v2727 = vpop.f32.mrb[0].mxu0
  %2728 = vmatprep.mubr.bf16.mxu0 %v1227
  %2729 = vmatmul.mubr.bf16.gmra.mrb[0].mxu0 %v1226
  %v2730 = vpop.f32.mrb[0].mxu0
  %v2731 = vadd.f32 %v2442, %v2730
  %v2732 = vpop.f32.mrb[0].mxu0
  %v2733 = vpop.f32.mrb[0].mxu0
  %v2734 = vadd.f32 %v2445, %v2733
  %v2735 = vpop.f32.mrb[0].mxu0
  %2736 = vmatprep.mubr.bf16.mxu0 %v1235
  %2737 = vmatmul.mubr.bf16.gmra.mrb[0].mxu0 %v1234
  %v2738 = vpop.f32.mrb[0].mxu0
  %v2739 = vadd.f32 %v2450, %v2738
  %v2740 = vpop.f32.mrb[0].mxu0
  %v2741 = vpop.f32.mrb[0].mxu0
  %v2742 = vadd.f32 %v2453, %v2741
  %v2743 = vpop.f32.mrb[0].mxu0
  %2744 = vmatprep.mubr.bf16.mxu0 %v1243
  %2745 = vmatmul.mubr.bf16.gmra.mrb[0].mxu0 %v1242
  %v2746 = vpop.f32.mrb[0].mxu0
  %v2747 = vadd.f32 %v2458, %v2746
  %v2748 = vpop.f32.mrb[0].mxu0
  %v2749 = vpop.f32.mrb[0].mxu0
  %v2750 = vadd.f32 %v2461, %v2749
  %v2751 = vpop.f32.mrb[0].mxu0
  %2752 = vmatprep.mubr.bf16.mxu0 %v1251
  %2753 = vmatmul.mubr.bf16.gmra.mrb[0].mxu0 %v1250
  %v2754 = vpop.f32.mrb[0].mxu0
  %v2755 = vadd.f32 %v2466, %v2754
  %v2756 = vpop.f32.mrb[0].mxu0
  %v2757 = vpop.f32.mrb[0].mxu0
  %v2758 = vadd.f32 %v2469, %v2757
  %v2759 = vpop.f32.mrb[0].mxu0
  %2760 = vmatprep.mubr.bf16.mxu0 %v1259
  %2761 = vmatmul.mubr.bf16.gmra.mrb[0].mxu0 %v1258
  %v2762 = vpop.f32.mrb[0].mxu0
  %v2763 = vadd.f32 %v2474, %v2762
  %v2764 = vpop.f32.mrb[0].mxu0
  %v2765 = vpop.f32.mrb[0].mxu0
  %v2766 = vadd.f32 %v2477, %v2765
  %v2767 = vpop.f32.mrb[0].mxu0
  %2768 = vmatprep.mubr.bf16.mxu0 %v1267
  %2769 = vmatmul.mubr.bf16.gmra.mrb[0].mxu0 %v1266
  %v2770 = vpop.f32.mrb[0].mxu0
  %v2771 = vadd.f32 %v2482, %v2770
  %v2772 = vpop.f32.mrb[0].mxu0
  %v2773 = vpop.f32.mrb[0].mxu0
  %v2774 = vadd.f32 %v2485, %v2773
  %v2775 = vpop.f32.mrb[0].mxu0
  %2776 = vmatprep.mubr.bf16.mxu0 %v1275
  %2777 = vmatmul.mubr.bf16.gmra.mrb[0].mxu0 %v1274
  %v2778 = vpop.f32.mrb[0].mxu0
  %v2779 = vadd.f32 %v2490, %v2778
  %v2780 = vpop.f32.mrb[0].mxu0
  %v2781 = vpop.f32.mrb[0].mxu0
  %v2782 = vadd.f32 %v2493, %v2781
  %v2783 = vpop.f32.mrb[0].mxu0
  %2784 = vmatprep.mubr.bf16.mxu0 %v1283
  %2785 = vmatmul.mubr.bf16.gmra.mrb[0].mxu0 %v1282
  %v2786 = vpop.f32.mrb[0].mxu0
  %v2787 = vadd.f32 %v2498, %v2786
  %v2788 = vpop.f32.mrb[0].mxu0
  %v2789 = vpop.f32.mrb[0].mxu0
  %v2790 = vadd.f32 %v2501, %v2789
  %v2791 = vpop.f32.mrb[0].mxu0
  %2792 = vmatprep.mubr.bf16.mxu0 %v1291
  %2793 = vmatmul.mubr.bf16.gmra.mrb[0].mxu0 %v1290
  %v2794 = vpop.f32.mrb[0].mxu0
  %v2795 = vadd.f32 %v2506, %v2794
  %v2796 = vpop.f32.mrb[0].mxu0
  %v2797 = vpop.f32.mrb[0].mxu0
  %v2798 = vadd.f32 %v2509, %v2797
  %v2799 = vpop.f32.mrb[0].mxu0
  %2800 = vmatprep.mubr.bf16.mxu0 %v1299
  %2801 = vmatmul.mubr.bf16.gmra.mrb[0].mxu0 %v1298
  %v2802 = vpop.f32.mrb[0].mxu0
  %v2803 = vadd.f32 %v2514, %v2802
  %v2804 = vpop.f32.mrb[0].mxu0
  %v2805 = vpop.f32.mrb[0].mxu0
  %v2806 = vadd.f32 %v2517, %v2805
  %v2807 = vpop.f32.mrb[0].mxu0
  %2808 = vmatprep.mubr.bf16.mxu0 %v1307
  %2809 = vmatmul.mubr.bf16.gmra.mrb[0].mxu0 %v1306
  %v2810 = vpop.f32.mrb[0].mxu0
  %v2811 = vadd.f32 %v2522, %v2810
  %v2812 = vpop.f32.mrb[0].mxu0
  %v2813 = vpop.f32.mrb[0].mxu0
  %v2814 = vadd.f32 %v2525, %v2813
  %v2815 = vpop.f32.mrb[0].mxu0
  %2816 = vmatprep.mubr.bf16.mxu0 %v1315
  %2817 = vmatmul.mubr.bf16.gmra.mrb[0].mxu0 %v1314
  %v2818 = vpop.f32.mrb[0].mxu0
  %v2819 = vadd.f32 %v2530, %v2818
  %v2820 = vpop.f32.mrb[0].mxu0
  %v2821 = vpop.f32.mrb[0].mxu0
  %v2822 = vadd.f32 %v2533, %v2821
  %v2823 = vpop.f32.mrb[0].mxu0
  %2824 = vmatprep.mubr.bf16.mxu0 %v1323
  %2825 = vmatmul.mubr.bf16.gmra.mrb[0].mxu0 %v1322
  %v2826 = vpop.f32.mrb[0].mxu0
  %v2827 = vadd.f32 %v2538, %v2826
  %v2828 = vpop.f32.mrb[0].mxu0
  %v2829 = vpop.f32.mrb[0].mxu0
  %v2830 = vadd.f32 %v2541, %v2829
  %v2831 = vpop.f32.mrb[0].mxu0
  %2832 = vmatprep.mubr.bf16.mxu0 %v1331
  %2833 = vmatmul.mubr.bf16.gmra.mrb[0].mxu0 %v1330
  %v2834 = vpop.f32.mrb[0].mxu0
  %v2835 = vadd.f32 %v2546, %v2834
  %v2836 = vpop.f32.mrb[0].mxu0
  %v2837 = vpop.f32.mrb[0].mxu0
  %v2838 = vadd.f32 %v2549, %v2837
  %v2839 = vpop.f32.mrb[0].mxu0
  %2840 = vmatprep.mubr.bf16.mxu0 %v1339
  %2841 = vmatmul.mubr.bf16.gmra.mrb[0].mxu0 %v1338
  %v2842 = vpop.f32.mrb[0].mxu0
  %v2843 = vadd.f32 %v2554, %v2842
  %v2844 = vpop.f32.mrb[0].mxu0
  %v2845 = vpop.f32.mrb[0].mxu0
  %v2846 = vadd.f32 %v2557, %v2845
  %v2847 = vpop.f32.mrb[0].mxu0
  %2848 = vmatprep.mubr.bf16.mxu0 %v1347
  %2849 = vmatmul.mubr.bf16.gmra.mrb[0].mxu0 %v1346
  %v2850 = vpop.f32.mrb[0].mxu0
  %v2851 = vadd.f32 %v2562, %v2850
  %v2852 = vpop.f32.mrb[0].mxu0
  %v2853 = vpop.f32.mrb[0].mxu0
  %v2854 = vadd.f32 %v2565, %v2853
  %v2855 = vpop.f32.mrb[0].mxu0
  %2856 = vmatprep.mubr.bf16.mxu0 %v1355
  %2857 = vmatmul.mubr.bf16.gmra.mrb[0].mxu0 %v1354
  %v2858 = vpop.f32.mrb[0].mxu0
  %v2859 = vadd.f32 %v2570, %v2858
  %v2860 = vpop.f32.mrb[0].mxu0
  %v2861 = vpop.f32.mrb[0].mxu0
  %v2862 = vadd.f32 %v2573, %v2861
  %v2863 = vpop.f32.mrb[0].mxu0
  %2864 = vmatprep.mubr.bf16.mxu0 %v1363
  %2865 = vmatmul.mubr.bf16.gmra.mrb[0].mxu0 %v1362
  %v2866 = vpop.f32.mrb[0].mxu0
  %v2867 = vadd.f32 %v2578, %v2866
  %v2868 = vpop.f32.mrb[0].mxu0
  %v2869 = vpop.f32.mrb[0].mxu0
  %v2870 = vadd.f32 %v2581, %v2869
  %v2871 = vpop.f32.mrb[0].mxu0
  %2872 = vmatprep.mubr.bf16.mxu0 %v1371
  %2873 = vmatmul.mubr.bf16.gmra.mrb[0].mxu0 %v1370
  %v2874 = vpop.f32.mrb[0].mxu0
  %v2875 = vadd.f32 %v2586, %v2874
  %v2876 = vpop.f32.mrb[0].mxu0
  %v2877 = vpop.f32.mrb[0].mxu0
  %v2878 = vadd.f32 %v2589, %v2877
  %v2879 = vpop.f32.mrb[0].mxu0
  %2880 = vmatprep.mubr.bf16.mxu0 %v1379
  %2881 = vmatmul.mubr.bf16.gmra.mrb[0].mxu0 %v1378
  %v2882 = vpop.f32.mrb[0].mxu0
  %v2883 = vadd.f32 %v2594, %v2882
  %v2884 = vpop.f32.mrb[0].mxu0
  %v2885 = vpop.f32.mrb[0].mxu0
  %v2886 = vadd.f32 %v2597, %v2885
  %v2887 = vpop.f32.mrb[0].mxu0
  %2888 = vmatprep.mubr.bf16.mxu0 %v1387
  %2889 = vmatmul.mubr.bf16.gmra.mrb[0].mxu0 %v1386
  %v2890 = vpop.f32.mrb[0].mxu0
  %v2891 = vadd.f32 %v2602, %v2890
  %v2892 = vpop.f32.mrb[0].mxu0
  %v2893 = vpop.f32.mrb[0].mxu0
  %v2894 = vadd.f32 %v2605, %v2893
  %v2895 = vpop.f32.mrb[0].mxu0
  %2896 = vmatprep.mubr.bf16.mxu0 %v1395
  %2897 = vmatmul.mubr.bf16.gmra.mrb[0].mxu0 %v1394
  %v2898 = vpop.f32.mrb[0].mxu0
  %v2899 = vadd.f32 %v2610, %v2898
  %v2900 = vpop.f32.mrb[0].mxu0
  %v2901 = vpop.f32.mrb[0].mxu0
  %v2902 = vadd.f32 %v2613, %v2901
  %v2903 = vpop.f32.mrb[0].mxu0
  %2904 = vmatprep.mubr.bf16.mxu0 %v1403
  %2905 = vmatmul.mubr.bf16.gmra.mrb[0].mxu0 %v1402
  %v2906 = vpop.f32.mrb[0].mxu0
  %v2907 = vadd.f32 %v2618, %v2906
  %v2908 = vpop.f32.mrb[0].mxu0
  %v2909 = vpop.f32.mrb[0].mxu0
  %v2910 = vadd.f32 %v2621, %v2909
  %v2911 = vpop.f32.mrb[0].mxu0
  %2912 = vmatprep.mubr.bf16.mxu0 %v1411
  %2913 = vmatmul.mubr.bf16.gmra.mrb[0].mxu0 %v1410
  %v2914 = vpop.f32.mrb[0].mxu0
  %v2915 = vadd.f32 %v2626, %v2914
  %v2916 = vpop.f32.mrb[0].mxu0
  %v2917 = vpop.f32.mrb[0].mxu0
  %v2918 = vadd.f32 %v2629, %v2917
  %v2919 = vpop.f32.mrb[0].mxu0
  %2920 = vmatprep.mubr.bf16.mxu0 %v1419
  %2921 = vmatmul.mubr.bf16.gmra.mrb[0].mxu0 %v1418
  %v2922 = vpop.f32.mrb[0].mxu0
  %v2923 = vadd.f32 %v2634, %v2922
  %v2924 = vpop.f32.mrb[0].mxu0
  %v2925 = vpop.f32.mrb[0].mxu0
  %v2926 = vadd.f32 %v2637, %v2925
  %v2927 = vpop.f32.mrb[0].mxu0
  %2928 = vmatprep.mubr.bf16.mxu0 %v1427
  %2929 = vmatmul.mubr.bf16.gmra.mrb[0].mxu0 %v1426
  %v2930 = vpop.f32.mrb[0].mxu0
  %v2931 = vadd.f32 %v2642, %v2930
  %v2932 = vpop.f32.mrb[0].mxu0
  %v2933 = vpop.f32.mrb[0].mxu0
  %v2934 = vadd.f32 %v2645, %v2933
  %v2935 = vpop.f32.mrb[0].mxu0
  %2936 = vmatprep.mubr.bf16.mxu0 %v1435
  %2937 = vmatmul.mubr.bf16.gmra.mrb[0].mxu0 %v1434
  %v2938 = vpop.f32.mrb[0].mxu0
  %v2939 = vadd.f32 %v2650, %v2938
  %v2940 = vpop.f32.mrb[0].mxu0
  %v2941 = vpop.f32.mrb[0].mxu0
  %v2942 = vadd.f32 %v2653, %v2941
  %v2943 = vpop.f32.mrb[0].mxu0
  %2944 = vdwg.mxu0
  %2945 = vmatprep.subr.bf16.mxu0 0
  %2946 = vmatpush1.bf16.msra.mxu0 %v1998
  %2947 = vmatprep.subr.bf16.mxu0 0
  %2948 = vmatpush1.bf16.msra.mxu0 %v1999
  %2949 = vmatprep.subr.bf16.mxu0 0
  %2950 = vmatpush1.bf16.msra.mxu0 %v2000
  %2951 = vmatprep.subr.bf16.mxu0 0
  %2952 = vmatpush1.bf16.msra.mxu0 %v2001
  %2953 = vmatprep.subr.bf16.mxu0 0
  %2954 = vmatpush1.bf16.msra.mxu0 %v2002
  %2955 = vmatprep.subr.bf16.mxu0 0
  %2956 = vmatpush1.bf16.msra.mxu0 %v2003
  %2957 = vmatprep.subr.bf16.mxu0 0
  %2958 = vmatpush1.bf16.msra.mxu0 %v2004
  %2959 = vmatprep.subr.bf16.mxu0 0
  %2960 = vmatpush1.bf16.msra.mxu0 %v2005
  %2961 = vmatprep.subr.bf16.mxu0 0
  %2962 = vmatpush1.bf16.msra.mxu0 %v2006
  %2963 = vmatprep.subr.bf16.mxu0 0
  %2964 = vmatpush1.bf16.msra.mxu0 %v2007
  %2965 = vmatprep.subr.bf16.mxu0 0
  %2966 = vmatpush1.bf16.msra.mxu0 %v2008
  %2967 = vmatprep.subr.bf16.mxu0 0
  %2968 = vmatpush1.bf16.msra.mxu0 %v2009
  %2969 = vmatprep.subr.bf16.mxu0 0
  %2970 = vmatpush1.bf16.msra.mxu0 %v2010
  %2971 = vmatprep.subr.bf16.mxu0 0
  %2972 = vmatpush1.bf16.msra.mxu0 %v2011
  %2973 = vmatprep.subr.bf16.mxu0 0
  %2974 = vmatpush1.bf16.msra.mxu0 %v2012
  %2975 = vmatprep.subr.bf16.mxu0 0
  %2976 = vmatpush1.bf16.msra.mxu0 %v2013
  %2977 = vmatprep.mubr.bf16.mxu0 %v1189
  %2978 = vmatmul.mubr.bf16.gmra.mrb[0].mxu0 %v1188
  %v2979 = vpop.f32.mrb[0].mxu0
  %v2980 = vadd.f32 %v2691, %v2979
  %v2981 = vpop.f32.mrb[0].mxu0
  %v2982 = vpop.f32.mrb[0].mxu0
  %v2983 = vadd.f32 %v2694, %v2982
  %v2984 = vpop.f32.mrb[0].mxu0
  %2985 = vmatprep.mubr.bf16.mxu0 %v1197
  %2986 = vmatmul.mubr.bf16.gmra.mrb[0].mxu0 %v1196
  %v2987 = vpop.f32.mrb[0].mxu0
  %v2988 = vadd.f32 %v2699, %v2987
  %v2989 = vpop.f32.mrb[0].mxu0
  %v2990 = vpop.f32.mrb[0].mxu0
  %v2991 = vadd.f32 %v2702, %v2990
  %v2992 = vpop.f32.mrb[0].mxu0
  %2993 = vmatprep.mubr.bf16.mxu0 %v1205
  %2994 = vmatmul.mubr.bf16.gmra.mrb[0].mxu0 %v1204
  %v2995 = vpop.f32.mrb[0].mxu0
  %v2996 = vadd.f32 %v2707, %v2995
  %v2997 = vpop.f32.mrb[0].mxu0
  %v2998 = vpop.f32.mrb[0].mxu0
  %v2999 = vadd.f32 %v2710, %v2998
  %v3000 = vpop.f32.mrb[0].mxu0
  %3001 = vmatprep.mubr.bf16.mxu0 %v1213
  %3002 = vmatmul.mubr.bf16.gmra.mrb[0].mxu0 %v1212
  %v3003 = vpop.f32.mrb[0].mxu0
  %v3004 = vadd.f32 %v2715, %v3003
  %v3005 = vpop.f32.mrb[0].mxu0
  %v3006 = vpop.f32.mrb[0].mxu0
  %v3007 = vadd.f32 %v2718, %v3006
  %v3008 = vpop.f32.mrb[0].mxu0
  %3009 = vmatprep.mubr.bf16.mxu0 %v1221
  %3010 = vmatmul.mubr.bf16.gmra.mrb[0].mxu0 %v1220
  %v3011 = vpop.f32.mrb[0].mxu0
  %v3012 = vadd.f32 %v2723, %v3011
  %v3013 = vpop.f32.mrb[0].mxu0
  %v3014 = vpop.f32.mrb[0].mxu0
  %v3015 = vadd.f32 %v2726, %v3014
  %v3016 = vpop.f32.mrb[0].mxu0
  %3017 = vmatprep.mubr.bf16.mxu0 %v1229
  %3018 = vmatmul.mubr.bf16.gmra.mrb[0].mxu0 %v1228
  %v3019 = vpop.f32.mrb[0].mxu0
  %v3020 = vadd.f32 %v2731, %v3019
  %v3021 = vpop.f32.mrb[0].mxu0
  %v3022 = vpop.f32.mrb[0].mxu0
  %v3023 = vadd.f32 %v2734, %v3022
  %v3024 = vpop.f32.mrb[0].mxu0
  %3025 = vmatprep.mubr.bf16.mxu0 %v1237
  %3026 = vmatmul.mubr.bf16.gmra.mrb[0].mxu0 %v1236
  %v3027 = vpop.f32.mrb[0].mxu0
  %v3028 = vadd.f32 %v2739, %v3027
  %v3029 = vpop.f32.mrb[0].mxu0
  %v3030 = vpop.f32.mrb[0].mxu0
  %v3031 = vadd.f32 %v2742, %v3030
  %v3032 = vpop.f32.mrb[0].mxu0
  %3033 = vmatprep.mubr.bf16.mxu0 %v1245
  %3034 = vmatmul.mubr.bf16.gmra.mrb[0].mxu0 %v1244
  %v3035 = vpop.f32.mrb[0].mxu0
  %v3036 = vadd.f32 %v2747, %v3035
  %v3037 = vpop.f32.mrb[0].mxu0
  %v3038 = vpop.f32.mrb[0].mxu0
  %v3039 = vadd.f32 %v2750, %v3038
  %v3040 = vpop.f32.mrb[0].mxu0
  %3041 = vmatprep.mubr.bf16.mxu0 %v1253
  %3042 = vmatmul.mubr.bf16.gmra.mrb[0].mxu0 %v1252
  %v3043 = vpop.f32.mrb[0].mxu0
  %v3044 = vadd.f32 %v2755, %v3043
  %v3045 = vpop.f32.mrb[0].mxu0
  %v3046 = vpop.f32.mrb[0].mxu0
  %v3047 = vadd.f32 %v2758, %v3046
  %v3048 = vpop.f32.mrb[0].mxu0
  %3049 = vmatprep.mubr.bf16.mxu0 %v1261
  %3050 = vmatmul.mubr.bf16.gmra.mrb[0].mxu0 %v1260
  %v3051 = vpop.f32.mrb[0].mxu0
  %v3052 = vadd.f32 %v2763, %v3051
  %v3053 = vpop.f32.mrb[0].mxu0
  %v3054 = vpop.f32.mrb[0].mxu0
  %v3055 = vadd.f32 %v2766, %v3054
  %v3056 = vpop.f32.mrb[0].mxu0
  %3057 = vmatprep.mubr.bf16.mxu0 %v1269
  %3058 = vmatmul.mubr.bf16.gmra.mrb[0].mxu0 %v1268
  %v3059 = vpop.f32.mrb[0].mxu0
  %v3060 = vadd.f32 %v2771, %v3059
  %v3061 = vpop.f32.mrb[0].mxu0
  %v3062 = vpop.f32.mrb[0].mxu0
  %v3063 = vadd.f32 %v2774, %v3062
  %v3064 = vpop.f32.mrb[0].mxu0
  %3065 = vmatprep.mubr.bf16.mxu0 %v1277
  %3066 = vmatmul.mubr.bf16.gmra.mrb[0].mxu0 %v1276
  %v3067 = vpop.f32.mrb[0].mxu0
  %v3068 = vadd.f32 %v2779, %v3067
  %v3069 = vpop.f32.mrb[0].mxu0
  %v3070 = vpop.f32.mrb[0].mxu0
  %v3071 = vadd.f32 %v2782, %v3070
  %v3072 = vpop.f32.mrb[0].mxu0
  %3073 = vmatprep.mubr.bf16.mxu0 %v1285
  %3074 = vmatmul.mubr.bf16.gmra.mrb[0].mxu0 %v1284
  %v3075 = vpop.f32.mrb[0].mxu0
  %v3076 = vadd.f32 %v2787, %v3075
  %v3077 = vpop.f32.mrb[0].mxu0
  %v3078 = vpop.f32.mrb[0].mxu0
  %v3079 = vadd.f32 %v2790, %v3078
  %v3080 = vpop.f32.mrb[0].mxu0
  %3081 = vmatprep.mubr.bf16.mxu0 %v1293
  %3082 = vmatmul.mubr.bf16.gmra.mrb[0].mxu0 %v1292
  %v3083 = vpop.f32.mrb[0].mxu0
  %v3084 = vadd.f32 %v2795, %v3083
  %v3085 = vpop.f32.mrb[0].mxu0
  %v3086 = vpop.f32.mrb[0].mxu0
  %v3087 = vadd.f32 %v2798, %v3086
  %v3088 = vpop.f32.mrb[0].mxu0
  %3089 = vmatprep.mubr.bf16.mxu0 %v1301
  %3090 = vmatmul.mubr.bf16.gmra.mrb[0].mxu0 %v1300
  %v3091 = vpop.f32.mrb[0].mxu0
  %v3092 = vadd.f32 %v2803, %v3091
  %v3093 = vpop.f32.mrb[0].mxu0
  %v3094 = vpop.f32.mrb[0].mxu0
  %v3095 = vadd.f32 %v2806, %v3094
  %v3096 = vpop.f32.mrb[0].mxu0
  %3097 = vmatprep.mubr.bf16.mxu0 %v1309
  %3098 = vmatmul.mubr.bf16.gmra.mrb[0].mxu0 %v1308
  %v3099 = vpop.f32.mrb[0].mxu0
  %v3100 = vadd.f32 %v2811, %v3099
  %v3101 = vpop.f32.mrb[0].mxu0
  %v3102 = vpop.f32.mrb[0].mxu0
  %v3103 = vadd.f32 %v2814, %v3102
  %v3104 = vpop.f32.mrb[0].mxu0
  %3105 = vmatprep.mubr.bf16.mxu0 %v1317
  %3106 = vmatmul.mubr.bf16.gmra.mrb[0].mxu0 %v1316
  %v3107 = vpop.f32.mrb[0].mxu0
  %v3108 = vadd.f32 %v2819, %v3107
  %v3109 = vpop.f32.mrb[0].mxu0
  %v3110 = vpop.f32.mrb[0].mxu0
  %v3111 = vadd.f32 %v2822, %v3110
  %v3112 = vpop.f32.mrb[0].mxu0
  %3113 = vmatprep.mubr.bf16.mxu0 %v1325
  %3114 = vmatmul.mubr.bf16.gmra.mrb[0].mxu0 %v1324
  %v3115 = vpop.f32.mrb[0].mxu0
  %v3116 = vadd.f32 %v2827, %v3115
  %v3117 = vpop.f32.mrb[0].mxu0
  %v3118 = vpop.f32.mrb[0].mxu0
  %v3119 = vadd.f32 %v2830, %v3118
  %v3120 = vpop.f32.mrb[0].mxu0
  %3121 = vmatprep.mubr.bf16.mxu0 %v1333
  %3122 = vmatmul.mubr.bf16.gmra.mrb[0].mxu0 %v1332
  %v3123 = vpop.f32.mrb[0].mxu0
  %v3124 = vadd.f32 %v2835, %v3123
  %v3125 = vpop.f32.mrb[0].mxu0
  %v3126 = vpop.f32.mrb[0].mxu0
  %v3127 = vadd.f32 %v2838, %v3126
  %v3128 = vpop.f32.mrb[0].mxu0
  %3129 = vmatprep.mubr.bf16.mxu0 %v1341
  %3130 = vmatmul.mubr.bf16.gmra.mrb[0].mxu0 %v1340
  %v3131 = vpop.f32.mrb[0].mxu0
  %v3132 = vadd.f32 %v2843, %v3131
  %v3133 = vpop.f32.mrb[0].mxu0
  %v3134 = vpop.f32.mrb[0].mxu0
  %v3135 = vadd.f32 %v2846, %v3134
  %v3136 = vpop.f32.mrb[0].mxu0
  %3137 = vmatprep.mubr.bf16.mxu0 %v1349
  %3138 = vmatmul.mubr.bf16.gmra.mrb[0].mxu0 %v1348
  %v3139 = vpop.f32.mrb[0].mxu0
  %v3140 = vadd.f32 %v2851, %v3139
  %v3141 = vpop.f32.mrb[0].mxu0
  %v3142 = vpop.f32.mrb[0].mxu0
  %v3143 = vadd.f32 %v2854, %v3142
  %v3144 = vpop.f32.mrb[0].mxu0
  %3145 = vmatprep.mubr.bf16.mxu0 %v1357
  %3146 = vmatmul.mubr.bf16.gmra.mrb[0].mxu0 %v1356
  %v3147 = vpop.f32.mrb[0].mxu0
  %v3148 = vadd.f32 %v2859, %v3147
  %v3149 = vpop.f32.mrb[0].mxu0
  %v3150 = vpop.f32.mrb[0].mxu0
  %v3151 = vadd.f32 %v2862, %v3150
  %v3152 = vpop.f32.mrb[0].mxu0
  %3153 = vmatprep.mubr.bf16.mxu0 %v1365
  %3154 = vmatmul.mubr.bf16.gmra.mrb[0].mxu0 %v1364
  %v3155 = vpop.f32.mrb[0].mxu0
  %v3156 = vadd.f32 %v2867, %v3155
  %v3157 = vpop.f32.mrb[0].mxu0
  %v3158 = vpop.f32.mrb[0].mxu0
  %v3159 = vadd.f32 %v2870, %v3158
  %v3160 = vpop.f32.mrb[0].mxu0
  %3161 = vmatprep.mubr.bf16.mxu0 %v1373
  %3162 = vmatmul.mubr.bf16.gmra.mrb[0].mxu0 %v1372
  %v3163 = vpop.f32.mrb[0].mxu0
  %v3164 = vadd.f32 %v2875, %v3163
  %v3165 = vpop.f32.mrb[0].mxu0
  %v3166 = vpop.f32.mrb[0].mxu0
  %v3167 = vadd.f32 %v2878, %v3166
  %v3168 = vpop.f32.mrb[0].mxu0
  %3169 = vmatprep.mubr.bf16.mxu0 %v1381
  %3170 = vmatmul.mubr.bf16.gmra.mrb[0].mxu0 %v1380
  %v3171 = vpop.f32.mrb[0].mxu0
  %v3172 = vadd.f32 %v2883, %v3171
  %v3173 = vpop.f32.mrb[0].mxu0
  %v3174 = vpop.f32.mrb[0].mxu0
  %v3175 = vadd.f32 %v2886, %v3174
  %v3176 = vpop.f32.mrb[0].mxu0
  %3177 = vmatprep.mubr.bf16.mxu0 %v1389
  %3178 = vmatmul.mubr.bf16.gmra.mrb[0].mxu0 %v1388
  %v3179 = vpop.f32.mrb[0].mxu0
  %v3180 = vadd.f32 %v2891, %v3179
  %v3181 = vpop.f32.mrb[0].mxu0
  %v3182 = vpop.f32.mrb[0].mxu0
  %v3183 = vadd.f32 %v2894, %v3182
  %v3184 = vpop.f32.mrb[0].mxu0
  %3185 = vmatprep.mubr.bf16.mxu0 %v1397
  %3186 = vmatmul.mubr.bf16.gmra.mrb[0].mxu0 %v1396
  %v3187 = vpop.f32.mrb[0].mxu0
  %v3188 = vadd.f32 %v2899, %v3187
  %v3189 = vpop.f32.mrb[0].mxu0
  %v3190 = vpop.f32.mrb[0].mxu0
  %v3191 = vadd.f32 %v2902, %v3190
  %v3192 = vpop.f32.mrb[0].mxu0
  %3193 = vmatprep.mubr.bf16.mxu0 %v1405
  %3194 = vmatmul.mubr.bf16.gmra.mrb[0].mxu0 %v1404
  %v3195 = vpop.f32.mrb[0].mxu0
  %v3196 = vadd.f32 %v2907, %v3195
  %v3197 = vpop.f32.mrb[0].mxu0
  %v3198 = vpop.f32.mrb[0].mxu0
  %v3199 = vadd.f32 %v2910, %v3198
  %v3200 = vpop.f32.mrb[0].mxu0
  %3201 = vmatprep.mubr.bf16.mxu0 %v1413
  %3202 = vmatmul.mubr.bf16.gmra.mrb[0].mxu0 %v1412
  %v3203 = vpop.f32.mrb[0].mxu0
  %v3204 = vadd.f32 %v2915, %v3203
  %v3205 = vpop.f32.mrb[0].mxu0
  %v3206 = vpop.f32.mrb[0].mxu0
  %v3207 = vadd.f32 %v2918, %v3206
  %v3208 = vpop.f32.mrb[0].mxu0
  %3209 = vmatprep.mubr.bf16.mxu0 %v1421
  %3210 = vmatmul.mubr.bf16.gmra.mrb[0].mxu0 %v1420
  %v3211 = vpop.f32.mrb[0].mxu0
  %v3212 = vadd.f32 %v2923, %v3211
  %v3213 = vpop.f32.mrb[0].mxu0
  %v3214 = vpop.f32.mrb[0].mxu0
  %v3215 = vadd.f32 %v2926, %v3214
  %v3216 = vpop.f32.mrb[0].mxu0
  %3217 = vmatprep.mubr.bf16.mxu0 %v1429
  %3218 = vmatmul.mubr.bf16.gmra.mrb[0].mxu0 %v1428
  %v3219 = vpop.f32.mrb[0].mxu0
  %v3220 = vadd.f32 %v2931, %v3219
  %v3221 = vpop.f32.mrb[0].mxu0
  %v3222 = vpop.f32.mrb[0].mxu0
  %v3223 = vadd.f32 %v2934, %v3222
  %v3224 = vpop.f32.mrb[0].mxu0
  %3225 = vmatprep.mubr.bf16.mxu0 %v1437
  %3226 = vmatmul.mubr.bf16.gmra.mrb[0].mxu0 %v1436
  %v3227 = vpop.f32.mrb[0].mxu0
  %v3228 = vadd.f32 %v2939, %v3227
  %v3229 = vpop.f32.mrb[0].mxu0
  %v3230 = vpop.f32.mrb[0].mxu0
  %v3231 = vadd.f32 %v2942, %v3230
  %v3232 = vpop.f32.mrb[0].mxu0
  %3233 = vdwg.mxu0
  %v3234 = vld [vmem:[%s2] sm:$0x1]
  %v3235 = vld [vmem:[%s3] sm:$0x1]
  %v3237 = vlaneseq
  %v3238 = vshrl.u32 %v3237, 7
  %v3239 = vsub.s32 0, %v3238
  %v3240 = vrot.slane %v3234, %v3239
  %v3242 = vmul.f32 %v2980, %v3240
  %v3243 = vmul.f32 %v2983, %v3240
  %v3244 = vmul.f32 %v2988, %v3240
  %v3245 = vmul.f32 %v2991, %v3240
  %v3246 = vmul.f32 %v2996, %v3240
  %v3247 = vmul.f32 %v2999, %v3240
  %v3248 = vmul.f32 %v3004, %v3240
  %v3249 = vmul.f32 %v3007, %v3240
  %v3250 = vmul.f32 %v3012, %v3240
  %v3251 = vmul.f32 %v3015, %v3240
  %v3252 = vmul.f32 %v3020, %v3240
  %v3253 = vmul.f32 %v3023, %v3240
  %v3254 = vmul.f32 %v3028, %v3240
  %v3255 = vmul.f32 %v3031, %v3240
  %v3256 = vmul.f32 %v3036, %v3240
  %v3257 = vmul.f32 %v3039, %v3240
  %v3258 = vmul.f32 %v3044, %v3240
  %v3259 = vmul.f32 %v3047, %v3240
  %v3260 = vmul.f32 %v3052, %v3240
  %v3261 = vmul.f32 %v3055, %v3240
  %v3262 = vmul.f32 %v3060, %v3240
  %v3263 = vmul.f32 %v3063, %v3240
  %v3264 = vmul.f32 %v3068, %v3240
  %v3265 = vmul.f32 %v3071, %v3240
  %v3266 = vmul.f32 %v3076, %v3240
  %v3267 = vmul.f32 %v3079, %v3240
  %v3268 = vmul.f32 %v3084, %v3240
  %v3269 = vmul.f32 %v3087, %v3240
  %v3270 = vmul.f32 %v3092, %v3240
  %v3271 = vmul.f32 %v3095, %v3240
  %v3272 = vmul.f32 %v3100, %v3240
  %v3273 = vmul.f32 %v3103, %v3240
  %v3274 = vmul.f32 %v3108, %v3240
  %v3275 = vmul.f32 %v3111, %v3240
  %v3276 = vmul.f32 %v3116, %v3240
  %v3277 = vmul.f32 %v3119, %v3240
  %v3278 = vmul.f32 %v3124, %v3240
  %v3279 = vmul.f32 %v3127, %v3240
  %v3280 = vmul.f32 %v3132, %v3240
  %v3281 = vmul.f32 %v3135, %v3240
  %v3282 = vmul.f32 %v3140, %v3240
  %v3283 = vmul.f32 %v3143, %v3240
  %v3284 = vmul.f32 %v3148, %v3240
  %v3285 = vmul.f32 %v3151, %v3240
  %v3286 = vmul.f32 %v3156, %v3240
  %v3287 = vmul.f32 %v3159, %v3240
  %v3288 = vmul.f32 %v3164, %v3240
  %v3289 = vmul.f32 %v3167, %v3240
  %v3290 = vmul.f32 %v3172, %v3240
  %v3291 = vmul.f32 %v3175, %v3240
  %v3292 = vmul.f32 %v3180, %v3240
  %v3293 = vmul.f32 %v3183, %v3240
  %v3294 = vmul.f32 %v3188, %v3240
  %v3295 = vmul.f32 %v3191, %v3240
  %v3296 = vmul.f32 %v3196, %v3240
  %v3297 = vmul.f32 %v3199, %v3240
  %v3298 = vmul.f32 %v3204, %v3240
  %v3299 = vmul.f32 %v3207, %v3240
  %v3300 = vmul.f32 %v3212, %v3240
  %v3301 = vmul.f32 %v3215, %v3240
  %v3302 = vmul.f32 %v3220, %v3240
  %v3303 = vmul.f32 %v3223, %v3240
  %v3304 = vmul.f32 %v3228, %v3240
  %v3305 = vmul.f32 %v3231, %v3240
  %v3307 = vlaneseq
  %v3308 = vshrl.u32 %v3307, 7
  %v3309 = vsub.s32 0, %v3308
  %v3310 = vrot.slane %v3235, %v3309
  %v3312 = vadd.f32 %v3242, %v3310
  %v3313 = vadd.f32 %v3243, %v3310
  %v3314 = vadd.f32 %v3244, %v3310
  %v3315 = vadd.f32 %v3245, %v3310
  %v3316 = vadd.f32 %v3246, %v3310
  %v3317 = vadd.f32 %v3247, %v3310
  %v3318 = vadd.f32 %v3248, %v3310
  %v3319 = vadd.f32 %v3249, %v3310
  %v3320 = vadd.f32 %v3250, %v3310
  %v3321 = vadd.f32 %v3251, %v3310
  %v3322 = vadd.f32 %v3252, %v3310
  %v3323 = vadd.f32 %v3253, %v3310
  %v3324 = vadd.f32 %v3254, %v3310
  %v3325 = vadd.f32 %v3255, %v3310
  %v3326 = vadd.f32 %v3256, %v3310
  %v3327 = vadd.f32 %v3257, %v3310
  %v3328 = vadd.f32 %v3258, %v3310
  %v3329 = vadd.f32 %v3259, %v3310
  %v3330 = vadd.f32 %v3260, %v3310
  %v3331 = vadd.f32 %v3261, %v3310
  %v3332 = vadd.f32 %v3262, %v3310
  %v3333 = vadd.f32 %v3263, %v3310
  %v3334 = vadd.f32 %v3264, %v3310
  %v3335 = vadd.f32 %v3265, %v3310
  %v3336 = vadd.f32 %v3266, %v3310
  %v3337 = vadd.f32 %v3267, %v3310
  %v3338 = vadd.f32 %v3268, %v3310
  %v3339 = vadd.f32 %v3269, %v3310
  %v3340 = vadd.f32 %v3270, %v3310
  %v3341 = vadd.f32 %v3271, %v3310
  %v3342 = vadd.f32 %v3272, %v3310
  %v3343 = vadd.f32 %v3273, %v3310
  %v3344 = vadd.f32 %v3274, %v3310
  %v3345 = vadd.f32 %v3275, %v3310
  %v3346 = vadd.f32 %v3276, %v3310
  %v3347 = vadd.f32 %v3277, %v3310
  %v3348 = vadd.f32 %v3278, %v3310
  %v3349 = vadd.f32 %v3279, %v3310
  %v3350 = vadd.f32 %v3280, %v3310
  %v3351 = vadd.f32 %v3281, %v3310
  %v3352 = vadd.f32 %v3282, %v3310
  %v3353 = vadd.f32 %v3283, %v3310
  %v3354 = vadd.f32 %v3284, %v3310
  %v3355 = vadd.f32 %v3285, %v3310
  %v3356 = vadd.f32 %v3286, %v3310
  %v3357 = vadd.f32 %v3287, %v3310
  %v3358 = vadd.f32 %v3288, %v3310
  %v3359 = vadd.f32 %v3289, %v3310
  %v3360 = vadd.f32 %v3290, %v3310
  %v3361 = vadd.f32 %v3291, %v3310
  %v3362 = vadd.f32 %v3292, %v3310
  %v3363 = vadd.f32 %v3293, %v3310
  %v3364 = vadd.f32 %v3294, %v3310
  %v3365 = vadd.f32 %v3295, %v3310
  %v3366 = vadd.f32 %v3296, %v3310
  %v3367 = vadd.f32 %v3297, %v3310
  %v3368 = vadd.f32 %v3298, %v3310
  %v3369 = vadd.f32 %v3299, %v3310
  %v3370 = vadd.f32 %v3300, %v3310
  %v3371 = vadd.f32 %v3301, %v3310
  %v3372 = vadd.f32 %v3302, %v3310
  %v3373 = vadd.f32 %v3303, %v3310
  %v3374 = vadd.f32 %v3304, %v3310
  %v3375 = vadd.f32 %v3305, %v3310
  %vm3376 = vcmp.ge.f32.partialorder %v3312, 0.0
  %vm3377 = vcmp.ge.f32.partialorder %v3313, 0.0
  %vm3378 = vcmp.ge.f32.partialorder %v3314, 0.0
  %vm3379 = vcmp.ge.f32.partialorder %v3315, 0.0
  %vm3380 = vcmp.ge.f32.partialorder %v3316, 0.0
  %vm3381 = vcmp.ge.f32.partialorder %v3317, 0.0
  %vm3382 = vcmp.ge.f32.partialorder %v3318, 0.0
  %vm3383 = vcmp.ge.f32.partialorder %v3319, 0.0
  %vm3384 = vcmp.ge.f32.partialorder %v3320, 0.0
  %vm3385 = vcmp.ge.f32.partialorder %v3321, 0.0
  %vm3386 = vcmp.ge.f32.partialorder %v3322, 0.0
  %vm3387 = vcmp.ge.f32.partialorder %v3323, 0.0
  %vm3388 = vcmp.ge.f32.partialorder %v3324, 0.0
  %vm3389 = vcmp.ge.f32.partialorder %v3325, 0.0
  %vm3390 = vcmp.ge.f32.partialorder %v3326, 0.0
  %vm3391 = vcmp.ge.f32.partialorder %v3327, 0.0
  %vm3392 = vcmp.ge.f32.partialorder %v3328, 0.0
  %vm3393 = vcmp.ge.f32.partialorder %v3329, 0.0
  %vm3394 = vcmp.ge.f32.partialorder %v3330, 0.0
  %vm3395 = vcmp.ge.f32.partialorder %v3331, 0.0
  %vm3396 = vcmp.ge.f32.partialorder %v3332, 0.0
  %vm3397 = vcmp.ge.f32.partialorder %v3333, 0.0
  %vm3398 = vcmp.ge.f32.partialorder %v3334, 0.0
  %vm3399 = vcmp.ge.f32.partialorder %v3335, 0.0
  %vm3400 = vcmp.ge.f32.partialorder %v3336, 0.0
  %vm3401 = vcmp.ge.f32.partialorder %v3337, 0.0
  %vm3402 = vcmp.ge.f32.partialorder %v3338, 0.0
  %vm3403 = vcmp.ge.f32.partialorder %v3339, 0.0
  %vm3404 = vcmp.ge.f32.partialorder %v3340, 0.0
  %vm3405 = vcmp.ge.f32.partialorder %v3341, 0.0
  %vm3406 = vcmp.ge.f32.partialorder %v3342, 0.0
  %vm3407 = vcmp.ge.f32.partialorder %v3343, 0.0
  %vm3408 = vcmp.ge.f32.partialorder %v3344, 0.0
  %vm3409 = vcmp.ge.f32.partialorder %v3345, 0.0
  %vm3410 = vcmp.ge.f32.partialorder %v3346, 0.0
  %vm3411 = vcmp.ge.f32.partialorder %v3347, 0.0
  %vm3412 = vcmp.ge.f32.partialorder %v3348, 0.0
  %vm3413 = vcmp.ge.f32.partialorder %v3349, 0.0
  %vm3414 = vcmp.ge.f32.partialorder %v3350, 0.0
  %vm3415 = vcmp.ge.f32.partialorder %v3351, 0.0
  %vm3416 = vcmp.ge.f32.partialorder %v3352, 0.0
  %vm3417 = vcmp.ge.f32.partialorder %v3353, 0.0
  %vm3418 = vcmp.ge.f32.partialorder %v3354, 0.0
  %vm3419 = vcmp.ge.f32.partialorder %v3355, 0.0
  %vm3420 = vcmp.ge.f32.partialorder %v3356, 0.0
  %vm3421 = vcmp.ge.f32.partialorder %v3357, 0.0
  %vm3422 = vcmp.ge.f32.partialorder %v3358, 0.0
  %vm3423 = vcmp.ge.f32.partialorder %v3359, 0.0
  %vm3424 = vcmp.ge.f32.partialorder %v3360, 0.0
  %vm3425 = vcmp.ge.f32.partialorder %v3361, 0.0
  %vm3426 = vcmp.ge.f32.partialorder %v3362, 0.0
  %vm3427 = vcmp.ge.f32.partialorder %v3363, 0.0
  %vm3428 = vcmp.ge.f32.partialorder %v3364, 0.0
  %vm3429 = vcmp.ge.f32.partialorder %v3365, 0.0
  %vm3430 = vcmp.ge.f32.partialorder %v3366, 0.0
  %vm3431 = vcmp.ge.f32.partialorder %v3367, 0.0
  %vm3432 = vcmp.ge.f32.partialorder %v3368, 0.0
  %vm3433 = vcmp.ge.f32.partialorder %v3369, 0.0
  %vm3434 = vcmp.ge.f32.partialorder %v3370, 0.0
  %vm3435 = vcmp.ge.f32.partialorder %v3371, 0.0
  %vm3436 = vcmp.ge.f32.partialorder %v3372, 0.0
  %vm3437 = vcmp.ge.f32.partialorder %v3373, 0.0
  %vm3438 = vcmp.ge.f32.partialorder %v3374, 0.0
  %vm3439 = vcmp.ge.f32.partialorder %v3375, 0.0
  %v3440 = vmul.f32 %v3312, 0.2
  %v3441 = vmul.f32 %v3313, 0.2
  %v3442 = vmul.f32 %v3314, 0.2
  %v3443 = vmul.f32 %v3315, 0.2
  %v3444 = vmul.f32 %v3316, 0.2
  %v3445 = vmul.f32 %v3317, 0.2
  %v3446 = vmul.f32 %v3318, 0.2
  %v3447 = vmul.f32 %v3319, 0.2
  %v3448 = vmul.f32 %v3320, 0.2
  %v3449 = vmul.f32 %v3321, 0.2
  %v3450 = vmul.f32 %v3322, 0.2
  %v3451 = vmul.f32 %v3323, 0.2
  %v3452 = vmul.f32 %v3324, 0.2
  %v3453 = vmul.f32 %v3325, 0.2
  %v3454 = vmul.f32 %v3326, 0.2
  %v3455 = vmul.f32 %v3327, 0.2
  %v3456 = vmul.f32 %v3328, 0.2
  %v3457 = vmul.f32 %v3329, 0.2
  %v3458 = vmul.f32 %v3330, 0.2
  %v3459 = vmul.f32 %v3331, 0.2
  %v3460 = vmul.f32 %v3332, 0.2
  %v3461 = vmul.f32 %v3333, 0.2
  %v3462 = vmul.f32 %v3334, 0.2
  %v3463 = vmul.f32 %v3335, 0.2
  %v3464 = vmul.f32 %v3336, 0.2
  %v3465 = vmul.f32 %v3337, 0.2
  %v3466 = vmul.f32 %v3338, 0.2
  %v3467 = vmul.f32 %v3339, 0.2
  %v3468 = vmul.f32 %v3340, 0.2
  %v3469 = vmul.f32 %v3341, 0.2
  %v3470 = vmul.f32 %v3342, 0.2
  %v3471 = vmul.f32 %v3343, 0.2
  %v3472 = vmul.f32 %v3344, 0.2
  %v3473 = vmul.f32 %v3345, 0.2
  %v3474 = vmul.f32 %v3346, 0.2
  %v3475 = vmul.f32 %v3347, 0.2
  %v3476 = vmul.f32 %v3348, 0.2
  %v3477 = vmul.f32 %v3349, 0.2
  %v3478 = vmul.f32 %v3350, 0.2
  %v3479 = vmul.f32 %v3351, 0.2
  %v3480 = vmul.f32 %v3352, 0.2
  %v3481 = vmul.f32 %v3353, 0.2
  %v3482 = vmul.f32 %v3354, 0.2
  %v3483 = vmul.f32 %v3355, 0.2
  %v3484 = vmul.f32 %v3356, 0.2
  %v3485 = vmul.f32 %v3357, 0.2
  %v3486 = vmul.f32 %v3358, 0.2
  %v3487 = vmul.f32 %v3359, 0.2
  %v3488 = vmul.f32 %v3360, 0.2
  %v3489 = vmul.f32 %v3361, 0.2
  %v3490 = vmul.f32 %v3362, 0.2
  %v3491 = vmul.f32 %v3363, 0.2
  %v3492 = vmul.f32 %v3364, 0.2
  %v3493 = vmul.f32 %v3365, 0.2
  %v3494 = vmul.f32 %v3366, 0.2
  %v3495 = vmul.f32 %v3367, 0.2
  %v3496 = vmul.f32 %v3368, 0.2
  %v3497 = vmul.f32 %v3369, 0.2
  %v3498 = vmul.f32 %v3370, 0.2
  %v3499 = vmul.f32 %v3371, 0.2
  %v3500 = vmul.f32 %v3372, 0.2
  %v3501 = vmul.f32 %v3373, 0.2
  %v3502 = vmul.f32 %v3374, 0.2
  %v3503 = vmul.f32 %v3375, 0.2
  %v3504 = vsel %vm3376, %v3312, %v3440
  %v3505 = vsel %vm3377, %v3313, %v3441
  %v3506 = vsel %vm3378, %v3314, %v3442
  %v3507 = vsel %vm3379, %v3315, %v3443
  %v3508 = vsel %vm3380, %v3316, %v3444
  %v3509 = vsel %vm3381, %v3317, %v3445
  %v3510 = vsel %vm3382, %v3318, %v3446
  %v3511 = vsel %vm3383, %v3319, %v3447
  %v3512 = vsel %vm3384, %v3320, %v3448
  %v3513 = vsel %vm3385, %v3321, %v3449
  %v3514 = vsel %vm3386, %v3322, %v3450
  %v3515 = vsel %vm3387, %v3323, %v3451
  %v3516 = vsel %vm3388, %v3324, %v3452
  %v3517 = vsel %vm3389, %v3325, %v3453
  %v3518 = vsel %vm3390, %v3326, %v3454
  %v3519 = vsel %vm3391, %v3327, %v3455
  %v3520 = vsel %vm3392, %v3328, %v3456
  %v3521 = vsel %vm3393, %v3329, %v3457
  %v3522 = vsel %vm3394, %v3330, %v3458
  %v3523 = vsel %vm3395, %v3331, %v3459
  %v3524 = vsel %vm3396, %v3332, %v3460
  %v3525 = vsel %vm3397, %v3333, %v3461
  %v3526 = vsel %vm3398, %v3334, %v3462
  %v3527 = vsel %vm3399, %v3335, %v3463
  %v3528 = vsel %vm3400, %v3336, %v3464
  %v3529 = vsel %vm3401, %v3337, %v3465
  %v3530 = vsel %vm3402, %v3338, %v3466
  %v3531 = vsel %vm3403, %v3339, %v3467
  %v3532 = vsel %vm3404, %v3340, %v3468
  %v3533 = vsel %vm3405, %v3341, %v3469
  %v3534 = vsel %vm3406, %v3342, %v3470
  %v3535 = vsel %vm3407, %v3343, %v3471
  %v3536 = vsel %vm3408, %v3344, %v3472
  %v3537 = vsel %vm3409, %v3345, %v3473
  %v3538 = vsel %vm3410, %v3346, %v3474
  %v3539 = vsel %vm3411, %v3347, %v3475
  %v3540 = vsel %vm3412, %v3348, %v3476
  %v3541 = vsel %vm3413, %v3349, %v3477
  %v3542 = vsel %vm3414, %v3350, %v3478
  %v3543 = vsel %vm3415, %v3351, %v3479
  %v3544 = vsel %vm3416, %v3352, %v3480
  %v3545 = vsel %vm3417, %v3353, %v3481
  %v3546 = vsel %vm3418, %v3354, %v3482
  %v3547 = vsel %vm3419, %v3355, %v3483
  %v3548 = vsel %vm3420, %v3356, %v3484
  %v3549 = vsel %vm3421, %v3357, %v3485
  %v3550 = vsel %vm3422, %v3358, %v3486
  %v3551 = vsel %vm3423, %v3359, %v3487
  %v3552 = vsel %vm3424, %v3360, %v3488
  %v3553 = vsel %vm3425, %v3361, %v3489
  %v3554 = vsel %vm3426, %v3362, %v3490
  %v3555 = vsel %vm3427, %v3363, %v3491
  %v3556 = vsel %vm3428, %v3364, %v3492
  %v3557 = vsel %vm3429, %v3365, %v3493
  %v3558 = vsel %vm3430, %v3366, %v3494
  %v3559 = vsel %vm3431, %v3367, %v3495
  %v3560 = vsel %vm3432, %v3368, %v3496
  %v3561 = vsel %vm3433, %v3369, %v3497
  %v3562 = vsel %vm3434, %v3370, %v3498
  %v3563 = vsel %vm3435, %v3371, %v3499
  %v3564 = vsel %vm3436, %v3372, %v3500
  %v3565 = vsel %vm3437, %v3373, %v3501
  %v3566 = vsel %vm3438, %v3374, %v3502
  %v3567 = vsel %vm3439, %v3375, %v3503
  %v3568 = vpack.c.bf16 %v3505, %v3504
  %v3569 = vpack.c.bf16 %v3507, %v3506
  %v3570 = vpack.c.bf16 %v3509, %v3508
  %v3571 = vpack.c.bf16 %v3511, %v3510
  %v3572 = vpack.c.bf16 %v3513, %v3512
  %v3573 = vpack.c.bf16 %v3515, %v3514
  %v3574 = vpack.c.bf16 %v3517, %v3516
  %v3575 = vpack.c.bf16 %v3519, %v3518
  %v3576 = vpack.c.bf16 %v3521, %v3520
  %v3577 = vpack.c.bf16 %v3523, %v3522
  %v3578 = vpack.c.bf16 %v3525, %v3524
  %v3579 = vpack.c.bf16 %v3527, %v3526
  %v3580 = vpack.c.bf16 %v3529, %v3528
  %v3581 = vpack.c.bf16 %v3531, %v3530
  %v3582 = vpack.c.bf16 %v3533, %v3532
  %v3583 = vpack.c.bf16 %v3535, %v3534
  %v3584 = vpack.c.bf16 %v3537, %v3536
  %v3585 = vpack.c.bf16 %v3539, %v3538
  %v3586 = vpack.c.bf16 %v3541, %v3540
  %v3587 = vpack.c.bf16 %v3543, %v3542
  %v3588 = vpack.c.bf16 %v3545, %v3544
  %v3589 = vpack.c.bf16 %v3547, %v3546
  %v3590 = vpack.c.bf16 %v3549, %v3548
  %v3591 = vpack.c.bf16 %v3551, %v3550
  %v3592 = vpack.c.bf16 %v3553, %v3552
  %v3593 = vpack.c.bf16 %v3555, %v3554
  %v3594 = vpack.c.bf16 %v3557, %v3556
  %v3595 = vpack.c.bf16 %v3559, %v3558
  %v3596 = vpack.c.bf16 %v3561, %v3560
  %v3597 = vpack.c.bf16 %v3563, %v3562
  %v3598 = vpack.c.bf16 %v3565, %v3564
  %v3599 = vpack.c.bf16 %v3567, %v3566
  %v3632 = vunpack.c.l.b16 %v3568
  %v3633 = vunpack.c.h.b16 %v3568
  %v3634 = vunpack.c.l.b16 %v3569
  %v3635 = vunpack.c.h.b16 %v3569
  %v3636 = vunpack.c.l.b16 %v3570
  %v3637 = vunpack.c.h.b16 %v3570
  %v3638 = vunpack.c.l.b16 %v3571
  %v3639 = vunpack.c.h.b16 %v3571
  %v3640 = vunpack.c.l.b16 %v3572
  %v3641 = vunpack.c.h.b16 %v3572
  %v3642 = vunpack.c.l.b16 %v3573
  %v3643 = vunpack.c.h.b16 %v3573
  %v3644 = vunpack.c.l.b16 %v3574
  %v3645 = vunpack.c.h.b16 %v3574
  %v3646 = vunpack.c.l.b16 %v3575
  %v3647 = vunpack.c.h.b16 %v3575
  %v3648 = vunpack.c.l.b16 %v3576
  %v3649 = vunpack.c.h.b16 %v3576
  %v3650 = vunpack.c.l.b16 %v3577
  %v3651 = vunpack.c.h.b16 %v3577
  %v3652 = vunpack.c.l.b16 %v3578
  %v3653 = vunpack.c.h.b16 %v3578
  %v3654 = vunpack.c.l.b16 %v3579
  %v3655 = vunpack.c.h.b16 %v3579
  %v3656 = vunpack.c.l.b16 %v3580
  %v3657 = vunpack.c.h.b16 %v3580
  %v3658 = vunpack.c.l.b16 %v3581
  %v3659 = vunpack.c.h.b16 %v3581
  %v3660 = vunpack.c.l.b16 %v3582
  %v3661 = vunpack.c.h.b16 %v3582
  %v3662 = vunpack.c.l.b16 %v3583
  %v3663 = vunpack.c.h.b16 %v3583
  %v3664 = vunpack.c.l.b16 %v3584
  %v3665 = vunpack.c.h.b16 %v3584
  %v3666 = vunpack.c.l.b16 %v3585
  %v3667 = vunpack.c.h.b16 %v3585
  %v3668 = vunpack.c.l.b16 %v3586
  %v3669 = vunpack.c.h.b16 %v3586
  %v3670 = vunpack.c.l.b16 %v3587
  %v3671 = vunpack.c.h.b16 %v3587
  %v3672 = vunpack.c.l.b16 %v3588
  %v3673 = vunpack.c.h.b16 %v3588
  %v3674 = vunpack.c.l.b16 %v3589
  %v3675 = vunpack.c.h.b16 %v3589
  %v3676 = vunpack.c.l.b16 %v3590
  %v3677 = vunpack.c.h.b16 %v3590
  %v3678 = vunpack.c.l.b16 %v3591
  %v3679 = vunpack.c.h.b16 %v3591
  %v3680 = vunpack.c.l.b16 %v3592
  %v3681 = vunpack.c.h.b16 %v3592
  %v3682 = vunpack.c.l.b16 %v3593
  %v3683 = vunpack.c.h.b16 %v3593
  %v3684 = vunpack.c.l.b16 %v3594
  %v3685 = vunpack.c.h.b16 %v3594
  %v3686 = vunpack.c.l.b16 %v3595
  %v3687 = vunpack.c.h.b16 %v3595
  %v3688 = vunpack.c.l.b16 %v3596
  %v3689 = vunpack.c.h.b16 %v3596
  %v3690 = vunpack.c.l.b16 %v3597
  %v3691 = vunpack.c.h.b16 %v3597
  %v3692 = vunpack.c.l.b16 %v3598
  %v3693 = vunpack.c.h.b16 %v3598
  %v3694 = vunpack.c.l.b16 %v3599
  %v3695 = vunpack.c.h.b16 %v3599
  %v3696 = vpack.c.b16 %v3632, %v3632
  %v3697 = vpack.c.b16 %v3633, %v3633
  %v3698 = vpack.c.b16 %v3634, %v3634
  %v3699 = vpack.c.b16 %v3635, %v3635
  %v3700 = vpack.c.b16 %v3636, %v3636
  %v3701 = vpack.c.b16 %v3637, %v3637
  %v3702 = vpack.c.b16 %v3638, %v3638
  %v3703 = vpack.c.b16 %v3639, %v3639
  %v3704 = vpack.c.b16 %v3640, %v3640
  %v3705 = vpack.c.b16 %v3641, %v3641
  %v3706 = vpack.c.b16 %v3642, %v3642
  %v3707 = vpack.c.b16 %v3643, %v3643
  %v3708 = vpack.c.b16 %v3644, %v3644
  %v3709 = vpack.c.b16 %v3645, %v3645
  %v3710 = vpack.c.b16 %v3646, %v3646
  %v3711 = vpack.c.b16 %v3647, %v3647
  %v3712 = vpack.c.b16 %v3648, %v3648
  %v3713 = vpack.c.b16 %v3649, %v3649
  %v3714 = vpack.c.b16 %v3650, %v3650
  %v3715 = vpack.c.b16 %v3651, %v3651
  %v3716 = vpack.c.b16 %v3652, %v3652
  %v3717 = vpack.c.b16 %v3653, %v3653
  %v3718 = vpack.c.b16 %v3654, %v3654
  %v3719 = vpack.c.b16 %v3655, %v3655
  %v3720 = vpack.c.b16 %v3656, %v3656
  %v3721 = vpack.c.b16 %v3657, %v3657
  %v3722 = vpack.c.b16 %v3658, %v3658
  %v3723 = vpack.c.b16 %v3659, %v3659
  %v3724 = vpack.c.b16 %v3660, %v3660
  %v3725 = vpack.c.b16 %v3661, %v3661
  %v3726 = vpack.c.b16 %v3662, %v3662
  %v3727 = vpack.c.b16 %v3663, %v3663
  %v3728 = vpack.c.b16 %v3664, %v3664
  %v3729 = vpack.c.b16 %v3665, %v3665
  %v3730 = vpack.c.b16 %v3666, %v3666
  %v3731 = vpack.c.b16 %v3667, %v3667
  %v3732 = vpack.c.b16 %v3668, %v3668
  %v3733 = vpack.c.b16 %v3669, %v3669
  %v3734 = vpack.c.b16 %v3670, %v3670
  %v3735 = vpack.c.b16 %v3671, %v3671
  %v3736 = vpack.c.b16 %v3672, %v3672
  %v3737 = vpack.c.b16 %v3673, %v3673
  %v3738 = vpack.c.b16 %v3674, %v3674
  %v3739 = vpack.c.b16 %v3675, %v3675
  %v3740 = vpack.c.b16 %v3676, %v3676
  %v3741 = vpack.c.b16 %v3677, %v3677
  %v3742 = vpack.c.b16 %v3678, %v3678
  %v3743 = vpack.c.b16 %v3679, %v3679
  %v3744 = vpack.c.b16 %v3680, %v3680
  %v3745 = vpack.c.b16 %v3681, %v3681
  %v3746 = vpack.c.b16 %v3682, %v3682
  %v3747 = vpack.c.b16 %v3683, %v3683
  %v3748 = vpack.c.b16 %v3684, %v3684
  %v3749 = vpack.c.b16 %v3685, %v3685
  %v3750 = vpack.c.b16 %v3686, %v3686
  %v3751 = vpack.c.b16 %v3687, %v3687
  %v3752 = vpack.c.b16 %v3688, %v3688
  %v3753 = vpack.c.b16 %v3689, %v3689
  %v3754 = vpack.c.b16 %v3690, %v3690
  %v3755 = vpack.c.b16 %v3691, %v3691
  %v3756 = vpack.c.b16 %v3692, %v3692
  %v3757 = vpack.c.b16 %v3693, %v3693
  %v3758 = vpack.c.b16 %v3694, %v3694
  %v3759 = vpack.c.b16 %v3695, %v3695
  %vm3824 = vcmask 257024
  %3825 = vst.msk [vmem:[%s7] sm:$0xf] %vm3824, %v3696
  %3826 = vst.msk [vmem:[%s7 + $0x4] sm:$0xf] %vm3824, %v3697
  %3827 = vst.msk [vmem:[%s7 + $0x8] sm:$0xf] %vm3824, %v3698
  %3828 = vst.msk [vmem:[%s7 + $0xc] sm:$0xf] %vm3824, %v3699
  %3829 = vst.msk [vmem:[%s7 + $0x10] sm:$0xf] %vm3824, %v3700
  %3830 = vst.msk [vmem:[%s7 + $0x14] sm:$0xf] %vm3824, %v3701
  %3831 = vst.msk [vmem:[%s7 + $0x18] sm:$0xf] %vm3824, %v3702
  %3832 = vst.msk [vmem:[%s7 + $0x1c] sm:$0xf] %vm3824, %v3703
  %3833 = vst.msk [vmem:[%s7 + $0x20] sm:$0xf] %vm3824, %v3704
  %3834 = vst.msk [vmem:[%s7 + $0x24] sm:$0xf] %vm3824, %v3705
  %3835 = vst.msk [vmem:[%s7 + $0x28] sm:$0xf] %vm3824, %v3706
  %3836 = vst.msk [vmem:[%s7 + $0x2c] sm:$0xf] %vm3824, %v3707
  %3837 = vst.msk [vmem:[%s7 + $0x30] sm:$0xf] %vm3824, %v3708
  %3838 = vst.msk [vmem:[%s7 + $0x34] sm:$0xf] %vm3824, %v3709
  %3839 = vst.msk [vmem:[%s7 + $0x38] sm:$0xf] %vm3824, %v3710
  %3840 = vst.msk [vmem:[%s7 + $0x3c] sm:$0xf] %vm3824, %v3711
  %3841 = vst.msk [vmem:[%s7 + $0x40] sm:$0xf] %vm3824, %v3712
  %3842 = vst.msk [vmem:[%s7 + $0x44] sm:$0xf] %vm3824, %v3713
  %3843 = vst.msk [vmem:[%s7 + $0x48] sm:$0xf] %vm3824, %v3714
  %3844 = vst.msk [vmem:[%s7 + $0x4c] sm:$0xf] %vm3824, %v3715
  %3845 = vst.msk [vmem:[%s7 + $0x50] sm:$0xf] %vm3824, %v3716
  %3846 = vst.msk [vmem:[%s7 + $0x54] sm:$0xf] %vm3824, %v3717
  %3847 = vst.msk [vmem:[%s7 + $0x58] sm:$0xf] %vm3824, %v3718
  %3848 = vst.msk [vmem:[%s7 + $0x5c] sm:$0xf] %vm3824, %v3719
  %3849 = vst.msk [vmem:[%s7 + $0x60] sm:$0xf] %vm3824, %v3720
  %3850 = vst.msk [vmem:[%s7 + $0x64] sm:$0xf] %vm3824, %v3721
  %3851 = vst.msk [vmem:[%s7 + $0x68] sm:$0xf] %vm3824, %v3722
  %3852 = vst.msk [vmem:[%s7 + $0x6c] sm:$0xf] %vm3824, %v3723
  %3853 = vst.msk [vmem:[%s7 + $0x70] sm:$0xf] %vm3824, %v3724
  %3854 = vst.msk [vmem:[%s7 + $0x74] sm:$0xf] %vm3824, %v3725
  %3855 = vst.msk [vmem:[%s7 + $0x78] sm:$0xf] %vm3824, %v3726
  %3856 = vst.msk [vmem:[%s7 + $0x7c] sm:$0xf] %vm3824, %v3727
  %3857 = vst.msk [vmem:[%s7 + $0x80] sm:$0xf] %vm3824, %v3728
  %3858 = vst.msk [vmem:[%s7 + $0x84] sm:$0xf] %vm3824, %v3729
  %3859 = vst.msk [vmem:[%s7 + $0x88] sm:$0xf] %vm3824, %v3730
  %3860 = vst.msk [vmem:[%s7 + $0x8c] sm:$0xf] %vm3824, %v3731
  %3861 = vst.msk [vmem:[%s7 + $0x90] sm:$0xf] %vm3824, %v3732
  %3862 = vst.msk [vmem:[%s7 + $0x94] sm:$0xf] %vm3824, %v3733
  %3863 = vst.msk [vmem:[%s7 + $0x98] sm:$0xf] %vm3824, %v3734
  %3864 = vst.msk [vmem:[%s7 + $0x9c] sm:$0xf] %vm3824, %v3735
  %3865 = vst.msk [vmem:[%s7 + $0xa0] sm:$0xf] %vm3824, %v3736
  %3866 = vst.msk [vmem:[%s7 + $0xa4] sm:$0xf] %vm3824, %v3737
  %3867 = vst.msk [vmem:[%s7 + $0xa8] sm:$0xf] %vm3824, %v3738
  %3868 = vst.msk [vmem:[%s7 + $0xac] sm:$0xf] %vm3824, %v3739
  %3869 = vst.msk [vmem:[%s7 + $0xb0] sm:$0xf] %vm3824, %v3740
  %3870 = vst.msk [vmem:[%s7 + $0xb4] sm:$0xf] %vm3824, %v3741
  %3871 = vst.msk [vmem:[%s7 + $0xb8] sm:$0xf] %vm3824, %v3742
  %3872 = vst.msk [vmem:[%s7 + $0xbc] sm:$0xf] %vm3824, %v3743
  %3873 = vst.msk [vmem:[%s7 + $0xc0] sm:$0xf] %vm3824, %v3744
  %3874 = vst.msk [vmem:[%s7 + $0xc4] sm:$0xf] %vm3824, %v3745
  %3875 = vst.msk [vmem:[%s7 + $0xc8] sm:$0xf] %vm3824, %v3746
  %3876 = vst.msk [vmem:[%s7 + $0xcc] sm:$0xf] %vm3824, %v3747
  %3877 = vst.msk [vmem:[%s7 + $0xd0] sm:$0xf] %vm3824, %v3748
  %3878 = vst.msk [vmem:[%s7 + $0xd4] sm:$0xf] %vm3824, %v3749
  %3879 = vst.msk [vmem:[%s7 + $0xd8] sm:$0xf] %vm3824, %v3750
  %3880 = vst.msk [vmem:[%s7 + $0xdc] sm:$0xf] %vm3824, %v3751
  %3881 = vst.msk [vmem:[%s7 + $0xe0] sm:$0xf] %vm3824, %v3752
  %3882 = vst.msk [vmem:[%s7 + $0xe4] sm:$0xf] %vm3824, %v3753
  %3883 = vst.msk [vmem:[%s7 + $0xe8] sm:$0xf] %vm3824, %v3754
  %3884 = vst.msk [vmem:[%s7 + $0xec] sm:$0xf] %vm3824, %v3755
  %3885 = vst.msk [vmem:[%s7 + $0xf0] sm:$0xf] %vm3824, %v3756
  %3886 = vst.msk [vmem:[%s7 + $0xf4] sm:$0xf] %vm3824, %v3757
  %3887 = vst.msk [vmem:[%s7 + $0xf8] sm:$0xf] %vm3824, %v3758
  %3888 = vst.msk [vmem:[%s7 + $0xfc] sm:$0xf] %vm3824, %v3759
  %v3889 = vld [vmem:[%s4] sm:$0xff]
  %v3890 = vld [vmem:[%s4 + $0x8] sm:$0xff]
  %v3891 = vld [vmem:[%s4 + $0x10] sm:$0xff]
  %v3892 = vld [vmem:[%s4 + $0x18] sm:$0xff]
  %v3893 = vld [vmem:[%s4 + $0x20] sm:$0xff]
  %v3894 = vld [vmem:[%s4 + $0x28] sm:$0xff]
  %v3895 = vld [vmem:[%s4 + $0x30] sm:$0xff]
  %v3896 = vld [vmem:[%s4 + $0x38] sm:$0xff]
  %v3897 = vld [vmem:[%s4 + $0x40] sm:$0xff]
  %v3898 = vld [vmem:[%s4 + $0x48] sm:$0xff]
  %v3899 = vld [vmem:[%s4 + $0x50] sm:$0xff]
  %v3900 = vld [vmem:[%s4 + $0x58] sm:$0xff]
  %v3901 = vld [vmem:[%s4 + $0x60] sm:$0xff]
  %v3902 = vld [vmem:[%s4 + $0x68] sm:$0xff]
  %v3903 = vld [vmem:[%s4 + $0x70] sm:$0xff]
  %v3904 = vld [vmem:[%s4 + $0x78] sm:$0xff]
  %v3905 = vld [vmem:[%s4 + $0x80] sm:$0xff]
  %v3906 = vld [vmem:[%s4 + $0x88] sm:$0xff]
  %v3907 = vld [vmem:[%s4 + $0x90] sm:$0xff]
  %v3908 = vld [vmem:[%s4 + $0x98] sm:$0xff]
  %v3909 = vld [vmem:[%s4 + $0xa0] sm:$0xff]
  %v3910 = vld [vmem:[%s4 + $0xa8] sm:$0xff]
  %v3911 = vld [vmem:[%s4 + $0xb0] sm:$0xff]
  %v3912 = vld [vmem:[%s4 + $0xb8] sm:$0xff]
  %v3913 = vld [vmem:[%s4 + $0xc0] sm:$0xff]
  %v3914 = vld [vmem:[%s4 + $0xc8] sm:$0xff]
  %v3915 = vld [vmem:[%s4 + $0xd0] sm:$0xff]
  %v3916 = vld [vmem:[%s4 + $0xd8] sm:$0xff]
  %v3917 = vld [vmem:[%s4 + $0xe0] sm:$0xff]
  %v3918 = vld [vmem:[%s4 + $0xe8] sm:$0xff]
  %v3919 = vld [vmem:[%s4 + $0xf0] sm:$0xff]
  %v3920 = vld [vmem:[%s4 + $0xf8] sm:$0xff]
  %v3921 = vld [vmem:[%s5] sm:$0xff]
  %v3922 = vld [vmem:[%s5 + $0x8] sm:$0xff]
  %v3923 = vld [vmem:[%s5 + $0x10] sm:$0xff]
  %v3924 = vld [vmem:[%s5 + $0x18] sm:$0xff]
  %v3925 = vld [vmem:[%s5 + $0x20] sm:$0xff]
  %v3926 = vld [vmem:[%s5 + $0x28] sm:$0xff]
  %v3927 = vld [vmem:[%s5 + $0x30] sm:$0xff]
  %v3928 = vld [vmem:[%s5 + $0x38] sm:$0xff]
  %v3929 = vld [vmem:[%s5 + $0x40] sm:$0xff]
  %v3930 = vld [vmem:[%s5 + $0x48] sm:$0xff]
  %v3931 = vld [vmem:[%s5 + $0x50] sm:$0xff]
  %v3932 = vld [vmem:[%s5 + $0x58] sm:$0xff]
  %v3933 = vld [vmem:[%s5 + $0x60] sm:$0xff]
  %v3934 = vld [vmem:[%s5 + $0x68] sm:$0xff]
  %v3935 = vld [vmem:[%s5 + $0x70] sm:$0xff]
  %v3936 = vld [vmem:[%s5 + $0x78] sm:$0xff]
  %v3937 = vld [vmem:[%s5 + $0x80] sm:$0xff]
  %v3938 = vld [vmem:[%s5 + $0x88] sm:$0xff]
  %v3939 = vld [vmem:[%s5 + $0x90] sm:$0xff]
  %v3940 = vld [vmem:[%s5 + $0x98] sm:$0xff]
  %v3941 = vld [vmem:[%s5 + $0xa0] sm:$0xff]
  %v3942 = vld [vmem:[%s5 + $0xa8] sm:$0xff]
  %v3943 = vld [vmem:[%s5 + $0xb0] sm:$0xff]
  %v3944 = vld [vmem:[%s5 + $0xb8] sm:$0xff]
  %v3945 = vld [vmem:[%s5 + $0xc0] sm:$0xff]
  %v3946 = vld [vmem:[%s5 + $0xc8] sm:$0xff]
  %v3947 = vld [vmem:[%s5 + $0xd0] sm:$0xff]
  %v3948 = vld [vmem:[%s5 + $0xd8] sm:$0xff]
  %v3949 = vld [vmem:[%s5 + $0xe0] sm:$0xff]
  %v3950 = vld [vmem:[%s5 + $0xe8] sm:$0xff]
  %v3951 = vld [vmem:[%s5 + $0xf0] sm:$0xff]
  %v3952 = vld [vmem:[%s5 + $0xf8] sm:$0xff]
  %v3953 = vld [vmem:[%s6] sm:$0x1]
  %v3954 = vmul.f32 %v2980, %v3889
  %v3955 = vmul.f32 %v2983, %v3890
  %v3956 = vmul.f32 %v2988, %v3891
  %v3957 = vmul.f32 %v2991, %v3892
  %v3958 = vmul.f32 %v2996, %v3893
  %v3959 = vmul.f32 %v2999, %v3894
  %v3960 = vmul.f32 %v3004, %v3895
  %v3961 = vmul.f32 %v3007, %v3896
  %v3962 = vmul.f32 %v3012, %v3897
  %v3963 = vmul.f32 %v3015, %v3898
  %v3964 = vmul.f32 %v3020, %v3899
  %v3965 = vmul.f32 %v3023, %v3900
  %v3966 = vmul.f32 %v3028, %v3901
  %v3967 = vmul.f32 %v3031, %v3902
  %v3968 = vmul.f32 %v3036, %v3903
  %v3969 = vmul.f32 %v3039, %v3904
  %v3970 = vmul.f32 %v3044, %v3905
  %v3971 = vmul.f32 %v3047, %v3906
  %v3972 = vmul.f32 %v3052, %v3907
  %v3973 = vmul.f32 %v3055, %v3908
  %v3974 = vmul.f32 %v3060, %v3909
  %v3975 = vmul.f32 %v3063, %v3910
  %v3976 = vmul.f32 %v3068, %v3911
  %v3977 = vmul.f32 %v3071, %v3912
  %v3978 = vmul.f32 %v3076, %v3913
  %v3979 = vmul.f32 %v3079, %v3914
  %v3980 = vmul.f32 %v3084, %v3915
  %v3981 = vmul.f32 %v3087, %v3916
  %v3982 = vmul.f32 %v3092, %v3917
  %v3983 = vmul.f32 %v3095, %v3918
  %v3984 = vmul.f32 %v3100, %v3919
  %v3985 = vmul.f32 %v3103, %v3920
  %v3986 = vmul.f32 %v3108, %v3889
  %v3987 = vmul.f32 %v3111, %v3890
  %v3988 = vmul.f32 %v3116, %v3891
  %v3989 = vmul.f32 %v3119, %v3892
  %v3990 = vmul.f32 %v3124, %v3893
  %v3991 = vmul.f32 %v3127, %v3894
  %v3992 = vmul.f32 %v3132, %v3895
  %v3993 = vmul.f32 %v3135, %v3896
  %v3994 = vmul.f32 %v3140, %v3897
  %v3995 = vmul.f32 %v3143, %v3898
  %v3996 = vmul.f32 %v3148, %v3899
  %v3997 = vmul.f32 %v3151, %v3900
  %v3998 = vmul.f32 %v3156, %v3901
  %v3999 = vmul.f32 %v3159, %v3902
  %v4000 = vmul.f32 %v3164, %v3903
  %v4001 = vmul.f32 %v3167, %v3904
  %v4002 = vmul.f32 %v3172, %v3905
  %v4003 = vmul.f32 %v3175, %v3906
  %v4004 = vmul.f32 %v3180, %v3907
  %v4005 = vmul.f32 %v3183, %v3908
  %v4006 = vmul.f32 %v3188, %v3909
  %v4007 = vmul.f32 %v3191, %v3910
  %v4008 = vmul.f32 %v3196, %v3911
  %v4009 = vmul.f32 %v3199, %v3912
  %v4010 = vmul.f32 %v3204, %v3913
  %v4011 = vmul.f32 %v3207, %v3914
  %v4012 = vmul.f32 %v3212, %v3915
  %v4013 = vmul.f32 %v3215, %v3916
  %v4014 = vmul.f32 %v3220, %v3917
  %v4015 = vmul.f32 %v3223, %v3918
  %v4016 = vmul.f32 %v3228, %v3919
  %v4017 = vmul.f32 %v3231, %v3920
  %vm4018 = vcmask 261120
  %v4019 = vsel %vm4018, %v3954, 0.0
  %4020 = vadd.xlane.f32.xlu0 %v4019
  %v4021 = vpop.xlane.xlu0 %4020
  %v4022 = vsel %vm4018, %v3955, 0.0
  %4023 = vadd.xlane.f32.xlu0 %v4022
  %v4024 = vpop.xlane.xlu0 %4023
  %v4025 = vsel %vm4018, %v3956, 0.0
  %4026 = vadd.xlane.f32.xlu0 %v4025
  %v4027 = vpop.xlane.xlu0 %4026
  %v4028 = vsel %vm4018, %v3957, 0.0
  %4029 = vadd.xlane.f32.xlu0 %v4028
  %v4030 = vpop.xlane.xlu0 %4029
  %v4031 = vsel %vm4018, %v3958, 0.0
  %4032 = vadd.xlane.f32.xlu0 %v4031
  %v4033 = vpop.xlane.xlu0 %4032
  %v4034 = vsel %vm4018, %v3959, 0.0
  %4035 = vadd.xlane.f32.xlu0 %v4034
  %v4036 = vpop.xlane.xlu0 %4035
  %v4037 = vsel %vm4018, %v3960, 0.0
  %4038 = vadd.xlane.f32.xlu0 %v4037
  %v4039 = vpop.xlane.xlu0 %4038
  %v4040 = vsel %vm4018, %v3961, 0.0
  %4041 = vadd.xlane.f32.xlu0 %v4040
  %v4042 = vpop.xlane.xlu0 %4041
  %v4043 = vsel %vm4018, %v3962, 0.0
  %4044 = vadd.xlane.f32.xlu0 %v4043
  %v4045 = vpop.xlane.xlu0 %4044
  %v4046 = vsel %vm4018, %v3963, 0.0
  %4047 = vadd.xlane.f32.xlu0 %v4046
  %v4048 = vpop.xlane.xlu0 %4047
  %v4049 = vsel %vm4018, %v3964, 0.0
  %4050 = vadd.xlane.f32.xlu0 %v4049
  %v4051 = vpop.xlane.xlu0 %4050
  %v4052 = vsel %vm4018, %v3965, 0.0
  %4053 = vadd.xlane.f32.xlu0 %v4052
  %v4054 = vpop.xlane.xlu0 %4053
  %v4055 = vsel %vm4018, %v3966, 0.0
  %4056 = vadd.xlane.f32.xlu0 %v4055
  %v4057 = vpop.xlane.xlu0 %4056
  %v4058 = vsel %vm4018, %v3967, 0.0
  %4059 = vadd.xlane.f32.xlu0 %v4058
  %v4060 = vpop.xlane.xlu0 %4059
  %v4061 = vsel %vm4018, %v3968, 0.0
  %4062 = vadd.xlane.f32.xlu0 %v4061
  %v4063 = vpop.xlane.xlu0 %4062
  %v4064 = vsel %vm4018, %v3969, 0.0
  %4065 = vadd.xlane.f32.xlu0 %v4064
  %v4066 = vpop.xlane.xlu0 %4065
  %v4067 = vsel %vm4018, %v3970, 0.0
  %4068 = vadd.xlane.f32.xlu0 %v4067
  %v4069 = vpop.xlane.xlu0 %4068
  %v4070 = vsel %vm4018, %v3971, 0.0
  %4071 = vadd.xlane.f32.xlu0 %v4070
  %v4072 = vpop.xlane.xlu0 %4071
  %v4073 = vsel %vm4018, %v3972, 0.0
  %4074 = vadd.xlane.f32.xlu0 %v4073
  %v4075 = vpop.xlane.xlu0 %4074
  %v4076 = vsel %vm4018, %v3973, 0.0
  %4077 = vadd.xlane.f32.xlu0 %v4076
  %v4078 = vpop.xlane.xlu0 %4077
  %v4079 = vsel %vm4018, %v3974, 0.0
  %4080 = vadd.xlane.f32.xlu0 %v4079
  %v4081 = vpop.xlane.xlu0 %4080
  %v4082 = vsel %vm4018, %v3975, 0.0
  %4083 = vadd.xlane.f32.xlu0 %v4082
  %v4084 = vpop.xlane.xlu0 %4083
  %v4085 = vsel %vm4018, %v3976, 0.0
  %4086 = vadd.xlane.f32.xlu0 %v4085
  %v4087 = vpop.xlane.xlu0 %4086
  %v4088 = vsel %vm4018, %v3977, 0.0
  %4089 = vadd.xlane.f32.xlu0 %v4088
  %v4090 = vpop.xlane.xlu0 %4089
  %v4091 = vsel %vm4018, %v3978, 0.0
  %4092 = vadd.xlane.f32.xlu0 %v4091
  %v4093 = vpop.xlane.xlu0 %4092
  %v4094 = vsel %vm4018, %v3979, 0.0
  %4095 = vadd.xlane.f32.xlu0 %v4094
  %v4096 = vpop.xlane.xlu0 %4095
  %v4097 = vsel %vm4018, %v3980, 0.0
  %4098 = vadd.xlane.f32.xlu0 %v4097
  %v4099 = vpop.xlane.xlu0 %4098
  %v4100 = vsel %vm4018, %v3981, 0.0
  %4101 = vadd.xlane.f32.xlu0 %v4100
  %v4102 = vpop.xlane.xlu0 %4101
  %v4103 = vsel %vm4018, %v3982, 0.0
  %4104 = vadd.xlane.f32.xlu0 %v4103
  %v4105 = vpop.xlane.xlu0 %4104
  %v4106 = vsel %vm4018, %v3983, 0.0
  %4107 = vadd.xlane.f32.xlu0 %v4106
  %v4108 = vpop.xlane.xlu0 %4107
  %v4109 = vsel %vm4018, %v3984, 0.0
  %4110 = vadd.xlane.f32.xlu0 %v4109
  %v4111 = vpop.xlane.xlu0 %4110
  %v4112 = vsel %vm4018, %v3985, 0.0
  %4113 = vadd.xlane.f32.xlu0 %v4112
  %v4114 = vpop.xlane.xlu0 %4113
  %v4115 = vsel %vm4018, %v3986, 0.0
  %4116 = vadd.xlane.f32.xlu0 %v4115
  %v4117 = vpop.xlane.xlu0 %4116
  %v4118 = vsel %vm4018, %v3987, 0.0
  %4119 = vadd.xlane.f32.xlu0 %v4118
  %v4120 = vpop.xlane.xlu0 %4119
  %v4121 = vsel %vm4018, %v3988, 0.0
  %4122 = vadd.xlane.f32.xlu0 %v4121
  %v4123 = vpop.xlane.xlu0 %4122
  %v4124 = vsel %vm4018, %v3989, 0.0
  %4125 = vadd.xlane.f32.xlu0 %v4124
  %v4126 = vpop.xlane.xlu0 %4125
  %v4127 = vsel %vm4018, %v3990, 0.0
  %4128 = vadd.xlane.f32.xlu0 %v4127
  %v4129 = vpop.xlane.xlu0 %4128
  %v4130 = vsel %vm4018, %v3991, 0.0
  %4131 = vadd.xlane.f32.xlu0 %v4130
  %v4132 = vpop.xlane.xlu0 %4131
  %v4133 = vsel %vm4018, %v3992, 0.0
  %4134 = vadd.xlane.f32.xlu0 %v4133
  %v4135 = vpop.xlane.xlu0 %4134
  %v4136 = vsel %vm4018, %v3993, 0.0
  %4137 = vadd.xlane.f32.xlu0 %v4136
  %v4138 = vpop.xlane.xlu0 %4137
  %v4139 = vsel %vm4018, %v3994, 0.0
  %4140 = vadd.xlane.f32.xlu0 %v4139
  %v4141 = vpop.xlane.xlu0 %4140
  %v4142 = vsel %vm4018, %v3995, 0.0
  %4143 = vadd.xlane.f32.xlu0 %v4142
  %v4144 = vpop.xlane.xlu0 %4143
  %v4145 = vsel %vm4018, %v3996, 0.0
  %4146 = vadd.xlane.f32.xlu0 %v4145
  %v4147 = vpop.xlane.xlu0 %4146
  %v4148 = vsel %vm4018, %v3997, 0.0
  %4149 = vadd.xlane.f32.xlu0 %v4148
  %v4150 = vpop.xlane.xlu0 %4149
  %v4151 = vsel %vm4018, %v3998, 0.0
  %4152 = vadd.xlane.f32.xlu0 %v4151
  %v4153 = vpop.xlane.xlu0 %4152
  %v4154 = vsel %vm4018, %v3999, 0.0
  %4155 = vadd.xlane.f32.xlu0 %v4154
  %v4156 = vpop.xlane.xlu0 %4155
  %v4157 = vsel %vm4018, %v4000, 0.0
  %4158 = vadd.xlane.f32.xlu0 %v4157
  %v4159 = vpop.xlane.xlu0 %4158
  %v4160 = vsel %vm4018, %v4001, 0.0
  %4161 = vadd.xlane.f32.xlu0 %v4160
  %v4162 = vpop.xlane.xlu0 %4161
  %v4163 = vsel %vm4018, %v4002, 0.0
  %4164 = vadd.xlane.f32.xlu0 %v4163
  %v4165 = vpop.xlane.xlu0 %4164
  %v4166 = vsel %vm4018, %v4003, 0.0
  %4167 = vadd.xlane.f32.xlu0 %v4166
  %v4168 = vpop.xlane.xlu0 %4167
  %v4169 = vsel %vm4018, %v4004, 0.0
  %4170 = vadd.xlane.f32.xlu0 %v4169
  %v4171 = vpop.xlane.xlu0 %4170
  %v4172 = vsel %vm4018, %v4005, 0.0
  %4173 = vadd.xlane.f32.xlu0 %v4172
  %v4174 = vpop.xlane.xlu0 %4173
  %v4175 = vsel %vm4018, %v4006, 0.0
  %4176 = vadd.xlane.f32.xlu0 %v4175
  %v4177 = vpop.xlane.xlu0 %4176
  %v4178 = vsel %vm4018, %v4007, 0.0
  %4179 = vadd.xlane.f32.xlu0 %v4178
  %v4180 = vpop.xlane.xlu0 %4179
  %v4181 = vsel %vm4018, %v4008, 0.0
  %4182 = vadd.xlane.f32.xlu0 %v4181
  %v4183 = vpop.xlane.xlu0 %4182
  %v4184 = vsel %vm4018, %v4009, 0.0
  %4185 = vadd.xlane.f32.xlu0 %v4184
  %v4186 = vpop.xlane.xlu0 %4185
  %v4187 = vsel %vm4018, %v4010, 0.0
  %4188 = vadd.xlane.f32.xlu0 %v4187
  %v4189 = vpop.xlane.xlu0 %4188
  %v4190 = vsel %vm4018, %v4011, 0.0
  %4191 = vadd.xlane.f32.xlu0 %v4190
  %v4192 = vpop.xlane.xlu0 %4191
  %v4193 = vsel %vm4018, %v4012, 0.0
  %4194 = vadd.xlane.f32.xlu0 %v4193
  %v4195 = vpop.xlane.xlu0 %4194
  %v4196 = vsel %vm4018, %v4013, 0.0
  %4197 = vadd.xlane.f32.xlu0 %v4196
  %v4198 = vpop.xlane.xlu0 %4197
  %v4199 = vsel %vm4018, %v4014, 0.0
  %4200 = vadd.xlane.f32.xlu0 %v4199
  %v4201 = vpop.xlane.xlu0 %4200
  %v4202 = vsel %vm4018, %v4015, 0.0
  %4203 = vadd.xlane.f32.xlu0 %v4202
  %v4204 = vpop.xlane.xlu0 %4203
  %v4205 = vsel %vm4018, %v4016, 0.0
  %4206 = vadd.xlane.f32.xlu0 %v4205
  %v4207 = vpop.xlane.xlu0 %4206
  %v4208 = vsel %vm4018, %v4017, 0.0
  %4209 = vadd.xlane.f32.xlu0 %v4208
  %v4210 = vpop.xlane.xlu0 %4209
  %v4275 = vlaneseq
  %v4276 = vand.u32 %v4275, 127
  %v4277 = vlaneseq
  %v4278 = vshrl.u32 %v4277, 7
  %v4279 = vsub.s32 %v4276, %v4278
  %v4280 = vrot.slane %v4021, %v4279
  %v4281 = vadd.s32 %v4276, 4294967288
  %v4282 = vlaneseq
  %v4283 = vshrl.u32 %v4282, 7
  %v4284 = vsub.s32 %v4281, %v4283
  %v4285 = vrot.slane %v4024, %v4284
  %vm4286 = vcmask 130112
  %v4287 = vsel %vm4286, %v4285, %v4280
  %v4288 = vadd.s32 %v4276, 4294967280
  %v4289 = vlaneseq
  %v4290 = vshrl.u32 %v4289, 7
  %v4291 = vsub.s32 %v4288, %v4290
  %v4292 = vrot.slane %v4027, %v4291
  %vm4293 = vcmask 195712
  %v4294 = vsel %vm4293, %v4292, %v4287
  %v4295 = vadd.s32 %v4276, 4294967272
  %v4296 = vlaneseq
  %v4297 = vshrl.u32 %v4296, 7
  %v4298 = vsub.s32 %v4295, %v4297
  %v4299 = vrot.slane %v4030, %v4298
  %vm4300 = vcmask 261312
  %v4301 = vsel %vm4300, %v4299, %v4294
  %v4302 = vadd.s32 %v4276, 4294967264
  %v4303 = vlaneseq
  %v4304 = vshrl.u32 %v4303, 7
  %v4305 = vsub.s32 %v4302, %v4304
  %v4306 = vrot.slane %v4033, %v4305
  %vm4307 = vcmask 326912
  %v4308 = vsel %vm4307, %v4306, %v4301
  %v4309 = vadd.s32 %v4276, 4294967256
  %v4310 = vlaneseq
  %v4311 = vshrl.u32 %v4310, 7
  %v4312 = vsub.s32 %v4309, %v4311
  %v4313 = vrot.slane %v4036, %v4312
  %vm4314 = vcmask 392512
  %v4315 = vsel %vm4314, %v4313, %v4308
  %v4316 = vadd.s32 %v4276, 4294967248
  %v4317 = vlaneseq
  %v4318 = vshrl.u32 %v4317, 7
  %v4319 = vsub.s32 %v4316, %v4318
  %v4320 = vrot.slane %v4039, %v4319
  %vm4321 = vcmask 458112
  %v4322 = vsel %vm4321, %v4320, %v4315
  %v4323 = vadd.s32 %v4276, 4294967240
  %v4324 = vlaneseq
  %v4325 = vshrl.u32 %v4324, 7
  %v4326 = vsub.s32 %v4323, %v4325
  %v4327 = vrot.slane %v4042, %v4326
  %vm4328 = vcmask 523712
  %v4329 = vsel %vm4328, %v4327, %v4322
  %v4330 = vadd.s32 %v4276, 4294967232
  %v4331 = vlaneseq
  %v4332 = vshrl.u32 %v4331, 7
  %v4333 = vsub.s32 %v4330, %v4332
  %v4334 = vrot.slane %v4045, %v4333
  %vm4335 = vcmask 589312
  %v4336 = vsel %vm4335, %v4334, %v4329
  %v4337 = vadd.s32 %v4276, 4294967224
  %v4338 = vlaneseq
  %v4339 = vshrl.u32 %v4338, 7
  %v4340 = vsub.s32 %v4337, %v4339
  %v4341 = vrot.slane %v4048, %v4340
  %vm4342 = vcmask 654912
  %v4343 = vsel %vm4342, %v4341, %v4336
  %v4344 = vadd.s32 %v4276, 4294967216
  %v4345 = vlaneseq
  %v4346 = vshrl.u32 %v4345, 7
  %v4347 = vsub.s32 %v4344, %v4346
  %v4348 = vrot.slane %v4051, %v4347
  %vm4349 = vcmask 720512
  %v4350 = vsel %vm4349, %v4348, %v4343
  %v4351 = vadd.s32 %v4276, 4294967208
  %v4352 = vlaneseq
  %v4353 = vshrl.u32 %v4352, 7
  %v4354 = vsub.s32 %v4351, %v4353
  %v4355 = vrot.slane %v4054, %v4354
  %vm4356 = vcmask 786112
  %v4357 = vsel %vm4356, %v4355, %v4350
  %v4358 = vadd.s32 %v4276, 4294967200
  %v4359 = vlaneseq
  %v4360 = vshrl.u32 %v4359, 7
  %v4361 = vsub.s32 %v4358, %v4360
  %v4362 = vrot.slane %v4057, %v4361
  %vm4363 = vcmask 851712
  %v4364 = vsel %vm4363, %v4362, %v4357
  %v4365 = vadd.s32 %v4276, 4294967192
  %v4366 = vlaneseq
  %v4367 = vshrl.u32 %v4366, 7
  %v4368 = vsub.s32 %v4365, %v4367
  %v4369 = vrot.slane %v4060, %v4368
  %vm4370 = vcmask 917312
  %v4371 = vsel %vm4370, %v4369, %v4364
  %v4372 = vadd.s32 %v4276, 4294967184
  %v4373 = vlaneseq
  %v4374 = vshrl.u32 %v4373, 7
  %v4375 = vsub.s32 %v4372, %v4374
  %v4376 = vrot.slane %v4063, %v4375
  %vm4377 = vcmask 982912
  %v4378 = vsel %vm4377, %v4376, %v4371
  %v4379 = vadd.s32 %v4276, 4294967176
  %v4380 = vlaneseq
  %v4381 = vshrl.u32 %v4380, 7
  %v4382 = vsub.s32 %v4379, %v4381
  %v4383 = vrot.slane %v4066, %v4382
  %vm4384 = vcmask 1048512
  %v4385 = vsel %vm4384, %v4383, %v4378
  %v4386 = vlaneseq
  %v4387 = vshrl.u32 %v4386, 7
  %v4388 = vsub.s32 %v4276, %v4387
  %v4389 = vrot.slane %v4069, %v4388
  %v4390 = vlaneseq
  %v4391 = vshrl.u32 %v4390, 7
  %v4392 = vsub.s32 %v4281, %v4391
  %v4393 = vrot.slane %v4072, %v4392
  %v4394 = vsel %vm4286, %v4393, %v4389
  %v4395 = vlaneseq
  %v4396 = vshrl.u32 %v4395, 7
  %v4397 = vsub.s32 %v4288, %v4396
  %v4398 = vrot.slane %v4075, %v4397
  %v4399 = vsel %vm4293, %v4398, %v4394
  %v4400 = vlaneseq
  %v4401 = vshrl.u32 %v4400, 7
  %v4402 = vsub.s32 %v4295, %v4401
  %v4403 = vrot.slane %v4078, %v4402
  %v4404 = vsel %vm4300, %v4403, %v4399
  %v4405 = vlaneseq
  %v4406 = vshrl.u32 %v4405, 7
  %v4407 = vsub.s32 %v4302, %v4406
  %v4408 = vrot.slane %v4081, %v4407
  %v4409 = vsel %vm4307, %v4408, %v4404
  %v4410 = vlaneseq
  %v4411 = vshrl.u32 %v4410, 7
  %v4412 = vsub.s32 %v4309, %v4411
  %v4413 = vrot.slane %v4084, %v4412
  %v4414 = vsel %vm4314, %v4413, %v4409
  %v4415 = vlaneseq
  %v4416 = vshrl.u32 %v4415, 7
  %v4417 = vsub.s32 %v4316, %v4416
  %v4418 = vrot.slane %v4087, %v4417
  %v4419 = vsel %vm4321, %v4418, %v4414
  %v4420 = vlaneseq
  %v4421 = vshrl.u32 %v4420, 7
  %v4422 = vsub.s32 %v4323, %v4421
  %v4423 = vrot.slane %v4090, %v4422
  %v4424 = vsel %vm4328, %v4423, %v4419
  %v4425 = vlaneseq
  %v4426 = vshrl.u32 %v4425, 7
  %v4427 = vsub.s32 %v4330, %v4426
  %v4428 = vrot.slane %v4093, %v4427
  %v4429 = vsel %vm4335, %v4428, %v4424
  %v4430 = vlaneseq
  %v4431 = vshrl.u32 %v4430, 7
  %v4432 = vsub.s32 %v4337, %v4431
  %v4433 = vrot.slane %v4096, %v4432
  %v4434 = vsel %vm4342, %v4433, %v4429
  %v4435 = vlaneseq
  %v4436 = vshrl.u32 %v4435, 7
  %v4437 = vsub.s32 %v4344, %v4436
  %v4438 = vrot.slane %v4099, %v4437
  %v4439 = vsel %vm4349, %v4438, %v4434
  %v4440 = vlaneseq
  %v4441 = vshrl.u32 %v4440, 7
  %v4442 = vsub.s32 %v4351, %v4441
  %v4443 = vrot.slane %v4102, %v4442
  %v4444 = vsel %vm4356, %v4443, %v4439
  %v4445 = vlaneseq
  %v4446 = vshrl.u32 %v4445, 7
  %v4447 = vsub.s32 %v4358, %v4446
  %v4448 = vrot.slane %v4105, %v4447
  %v4449 = vsel %vm4363, %v4448, %v4444
  %v4450 = vlaneseq
  %v4451 = vshrl.u32 %v4450, 7
  %v4452 = vsub.s32 %v4365, %v4451
  %v4453 = vrot.slane %v4108, %v4452
  %v4454 = vsel %vm4370, %v4453, %v4449
  %v4455 = vlaneseq
  %v4456 = vshrl.u32 %v4455, 7
  %v4457 = vsub.s32 %v4372, %v4456
  %v4458 = vrot.slane %v4111, %v4457
  %v4459 = vsel %vm4377, %v4458, %v4454
  %v4460 = vlaneseq
  %v4461 = vshrl.u32 %v4460, 7
  %v4462 = vsub.s32 %v4379, %v4461
  %v4463 = vrot.slane %v4114, %v4462
  %v4464 = vsel %vm4384, %v4463, %v4459
  %v4465 = vlaneseq
  %v4466 = vshrl.u32 %v4465, 7
  %v4467 = vsub.s32 %v4276, %v4466
  %v4468 = vrot.slane %v4117, %v4467
  %v4469 = vlaneseq
  %v4470 = vshrl.u32 %v4469, 7
  %v4471 = vsub.s32 %v4281, %v4470
  %v4472 = vrot.slane %v4120, %v4471
  %v4473 = vsel %vm4286, %v4472, %v4468
  %v4474 = vlaneseq
  %v4475 = vshrl.u32 %v4474, 7
  %v4476 = vsub.s32 %v4288, %v4475
  %v4477 = vrot.slane %v4123, %v4476
  %v4478 = vsel %vm4293, %v4477, %v4473
  %v4479 = vlaneseq
  %v4480 = vshrl.u32 %v4479, 7
  %v4481 = vsub.s32 %v4295, %v4480
  %v4482 = vrot.slane %v4126, %v4481
  %v4483 = vsel %vm4300, %v4482, %v4478
  %v4484 = vlaneseq
  %v4485 = vshrl.u32 %v4484, 7
  %v4486 = vsub.s32 %v4302, %v4485
  %v4487 = vrot.slane %v4129, %v4486
  %v4488 = vsel %vm4307, %v4487, %v4483
  %v4489 = vlaneseq
  %v4490 = vshrl.u32 %v4489, 7
  %v4491 = vsub.s32 %v4309, %v4490
  %v4492 = vrot.slane %v4132, %v4491
  %v4493 = vsel %vm4314, %v4492, %v4488
  %v4494 = vlaneseq
  %v4495 = vshrl.u32 %v4494, 7
  %v4496 = vsub.s32 %v4316, %v4495
  %v4497 = vrot.slane %v4135, %v4496
  %v4498 = vsel %vm4321, %v4497, %v4493
  %v4499 = vlaneseq
  %v4500 = vshrl.u32 %v4499, 7
  %v4501 = vsub.s32 %v4323, %v4500
  %v4502 = vrot.slane %v4138, %v4501
  %v4503 = vsel %vm4328, %v4502, %v4498
  %v4504 = vlaneseq
  %v4505 = vshrl.u32 %v4504, 7
  %v4506 = vsub.s32 %v4330, %v4505
  %v4507 = vrot.slane %v4141, %v4506
  %v4508 = vsel %vm4335, %v4507, %v4503
  %v4509 = vlaneseq
  %v4510 = vshrl.u32 %v4509, 7
  %v4511 = vsub.s32 %v4337, %v4510
  %v4512 = vrot.slane %v4144, %v4511
  %v4513 = vsel %vm4342, %v4512, %v4508
  %v4514 = vlaneseq
  %v4515 = vshrl.u32 %v4514, 7
  %v4516 = vsub.s32 %v4344, %v4515
  %v4517 = vrot.slane %v4147, %v4516
  %v4518 = vsel %vm4349, %v4517, %v4513
  %v4519 = vlaneseq
  %v4520 = vshrl.u32 %v4519, 7
  %v4521 = vsub.s32 %v4351, %v4520
  %v4522 = vrot.slane %v4150, %v4521
  %v4523 = vsel %vm4356, %v4522, %v4518
  %v4524 = vlaneseq
  %v4525 = vshrl.u32 %v4524, 7
  %v4526 = vsub.s32 %v4358, %v4525
  %v4527 = vrot.slane %v4153, %v4526
  %v4528 = vsel %vm4363, %v4527, %v4523
  %v4529 = vlaneseq
  %v4530 = vshrl.u32 %v4529, 7
  %v4531 = vsub.s32 %v4365, %v4530
  %v4532 = vrot.slane %v4156, %v4531
  %v4533 = vsel %vm4370, %v4532, %v4528
  %v4534 = vlaneseq
  %v4535 = vshrl.u32 %v4534, 7
  %v4536 = vsub.s32 %v4372, %v4535
  %v4537 = vrot.slane %v4159, %v4536
  %v4538 = vsel %vm4377, %v4537, %v4533
  %v4539 = vlaneseq
  %v4540 = vshrl.u32 %v4539, 7
  %v4541 = vsub.s32 %v4379, %v4540
  %v4542 = vrot.slane %v4162, %v4541
  %v4543 = vsel %vm4384, %v4542, %v4538
  %v4544 = vlaneseq
  %v4545 = vshrl.u32 %v4544, 7
  %v4546 = vsub.s32 %v4276, %v4545
  %v4547 = vrot.slane %v4165, %v4546
  %v4548 = vlaneseq
  %v4549 = vshrl.u32 %v4548, 7
  %v4550 = vsub.s32 %v4281, %v4549
  %v4551 = vrot.slane %v4168, %v4550
  %v4552 = vsel %vm4286, %v4551, %v4547
  %v4553 = vlaneseq
  %v4554 = vshrl.u32 %v4553, 7
  %v4555 = vsub.s32 %v4288, %v4554
  %v4556 = vrot.slane %v4171, %v4555
  %v4557 = vsel %vm4293, %v4556, %v4552
  %v4558 = vlaneseq
  %v4559 = vshrl.u32 %v4558, 7
  %v4560 = vsub.s32 %v4295, %v4559
  %v4561 = vrot.slane %v4174, %v4560
  %v4562 = vsel %vm4300, %v4561, %v4557
  %v4563 = vlaneseq
  %v4564 = vshrl.u32 %v4563, 7
  %v4565 = vsub.s32 %v4302, %v4564
  %v4566 = vrot.slane %v4177, %v4565
  %v4567 = vsel %vm4307, %v4566, %v4562
  %v4568 = vlaneseq
  %v4569 = vshrl.u32 %v4568, 7
  %v4570 = vsub.s32 %v4309, %v4569
  %v4571 = vrot.slane %v4180, %v4570
  %v4572 = vsel %vm4314, %v4571, %v4567
  %v4573 = vlaneseq
  %v4574 = vshrl.u32 %v4573, 7
  %v4575 = vsub.s32 %v4316, %v4574
  %v4576 = vrot.slane %v4183, %v4575
  %v4577 = vsel %vm4321, %v4576, %v4572
  %v4578 = vlaneseq
  %v4579 = vshrl.u32 %v4578, 7
  %v4580 = vsub.s32 %v4323, %v4579
  %v4581 = vrot.slane %v4186, %v4580
  %v4582 = vsel %vm4328, %v4581, %v4577
  %v4583 = vlaneseq
  %v4584 = vshrl.u32 %v4583, 7
  %v4585 = vsub.s32 %v4330, %v4584
  %v4586 = vrot.slane %v4189, %v4585
  %v4587 = vsel %vm4335, %v4586, %v4582
  %v4588 = vlaneseq
  %v4589 = vshrl.u32 %v4588, 7
  %v4590 = vsub.s32 %v4337, %v4589
  %v4591 = vrot.slane %v4192, %v4590
  %v4592 = vsel %vm4342, %v4591, %v4587
  %v4593 = vlaneseq
  %v4594 = vshrl.u32 %v4593, 7
  %v4595 = vsub.s32 %v4344, %v4594
  %v4596 = vrot.slane %v4195, %v4595
  %v4597 = vsel %vm4349, %v4596, %v4592
  %v4598 = vlaneseq
  %v4599 = vshrl.u32 %v4598, 7
  %v4600 = vsub.s32 %v4351, %v4599
  %v4601 = vrot.slane %v4198, %v4600
  %v4602 = vsel %vm4356, %v4601, %v4597
  %v4603 = vlaneseq
  %v4604 = vshrl.u32 %v4603, 7
  %v4605 = vsub.s32 %v4358, %v4604
  %v4606 = vrot.slane %v4201, %v4605
  %v4607 = vsel %vm4363, %v4606, %v4602
  %v4608 = vlaneseq
  %v4609 = vshrl.u32 %v4608, 7
  %v4610 = vsub.s32 %v4365, %v4609
  %v4611 = vrot.slane %v4204, %v4610
  %v4612 = vsel %vm4370, %v4611, %v4607
  %v4613 = vlaneseq
  %v4614 = vshrl.u32 %v4613, 7
  %v4615 = vsub.s32 %v4372, %v4614
  %v4616 = vrot.slane %v4207, %v4615
  %v4617 = vsel %vm4377, %v4616, %v4612
  %v4618 = vlaneseq
  %v4619 = vshrl.u32 %v4618, 7
  %v4620 = vsub.s32 %v4379, %v4619
  %v4621 = vrot.slane %v4210, %v4620
  %v4622 = vsel %vm4384, %v4621, %v4617
  %vm4623 = vcmask 1041409
  %v4624 = vsel %vm4623, %v4543, %v4385
  %v4625 = vsel %vm4623, %v4622, %v4464
  %vm4628 = vcmask 1041408
  %v4629 = vsel %vm4628, %v4624, 0.0
  %v4630 = vsel %vm4628, %v4625, 0.0
  %v4631 = vadd.f32 %v4629, %v4630
  %4632 = vadd.xlane.f32.xlu0 %v4631
  %v4633 = vpop.xlane.xlu0 %4632
  %v4634 = vmul.f32 %v2980, %v3921
  %v4635 = vmul.f32 %v2983, %v3922
  %v4636 = vmul.f32 %v2988, %v3923
  %v4637 = vmul.f32 %v2991, %v3924
  %v4638 = vmul.f32 %v2996, %v3925
  %v4639 = vmul.f32 %v2999, %v3926
  %v4640 = vmul.f32 %v3004, %v3927
  %v4641 = vmul.f32 %v3007, %v3928
  %v4642 = vmul.f32 %v3012, %v3929
  %v4643 = vmul.f32 %v3015, %v3930
  %v4644 = vmul.f32 %v3020, %v3931
  %v4645 = vmul.f32 %v3023, %v3932
  %v4646 = vmul.f32 %v3028, %v3933
  %v4647 = vmul.f32 %v3031, %v3934
  %v4648 = vmul.f32 %v3036, %v3935
  %v4649 = vmul.f32 %v3039, %v3936
  %v4650 = vmul.f32 %v3044, %v3937
  %v4651 = vmul.f32 %v3047, %v3938
  %v4652 = vmul.f32 %v3052, %v3939
  %v4653 = vmul.f32 %v3055, %v3940
  %v4654 = vmul.f32 %v3060, %v3941
  %v4655 = vmul.f32 %v3063, %v3942
  %v4656 = vmul.f32 %v3068, %v3943
  %v4657 = vmul.f32 %v3071, %v3944
  %v4658 = vmul.f32 %v3076, %v3945
  %v4659 = vmul.f32 %v3079, %v3946
  %v4660 = vmul.f32 %v3084, %v3947
  %v4661 = vmul.f32 %v3087, %v3948
  %v4662 = vmul.f32 %v3092, %v3949
  %v4663 = vmul.f32 %v3095, %v3950
  %v4664 = vmul.f32 %v3100, %v3951
  %v4665 = vmul.f32 %v3103, %v3952
  %v4666 = vmul.f32 %v3108, %v3921
  %v4667 = vmul.f32 %v3111, %v3922
  %v4668 = vmul.f32 %v3116, %v3923
  %v4669 = vmul.f32 %v3119, %v3924
  %v4670 = vmul.f32 %v3124, %v3925
  %v4671 = vmul.f32 %v3127, %v3926
  %v4672 = vmul.f32 %v3132, %v3927
  %v4673 = vmul.f32 %v3135, %v3928
  %v4674 = vmul.f32 %v3140, %v3929
  %v4675 = vmul.f32 %v3143, %v3930
  %v4676 = vmul.f32 %v3148, %v3931
  %v4677 = vmul.f32 %v3151, %v3932
  %v4678 = vmul.f32 %v3156, %v3933
  %v4679 = vmul.f32 %v3159, %v3934
  %v4680 = vmul.f32 %v3164, %v3935
  %v4681 = vmul.f32 %v3167, %v3936
  %v4682 = vmul.f32 %v3172, %v3937
  %v4683 = vmul.f32 %v3175, %v3938
  %v4684 = vmul.f32 %v3180, %v3939
  %v4685 = vmul.f32 %v3183, %v3940
  %v4686 = vmul.f32 %v3188, %v3941
  %v4687 = vmul.f32 %v3191, %v3942
  %v4688 = vmul.f32 %v3196, %v3943
  %v4689 = vmul.f32 %v3199, %v3944
  %v4690 = vmul.f32 %v3204, %v3945
  %v4691 = vmul.f32 %v3207, %v3946
  %v4692 = vmul.f32 %v3212, %v3947
  %v4693 = vmul.f32 %v3215, %v3948
  %v4694 = vmul.f32 %v3220, %v3949
  %v4695 = vmul.f32 %v3223, %v3950
  %v4696 = vmul.f32 %v3228, %v3951
  %v4697 = vmul.f32 %v3231, %v3952
  %v4698 = vsel %vm4018, %v4634, 0.0
  %4699 = vadd.xlane.f32.xlu0 %v4698
  %v4700 = vpop.xlane.xlu0 %4699
  %v4701 = vsel %vm4018, %v4635, 0.0
  %4702 = vadd.xlane.f32.xlu0 %v4701
  %v4703 = vpop.xlane.xlu0 %4702
  %v4704 = vsel %vm4018, %v4636, 0.0
  %4705 = vadd.xlane.f32.xlu0 %v4704
  %v4706 = vpop.xlane.xlu0 %4705
  %v4707 = vsel %vm4018, %v4637, 0.0
  %4708 = vadd.xlane.f32.xlu0 %v4707
  %v4709 = vpop.xlane.xlu0 %4708
  %v4710 = vsel %vm4018, %v4638, 0.0
  %4711 = vadd.xlane.f32.xlu0 %v4710
  %v4712 = vpop.xlane.xlu0 %4711
  %v4713 = vsel %vm4018, %v4639, 0.0
  %4714 = vadd.xlane.f32.xlu0 %v4713
  %v4715 = vpop.xlane.xlu0 %4714
  %v4716 = vsel %vm4018, %v4640, 0.0
  %4717 = vadd.xlane.f32.xlu0 %v4716
  %v4718 = vpop.xlane.xlu0 %4717
  %v4719 = vsel %vm4018, %v4641, 0.0
  %4720 = vadd.xlane.f32.xlu0 %v4719
  %v4721 = vpop.xlane.xlu0 %4720
  %v4722 = vsel %vm4018, %v4642, 0.0
  %4723 = vadd.xlane.f32.xlu0 %v4722
  %v4724 = vpop.xlane.xlu0 %4723
  %v4725 = vsel %vm4018, %v4643, 0.0
  %4726 = vadd.xlane.f32.xlu0 %v4725
  %v4727 = vpop.xlane.xlu0 %4726
  %v4728 = vsel %vm4018, %v4644, 0.0
  %4729 = vadd.xlane.f32.xlu0 %v4728
  %v4730 = vpop.xlane.xlu0 %4729
  %v4731 = vsel %vm4018, %v4645, 0.0
  %4732 = vadd.xlane.f32.xlu0 %v4731
  %v4733 = vpop.xlane.xlu0 %4732
  %v4734 = vsel %vm4018, %v4646, 0.0
  %4735 = vadd.xlane.f32.xlu0 %v4734
  %v4736 = vpop.xlane.xlu0 %4735
  %v4737 = vsel %vm4018, %v4647, 0.0
  %4738 = vadd.xlane.f32.xlu0 %v4737
  %v4739 = vpop.xlane.xlu0 %4738
  %v4740 = vsel %vm4018, %v4648, 0.0
  %4741 = vadd.xlane.f32.xlu0 %v4740
  %v4742 = vpop.xlane.xlu0 %4741
  %v4743 = vsel %vm4018, %v4649, 0.0
  %4744 = vadd.xlane.f32.xlu0 %v4743
  %v4745 = vpop.xlane.xlu0 %4744
  %v4746 = vsel %vm4018, %v4650, 0.0
  %4747 = vadd.xlane.f32.xlu0 %v4746
  %v4748 = vpop.xlane.xlu0 %4747
  %v4749 = vsel %vm4018, %v4651, 0.0
  %4750 = vadd.xlane.f32.xlu0 %v4749
  %v4751 = vpop.xlane.xlu0 %4750
  %v4752 = vsel %vm4018, %v4652, 0.0
  %4753 = vadd.xlane.f32.xlu0 %v4752
  %v4754 = vpop.xlane.xlu0 %4753
  %v4755 = vsel %vm4018, %v4653, 0.0
  %4756 = vadd.xlane.f32.xlu0 %v4755
  %v4757 = vpop.xlane.xlu0 %4756
  %v4758 = vsel %vm4018, %v4654, 0.0
  %4759 = vadd.xlane.f32.xlu0 %v4758
  %v4760 = vpop.xlane.xlu0 %4759
  %v4761 = vsel %vm4018, %v4655, 0.0
  %4762 = vadd.xlane.f32.xlu0 %v4761
  %v4763 = vpop.xlane.xlu0 %4762
  %v4764 = vsel %vm4018, %v4656, 0.0
  %4765 = vadd.xlane.f32.xlu0 %v4764
  %v4766 = vpop.xlane.xlu0 %4765
  %v4767 = vsel %vm4018, %v4657, 0.0
  %4768 = vadd.xlane.f32.xlu0 %v4767
  %v4769 = vpop.xlane.xlu0 %4768
  %v4770 = vsel %vm4018, %v4658, 0.0
  %4771 = vadd.xlane.f32.xlu0 %v4770
  %v4772 = vpop.xlane.xlu0 %4771
  %v4773 = vsel %vm4018, %v4659, 0.0
  %4774 = vadd.xlane.f32.xlu0 %v4773
  %v4775 = vpop.xlane.xlu0 %4774
  %v4776 = vsel %vm4018, %v4660, 0.0
  %4777 = vadd.xlane.f32.xlu0 %v4776
  %v4778 = vpop.xlane.xlu0 %4777
  %v4779 = vsel %vm4018, %v4661, 0.0
  %4780 = vadd.xlane.f32.xlu0 %v4779
  %v4781 = vpop.xlane.xlu0 %4780
  %v4782 = vsel %vm4018, %v4662, 0.0
  %4783 = vadd.xlane.f32.xlu0 %v4782
  %v4784 = vpop.xlane.xlu0 %4783
  %v4785 = vsel %vm4018, %v4663, 0.0
  %4786 = vadd.xlane.f32.xlu0 %v4785
  %v4787 = vpop.xlane.xlu0 %4786
  %v4788 = vsel %vm4018, %v4664, 0.0
  %4789 = vadd.xlane.f32.xlu0 %v4788
  %v4790 = vpop.xlane.xlu0 %4789
  %v4791 = vsel %vm4018, %v4665, 0.0
  %4792 = vadd.xlane.f32.xlu0 %v4791
  %v4793 = vpop.xlane.xlu0 %4792
  %v4794 = vsel %vm4018, %v4666, 0.0
  %4795 = vadd.xlane.f32.xlu0 %v4794
  %v4796 = vpop.xlane.xlu0 %4795
  %v4797 = vsel %vm4018, %v4667, 0.0
  %4798 = vadd.xlane.f32.xlu0 %v4797
  %v4799 = vpop.xlane.xlu0 %4798
  %v4800 = vsel %vm4018, %v4668, 0.0
  %4801 = vadd.xlane.f32.xlu0 %v4800
  %v4802 = vpop.xlane.xlu0 %4801
  %v4803 = vsel %vm4018, %v4669, 0.0
  %4804 = vadd.xlane.f32.xlu0 %v4803
  %v4805 = vpop.xlane.xlu0 %4804
  %v4806 = vsel %vm4018, %v4670, 0.0
  %4807 = vadd.xlane.f32.xlu0 %v4806
  %v4808 = vpop.xlane.xlu0 %4807
  %v4809 = vsel %vm4018, %v4671, 0.0
  %4810 = vadd.xlane.f32.xlu0 %v4809
  %v4811 = vpop.xlane.xlu0 %4810
  %v4812 = vsel %vm4018, %v4672, 0.0
  %4813 = vadd.xlane.f32.xlu0 %v4812
  %v4814 = vpop.xlane.xlu0 %4813
  %v4815 = vsel %vm4018, %v4673, 0.0
  %4816 = vadd.xlane.f32.xlu0 %v4815
  %v4817 = vpop.xlane.xlu0 %4816
  %v4818 = vsel %vm4018, %v4674, 0.0
  %4819 = vadd.xlane.f32.xlu0 %v4818
  %v4820 = vpop.xlane.xlu0 %4819
  %v4821 = vsel %vm4018, %v4675, 0.0
  %4822 = vadd.xlane.f32.xlu0 %v4821
  %v4823 = vpop.xlane.xlu0 %4822
  %v4824 = vsel %vm4018, %v4676, 0.0
  %4825 = vadd.xlane.f32.xlu0 %v4824
  %v4826 = vpop.xlane.xlu0 %4825
  %v4827 = vsel %vm4018, %v4677, 0.0
  %4828 = vadd.xlane.f32.xlu0 %v4827
  %v4829 = vpop.xlane.xlu0 %4828
  %v4830 = vsel %vm4018, %v4678, 0.0
  %4831 = vadd.xlane.f32.xlu0 %v4830
  %v4832 = vpop.xlane.xlu0 %4831
  %v4833 = vsel %vm4018, %v4679, 0.0
  %4834 = vadd.xlane.f32.xlu0 %v4833
  %v4835 = vpop.xlane.xlu0 %4834
  %v4836 = vsel %vm4018, %v4680, 0.0
  %4837 = vadd.xlane.f32.xlu0 %v4836
  %v4838 = vpop.xlane.xlu0 %4837
  %v4839 = vsel %vm4018, %v4681, 0.0
  %4840 = vadd.xlane.f32.xlu0 %v4839
  %v4841 = vpop.xlane.xlu0 %4840
  %v4842 = vsel %vm4018, %v4682, 0.0
  %4843 = vadd.xlane.f32.xlu0 %v4842
  %v4844 = vpop.xlane.xlu0 %4843
  %v4845 = vsel %vm4018, %v4683, 0.0
  %4846 = vadd.xlane.f32.xlu0 %v4845
  %v4847 = vpop.xlane.xlu0 %4846
  %v4848 = vsel %vm4018, %v4684, 0.0
  %4849 = vadd.xlane.f32.xlu0 %v4848
  %v4850 = vpop.xlane.xlu0 %4849
  %v4851 = vsel %vm4018, %v4685, 0.0
  %4852 = vadd.xlane.f32.xlu0 %v4851
  %v4853 = vpop.xlane.xlu0 %4852
  %v4854 = vsel %vm4018, %v4686, 0.0
  %4855 = vadd.xlane.f32.xlu0 %v4854
  %v4856 = vpop.xlane.xlu0 %4855
  %v4857 = vsel %vm4018, %v4687, 0.0
  %4858 = vadd.xlane.f32.xlu0 %v4857
  %v4859 = vpop.xlane.xlu0 %4858
  %v4860 = vsel %vm4018, %v4688, 0.0
  %4861 = vadd.xlane.f32.xlu0 %v4860
  %v4862 = vpop.xlane.xlu0 %4861
  %v4863 = vsel %vm4018, %v4689, 0.0
  %4864 = vadd.xlane.f32.xlu0 %v4863
  %v4865 = vpop.xlane.xlu0 %4864
  %v4866 = vsel %vm4018, %v4690, 0.0
  %4867 = vadd.xlane.f32.xlu0 %v4866
  %v4868 = vpop.xlane.xlu0 %4867
  %v4869 = vsel %vm4018, %v4691, 0.0
  %4870 = vadd.xlane.f32.xlu0 %v4869
  %v4871 = vpop.xlane.xlu0 %4870
  %v4872 = vsel %vm4018, %v4692, 0.0
  %4873 = vadd.xlane.f32.xlu0 %v4872
  %v4874 = vpop.xlane.xlu0 %4873
  %v4875 = vsel %vm4018, %v4693, 0.0
  %4876 = vadd.xlane.f32.xlu0 %v4875
  %v4877 = vpop.xlane.xlu0 %4876
  %v4878 = vsel %vm4018, %v4694, 0.0
  %4879 = vadd.xlane.f32.xlu0 %v4878
  %v4880 = vpop.xlane.xlu0 %4879
  %v4881 = vsel %vm4018, %v4695, 0.0
  %4882 = vadd.xlane.f32.xlu0 %v4881
  %v4883 = vpop.xlane.xlu0 %4882
  %v4884 = vsel %vm4018, %v4696, 0.0
  %4885 = vadd.xlane.f32.xlu0 %v4884
  %v4886 = vpop.xlane.xlu0 %4885
  %v4887 = vsel %vm4018, %v4697, 0.0
  %4888 = vadd.xlane.f32.xlu0 %v4887
  %v4889 = vpop.xlane.xlu0 %4888
  %v4954 = vlaneseq
  %v4955 = vshrl.u32 %v4954, 7
  %v4956 = vsub.s32 %v4276, %v4955
  %v4957 = vrot.slane %v4700, %v4956
  %v4958 = vlaneseq
  %v4959 = vshrl.u32 %v4958, 7
  %v4960 = vsub.s32 %v4281, %v4959
  %v4961 = vrot.slane %v4703, %v4960
  %v4962 = vsel %vm4286, %v4961, %v4957
  %v4963 = vlaneseq
  %v4964 = vshrl.u32 %v4963, 7
  %v4965 = vsub.s32 %v4288, %v4964
  %v4966 = vrot.slane %v4706, %v4965
  %v4967 = vsel %vm4293, %v4966, %v4962
  %v4968 = vlaneseq
  %v4969 = vshrl.u32 %v4968, 7
  %v4970 = vsub.s32 %v4295, %v4969
  %v4971 = vrot.slane %v4709, %v4970
  %v4972 = vsel %vm4300, %v4971, %v4967
  %v4973 = vlaneseq
  %v4974 = vshrl.u32 %v4973, 7
  %v4975 = vsub.s32 %v4302, %v4974
  %v4976 = vrot.slane %v4712, %v4975
  %v4977 = vsel %vm4307, %v4976, %v4972
  %v4978 = vlaneseq
  %v4979 = vshrl.u32 %v4978, 7
  %v4980 = vsub.s32 %v4309, %v4979
  %v4981 = vrot.slane %v4715, %v4980
  %v4982 = vsel %vm4314, %v4981, %v4977
  %v4983 = vlaneseq
  %v4984 = vshrl.u32 %v4983, 7
  %v4985 = vsub.s32 %v4316, %v4984
  %v4986 = vrot.slane %v4718, %v4985
  %v4987 = vsel %vm4321, %v4986, %v4982
  %v4988 = vlaneseq
  %v4989 = vshrl.u32 %v4988, 7
  %v4990 = vsub.s32 %v4323, %v4989
  %v4991 = vrot.slane %v4721, %v4990
  %v4992 = vsel %vm4328, %v4991, %v4987
  %v4993 = vlaneseq
  %v4994 = vshrl.u32 %v4993, 7
  %v4995 = vsub.s32 %v4330, %v4994
  %v4996 = vrot.slane %v4724, %v4995
  %v4997 = vsel %vm4335, %v4996, %v4992
  %v4998 = vlaneseq
  %v4999 = vshrl.u32 %v4998, 7
  %v5000 = vsub.s32 %v4337, %v4999
  %v5001 = vrot.slane %v4727, %v5000
  %v5002 = vsel %vm4342, %v5001, %v4997
  %v5003 = vlaneseq
  %v5004 = vshrl.u32 %v5003, 7
  %v5005 = vsub.s32 %v4344, %v5004
  %v5006 = vrot.slane %v4730, %v5005
  %v5007 = vsel %vm4349, %v5006, %v5002
  %v5008 = vlaneseq
  %v5009 = vshrl.u32 %v5008, 7
  %v5010 = vsub.s32 %v4351, %v5009
  %v5011 = vrot.slane %v4733, %v5010
  %v5012 = vsel %vm4356, %v5011, %v5007
  %v5013 = vlaneseq
  %v5014 = vshrl.u32 %v5013, 7
  %v5015 = vsub.s32 %v4358, %v5014
  %v5016 = vrot.slane %v4736, %v5015
  %v5017 = vsel %vm4363, %v5016, %v5012
  %v5018 = vlaneseq
  %v5019 = vshrl.u32 %v5018, 7
  %v5020 = vsub.s32 %v4365, %v5019
  %v5021 = vrot.slane %v4739, %v5020
  %v5022 = vsel %vm4370, %v5021, %v5017
  %v5023 = vlaneseq
  %v5024 = vshrl.u32 %v5023, 7
  %v5025 = vsub.s32 %v4372, %v5024
  %v5026 = vrot.slane %v4742, %v5025
  %v5027 = vsel %vm4377, %v5026, %v5022
  %v5028 = vlaneseq
  %v5029 = vshrl.u32 %v5028, 7
  %v5030 = vsub.s32 %v4379, %v5029
  %v5031 = vrot.slane %v4745, %v5030
  %v5032 = vsel %vm4384, %v5031, %v5027
  %v5033 = vlaneseq
  %v5034 = vshrl.u32 %v5033, 7
  %v5035 = vsub.s32 %v4276, %v5034
  %v5036 = vrot.slane %v4748, %v5035
  %v5037 = vlaneseq
  %v5038 = vshrl.u32 %v5037, 7
  %v5039 = vsub.s32 %v4281, %v5038
  %v5040 = vrot.slane %v4751, %v5039
  %v5041 = vsel %vm4286, %v5040, %v5036
  %v5042 = vlaneseq
  %v5043 = vshrl.u32 %v5042, 7
  %v5044 = vsub.s32 %v4288, %v5043
  %v5045 = vrot.slane %v4754, %v5044
  %v5046 = vsel %vm4293, %v5045, %v5041
  %v5047 = vlaneseq
  %v5048 = vshrl.u32 %v5047, 7
  %v5049 = vsub.s32 %v4295, %v5048
  %v5050 = vrot.slane %v4757, %v5049
  %v5051 = vsel %vm4300, %v5050, %v5046
  %v5052 = vlaneseq
  %v5053 = vshrl.u32 %v5052, 7
  %v5054 = vsub.s32 %v4302, %v5053
  %v5055 = vrot.slane %v4760, %v5054
  %v5056 = vsel %vm4307, %v5055, %v5051
  %v5057 = vlaneseq
  %v5058 = vshrl.u32 %v5057, 7
  %v5059 = vsub.s32 %v4309, %v5058
  %v5060 = vrot.slane %v4763, %v5059
  %v5061 = vsel %vm4314, %v5060, %v5056
  %v5062 = vlaneseq
  %v5063 = vshrl.u32 %v5062, 7
  %v5064 = vsub.s32 %v4316, %v5063
  %v5065 = vrot.slane %v4766, %v5064
  %v5066 = vsel %vm4321, %v5065, %v5061
  %v5067 = vlaneseq
  %v5068 = vshrl.u32 %v5067, 7
  %v5069 = vsub.s32 %v4323, %v5068
  %v5070 = vrot.slane %v4769, %v5069
  %v5071 = vsel %vm4328, %v5070, %v5066
  %v5072 = vlaneseq
  %v5073 = vshrl.u32 %v5072, 7
  %v5074 = vsub.s32 %v4330, %v5073
  %v5075 = vrot.slane %v4772, %v5074
  %v5076 = vsel %vm4335, %v5075, %v5071
  %v5077 = vlaneseq
  %v5078 = vshrl.u32 %v5077, 7
  %v5079 = vsub.s32 %v4337, %v5078
  %v5080 = vrot.slane %v4775, %v5079
  %v5081 = vsel %vm4342, %v5080, %v5076
  %v5082 = vlaneseq
  %v5083 = vshrl.u32 %v5082, 7
  %v5084 = vsub.s32 %v4344, %v5083
  %v5085 = vrot.slane %v4778, %v5084
  %v5086 = vsel %vm4349, %v5085, %v5081
  %v5087 = vlaneseq
  %v5088 = vshrl.u32 %v5087, 7
  %v5089 = vsub.s32 %v4351, %v5088
  %v5090 = vrot.slane %v4781, %v5089
  %v5091 = vsel %vm4356, %v5090, %v5086
  %v5092 = vlaneseq
  %v5093 = vshrl.u32 %v5092, 7
  %v5094 = vsub.s32 %v4358, %v5093
  %v5095 = vrot.slane %v4784, %v5094
  %v5096 = vsel %vm4363, %v5095, %v5091
  %v5097 = vlaneseq
  %v5098 = vshrl.u32 %v5097, 7
  %v5099 = vsub.s32 %v4365, %v5098
  %v5100 = vrot.slane %v4787, %v5099
  %v5101 = vsel %vm4370, %v5100, %v5096
  %v5102 = vlaneseq
  %v5103 = vshrl.u32 %v5102, 7
  %v5104 = vsub.s32 %v4372, %v5103
  %v5105 = vrot.slane %v4790, %v5104
  %v5106 = vsel %vm4377, %v5105, %v5101
  %v5107 = vlaneseq
  %v5108 = vshrl.u32 %v5107, 7
  %v5109 = vsub.s32 %v4379, %v5108
  %v5110 = vrot.slane %v4793, %v5109
  %v5111 = vsel %vm4384, %v5110, %v5106
  %v5112 = vlaneseq
  %v5113 = vshrl.u32 %v5112, 7
  %v5114 = vsub.s32 %v4276, %v5113
  %v5115 = vrot.slane %v4796, %v5114
  %v5116 = vlaneseq
  %v5117 = vshrl.u32 %v5116, 7
  %v5118 = vsub.s32 %v4281, %v5117
  %v5119 = vrot.slane %v4799, %v5118
  %v5120 = vsel %vm4286, %v5119, %v5115
  %v5121 = vlaneseq
  %v5122 = vshrl.u32 %v5121, 7
  %v5123 = vsub.s32 %v4288, %v5122
  %v5124 = vrot.slane %v4802, %v5123
  %v5125 = vsel %vm4293, %v5124, %v5120
  %v5126 = vlaneseq
  %v5127 = vshrl.u32 %v5126, 7
  %v5128 = vsub.s32 %v4295, %v5127
  %v5129 = vrot.slane %v4805, %v5128
  %v5130 = vsel %vm4300, %v5129, %v5125
  %v5131 = vlaneseq
  %v5132 = vshrl.u32 %v5131, 7
  %v5133 = vsub.s32 %v4302, %v5132
  %v5134 = vrot.slane %v4808, %v5133
  %v5135 = vsel %vm4307, %v5134, %v5130
  %v5136 = vlaneseq
  %v5137 = vshrl.u32 %v5136, 7
  %v5138 = vsub.s32 %v4309, %v5137
  %v5139 = vrot.slane %v4811, %v5138
  %v5140 = vsel %vm4314, %v5139, %v5135
  %v5141 = vlaneseq
  %v5142 = vshrl.u32 %v5141, 7
  %v5143 = vsub.s32 %v4316, %v5142
  %v5144 = vrot.slane %v4814, %v5143
  %v5145 = vsel %vm4321, %v5144, %v5140
  %v5146 = vlaneseq
  %v5147 = vshrl.u32 %v5146, 7
  %v5148 = vsub.s32 %v4323, %v5147
  %v5149 = vrot.slane %v4817, %v5148
  %v5150 = vsel %vm4328, %v5149, %v5145
  %v5151 = vlaneseq
  %v5152 = vshrl.u32 %v5151, 7
  %v5153 = vsub.s32 %v4330, %v5152
  %v5154 = vrot.slane %v4820, %v5153
  %v5155 = vsel %vm4335, %v5154, %v5150
  %v5156 = vlaneseq
  %v5157 = vshrl.u32 %v5156, 7
  %v5158 = vsub.s32 %v4337, %v5157
  %v5159 = vrot.slane %v4823, %v5158
  %v5160 = vsel %vm4342, %v5159, %v5155
  %v5161 = vlaneseq
  %v5162 = vshrl.u32 %v5161, 7
  %v5163 = vsub.s32 %v4344, %v5162
  %v5164 = vrot.slane %v4826, %v5163
  %v5165 = vsel %vm4349, %v5164, %v5160
  %v5166 = vlaneseq
  %v5167 = vshrl.u32 %v5166, 7
  %v5168 = vsub.s32 %v4351, %v5167
  %v5169 = vrot.slane %v4829, %v5168
  %v5170 = vsel %vm4356, %v5169, %v5165
  %v5171 = vlaneseq
  %v5172 = vshrl.u32 %v5171, 7
  %v5173 = vsub.s32 %v4358, %v5172
  %v5174 = vrot.slane %v4832, %v5173
  %v5175 = vsel %vm4363, %v5174, %v5170
  %v5176 = vlaneseq
  %v5177 = vshrl.u32 %v5176, 7
  %v5178 = vsub.s32 %v4365, %v5177
  %v5179 = vrot.slane %v4835, %v5178
  %v5180 = vsel %vm4370, %v5179, %v5175
  %v5181 = vlaneseq
  %v5182 = vshrl.u32 %v5181, 7
  %v5183 = vsub.s32 %v4372, %v5182
  %v5184 = vrot.slane %v4838, %v5183
  %v5185 = vsel %vm4377, %v5184, %v5180
  %v5186 = vlaneseq
  %v5187 = vshrl.u32 %v5186, 7
  %v5188 = vsub.s32 %v4379, %v5187
  %v5189 = vrot.slane %v4841, %v5188
  %v5190 = vsel %vm4384, %v5189, %v5185
  %v5191 = vlaneseq
  %v5192 = vshrl.u32 %v5191, 7
  %v5193 = vsub.s32 %v4276, %v5192
  %v5194 = vrot.slane %v4844, %v5193
  %v5195 = vlaneseq
  %v5196 = vshrl.u32 %v5195, 7
  %v5197 = vsub.s32 %v4281, %v5196
  %v5198 = vrot.slane %v4847, %v5197
  %v5199 = vsel %vm4286, %v5198, %v5194
  %v5200 = vlaneseq
  %v5201 = vshrl.u32 %v5200, 7
  %v5202 = vsub.s32 %v4288, %v5201
  %v5203 = vrot.slane %v4850, %v5202
  %v5204 = vsel %vm4293, %v5203, %v5199
  %v5205 = vlaneseq
  %v5206 = vshrl.u32 %v5205, 7
  %v5207 = vsub.s32 %v4295, %v5206
  %v5208 = vrot.slane %v4853, %v5207
  %v5209 = vsel %vm4300, %v5208, %v5204
  %v5210 = vlaneseq
  %v5211 = vshrl.u32 %v5210, 7
  %v5212 = vsub.s32 %v4302, %v5211
  %v5213 = vrot.slane %v4856, %v5212
  %v5214 = vsel %vm4307, %v5213, %v5209
  %v5215 = vlaneseq
  %v5216 = vshrl.u32 %v5215, 7
  %v5217 = vsub.s32 %v4309, %v5216
  %v5218 = vrot.slane %v4859, %v5217
  %v5219 = vsel %vm4314, %v5218, %v5214
  %v5220 = vlaneseq
  %v5221 = vshrl.u32 %v5220, 7
  %v5222 = vsub.s32 %v4316, %v5221
  %v5223 = vrot.slane %v4862, %v5222
  %v5224 = vsel %vm4321, %v5223, %v5219
  %v5225 = vlaneseq
  %v5226 = vshrl.u32 %v5225, 7
  %v5227 = vsub.s32 %v4323, %v5226
  %v5228 = vrot.slane %v4865, %v5227
  %v5229 = vsel %vm4328, %v5228, %v5224
  %v5230 = vlaneseq
  %v5231 = vshrl.u32 %v5230, 7
  %v5232 = vsub.s32 %v4330, %v5231
  %v5233 = vrot.slane %v4868, %v5232
  %v5234 = vsel %vm4335, %v5233, %v5229
  %v5235 = vlaneseq
  %v5236 = vshrl.u32 %v5235, 7
  %v5237 = vsub.s32 %v4337, %v5236
  %v5238 = vrot.slane %v4871, %v5237
  %v5239 = vsel %vm4342, %v5238, %v5234
  %v5240 = vlaneseq
  %v5241 = vshrl.u32 %v5240, 7
  %v5242 = vsub.s32 %v4344, %v5241
  %v5243 = vrot.slane %v4874, %v5242
  %v5244 = vsel %vm4349, %v5243, %v5239
  %v5245 = vlaneseq
  %v5246 = vshrl.u32 %v5245, 7
  %v5247 = vsub.s32 %v4351, %v5246
  %v5248 = vrot.slane %v4877, %v5247
  %v5249 = vsel %vm4356, %v5248, %v5244
  %v5250 = vlaneseq
  %v5251 = vshrl.u32 %v5250, 7
  %v5252 = vsub.s32 %v4358, %v5251
  %v5253 = vrot.slane %v4880, %v5252
  %v5254 = vsel %vm4363, %v5253, %v5249
  %v5255 = vlaneseq
  %v5256 = vshrl.u32 %v5255, 7
  %v5257 = vsub.s32 %v4365, %v5256
  %v5258 = vrot.slane %v4883, %v5257
  %v5259 = vsel %vm4370, %v5258, %v5254
  %v5260 = vlaneseq
  %v5261 = vshrl.u32 %v5260, 7
  %v5262 = vsub.s32 %v4372, %v5261
  %v5263 = vrot.slane %v4886, %v5262
  %v5264 = vsel %vm4377, %v5263, %v5259
  %v5265 = vlaneseq
  %v5266 = vshrl.u32 %v5265, 7
  %v5267 = vsub.s32 %v4379, %v5266
  %v5268 = vrot.slane %v4889, %v5267
  %v5269 = vsel %vm4384, %v5268, %v5264
  %v5270 = vsel %vm4623, %v5190, %v5032
  %v5271 = vsel %vm4623, %v5269, %v5111
  %v5274 = vsel %vm4628, %v5270, 0.0
  %v5275 = vsel %vm4628, %v5271, 0.0
  %v5276 = vadd.f32 %v5274, %v5275
  %5277 = vadd.xlane.f32.xlu0 %v5276
  %v5278 = vpop.xlane.xlu0 %5277
  %v5280 = vlaneseq
  %v5281 = vshrl.u32 %v5280, 7
  %v5282 = vsub.s32 0, %v5281
  %v5283 = vrot.slane %v3953, %v5282
  %v5285 = vadd.f32 %v4633, %v5283
  %v5286 = vadd.f32 %v5278, %v5283
  %v5287 = vmul.f32 %v5286, 1.442695
  %v5288 = vpow.pop %v5287
  %vm5289 = vcmask 1024
  %5290 = vst.msk [vmem:[%s8] sm:$0x3] %vm5289, %v5285
  %5292 = vrot.lane.b32.xlu0 %v5288, 127
  %v5293 = vpop.permute.xlu0 %5292
  %5295 = vst.msk [vmem:[%s9] sm:$0x3] %vm5289, %v5293
  // Predicated region
  $region30: #{qnet_forward.5} parent=0 // pred_check
    _
  $region31: #{qnet_forward.5} parent=0 // pred_check_branch
    %5297 = sbr.rel (0) target = $region33
  $region32: #{qnet_forward.5} parent=0 // pred_region
    _
  $region33: #{qnet_forward.5} parent=0 // pred_fallthru
    _
  // Predicated region
  $region34: #{qnet_forward.5} parent=0 // pred_check
    _
  $region35: #{qnet_forward.5} parent=0 // pred_check_branch
    %5299 = sbr.rel (0) target = $region37
  $region36: #{qnet_forward.5} parent=0 // pred_region
    _
  $region37: #{qnet_forward.5} parent=0 // pred_fallthru
    _
  // Predicated region
  $region38: #{qnet_forward.5} parent=0 // pred_check
    _
  $region39: #{qnet_forward.5} parent=0 // pred_check_branch
    %5301 = sbr.rel (0) target = $region41
  $region40: #{qnet_forward.5} parent=0 // pred_region
    _
  $region41: #{qnet_forward.5} parent=0 // pred_fallthru
    _
  // Predicated region
  $region42: #{qnet_forward.5} parent=0 // pred_check
    _
  $region43: #{qnet_forward.5} parent=0 // pred_check_branch
    %5303 = sbr.rel (0) target = $region45
  $region44: #{qnet_forward.5} parent=0 // pred_region
    _
  $region45: #{qnet_forward.5} parent=0 // pred_fallthru
    _
  // Predicated region
  $region46: #{qnet_forward.5} parent=0 // pred_check
    _
  $region47: #{qnet_forward.5} parent=0 // pred_check_branch
    %5305 = sbr.rel (0) target = $region49
  $region48: #{qnet_forward.5} parent=0 // pred_region
    _
  $region49: #{qnet_forward.5} parent=0 // pred_fallthru
    _
  // Predicated region
  $region50: #{qnet_forward.5} parent=0 // pred_check
    _
  $region51: #{qnet_forward.5} parent=0 // pred_check_branch
    %5307 = sbr.rel (0) target = $region53
  $region52: #{qnet_forward.5} parent=0 // pred_region
    _
  $region53: #{qnet_forward.5} parent=0 // pred_fallthru
    _

// kernel: qnet_forward.6
$region0: #{qnet_forward.6}
  #allocation0 [shape = 'u32[]', space=smem, size = 0x4, offset = 0x4, fixed_abs, tag = 'smem constant byte address 0x4 - core index']
  #allocation1 [shape = 'u32[144,128]{1,0:T(1,128)}', space=vmem, size = 0x12000, scoped, tag = 'internal scratch']
  %s0 = inlined_call_operand.vmem [shape: bf16[128,512], index: 0, kind: input, shape index: {}]
  %s1 = inlined_call_operand.vmem [shape: bf16[512,64], index: 1, kind: input, shape index: {}]
  %s2 = inlined_call_operand.vmem [shape: f32[1,64], index: 2, kind: input, shape index: {}]
  %s3 = inlined_call_operand.vmem [shape: f32[1,64], index: 3, kind: input, shape index: {}]
  %s4 = inlined_call_operand.vmem [shape: f32[64,64], index: 4, kind: input, shape index: {}]
  %s5 = inlined_call_operand.vmem [shape: f32[64,64], index: 5, kind: input, shape index: {}]
  %s6 = inlined_call_operand.vmem [shape: f32[1,2], index: 6, kind: input, shape index: {}]
  %s7 = inlined_call_operand.vmem [shape: bf16[128,64], index: 7, kind: output, shape index: {0}]
  %s8 = inlined_call_operand.vmem [shape: f32[2,1], index: 8, kind: output, shape index: {1}]
  %s9 = inlined_call_operand.vmem [shape: f32[2,1], index: 9, kind: output, shape index: {2}]
  %10 = xla_tuple %s7, %s8, %s9
  %s11 = sld [smem:[#allocation0]]
  $region54: #{qnet_forward.6} parent=0
    _
  %s13 = ssub.s32 1, %s11
  %s14 = scalar_select 0, %s13, %s11
  // Predicated region
  $region2: #{qnet_forward.6} parent=0 // pred_check
    _
  $region3: #{qnet_forward.6} parent=0 // pred_check_branch
    %16 = sbr.rel (0) target = $region5
  $region4: #{qnet_forward.6} parent=0 // pred_region
    _
  $region5: #{qnet_forward.6} parent=0 // pred_fallthru
    _
  // Predicated region
  $region6: #{qnet_forward.6} parent=0 // pred_check
    _
  $region7: #{qnet_forward.6} parent=0 // pred_check_branch
    %18 = sbr.rel (0) target = $region9
  $region8: #{qnet_forward.6} parent=0 // pred_region
    _
  $region9: #{qnet_forward.6} parent=0 // pred_fallthru
    _
  // Predicated region
  $region10: #{qnet_forward.6} parent=0 // pred_check
    _
  $region11: #{qnet_forward.6} parent=0 // pred_check_branch
    %20 = sbr.rel (0) target = $region13
  $region12: #{qnet_forward.6} parent=0 // pred_region
    _
  $region13: #{qnet_forward.6} parent=0 // pred_fallthru
    _
  // Predicated region
  $region14: #{qnet_forward.6} parent=0 // pred_check
    _
  $region15: #{qnet_forward.6} parent=0 // pred_check_branch
    %22 = sbr.rel (0) target = $region17
  $region16: #{qnet_forward.6} parent=0 // pred_region
    _
  $region17: #{qnet_forward.6} parent=0 // pred_fallthru
    _
  // Predicated region
  $region18: #{qnet_forward.6} parent=0 // pred_check
    _
  $region19: #{qnet_forward.6} parent=0 // pred_check_branch
    %24 = sbr.rel (0) target = $region21
  $region20: #{qnet_forward.6} parent=0 // pred_region
    _
  $region21: #{qnet_forward.6} parent=0 // pred_fallthru
    _
  // Predicated region
  $region22: #{qnet_forward.6} parent=0 // pred_check
    _
  $region23: #{qnet_forward.6} parent=0 // pred_check_branch
    %26 = sbr.rel (0) target = $region25
  $region24: #{qnet_forward.6} parent=0 // pred_region
    _
  $region25: #{qnet_forward.6} parent=0 // pred_fallthru
    _
  // Predicated region
  $region26: #{qnet_forward.6} parent=0 // pred_check
    _
  $region27: #{qnet_forward.6} parent=0 // pred_check_branch
    %28 = sbr.rel (0) target = $region29
  $region28: #{qnet_forward.6} parent=0 // pred_region
    _
  $region29: #{qnet_forward.6} parent=0 // pred_fallthru
    _
  %v30 = vld [vmem:[%s0] sm:$0xff]
  %v31 = vld [vmem:[%s0 + $0x8] sm:$0xff]
  %v32 = vld [vmem:[%s0 + $0x10] sm:$0xff]
  %v33 = vld [vmem:[%s0 + $0x18] sm:$0xff]
  %v34 = vld [vmem:[%s0 + $0x20] sm:$0xff]
  %v35 = vld [vmem:[%s0 + $0x28] sm:$0xff]
  %v36 = vld [vmem:[%s0 + $0x30] sm:$0xff]
  %v37 = vld [vmem:[%s0 + $0x38] sm:$0xff]
  %v38 = vld [vmem:[%s0 + $0x40] sm:$0xff]
  %v39 = vld [vmem:[%s0 + $0x48] sm:$0xff]
  %v40 = vld [vmem:[%s0 + $0x50] sm:$0xff]
  %v41 = vld [vmem:[%s0 + $0x58] sm:$0xff]
  %v42 = vld [vmem:[%s0 + $0x60] sm:$0xff]
  %v43 = vld [vmem:[%s0 + $0x68] sm:$0xff]
  %v44 = vld [vmem:[%s0 + $0x70] sm:$0xff]
  %v45 = vld [vmem:[%s0 + $0x78] sm:$0xff]
  %v46 = vld [vmem:[%s0 + $0x80] sm:$0xff]
  %v47 = vld [vmem:[%s0 + $0x88] sm:$0xff]
  %v48 = vld [vmem:[%s0 + $0x90] sm:$0xff]
  %v49 = vld [vmem:[%s0 + $0x98] sm:$0xff]
  %v50 = vld [vmem:[%s0 + $0xa0] sm:$0xff]
  %v51 = vld [vmem:[%s0 + $0xa8] sm:$0xff]
  %v52 = vld [vmem:[%s0 + $0xb0] sm:$0xff]
  %v53 = vld [vmem:[%s0 + $0xb8] sm:$0xff]
  %v54 = vld [vmem:[%s0 + $0xc0] sm:$0xff]
  %v55 = vld [vmem:[%s0 + $0xc8] sm:$0xff]
  %v56 = vld [vmem:[%s0 + $0xd0] sm:$0xff]
  %v57 = vld [vmem:[%s0 + $0xd8] sm:$0xff]
  %v58 = vld [vmem:[%s0 + $0xe0] sm:$0xff]
  %v59 = vld [vmem:[%s0 + $0xe8] sm:$0xff]
  %v60 = vld [vmem:[%s0 + $0xf0] sm:$0xff]
  %v61 = vld [vmem:[%s0 + $0xf8] sm:$0xff]
  %v62 = vld [vmem:[%s1] sm:$0xf]
  %v63 = vld [vmem:[%s1 + $0x4] sm:$0xf]
  %v64 = vld [vmem:[%s1 + $0x8] sm:$0xf]
  %v65 = vld [vmem:[%s1 + $0xc] sm:$0xf]
  %v66 = vld [vmem:[%s1 + $0x10] sm:$0xf]
  %v67 = vld [vmem:[%s1 + $0x14] sm:$0xf]
  %v68 = vld [vmem:[%s1 + $0x18] sm:$0xf]
  %v69 = vld [vmem:[%s1 + $0x1c] sm:$0xf]
  %v70 = vld [vmem:[%s1 + $0x20] sm:$0xf]
  %v71 = vld [vmem:[%s1 + $0x24] sm:$0xf]
  %v72 = vld [vmem:[%s1 + $0x28] sm:$0xf]
  %v73 = vld [vmem:[%s1 + $0x2c] sm:$0xf]
  %v74 = vld [vmem:[%s1 + $0x30] sm:$0xf]
  %v75 = vld [vmem:[%s1 + $0x34] sm:$0xf]
  %v76 = vld [vmem:[%s1 + $0x38] sm:$0xf]
  %v77 = vld [vmem:[%s1 + $0x3c] sm:$0xf]
  %v78 = vld [vmem:[%s1 + $0x40] sm:$0xf]
  %v79 = vld [vmem:[%s1 + $0x44] sm:$0xf]
  %v80 = vld [vmem:[%s1 + $0x48] sm:$0xf]
  %v81 = vld [vmem:[%s1 + $0x4c] sm:$0xf]
  %v82 = vld [vmem:[%s1 + $0x50] sm:$0xf]
  %v83 = vld [vmem:[%s1 + $0x54] sm:$0xf]
  %v84 = vld [vmem:[%s1 + $0x58] sm:$0xf]
  %v85 = vld [vmem:[%s1 + $0x5c] sm:$0xf]
  %v86 = vld [vmem:[%s1 + $0x60] sm:$0xf]
  %v87 = vld [vmem:[%s1 + $0x64] sm:$0xf]
  %v88 = vld [vmem:[%s1 + $0x68] sm:$0xf]
  %v89 = vld [vmem:[%s1 + $0x6c] sm:$0xf]
  %v90 = vld [vmem:[%s1 + $0x70] sm:$0xf]
  %v91 = vld [vmem:[%s1 + $0x74] sm:$0xf]
  %v92 = vld [vmem:[%s1 + $0x78] sm:$0xf]
  %v93 = vld [vmem:[%s1 + $0x7c] sm:$0xf]
  %v94 = vld [vmem:[%s1 + $0x80] sm:$0xf]
  %v95 = vld [vmem:[%s1 + $0x84] sm:$0xf]
  %v96 = vld [vmem:[%s1 + $0x88] sm:$0xf]
  %v97 = vld [vmem:[%s1 + $0x8c] sm:$0xf]
  %v98 = vld [vmem:[%s1 + $0x90] sm:$0xf]
  %v99 = vld [vmem:[%s1 + $0x94] sm:$0xf]
  %v100 = vld [vmem:[%s1 + $0x98] sm:$0xf]
  %v101 = vld [vmem:[%s1 + $0x9c] sm:$0xf]
  %v102 = vld [vmem:[%s1 + $0xa0] sm:$0xf]
  %v103 = vld [vmem:[%s1 + $0xa4] sm:$0xf]
  %v104 = vld [vmem:[%s1 + $0xa8] sm:$0xf]
  %v105 = vld [vmem:[%s1 + $0xac] sm:$0xf]
  %v106 = vld [vmem:[%s1 + $0xb0] sm:$0xf]
  %v107 = vld [vmem:[%s1 + $0xb4] sm:$0xf]
  %v108 = vld [vmem:[%s1 + $0xb8] sm:$0xf]
  %v109 = vld [vmem:[%s1 + $0xbc] sm:$0xf]
  %v110 = vld [vmem:[%s1 + $0xc0] sm:$0xf]
  %v111 = vld [vmem:[%s1 + $0xc4] sm:$0xf]
  %v112 = vld [vmem:[%s1 + $0xc8] sm:$0xf]
  %v113 = vld [vmem:[%s1 + $0xcc] sm:$0xf]
  %v114 = vld [vmem:[%s1 + $0xd0] sm:$0xf]
  %v115 = vld [vmem:[%s1 + $0xd4] sm:$0xf]
  %v116 = vld [vmem:[%s1 + $0xd8] sm:$0xf]
  %v117 = vld [vmem:[%s1 + $0xdc] sm:$0xf]
  %v118 = vld [vmem:[%s1 + $0xe0] sm:$0xf]
  %v119 = vld [vmem:[%s1 + $0xe4] sm:$0xf]
  %v120 = vld [vmem:[%s1 + $0xe8] sm:$0xf]
  %v121 = vld [vmem:[%s1 + $0xec] sm:$0xf]
  %v122 = vld [vmem:[%s1 + $0xf0] sm:$0xf]
  %v123 = vld [vmem:[%s1 + $0xf4] sm:$0xf]
  %v124 = vld [vmem:[%s1 + $0xf8] sm:$0xf]
  %v125 = vld [vmem:[%s1 + $0xfc] sm:$0xf]
  %v158 = vunpack.c.l.b16 %v30
  %v159 = vunpack.c.h.b16 %v30
  %v160 = vunpack.c.l.b16 %v31
  %v161 = vunpack.c.h.b16 %v31
  %v162 = vunpack.c.l.b16 %v32
  %v163 = vunpack.c.h.b16 %v32
  %v164 = vunpack.c.l.b16 %v33
  %v165 = vunpack.c.h.b16 %v33
  %v166 = vunpack.c.l.b16 %v34
  %v167 = vunpack.c.h.b16 %v34
  %v168 = vunpack.c.l.b16 %v35
  %v169 = vunpack.c.h.b16 %v35
  %v170 = vunpack.c.l.b16 %v36
  %v171 = vunpack.c.h.b16 %v36
  %v172 = vunpack.c.l.b16 %v37
  %v173 = vunpack.c.h.b16 %v37
  %v174 = vunpack.c.l.b16 %v38
  %v175 = vunpack.c.h.b16 %v38
  %v176 = vunpack.c.l.b16 %v39
  %v177 = vunpack.c.h.b16 %v39
  %v178 = vunpack.c.l.b16 %v40
  %v179 = vunpack.c.h.b16 %v40
  %v180 = vunpack.c.l.b16 %v41
  %v181 = vunpack.c.h.b16 %v41
  %v182 = vunpack.c.l.b16 %v42
  %v183 = vunpack.c.h.b16 %v42
  %v184 = vunpack.c.l.b16 %v43
  %v185 = vunpack.c.h.b16 %v43
  %v186 = vunpack.c.l.b16 %v44
  %v187 = vunpack.c.h.b16 %v44
  %v188 = vunpack.c.l.b16 %v45
  %v189 = vunpack.c.h.b16 %v45
  %v190 = vunpack.c.l.b16 %v46
  %v191 = vunpack.c.h.b16 %v46
  %v192 = vunpack.c.l.b16 %v47
  %v193 = vunpack.c.h.b16 %v47
  %v194 = vunpack.c.l.b16 %v48
  %v195 = vunpack.c.h.b16 %v48
  %v196 = vunpack.c.l.b16 %v49
  %v197 = vunpack.c.h.b16 %v49
  %v198 = vunpack.c.l.b16 %v50
  %v199 = vunpack.c.h.b16 %v50
  %v200 = vunpack.c.l.b16 %v51
  %v201 = vunpack.c.h.b16 %v51
  %v202 = vunpack.c.l.b16 %v52
  %v203 = vunpack.c.h.b16 %v52
  %v204 = vunpack.c.l.b16 %v53
  %v205 = vunpack.c.h.b16 %v53
  %v206 = vunpack.c.l.b16 %v54
  %v207 = vunpack.c.h.b16 %v54
  %v208 = vunpack.c.l.b16 %v55
  %v209 = vunpack.c.h.b16 %v55
  %v210 = vunpack.c.l.b16 %v56
  %v211 = vunpack.c.h.b16 %v56
  %v212 = vunpack.c.l.b16 %v57
  %v213 = vunpack.c.h.b16 %v57
  %v214 = vunpack.c.l.b16 %v58
  %v215 = vunpack.c.h.b16 %v58
  %v216 = vunpack.c.l.b16 %v59
  %v217 = vunpack.c.h.b16 %v59
  %v218 = vunpack.c.l.b16 %v60
  %v219 = vunpack.c.h.b16 %v60
  %v220 = vunpack.c.l.b16 %v61
  %v221 = vunpack.c.h.b16 %v61
  %v222 = vpack.c.b16 %v162, %v158
  %v223 = vpack.c.b16 %v163, %v159
  %v224 = vpack.c.b16 %v164, %v160
  %v225 = vpack.c.b16 %v165, %v161
  %v226 = vpack.c.b16 %v170, %v166
  %v227 = vpack.c.b16 %v171, %v167
  %v228 = vpack.c.b16 %v172, %v168
  %v229 = vpack.c.b16 %v173, %v169
  %v230 = vpack.c.b16 %v178, %v174
  %v231 = vpack.c.b16 %v179, %v175
  %v232 = vpack.c.b16 %v180, %v176
  %v233 = vpack.c.b16 %v181, %v177
  %v234 = vpack.c.b16 %v186, %v182
  %v235 = vpack.c.b16 %v187, %v183
  %v236 = vpack.c.b16 %v188, %v184
  %v237 = vpack.c.b16 %v189, %v185
  %v238 = vpack.c.b16 %v194, %v190
  %v239 = vpack.c.b16 %v195, %v191
  %v240 = vpack.c.b16 %v196, %v192
  %v241 = vpack.c.b16 %v197, %v193
  %v242 = vpack.c.b16 %v202, %v198
  %v243 = vpack.c.b16 %v203, %v199
  %v244 = vpack.c.b16 %v204, %v200
  %v245 = vpack.c.b16 %v205, %v201
  %v246 = vpack.c.b16 %v210, %v206
  %v247 = vpack.c.b16 %v211, %v207
  %v248 = vpack.c.b16 %v212, %v208
  %v249 = vpack.c.b16 %v213, %v209
  %v250 = vpack.c.b16 %v218, %v214
  %v251 = vpack.c.b16 %v219, %v215
  %v252 = vpack.c.b16 %v220, %v216
  %v253 = vpack.c.b16 %v221, %v217
  %v350 = vunpack.c.l.b16 %v62
  %v351 = vunpack.c.l.b16 %v63
  %v352 = vunpack.c.l.b16 %v64
  %v353 = vunpack.c.l.b16 %v65
  %v354 = vunpack.c.l.b16 %v66
  %v355 = vunpack.c.l.b16 %v67
  %v356 = vunpack.c.l.b16 %v68
  %v357 = vunpack.c.l.b16 %v69
  %v358 = vunpack.c.l.b16 %v70
  %v359 = vunpack.c.l.b16 %v71
  %v360 = vunpack.c.l.b16 %v72
  %v361 = vunpack.c.l.b16 %v73
  %v362 = vunpack.c.l.b16 %v74
  %v363 = vunpack.c.l.b16 %v75
  %v364 = vunpack.c.l.b16 %v76
  %v365 = vunpack.c.l.b16 %v77
  %v366 = vunpack.c.l.b16 %v78
  %v367 = vunpack.c.l.b16 %v79
  %v368 = vunpack.c.l.b16 %v80
  %v369 = vunpack.c.l.b16 %v81
  %v370 = vunpack.c.l.b16 %v82
  %v371 = vunpack.c.l.b16 %v83
  %v372 = vunpack.c.l.b16 %v84
  %v373 = vunpack.c.l.b16 %v85
  %v374 = vunpack.c.l.b16 %v86
  %v375 = vunpack.c.l.b16 %v87
  %v376 = vunpack.c.l.b16 %v88
  %v377 = vunpack.c.l.b16 %v89
  %v378 = vunpack.c.l.b16 %v90
  %v379 = vunpack.c.l.b16 %v91
  %v380 = vunpack.c.l.b16 %v92
  %v381 = vunpack.c.l.b16 %v93
  %v382 = vunpack.c.l.b16 %v94
  %v383 = vunpack.c.l.b16 %v95
  %v384 = vunpack.c.l.b16 %v96
  %v385 = vunpack.c.l.b16 %v97
  %v386 = vunpack.c.l.b16 %v98
  %v387 = vunpack.c.l.b16 %v99
  %v388 = vunpack.c.l.b16 %v100
  %v389 = vunpack.c.l.b16 %v101
  %v390 = vunpack.c.l.b16 %v102
  %v391 = vunpack.c.l.b16 %v103
  %v392 = vunpack.c.l.b16 %v104
  %v393 = vunpack.c.l.b16 %v105
  %v394 = vunpack.c.l.b16 %v106
  %v395 = vunpack.c.l.b16 %v107
  %v396 = vunpack.c.l.b16 %v108
  %v397 = vunpack.c.l.b16 %v109
  %v398 = vunpack.c.l.b16 %v110
  %v399 = vunpack.c.l.b16 %v111
  %v400 = vunpack.c.l.b16 %v112
  %v401 = vunpack.c.l.b16 %v113
  %v402 = vunpack.c.l.b16 %v114
  %v403 = vunpack.c.l.b16 %v115
  %v404 = vunpack.c.l.b16 %v116
  %v405 = vunpack.c.l.b16 %v117
  %v406 = vunpack.c.l.b16 %v118
  %v407 = vunpack.c.l.b16 %v119
  %v408 = vunpack.c.l.b16 %v120
  %v409 = vunpack.c.l.b16 %v121
  %v410 = vunpack.c.l.b16 %v122
  %v411 = vunpack.c.l.b16 %v123
  %v412 = vunpack.c.l.b16 %v124
  %v413 = vunpack.c.l.b16 %v125
  %v414 = vpack.c.b16 %v351, %v350
  %v415 = vpack.c.b16 %v353, %v352
  %v416 = vpack.c.b16 %v355, %v354
  %v417 = vpack.c.b16 %v357, %v356
  %v418 = vpack.c.b16 %v359, %v358
  %v419 = vpack.c.b16 %v361, %v360
  %v420 = vpack.c.b16 %v363, %v362
  %v421 = vpack.c.b16 %v365, %v364
  %v422 = vpack.c.b16 %v367, %v366
  %v423 = vpack.c.b16 %v369, %v368
  %v424 = vpack.c.b16 %v371, %v370
  %v425 = vpack.c.b16 %v373, %v372
  %v426 = vpack.c.b16 %v375, %v374
  %v427 = vpack.c.b16 %v377, %v376
  %v428 = vpack.c.b16 %v379, %v378
  %v429 = vpack.c.b16 %v381, %v380
  %v430 = vpack.c.b16 %v383, %v382
  %v431 = vpack.c.b16 %v385, %v384
  %v432 = vpack.c.b16 %v387, %v386
  %v433 = vpack.c.b16 %v389, %v388
  %v434 = vpack.c.b16 %v391, %v390
  %v435 = vpack.c.b16 %v393, %v392
  %v436 = vpack.c.b16 %v395, %v394
  %v437 = vpack.c.b16 %v397, %v396
  %v438 = vpack.c.b16 %v399, %v398
  %v439 = vpack.c.b16 %v401, %v400
  %v440 = vpack.c.b16 %v403, %v402
  %v441 = vpack.c.b16 %v405, %v404
  %v442 = vpack.c.b16 %v407, %v406
  %v443 = vpack.c.b16 %v409, %v408
  %v444 = vpack.c.b16 %v411, %v410
  %v445 = vpack.c.b16 %v413, %v412
  %478 = vmatprep.subr.bf16.mxu0 0
  %479 = vmatpush1.bf16.msra.mxu0 %v414
  %480 = vmatprep.subr.bf16.mxu0 0
  %481 = vmatpush1.bf16.msra.mxu0 %v415
  %482 = vmatprep.subr.bf16.mxu0 0
  %483 = vmatpush1.bf16.msra.mxu0 %v416
  %484 = vmatprep.subr.bf16.mxu0 0
  %485 = vmatpush1.bf16.msra.mxu0 %v417
  %486 = vmatprep.subr.bf16.mxu0 0
  %487 = vmatpush1.bf16.msra.mxu0 %v418
  %488 = vmatprep.subr.bf16.mxu0 0
  %489 = vmatpush1.bf16.msra.mxu0 %v419
  %490 = vmatprep.subr.bf16.mxu0 0
  %491 = vmatpush1.bf16.msra.mxu0 %v420
  %492 = vmatprep.subr.bf16.mxu0 0
  %493 = vmatpush1.bf16.msra.mxu0 %v421
  %494 = vmatprep.subr.bf16.mxu0 0
  %495 = vmatpush1.bf16.msra.mxu0 %v422
  %496 = vmatprep.subr.bf16.mxu0 0
  %497 = vmatpush1.bf16.msra.mxu0 %v423
  %498 = vmatprep.subr.bf16.mxu0 0
  %499 = vmatpush1.bf16.msra.mxu0 %v424
  %500 = vmatprep.subr.bf16.mxu0 0
  %501 = vmatpush1.bf16.msra.mxu0 %v425
  %502 = vmatprep.subr.bf16.mxu0 0
  %503 = vmatpush1.bf16.msra.mxu0 %v426
  %504 = vmatprep.subr.bf16.mxu0 0
  %505 = vmatpush1.bf16.msra.mxu0 %v427
  %506 = vmatprep.subr.bf16.mxu0 0
  %507 = vmatpush1.bf16.msra.mxu0 %v428
  %508 = vmatprep.subr.bf16.mxu0 0
  %509 = vmatpush1.bf16.msra.mxu0 %v429
  %510 = vmatprep.mubr.bf16.mxu0 %v223
  %511 = vmatmul.mubr.bf16.gmra.mrb[0].mxu0 %v222
  %v512 = vpop.f32.mrb[0].mxu0
  %v513 = vadd.f32 0.0, %v512
  %v514 = vpop.f32.mrb[0].mxu0
  %v515 = vpop.f32.mrb[0].mxu0
  %v516 = vadd.f32 0.0, %v515
  %v517 = vpop.f32.mrb[0].mxu0
  %518 = vmatprep.mubr.bf16.mxu0 %v227
  %519 = vmatmul.mubr.bf16.gmra.mrb[0].mxu0 %v226
  %v520 = vpop.f32.mrb[0].mxu0
  %v521 = vadd.f32 0.0, %v520
  %v522 = vpop.f32.mrb[0].mxu0
  %v523 = vpop.f32.mrb[0].mxu0
  %v524 = vadd.f32 0.0, %v523
  %v525 = vpop.f32.mrb[0].mxu0
  %526 = vmatprep.mubr.bf16.mxu0 %v231
  %527 = vmatmul.mubr.bf16.gmra.mrb[0].mxu0 %v230
  %v528 = vpop.f32.mrb[0].mxu0
  %v529 = vadd.f32 0.0, %v528
  %v530 = vpop.f32.mrb[0].mxu0
  %v531 = vpop.f32.mrb[0].mxu0
  %v532 = vadd.f32 0.0, %v531
  %v533 = vpop.f32.mrb[0].mxu0
  %534 = vmatprep.mubr.bf16.mxu0 %v235
  %535 = vmatmul.mubr.bf16.gmra.mrb[0].mxu0 %v234
  %v536 = vpop.f32.mrb[0].mxu0
  %v537 = vadd.f32 0.0, %v536
  %v538 = vpop.f32.mrb[0].mxu0
  %v539 = vpop.f32.mrb[0].mxu0
  %v540 = vadd.f32 0.0, %v539
  %v541 = vpop.f32.mrb[0].mxu0
  %542 = vmatprep.mubr.bf16.mxu0 %v239
  %543 = vmatmul.mubr.bf16.gmra.mrb[0].mxu0 %v238
  %v544 = vpop.f32.mrb[0].mxu0
  %v545 = vadd.f32 0.0, %v544
  %v546 = vpop.f32.mrb[0].mxu0
  %v547 = vpop.f32.mrb[0].mxu0
  %v548 = vadd.f32 0.0, %v547
  %v549 = vpop.f32.mrb[0].mxu0
  %550 = vmatprep.mubr.bf16.mxu0 %v243
  %551 = vmatmul.mubr.bf16.gmra.mrb[0].mxu0 %v242
  %v552 = vpop.f32.mrb[0].mxu0
  %v553 = vadd.f32 0.0, %v552
  %v554 = vpop.f32.mrb[0].mxu0
  %v555 = vpop.f32.mrb[0].mxu0
  %v556 = vadd.f32 0.0, %v555
  %v557 = vpop.f32.mrb[0].mxu0
  %558 = vmatprep.mubr.bf16.mxu0 %v247
  %559 = vmatmul.mubr.bf16.gmra.mrb[0].mxu0 %v246
  %v560 = vpop.f32.mrb[0].mxu0
  %v561 = vadd.f32 0.0, %v560
  %v562 = vpop.f32.mrb[0].mxu0
  %v563 = vpop.f32.mrb[0].mxu0
  %v564 = vadd.f32 0.0, %v563
  %v565 = vpop.f32.mrb[0].mxu0
  %566 = vmatprep.mubr.bf16.mxu0 %v251
  %567 = vmatmul.mubr.bf16.gmra.mrb[0].mxu0 %v250
  %v568 = vpop.f32.mrb[0].mxu0
  %v569 = vadd.f32 0.0, %v568
  %v570 = vpop.f32.mrb[0].mxu0
  %v571 = vpop.f32.mrb[0].mxu0
  %v572 = vadd.f32 0.0, %v571
  %v573 = vpop.f32.mrb[0].mxu0
  %574 = vdwg.mxu0
  %575 = vmatprep.subr.bf16.mxu0 0
  %576 = vmatpush1.bf16.msra.mxu0 %v430
  %577 = vmatprep.subr.bf16.mxu0 0
  %578 = vmatpush1.bf16.msra.mxu0 %v431
  %579 = vmatprep.subr.bf16.mxu0 0
  %580 = vmatpush1.bf16.msra.mxu0 %v432
  %581 = vmatprep.subr.bf16.mxu0 0
  %582 = vmatpush1.bf16.msra.mxu0 %v433
  %583 = vmatprep.subr.bf16.mxu0 0
  %584 = vmatpush1.bf16.msra.mxu0 %v434
  %585 = vmatprep.subr.bf16.mxu0 0
  %586 = vmatpush1.bf16.msra.mxu0 %v435
  %587 = vmatprep.subr.bf16.mxu0 0
  %588 = vmatpush1.bf16.msra.mxu0 %v436
  %589 = vmatprep.subr.bf16.mxu0 0
  %590 = vmatpush1.bf16.msra.mxu0 %v437
  %591 = vmatprep.subr.bf16.mxu0 0
  %592 = vmatpush1.bf16.msra.mxu0 %v438
  %593 = vmatprep.subr.bf16.mxu0 0
  %594 = vmatpush1.bf16.msra.mxu0 %v439
  %595 = vmatprep.subr.bf16.mxu0 0
  %596 = vmatpush1.bf16.msra.mxu0 %v440
  %597 = vmatprep.subr.bf16.mxu0 0
  %598 = vmatpush1.bf16.msra.mxu0 %v441
  %599 = vmatprep.subr.bf16.mxu0 0
  %600 = vmatpush1.bf16.msra.mxu0 %v442
  %601 = vmatprep.subr.bf16.mxu0 0
  %602 = vmatpush1.bf16.msra.mxu0 %v443
  %603 = vmatprep.subr.bf16.mxu0 0
  %604 = vmatpush1.bf16.msra.mxu0 %v444
  %605 = vmatprep.subr.bf16.mxu0 0
  %606 = vmatpush1.bf16.msra.mxu0 %v445
  %607 = vmatprep.mubr.bf16.mxu0 %v225
  %608 = vmatmul.mubr.bf16.gmra.mrb[0].mxu0 %v224
  %v609 = vpop.f32.mrb[0].mxu0
  %v610 = vadd.f32 %v513, %v609
  %v611 = vpop.f32.mrb[0].mxu0
  %v612 = vpop.f32.mrb[0].mxu0
  %v613 = vadd.f32 %v516, %v612
  %v614 = vpop.f32.mrb[0].mxu0
  %615 = vmatprep.mubr.bf16.mxu0 %v229
  %616 = vmatmul.mubr.bf16.gmra.mrb[0].mxu0 %v228
  %v617 = vpop.f32.mrb[0].mxu0
  %v618 = vadd.f32 %v521, %v617
  %v619 = vpop.f32.mrb[0].mxu0
  %v620 = vpop.f32.mrb[0].mxu0
  %v621 = vadd.f32 %v524, %v620
  %v622 = vpop.f32.mrb[0].mxu0
  %623 = vmatprep.mubr.bf16.mxu0 %v233
  %624 = vmatmul.mubr.bf16.gmra.mrb[0].mxu0 %v232
  %v625 = vpop.f32.mrb[0].mxu0
  %v626 = vadd.f32 %v529, %v625
  %v627 = vpop.f32.mrb[0].mxu0
  %v628 = vpop.f32.mrb[0].mxu0
  %v629 = vadd.f32 %v532, %v628
  %v630 = vpop.f32.mrb[0].mxu0
  %631 = vmatprep.mubr.bf16.mxu0 %v237
  %632 = vmatmul.mubr.bf16.gmra.mrb[0].mxu0 %v236
  %v633 = vpop.f32.mrb[0].mxu0
  %v634 = vadd.f32 %v537, %v633
  %v635 = vpop.f32.mrb[0].mxu0
  %v636 = vpop.f32.mrb[0].mxu0
  %v637 = vadd.f32 %v540, %v636
  %v638 = vpop.f32.mrb[0].mxu0
  %639 = vmatprep.mubr.bf16.mxu0 %v241
  %640 = vmatmul.mubr.bf16.gmra.mrb[0].mxu0 %v240
  %v641 = vpop.f32.mrb[0].mxu0
  %v642 = vadd.f32 %v545, %v641
  %v643 = vpop.f32.mrb[0].mxu0
  %v644 = vpop.f32.mrb[0].mxu0
  %v645 = vadd.f32 %v548, %v644
  %v646 = vpop.f32.mrb[0].mxu0
  %647 = vmatprep.mubr.bf16.mxu0 %v245
  %648 = vmatmul.mubr.bf16.gmra.mrb[0].mxu0 %v244
  %v649 = vpop.f32.mrb[0].mxu0
  %v650 = vadd.f32 %v553, %v649
  %v651 = vpop.f32.mrb[0].mxu0
  %v652 = vpop.f32.mrb[0].mxu0
  %v653 = vadd.f32 %v556, %v652
  %v654 = vpop.f32.mrb[0].mxu0
  %655 = vmatprep.mubr.bf16.mxu0 %v249
  %656 = vmatmul.mubr.bf16.gmra.mrb[0].mxu0 %v248
  %v657 = vpop.f32.mrb[0].mxu0
  %v658 = vadd.f32 %v561, %v657
  %v659 = vpop.f32.mrb[0].mxu0
  %v660 = vpop.f32.mrb[0].mxu0
  %v661 = vadd.f32 %v564, %v660
  %v662 = vpop.f32.mrb[0].mxu0
  %663 = vmatprep.mubr.bf16.mxu0 %v253
  %664 = vmatmul.mubr.bf16.gmra.mrb[0].mxu0 %v252
  %v665 = vpop.f32.mrb[0].mxu0
  %v666 = vadd.f32 %v569, %v665
  %v667 = vpop.f32.mrb[0].mxu0
  %v668 = vpop.f32.mrb[0].mxu0
  %v669 = vadd.f32 %v572, %v668
  %v670 = vpop.f32.mrb[0].mxu0
  %671 = vdwg.mxu0
  %v672 = vld [vmem:[%s2] sm:$0x1]
  %v673 = vld [vmem:[%s3] sm:$0x1]
  %v675 = vlaneseq
  %v676 = vshrl.u32 %v675, 7
  %v677 = vsub.s32 0, %v676
  %v678 = vrot.slane %v672, %v677
  %v680 = vmul.f32 %v610, %v678
  %v681 = vmul.f32 %v613, %v678
  %v682 = vmul.f32 %v618, %v678
  %v683 = vmul.f32 %v621, %v678
  %v684 = vmul.f32 %v626, %v678
  %v685 = vmul.f32 %v629, %v678
  %v686 = vmul.f32 %v634, %v678
  %v687 = vmul.f32 %v637, %v678
  %v688 = vmul.f32 %v642, %v678
  %v689 = vmul.f32 %v645, %v678
  %v690 = vmul.f32 %v650, %v678
  %v691 = vmul.f32 %v653, %v678
  %v692 = vmul.f32 %v658, %v678
  %v693 = vmul.f32 %v661, %v678
  %v694 = vmul.f32 %v666, %v678
  %v695 = vmul.f32 %v669, %v678
  %v697 = vlaneseq
  %v698 = vshrl.u32 %v697, 7
  %v699 = vsub.s32 0, %v698
  %v700 = vrot.slane %v673, %v699
  %v702 = vadd.f32 %v680, %v700
  %v703 = vadd.f32 %v681, %v700
  %v704 = vadd.f32 %v682, %v700
  %v705 = vadd.f32 %v683, %v700
  %v706 = vadd.f32 %v684, %v700
  %v707 = vadd.f32 %v685, %v700
  %v708 = vadd.f32 %v686, %v700
  %v709 = vadd.f32 %v687, %v700
  %v710 = vadd.f32 %v688, %v700
  %v711 = vadd.f32 %v689, %v700
  %v712 = vadd.f32 %v690, %v700
  %v713 = vadd.f32 %v691, %v700
  %v714 = vadd.f32 %v692, %v700
  %v715 = vadd.f32 %v693, %v700
  %v716 = vadd.f32 %v694, %v700
  %v717 = vadd.f32 %v695, %v700
  %vm718 = vcmp.ge.f32.partialorder %v702, 0.0
  %vm719 = vcmp.ge.f32.partialorder %v703, 0.0
  %vm720 = vcmp.ge.f32.partialorder %v704, 0.0
  %vm721 = vcmp.ge.f32.partialorder %v705, 0.0
  %vm722 = vcmp.ge.f32.partialorder %v706, 0.0
  %vm723 = vcmp.ge.f32.partialorder %v707, 0.0
  %vm724 = vcmp.ge.f32.partialorder %v708, 0.0
  %vm725 = vcmp.ge.f32.partialorder %v709, 0.0
  %vm726 = vcmp.ge.f32.partialorder %v710, 0.0
  %vm727 = vcmp.ge.f32.partialorder %v711, 0.0
  %vm728 = vcmp.ge.f32.partialorder %v712, 0.0
  %vm729 = vcmp.ge.f32.partialorder %v713, 0.0
  %vm730 = vcmp.ge.f32.partialorder %v714, 0.0
  %vm731 = vcmp.ge.f32.partialorder %v715, 0.0
  %vm732 = vcmp.ge.f32.partialorder %v716, 0.0
  %vm733 = vcmp.ge.f32.partialorder %v717, 0.0
  %v734 = vmul.f32 %v702, 0.2
  %v735 = vmul.f32 %v703, 0.2
  %v736 = vmul.f32 %v704, 0.2
  %v737 = vmul.f32 %v705, 0.2
  %v738 = vmul.f32 %v706, 0.2
  %v739 = vmul.f32 %v707, 0.2
  %v740 = vmul.f32 %v708, 0.2
  %v741 = vmul.f32 %v709, 0.2
  %v742 = vmul.f32 %v710, 0.2
  %v743 = vmul.f32 %v711, 0.2
  %v744 = vmul.f32 %v712, 0.2
  %v745 = vmul.f32 %v713, 0.2
  %v746 = vmul.f32 %v714, 0.2
  %v747 = vmul.f32 %v715, 0.2
  %v748 = vmul.f32 %v716, 0.2
  %v749 = vmul.f32 %v717, 0.2
  %v750 = vsel %vm718, %v702, %v734
  %v751 = vsel %vm719, %v703, %v735
  %v752 = vsel %vm720, %v704, %v736
  %v753 = vsel %vm721, %v705, %v737
  %v754 = vsel %vm722, %v706, %v738
  %v755 = vsel %vm723, %v707, %v739
  %v756 = vsel %vm724, %v708, %v740
  %v757 = vsel %vm725, %v709, %v741
  %v758 = vsel %vm726, %v710, %v742
  %v759 = vsel %vm727, %v711, %v743
  %v760 = vsel %vm728, %v712, %v744
  %v761 = vsel %vm729, %v713, %v745
  %v762 = vsel %vm730, %v714, %v746
  %v763 = vsel %vm731, %v715, %v747
  %v764 = vsel %vm732, %v716, %v748
  %v765 = vsel %vm733, %v717, %v749
  %v766 = vpack.c.bf16 %v751, %v750
  %v767 = vpack.c.bf16 %v753, %v752
  %v768 = vpack.c.bf16 %v755, %v754
  %v769 = vpack.c.bf16 %v757, %v756
  %v770 = vpack.c.bf16 %v759, %v758
  %v771 = vpack.c.bf16 %v761, %v760
  %v772 = vpack.c.bf16 %v763, %v762
  %v773 = vpack.c.bf16 %v765, %v764
  %v782 = vunpack.c.l.b16 %v766
  %v783 = vunpack.c.h.b16 %v766
  %v784 = vunpack.c.l.b16 %v767
  %v785 = vunpack.c.h.b16 %v767
  %v786 = vunpack.c.l.b16 %v768
  %v787 = vunpack.c.h.b16 %v768
  %v788 = vunpack.c.l.b16 %v769
  %v789 = vunpack.c.h.b16 %v769
  %v790 = vunpack.c.l.b16 %v770
  %v791 = vunpack.c.h.b16 %v770
  %v792 = vunpack.c.l.b16 %v771
  %v793 = vunpack.c.h.b16 %v771
  %v794 = vunpack.c.l.b16 %v772
  %v795 = vunpack.c.h.b16 %v772
  %v796 = vunpack.c.l.b16 %v773
  %v797 = vunpack.c.h.b16 %v773
  %v798 = vpack.c.b16 %v782, %v782
  %v799 = vpack.c.b16 %v783, %v783
  %v800 = vpack.c.b16 %v784, %v784
  %v801 = vpack.c.b16 %v785, %v785
  %v802 = vpack.c.b16 %v786, %v786
  %v803 = vpack.c.b16 %v787, %v787
  %v804 = vpack.c.b16 %v788, %v788
  %v805 = vpack.c.b16 %v789, %v789
  %v806 = vpack.c.b16 %v790, %v790
  %v807 = vpack.c.b16 %v791, %v791
  %v808 = vpack.c.b16 %v792, %v792
  %v809 = vpack.c.b16 %v793, %v793
  %v810 = vpack.c.b16 %v794, %v794
  %v811 = vpack.c.b16 %v795, %v795
  %v812 = vpack.c.b16 %v796, %v796
  %v813 = vpack.c.b16 %v797, %v797
  %vm830 = vcmask 519168
  %831 = vst.msk [vmem:[%s7] sm:$0xf] %vm830, %v798
  %832 = vst.msk [vmem:[%s7 + $0x4] sm:$0xf] %vm830, %v799
  %833 = vst.msk [vmem:[%s7 + $0x8] sm:$0xf] %vm830, %v800
  %834 = vst.msk [vmem:[%s7 + $0xc] sm:$0xf] %vm830, %v801
  %835 = vst.msk [vmem:[%s7 + $0x10] sm:$0xf] %vm830, %v802
  %836 = vst.msk [vmem:[%s7 + $0x14] sm:$0xf] %vm830, %v803
  %837 = vst.msk [vmem:[%s7 + $0x18] sm:$0xf] %vm830, %v804
  %838 = vst.msk [vmem:[%s7 + $0x1c] sm:$0xf] %vm830, %v805
  %839 = vst.msk [vmem:[%s7 + $0x20] sm:$0xf] %vm830, %v806
  %840 = vst.msk [vmem:[%s7 + $0x24] sm:$0xf] %vm830, %v807
  %841 = vst.msk [vmem:[%s7 + $0x28] sm:$0xf] %vm830, %v808
  %842 = vst.msk [vmem:[%s7 + $0x2c] sm:$0xf] %vm830, %v809
  %843 = vst.msk [vmem:[%s7 + $0x30] sm:$0xf] %vm830, %v810
  %844 = vst.msk [vmem:[%s7 + $0x34] sm:$0xf] %vm830, %v811
  %845 = vst.msk [vmem:[%s7 + $0x38] sm:$0xf] %vm830, %v812
  %846 = vst.msk [vmem:[%s7 + $0x3c] sm:$0xf] %vm830, %v813
  %v847 = vld [vmem:[%s4] sm:$0xff]
  %v848 = vld [vmem:[%s4 + $0x8] sm:$0xff]
  %v849 = vld [vmem:[%s4 + $0x10] sm:$0xff]
  %v850 = vld [vmem:[%s4 + $0x18] sm:$0xff]
  %v851 = vld [vmem:[%s4 + $0x20] sm:$0xff]
  %v852 = vld [vmem:[%s4 + $0x28] sm:$0xff]
  %v853 = vld [vmem:[%s4 + $0x30] sm:$0xff]
  %v854 = vld [vmem:[%s4 + $0x38] sm:$0xff]
  %v855 = vld [vmem:[%s5] sm:$0xff]
  %v856 = vld [vmem:[%s5 + $0x8] sm:$0xff]
  %v857 = vld [vmem:[%s5 + $0x10] sm:$0xff]
  %v858 = vld [vmem:[%s5 + $0x18] sm:$0xff]
  %v859 = vld [vmem:[%s5 + $0x20] sm:$0xff]
  %v860 = vld [vmem:[%s5 + $0x28] sm:$0xff]
  %v861 = vld [vmem:[%s5 + $0x30] sm:$0xff]
  %v862 = vld [vmem:[%s5 + $0x38] sm:$0xff]
  %v863 = vld [vmem:[%s6] sm:$0x1]
  %v864 = vmul.f32 %v610, %v847
  %v865 = vmul.f32 %v613, %v848
  %v866 = vmul.f32 %v618, %v849
  %v867 = vmul.f32 %v621, %v850
  %v868 = vmul.f32 %v626, %v851
  %v869 = vmul.f32 %v629, %v852
  %v870 = vmul.f32 %v634, %v853
  %v871 = vmul.f32 %v637, %v854
  %v872 = vmul.f32 %v642, %v847
  %v873 = vmul.f32 %v645, %v848
  %v874 = vmul.f32 %v650, %v849
  %v875 = vmul.f32 %v653, %v850
  %v876 = vmul.f32 %v658, %v851
  %v877 = vmul.f32 %v661, %v852
  %v878 = vmul.f32 %v666, %v853
  %v879 = vmul.f32 %v669, %v854
  %vm880 = vcmask 523264
  %v881 = vsel %vm880, %v864, 0.0
  %882 = vadd.xlane.f32.xlu0 %v881
  %v883 = vpop.xlane.xlu0 %882
  %v884 = vsel %vm880, %v865, 0.0
  %885 = vadd.xlane.f32.xlu0 %v884
  %v886 = vpop.xlane.xlu0 %885
  %v887 = vsel %vm880, %v866, 0.0
  %888 = vadd.xlane.f32.xlu0 %v887
  %v889 = vpop.xlane.xlu0 %888
  %v890 = vsel %vm880, %v867, 0.0
  %891 = vadd.xlane.f32.xlu0 %v890
  %v892 = vpop.xlane.xlu0 %891
  %v893 = vsel %vm880, %v868, 0.0
  %894 = vadd.xlane.f32.xlu0 %v893
  %v895 = vpop.xlane.xlu0 %894
  %v896 = vsel %vm880, %v869, 0.0
  %897 = vadd.xlane.f32.xlu0 %v896
  %v898 = vpop.xlane.xlu0 %897
  %v899 = vsel %vm880, %v870, 0.0
  %900 = vadd.xlane.f32.xlu0 %v899
  %v901 = vpop.xlane.xlu0 %900
  %v902 = vsel %vm880, %v871, 0.0
  %903 = vadd.xlane.f32.xlu0 %v902
  %v904 = vpop.xlane.xlu0 %903
  %v905 = vsel %vm880, %v872, 0.0
  %906 = vadd.xlane.f32.xlu0 %v905
  %v907 = vpop.xlane.xlu0 %906
  %v908 = vsel %vm880, %v873, 0.0
  %909 = vadd.xlane.f32.xlu0 %v908
  %v910 = vpop.xlane.xlu0 %909
  %v911 = vsel %vm880, %v874, 0.0
  %912 = vadd.xlane.f32.xlu0 %v911
  %v913 = vpop.xlane.xlu0 %912
  %v914 = vsel %vm880, %v875, 0.0
  %915 = vadd.xlane.f32.xlu0 %v914
  %v916 = vpop.xlane.xlu0 %915
  %v917 = vsel %vm880, %v876, 0.0
  %918 = vadd.xlane.f32.xlu0 %v917
  %v919 = vpop.xlane.xlu0 %918
  %v920 = vsel %vm880, %v877, 0.0
  %921 = vadd.xlane.f32.xlu0 %v920
  %v922 = vpop.xlane.xlu0 %921
  %v923 = vsel %vm880, %v878, 0.0
  %924 = vadd.xlane.f32.xlu0 %v923
  %v925 = vpop.xlane.xlu0 %924
  %v926 = vsel %vm880, %v879, 0.0
  %927 = vadd.xlane.f32.xlu0 %v926
  %v928 = vpop.xlane.xlu0 %927
  %v945 = vlaneseq
  %v946 = vand.u32 %v945, 127
  %v947 = vlaneseq
  %v948 = vshrl.u32 %v947, 7
  %v949 = vsub.s32 %v946, %v948
  %v950 = vrot.slane %v883, %v949
  %v951 = vadd.s32 %v946, 4294967288
  %v952 = vlaneseq
  %v953 = vshrl.u32 %v952, 7
  %v954 = vsub.s32 %v951, %v953
  %v955 = vrot.slane %v886, %v954
  %vm956 = vcmask 130112
  %v957 = vsel %vm956, %v955, %v950
  %v958 = vadd.s32 %v946, 4294967280
  %v959 = vlaneseq
  %v960 = vshrl.u32 %v959, 7
  %v961 = vsub.s32 %v958, %v960
  %v962 = vrot.slane %v889, %v961
  %vm963 = vcmask 195712
  %v964 = vsel %vm963, %v962, %v957
  %v965 = vadd.s32 %v946, 4294967272
  %v966 = vlaneseq
  %v967 = vshrl.u32 %v966, 7
  %v968 = vsub.s32 %v965, %v967
  %v969 = vrot.slane %v892, %v968
  %vm970 = vcmask 261312
  %v971 = vsel %vm970, %v969, %v964
  %v972 = vadd.s32 %v946, 4294967264
  %v973 = vlaneseq
  %v974 = vshrl.u32 %v973, 7
  %v975 = vsub.s32 %v972, %v974
  %v976 = vrot.slane %v895, %v975
  %vm977 = vcmask 326912
  %v978 = vsel %vm977, %v976, %v971
  %v979 = vadd.s32 %v946, 4294967256
  %v980 = vlaneseq
  %v981 = vshrl.u32 %v980, 7
  %v982 = vsub.s32 %v979, %v981
  %v983 = vrot.slane %v898, %v982
  %vm984 = vcmask 392512
  %v985 = vsel %vm984, %v983, %v978
  %v986 = vadd.s32 %v946, 4294967248
  %v987 = vlaneseq
  %v988 = vshrl.u32 %v987, 7
  %v989 = vsub.s32 %v986, %v988
  %v990 = vrot.slane %v901, %v989
  %vm991 = vcmask 458112
  %v992 = vsel %vm991, %v990, %v985
  %v993 = vadd.s32 %v946, 4294967240
  %v994 = vlaneseq
  %v995 = vshrl.u32 %v994, 7
  %v996 = vsub.s32 %v993, %v995
  %v997 = vrot.slane %v904, %v996
  %vm998 = vcmask 523712
  %v999 = vsel %vm998, %v997, %v992
  %v1000 = vlaneseq
  %v1001 = vshrl.u32 %v1000, 7
  %v1002 = vsub.s32 %v946, %v1001
  %v1003 = vrot.slane %v907, %v1002
  %v1004 = vlaneseq
  %v1005 = vshrl.u32 %v1004, 7
  %v1006 = vsub.s32 %v951, %v1005
  %v1007 = vrot.slane %v910, %v1006
  %v1008 = vsel %vm956, %v1007, %v1003
  %v1009 = vlaneseq
  %v1010 = vshrl.u32 %v1009, 7
  %v1011 = vsub.s32 %v958, %v1010
  %v1012 = vrot.slane %v913, %v1011
  %v1013 = vsel %vm963, %v1012, %v1008
  %v1014 = vlaneseq
  %v1015 = vshrl.u32 %v1014, 7
  %v1016 = vsub.s32 %v965, %v1015
  %v1017 = vrot.slane %v916, %v1016
  %v1018 = vsel %vm970, %v1017, %v1013
  %v1019 = vlaneseq
  %v1020 = vshrl.u32 %v1019, 7
  %v1021 = vsub.s32 %v972, %v1020
  %v1022 = vrot.slane %v919, %v1021
  %v1023 = vsel %vm977, %v1022, %v1018
  %v1024 = vlaneseq
  %v1025 = vshrl.u32 %v1024, 7
  %v1026 = vsub.s32 %v979, %v1025
  %v1027 = vrot.slane %v922, %v1026
  %v1028 = vsel %vm984, %v1027, %v1023
  %v1029 = vlaneseq
  %v1030 = vshrl.u32 %v1029, 7
  %v1031 = vsub.s32 %v986, %v1030
  %v1032 = vrot.slane %v925, %v1031
  %v1033 = vsel %vm991, %v1032, %v1028
  %v1034 = vlaneseq
  %v1035 = vshrl.u32 %v1034, 7
  %v1036 = vsub.s32 %v993, %v1035
  %v1037 = vrot.slane %v928, %v1036
  %v1038 = vsel %vm998, %v1037, %v1033
  %vm1039 = vcmask 1041409
  %v1040 = vsel %vm1039, %v1038, %v999
  %vm1042 = vcmask 517120
  %v1043 = vsel %vm1042, %v1040, 0.0
  %1044 = vadd.xlane.f32.xlu0 %v1043
  %v1045 = vpop.xlane.xlu0 %1044
  %v1046 = vmul.f32 %v610, %v855
  %v1047 = vmul.f32 %v613, %v856
  %v1048 = vmul.f32 %v618, %v857
  %v1049 = vmul.f32 %v621, %v858
  %v1050 = vmul.f32 %v626, %v859
  %v1051 = vmul.f32 %v629, %v860
  %v1052 = vmul.f32 %v634, %v861
  %v1053 = vmul.f32 %v637, %v862
  %v1054 = vmul.f32 %v642, %v855
  %v1055 = vmul.f32 %v645, %v856
  %v1056 = vmul.f32 %v650, %v857
  %v1057 = vmul.f32 %v653, %v858
  %v1058 = vmul.f32 %v658, %v859
  %v1059 = vmul.f32 %v661, %v860
  %v1060 = vmul.f32 %v666, %v861
  %v1061 = vmul.f32 %v669, %v862
  %v1062 = vsel %vm880, %v1046, 0.0
  %1063 = vadd.xlane.f32.xlu0 %v1062
  %v1064 = vpop.xlane.xlu0 %1063
  %v1065 = vsel %vm880, %v1047, 0.0
  %1066 = vadd.xlane.f32.xlu0 %v1065
  %v1067 = vpop.xlane.xlu0 %1066
  %v1068 = vsel %vm880, %v1048, 0.0
  %1069 = vadd.xlane.f32.xlu0 %v1068
  %v1070 = vpop.xlane.xlu0 %1069
  %v1071 = vsel %vm880, %v1049, 0.0
  %1072 = vadd.xlane.f32.xlu0 %v1071
  %v1073 = vpop.xlane.xlu0 %1072
  %v1074 = vsel %vm880, %v1050, 0.0
  %1075 = vadd.xlane.f32.xlu0 %v1074
  %v1076 = vpop.xlane.xlu0 %1075
  %v1077 = vsel %vm880, %v1051, 0.0
  %1078 = vadd.xlane.f32.xlu0 %v1077
  %v1079 = vpop.xlane.xlu0 %1078
  %v1080 = vsel %vm880, %v1052, 0.0
  %1081 = vadd.xlane.f32.xlu0 %v1080
  %v1082 = vpop.xlane.xlu0 %1081
  %v1083 = vsel %vm880, %v1053, 0.0
  %1084 = vadd.xlane.f32.xlu0 %v1083
  %v1085 = vpop.xlane.xlu0 %1084
  %v1086 = vsel %vm880, %v1054, 0.0
  %1087 = vadd.xlane.f32.xlu0 %v1086
  %v1088 = vpop.xlane.xlu0 %1087
  %v1089 = vsel %vm880, %v1055, 0.0
  %1090 = vadd.xlane.f32.xlu0 %v1089
  %v1091 = vpop.xlane.xlu0 %1090
  %v1092 = vsel %vm880, %v1056, 0.0
  %1093 = vadd.xlane.f32.xlu0 %v1092
  %v1094 = vpop.xlane.xlu0 %1093
  %v1095 = vsel %vm880, %v1057, 0.0
  %1096 = vadd.xlane.f32.xlu0 %v1095
  %v1097 = vpop.xlane.xlu0 %1096
  %v1098 = vsel %vm880, %v1058, 0.0
  %1099 = vadd.xlane.f32.xlu0 %v1098
  %v1100 = vpop.xlane.xlu0 %1099
  %v1101 = vsel %vm880, %v1059, 0.0
  %1102 = vadd.xlane.f32.xlu0 %v1101
  %v1103 = vpop.xlane.xlu0 %1102
  %v1104 = vsel %vm880, %v1060, 0.0
  %1105 = vadd.xlane.f32.xlu0 %v1104
  %v1106 = vpop.xlane.xlu0 %1105
  %v1107 = vsel %vm880, %v1061, 0.0
  %1108 = vadd.xlane.f32.xlu0 %v1107
  %v1109 = vpop.xlane.xlu0 %1108
  %v1126 = vlaneseq
  %v1127 = vshrl.u32 %v1126, 7
  %v1128 = vsub.s32 %v946, %v1127
  %v1129 = vrot.slane %v1064, %v1128
  %v1130 = vlaneseq
  %v1131 = vshrl.u32 %v1130, 7
  %v1132 = vsub.s32 %v951, %v1131
  %v1133 = vrot.slane %v1067, %v1132
  %v1134 = vsel %vm956, %v1133, %v1129
  %v1135 = vlaneseq
  %v1136 = vshrl.u32 %v1135, 7
  %v1137 = vsub.s32 %v958, %v1136
  %v1138 = vrot.slane %v1070, %v1137
  %v1139 = vsel %vm963, %v1138, %v1134
  %v1140 = vlaneseq
  %v1141 = vshrl.u32 %v1140, 7
  %v1142 = vsub.s32 %v965, %v1141
  %v1143 = vrot.slane %v1073, %v1142
  %v1144 = vsel %vm970, %v1143, %v1139
  %v1145 = vlaneseq
  %v1146 = vshrl.u32 %v1145, 7
  %v1147 = vsub.s32 %v972, %v1146
  %v1148 = vrot.slane %v1076, %v1147
  %v1149 = vsel %vm977, %v1148, %v1144
  %v1150 = vlaneseq
  %v1151 = vshrl.u32 %v1150, 7
  %v1152 = vsub.s32 %v979, %v1151
  %v1153 = vrot.slane %v1079, %v1152
  %v1154 = vsel %vm984, %v1153, %v1149
  %v1155 = vlaneseq
  %v1156 = vshrl.u32 %v1155, 7
  %v1157 = vsub.s32 %v986, %v1156
  %v1158 = vrot.slane %v1082, %v1157
  %v1159 = vsel %vm991, %v1158, %v1154
  %v1160 = vlaneseq
  %v1161 = vshrl.u32 %v1160, 7
  %v1162 = vsub.s32 %v993, %v1161
  %v1163 = vrot.slane %v1085, %v1162
  %v1164 = vsel %vm998, %v1163, %v1159
  %v1165 = vlaneseq
  %v1166 = vshrl.u32 %v1165, 7
  %v1167 = vsub.s32 %v946, %v1166
  %v1168 = vrot.slane %v1088, %v1167
  %v1169 = vlaneseq
  %v1170 = vshrl.u32 %v1169, 7
  %v1171 = vsub.s32 %v951, %v1170
  %v1172 = vrot.slane %v1091, %v1171
  %v1173 = vsel %vm956, %v1172, %v1168
  %v1174 = vlaneseq
  %v1175 = vshrl.u32 %v1174, 7
  %v1176 = vsub.s32 %v958, %v1175
  %v1177 = vrot.slane %v1094, %v1176
  %v1178 = vsel %vm963, %v1177, %v1173
  %v1179 = vlaneseq
  %v1180 = vshrl.u32 %v1179, 7
  %v1181 = vsub.s32 %v965, %v1180
  %v1182 = vrot.slane %v1097, %v1181
  %v1183 = vsel %vm970, %v1182, %v1178
  %v1184 = vlaneseq
  %v1185 = vshrl.u32 %v1184, 7
  %v1186 = vsub.s32 %v972, %v1185
  %v1187 = vrot.slane %v1100, %v1186
  %v1188 = vsel %vm977, %v1187, %v1183
  %v1189 = vlaneseq
  %v1190 = vshrl.u32 %v1189, 7
  %v1191 = vsub.s32 %v979, %v1190
  %v1192 = vrot.slane %v1103, %v1191
  %v1193 = vsel %vm984, %v1192, %v1188
  %v1194 = vlaneseq
  %v1195 = vshrl.u32 %v1194, 7
  %v1196 = vsub.s32 %v986, %v1195
  %v1197 = vrot.slane %v1106, %v1196
  %v1198 = vsel %vm991, %v1197, %v1193
  %v1199 = vlaneseq
  %v1200 = vshrl.u32 %v1199, 7
  %v1201 = vsub.s32 %v993, %v1200
  %v1202 = vrot.slane %v1109, %v1201
  %v1203 = vsel %vm998, %v1202, %v1198
  %v1204 = vsel %vm1039, %v1203, %v1164
  %v1206 = vsel %vm1042, %v1204, 0.0
  %1207 = vadd.xlane.f32.xlu0 %v1206
  %v1208 = vpop.xlane.xlu0 %1207
  %v1210 = vlaneseq
  %v1211 = vshrl.u32 %v1210, 7
  %v1212 = vsub.s32 0, %v1211
  %v1213 = vrot.slane %v863, %v1212
  %v1215 = vadd.f32 %v1045, %v1213
  %v1216 = vadd.f32 %v1208, %v1213
  %v1217 = vmul.f32 %v1216, 1.442695
  %v1218 = vpow.pop %v1217
  %vm1219 = vcmask 1024
  %1220 = vst.msk [vmem:[%s8] sm:$0x3] %vm1219, %v1215
  %1222 = vrot.lane.b32.xlu0 %v1218, 127
  %v1223 = vpop.permute.xlu0 %1222
  %1225 = vst.msk [vmem:[%s9] sm:$0x3] %vm1219, %v1223
  // Predicated region
  $region30: #{qnet_forward.6} parent=0 // pred_check
    _
  $region31: #{qnet_forward.6} parent=0 // pred_check_branch
    %1227 = sbr.rel (0) target = $region33
  $region32: #{qnet_forward.6} parent=0 // pred_region
    _
  $region33: #{qnet_forward.6} parent=0 // pred_fallthru
    _
  // Predicated region
  $region34: #{qnet_forward.6} parent=0 // pred_check
    _
  $region35: #{qnet_forward.6} parent=0 // pred_check_branch
    %1229 = sbr.rel (0) target = $region37
  $region36: #{qnet_forward.6} parent=0 // pred_region
    _
  $region37: #{qnet_forward.6} parent=0 // pred_fallthru
    _
  // Predicated region
  $region38: #{qnet_forward.6} parent=0 // pred_check
    _
  $region39: #{qnet_forward.6} parent=0 // pred_check_branch
    %1231 = sbr.rel (0) target = $region41
  $region40: #{qnet_forward.6} parent=0 // pred_region
    _
  $region41: #{qnet_forward.6} parent=0 // pred_fallthru
    _
  // Predicated region
  $region42: #{qnet_forward.6} parent=0 // pred_check
    _
  $region43: #{qnet_forward.6} parent=0 // pred_check_branch
    %1233 = sbr.rel (0) target = $region45
  $region44: #{qnet_forward.6} parent=0 // pred_region
    _
  $region45: #{qnet_forward.6} parent=0 // pred_fallthru
    _
  // Predicated region
  $region46: #{qnet_forward.6} parent=0 // pred_check
    _
  $region47: #{qnet_forward.6} parent=0 // pred_check_branch
    %1235 = sbr.rel (0) target = $region49
  $region48: #{qnet_forward.6} parent=0 // pred_region
    _
  $region49: #{qnet_forward.6} parent=0 // pred_fallthru
    _
  // Predicated region
  $region50: #{qnet_forward.6} parent=0 // pred_check
    _
  $region51: #{qnet_forward.6} parent=0 // pred_check_branch
    %1237 = sbr.rel (0) target = $region53
  $region52: #{qnet_forward.6} parent=0 // pred_region
    _
  $region53: #{qnet_forward.6} parent=0 // pred_fallthru
    _

// kernel: qnet_forward.7
$region0: #{qnet_forward.7}
  #allocation0 [shape = 'u32[]', space=smem, size = 0x4, offset = 0x4, fixed_abs, tag = 'smem constant byte address 0x4 - core index']
  #allocation1 [shape = 'u32[144,128]{1,0:T(1,128)}', space=vmem, size = 0x12000, scoped, tag = 'internal scratch']
  %s0 = inlined_call_operand.vmem [shape: bf16[32,1024], index: 0, kind: input, shape index: {}]
  %s1 = inlined_call_operand.vmem [shape: bf16[1024,128], index: 1, kind: input, shape index: {}]
  %s2 = inlined_call_operand.vmem [shape: f32[16,128], index: 2, kind: input, shape index: {}]
  %s3 = inlined_call_operand.vmem [shape: f32[16,128], index: 3, kind: input, shape index: {}]
  %s4 = inlined_call_operand.vmem [shape: f32[1,2], index: 4, kind: input, shape index: {}]
  %s5 = inlined_call_operand.vmem [shape: f32[2,1], index: 5, kind: output, shape index: {0}]
  %s6 = inlined_call_operand.vmem [shape: f32[2,1], index: 6, kind: output, shape index: {1}]
  %7 = xla_tuple %s5, %s6
  %s8 = sld [smem:[#allocation0]]
  $region38: #{qnet_forward.7} parent=0
    _
  %s10 = ssub.s32 1, %s8
  %s11 = scalar_select 0, %s10, %s8
  // Predicated region
  $region2: #{qnet_forward.7} parent=0 // pred_check
    _
  $region3: #{qnet_forward.7} parent=0 // pred_check_branch
    %13 = sbr.rel (0) target = $region5
  $region4: #{qnet_forward.7} parent=0 // pred_region
    _
  $region5: #{qnet_forward.7} parent=0 // pred_fallthru
    _
  // Predicated region
  $region6: #{qnet_forward.7} parent=0 // pred_check
    _
  $region7: #{qnet_forward.7} parent=0 // pred_check_branch
    %15 = sbr.rel (0) target = $region9
  $region8: #{qnet_forward.7} parent=0 // pred_region
    _
  $region9: #{qnet_forward.7} parent=0 // pred_fallthru
    _
  // Predicated region
  $region10: #{qnet_forward.7} parent=0 // pred_check
    _
  $region11: #{qnet_forward.7} parent=0 // pred_check_branch
    %17 = sbr.rel (0) target = $region13
  $region12: #{qnet_forward.7} parent=0 // pred_region
    _
  $region13: #{qnet_forward.7} parent=0 // pred_fallthru
    _
  // Predicated region
  $region14: #{qnet_forward.7} parent=0 // pred_check
    _
  $region15: #{qnet_forward.7} parent=0 // pred_check_branch
    %19 = sbr.rel (0) target = $region17
  $region16: #{qnet_forward.7} parent=0 // pred_region
    _
  $region17: #{qnet_forward.7} parent=0 // pred_fallthru
    _
  // Predicated region
  $region18: #{qnet_forward.7} parent=0 // pred_check
    _
  $region19: #{qnet_forward.7} parent=0 // pred_check_branch
    %21 = sbr.rel (0) target = $region21
  $region20: #{qnet_forward.7} parent=0 // pred_region
    _
  $region21: #{qnet_forward.7} parent=0 // pred_fallthru
    _
  %v23 = vld [vmem:[%s0] sm:$0xff]
  %v24 = vld [vmem:[%s0 + $0x8] sm:$0xff]
  %v25 = vld [vmem:[%s0 + $0x10] sm:$0xff]
  %v26 = vld [vmem:[%s0 + $0x18] sm:$0xff]
  %v27 = vld [vmem:[%s0 + $0x20] sm:$0xff]
  %v28 = vld [vmem:[%s0 + $0x28] sm:$0xff]
  %v29 = vld [vmem:[%s0 + $0x30] sm:$0xff]
  %v30 = vld [vmem:[%s0 + $0x38] sm:$0xff]
  %v31 = vld [vmem:[%s0 + $0x40] sm:$0xff]
  %v32 = vld [vmem:[%s0 + $0x48] sm:$0xff]
  %v33 = vld [vmem:[%s0 + $0x50] sm:$0xff]
  %v34 = vld [vmem:[%s0 + $0x58] sm:$0xff]
  %v35 = vld [vmem:[%s0 + $0x60] sm:$0xff]
  %v36 = vld [vmem:[%s0 + $0x68] sm:$0xff]
  %v37 = vld [vmem:[%s0 + $0x70] sm:$0xff]
  %v38 = vld [vmem:[%s0 + $0x78] sm:$0xff]
  %v39 = vld [vmem:[%s1] sm:$0xf]
  %v40 = vld [vmem:[%s1 + $0x4] sm:$0xf]
  %v41 = vld [vmem:[%s1 + $0x8] sm:$0xf]
  %v42 = vld [vmem:[%s1 + $0xc] sm:$0xf]
  %v43 = vld [vmem:[%s1 + $0x10] sm:$0xf]
  %v44 = vld [vmem:[%s1 + $0x14] sm:$0xf]
  %v45 = vld [vmem:[%s1 + $0x18] sm:$0xf]
  %v46 = vld [vmem:[%s1 + $0x1c] sm:$0xf]
  %v47 = vld [vmem:[%s1 + $0x20] sm:$0xf]
  %v48 = vld [vmem:[%s1 + $0x24] sm:$0xf]
  %v49 = vld [vmem:[%s1 + $0x28] sm:$0xf]
  %v50 = vld [vmem:[%s1 + $0x2c] sm:$0xf]
  %v51 = vld [vmem:[%s1 + $0x30] sm:$0xf]
  %v52 = vld [vmem:[%s1 + $0x34] sm:$0xf]
  %v53 = vld [vmem:[%s1 + $0x38] sm:$0xf]
  %v54 = vld [vmem:[%s1 + $0x3c] sm:$0xf]
  %v55 = vld [vmem:[%s1 + $0x40] sm:$0xf]
  %v56 = vld [vmem:[%s1 + $0x44] sm:$0xf]
  %v57 = vld [vmem:[%s1 + $0x48] sm:$0xf]
  %v58 = vld [vmem:[%s1 + $0x4c] sm:$0xf]
  %v59 = vld [vmem:[%s1 + $0x50] sm:$0xf]
  %v60 = vld [vmem:[%s1 + $0x54] sm:$0xf]
  %v61 = vld [vmem:[%s1 + $0x58] sm:$0xf]
  %v62 = vld [vmem:[%s1 + $0x5c] sm:$0xf]
  %v63 = vld [vmem:[%s1 + $0x60] sm:$0xf]
  %v64 = vld [vmem:[%s1 + $0x64] sm:$0xf]
  %v65 = vld [vmem:[%s1 + $0x68] sm:$0xf]
  %v66 = vld [vmem:[%s1 + $0x6c] sm:$0xf]
  %v67 = vld [vmem:[%s1 + $0x70] sm:$0xf]
  %v68 = vld [vmem:[%s1 + $0x74] sm:$0xf]
  %v69 = vld [vmem:[%s1 + $0x78] sm:$0xf]
  %v70 = vld [vmem:[%s1 + $0x7c] sm:$0xf]
  %v71 = vld [vmem:[%s1 + $0x80] sm:$0xf]
  %v72 = vld [vmem:[%s1 + $0x84] sm:$0xf]
  %v73 = vld [vmem:[%s1 + $0x88] sm:$0xf]
  %v74 = vld [vmem:[%s1 + $0x8c] sm:$0xf]
  %v75 = vld [vmem:[%s1 + $0x90] sm:$0xf]
  %v76 = vld [vmem:[%s1 + $0x94] sm:$0xf]
  %v77 = vld [vmem:[%s1 + $0x98] sm:$0xf]
  %v78 = vld [vmem:[%s1 + $0x9c] sm:$0xf]
  %v79 = vld [vmem:[%s1 + $0xa0] sm:$0xf]
  %v80 = vld [vmem:[%s1 + $0xa4] sm:$0xf]
  %v81 = vld [vmem:[%s1 + $0xa8] sm:$0xf]
  %v82 = vld [vmem:[%s1 + $0xac] sm:$0xf]
  %v83 = vld [vmem:[%s1 + $0xb0] sm:$0xf]
  %v84 = vld [vmem:[%s1 + $0xb4] sm:$0xf]
  %v85 = vld [vmem:[%s1 + $0xb8] sm:$0xf]
  %v86 = vld [vmem:[%s1 + $0xbc] sm:$0xf]
  %v87 = vld [vmem:[%s1 + $0xc0] sm:$0xf]
  %v88 = vld [vmem:[%s1 + $0xc4] sm:$0xf]
  %v89 = vld [vmem:[%s1 + $0xc8] sm:$0xf]
  %v90 = vld [vmem:[%s1 + $0xcc] sm:$0xf]
  %v91 = vld [vmem:[%s1 + $0xd0] sm:$0xf]
  %v92 = vld [vmem:[%s1 + $0xd4] sm:$0xf]
  %v93 = vld [vmem:[%s1 + $0xd8] sm:$0xf]
  %v94 = vld [vmem:[%s1 + $0xdc] sm:$0xf]
  %v95 = vld [vmem:[%s1 + $0xe0] sm:$0xf]
  %v96 = vld [vmem:[%s1 + $0xe4] sm:$0xf]
  %v97 = vld [vmem:[%s1 + $0xe8] sm:$0xf]
  %v98 = vld [vmem:[%s1 + $0xec] sm:$0xf]
  %v99 = vld [vmem:[%s1 + $0xf0] sm:$0xf]
  %v100 = vld [vmem:[%s1 + $0xf4] sm:$0xf]
  %v101 = vld [vmem:[%s1 + $0xf8] sm:$0xf]
  %v102 = vld [vmem:[%s1 + $0xfc] sm:$0xf]
  %v103 = vld [vmem:[%s1 + $0x100] sm:$0xf]
  %v104 = vld [vmem:[%s1 + $0x104] sm:$0xf]
  %v105 = vld [vmem:[%s1 + $0x108] sm:$0xf]
  %v106 = vld [vmem:[%s1 + $0x10c] sm:$0xf]
  %v107 = vld [vmem:[%s1 + $0x110] sm:$0xf]
  %v108 = vld [vmem:[%s1 + $0x114] sm:$0xf]
  %v109 = vld [vmem:[%s1 + $0x118] sm:$0xf]
  %v110 = vld [vmem:[%s1 + $0x11c] sm:$0xf]
  %v111 = vld [vmem:[%s1 + $0x120] sm:$0xf]
  %v112 = vld [vmem:[%s1 + $0x124] sm:$0xf]
  %v113 = vld [vmem:[%s1 + $0x128] sm:$0xf]
  %v114 = vld [vmem:[%s1 + $0x12c] sm:$0xf]
  %v115 = vld [vmem:[%s1 + $0x130] sm:$0xf]
  %v116 = vld [vmem:[%s1 + $0x134] sm:$0xf]
  %v117 = vld [vmem:[%s1 + $0x138] sm:$0xf]
  %v118 = vld [vmem:[%s1 + $0x13c] sm:$0xf]
  %v119 = vld [vmem:[%s1 + $0x140] sm:$0xf]
  %v120 = vld [vmem:[%s1 + $0x144] sm:$0xf]
  %v121 = vld [vmem:[%s1 + $0x148] sm:$0xf]
  %v122 = vld [vmem:[%s1 + $0x14c] sm:$0xf]
  %v123 = vld [vmem:[%s1 + $0x150] sm:$0xf]
  %v124 = vld [vmem:[%s1 + $0x154] sm:$0xf]
  %v125 = vld [vmem:[%s1 + $0x158] sm:$0xf]
  %v126 = vld [vmem:[%s1 + $0x15c] sm:$0xf]
  %v127 = vld [vmem:[%s1 + $0x160] sm:$0xf]
  %v128 = vld [vmem:[%s1 + $0x164] sm:$0xf]
  %v129 = vld [vmem:[%s1 + $0x168] sm:$0xf]
  %v130 = vld [vmem:[%s1 + $0x16c] sm:$0xf]
  %v131 = vld [vmem:[%s1 + $0x170] sm:$0xf]
  %v132 = vld [vmem:[%s1 + $0x174] sm:$0xf]
  %v133 = vld [vmem:[%s1 + $0x178] sm:$0xf]
  %v134 = vld [vmem:[%s1 + $0x17c] sm:$0xf]
  %v135 = vld [vmem:[%s1 + $0x180] sm:$0xf]
  %v136 = vld [vmem:[%s1 + $0x184] sm:$0xf]
  %v137 = vld [vmem:[%s1 + $0x188] sm:$0xf]
  %v138 = vld [vmem:[%s1 + $0x18c] sm:$0xf]
  %v139 = vld [vmem:[%s1 + $0x190] sm:$0xf]
  %v140 = vld [vmem:[%s1 + $0x194] sm:$0xf]
  %v141 = vld [vmem:[%s1 + $0x198] sm:$0xf]
  %v142 = vld [vmem:[%s1 + $0x19c] sm:$0xf]
  %v143 = vld [vmem:[%s1 + $0x1a0] sm:$0xf]
  %v144 = vld [vmem:[%s1 + $0x1a4] sm:$0xf]
  %v145 = vld [vmem:[%s1 + $0x1a8] sm:$0xf]
  %v146 = vld [vmem:[%s1 + $0x1ac] sm:$0xf]
  %v147 = vld [vmem:[%s1 + $0x1b0] sm:$0xf]
  %v148 = vld [vmem:[%s1 + $0x1b4] sm:$0xf]
  %v149 = vld [vmem:[%s1 + $0x1b8] sm:$0xf]
  %v150 = vld [vmem:[%s1 + $0x1bc] sm:$0xf]
  %v151 = vld [vmem:[%s1 + $0x1c0] sm:$0xf]
  %v152 = vld [vmem:[%s1 + $0x1c4] sm:$0xf]
  %v153 = vld [vmem:[%s1 + $0x1c8] sm:$0xf]
  %v154 = vld [vmem:[%s1 + $0x1cc] sm:$0xf]
  %v155 = vld [vmem:[%s1 + $0x1d0] sm:$0xf]
  %v156 = vld [vmem:[%s1 + $0x1d4] sm:$0xf]
  %v157 = vld [vmem:[%s1 + $0x1d8] sm:$0xf]
  %v158 = vld [vmem:[%s1 + $0x1dc] sm:$0xf]
  %v159 = vld [vmem:[%s1 + $0x1e0] sm:$0xf]
  %v160 = vld [vmem:[%s1 + $0x1e4] sm:$0xf]
  %v161 = vld [vmem:[%s1 + $0x1e8] sm:$0xf]
  %v162 = vld [vmem:[%s1 + $0x1ec] sm:$0xf]
  %v163 = vld [vmem:[%s1 + $0x1f0] sm:$0xf]
  %v164 = vld [vmem:[%s1 + $0x1f4] sm:$0xf]
  %v165 = vld [vmem:[%s1 + $0x1f8] sm:$0xf]
  %v166 = vld [vmem:[%s1 + $0x1fc] sm:$0xf]
  %v183 = vunpack.c.l.b16 %v23
  %v184 = vunpack.c.h.b16 %v23
  %v185 = vunpack.c.l.b16 %v24
  %v186 = vunpack.c.h.b16 %v24
  %v187 = vunpack.c.l.b16 %v25
  %v188 = vunpack.c.h.b16 %v25
  %v189 = vunpack.c.l.b16 %v26
  %v190 = vunpack.c.h.b16 %v26
  %v191 = vunpack.c.l.b16 %v27
  %v192 = vunpack.c.h.b16 %v27
  %v193 = vunpack.c.l.b16 %v28
  %v194 = vunpack.c.h.b16 %v28
  %v195 = vunpack.c.l.b16 %v29
  %v196 = vunpack.c.h.b16 %v29
  %v197 = vunpack.c.l.b16 %v30
  %v198 = vunpack.c.h.b16 %v30
  %v199 = vunpack.c.l.b16 %v31
  %v200 = vunpack.c.h.b16 %v31
  %v201 = vunpack.c.l.b16 %v32
  %v202 = vunpack.c.h.b16 %v32
  %v203 = vunpack.c.l.b16 %v33
  %v204 = vunpack.c.h.b16 %v33
  %v205 = vunpack.c.l.b16 %v34
  %v206 = vunpack.c.h.b16 %v34
  %v207 = vunpack.c.l.b16 %v35
  %v208 = vunpack.c.h.b16 %v35
  %v209 = vunpack.c.l.b16 %v36
  %v210 = vunpack.c.h.b16 %v36
  %v211 = vunpack.c.l.b16 %v37
  %v212 = vunpack.c.h.b16 %v37
  %v213 = vunpack.c.l.b16 %v38
  %v214 = vunpack.c.h.b16 %v38
  %v215 = vpack.c.b16 %v191, %v183
  %v216 = vpack.c.b16 %v192, %v184
  %v217 = vpack.c.b16 %v193, %v185
  %v218 = vpack.c.b16 %v194, %v186
  %v219 = vpack.c.b16 %v195, %v187
  %v220 = vpack.c.b16 %v196, %v188
  %v221 = vpack.c.b16 %v197, %v189
  %v222 = vpack.c.b16 %v198, %v190
  %v223 = vpack.c.b16 %v207, %v199
  %v224 = vpack.c.b16 %v208, %v200
  %v225 = vpack.c.b16 %v209, %v201
  %v226 = vpack.c.b16 %v210, %v202
  %v227 = vpack.c.b16 %v211, %v203
  %v228 = vpack.c.b16 %v212, %v204
  %v229 = vpack.c.b16 %v213, %v205
  %v230 = vpack.c.b16 %v214, %v206
  %v375 = vunpack.c.l.b16 %v39
  %v376 = vunpack.c.l.b16 %v40
  %v377 = vunpack.c.l.b16 %v41
  %v378 = vunpack.c.l.b16 %v42
  %v379 = vunpack.c.l.b16 %v43
  %v380 = vunpack.c.l.b16 %v44
  %v381 = vunpack.c.l.b16 %v45
  %v382 = vunpack.c.l.b16 %v46
  %v383 = vunpack.c.l.b16 %v47
  %v384 = vunpack.c.l.b16 %v48
  %v385 = vunpack.c.l.b16 %v49
  %v386 = vunpack.c.l.b16 %v50
  %v387 = vunpack.c.l.b16 %v51
  %v388 = vunpack.c.l.b16 %v52
  %v389 = vunpack.c.l.b16 %v53
  %v390 = vunpack.c.l.b16 %v54
  %v391 = vunpack.c.l.b16 %v55
  %v392 = vunpack.c.l.b16 %v56
  %v393 = vunpack.c.l.b16 %v57
  %v394 = vunpack.c.l.b16 %v58
  %v395 = vunpack.c.l.b16 %v59
  %v396 = vunpack.c.l.b16 %v60
  %v397 = vunpack.c.l.b16 %v61
  %v398 = vunpack.c.l.b16 %v62
  %v399 = vunpack.c.l.b16 %v63
  %v400 = vunpack.c.l.b16 %v64
  %v401 = vunpack.c.l.b16 %v65
  %v402 = vunpack.c.l.b16 %v66
  %v403 = vunpack.c.l.b16 %v67
  %v404 = vunpack.c.l.b16 %v68
  %v405 = vunpack.c.l.b16 %v69
  %v406 = vunpack.c.l.b16 %v70
  %v407 = vunpack.c.l.b16 %v71
  %v408 = vunpack.c.l.b16 %v72
  %v409 = vunpack.c.l.b16 %v73
  %v410 = vunpack.c.l.b16 %v74
  %v411 = vunpack.c.l.b16 %v75
  %v412 = vunpack.c.l.b16 %v76
  %v413 = vunpack.c.l.b16 %v77
  %v414 = vunpack.c.l.b16 %v78
  %v415 = vunpack.c.l.b16 %v79
  %v416 = vunpack.c.l.b16 %v80
  %v417 = vunpack.c.l.b16 %v81
  %v418 = vunpack.c.l.b16 %v82
  %v419 = vunpack.c.l.b16 %v83
  %v420 = vunpack.c.l.b16 %v84
  %v421 = vunpack.c.l.b16 %v85
  %v422 = vunpack.c.l.b16 %v86
  %v423 = vunpack.c.l.b16 %v87
  %v424 = vunpack.c.l.b16 %v88
  %v425 = vunpack.c.l.b16 %v89
  %v426 = vunpack.c.l.b16 %v90
  %v427 = vunpack.c.l.b16 %v91
  %v428 = vunpack.c.l.b16 %v92
  %v429 = vunpack.c.l.b16 %v93
  %v430 = vunpack.c.l.b16 %v94
  %v431 = vunpack.c.l.b16 %v95
  %v432 = vunpack.c.l.b16 %v96
  %v433 = vunpack.c.l.b16 %v97
  %v434 = vunpack.c.l.b16 %v98
  %v435 = vunpack.c.l.b16 %v99
  %v436 = vunpack.c.l.b16 %v100
  %v437 = vunpack.c.l.b16 %v101
  %v438 = vunpack.c.l.b16 %v102
  %v439 = vunpack.c.l.b16 %v103
  %v440 = vunpack.c.l.b16 %v104
  %v441 = vunpack.c.l.b16 %v105
  %v442 = vunpack.c.l.b16 %v106
  %v443 = vunpack.c.l.b16 %v107
  %v444 = vunpack.c.l.b16 %v108
  %v445 = vunpack.c.l.b16 %v109
  %v446 = vunpack.c.l.b16 %v110
  %v447 = vunpack.c.l.b16 %v111
  %v448 = vunpack.c.l.b16 %v112
  %v449 = vunpack.c.l.b16 %v113
  %v450 = vunpack.c.l.b16 %v114
  %v451 = vunpack.c.l.b16 %v115
  %v452 = vunpack.c.l.b16 %v116
  %v453 = vunpack.c.l.b16 %v117
  %v454 = vunpack.c.l.b16 %v118
  %v455 = vunpack.c.l.b16 %v119
  %v456 = vunpack.c.l.b16 %v120
  %v457 = vunpack.c.l.b16 %v121
  %v458 = vunpack.c.l.b16 %v122
  %v459 = vunpack.c.l.b16 %v123
  %v460 = vunpack.c.l.b16 %v124
  %v461 = vunpack.c.l.b16 %v125
  %v462 = vunpack.c.l.b16 %v126
  %v463 = vunpack.c.l.b16 %v127
  %v464 = vunpack.c.l.b16 %v128
  %v465 = vunpack.c.l.b16 %v129
  %v466 = vunpack.c.l.b16 %v130
  %v467 = vunpack.c.l.b16 %v131
  %v468 = vunpack.c.l.b16 %v132
  %v469 = vunpack.c.l.b16 %v133
  %v470 = vunpack.c.l.b16 %v134
  %v471 = vunpack.c.l.b16 %v135
  %v472 = vunpack.c.l.b16 %v136
  %v473 = vunpack.c.l.b16 %v137
  %v474 = vunpack.c.l.b16 %v138
  %v475 = vunpack.c.l.b16 %v139
  %v476 = vunpack.c.l.b16 %v140
  %v477 = vunpack.c.l.b16 %v141
  %v478 = vunpack.c.l.b16 %v142
  %v479 = vunpack.c.l.b16 %v143
  %v480 = vunpack.c.l.b16 %v144
  %v481 = vunpack.c.l.b16 %v145
  %v482 = vunpack.c.l.b16 %v146
  %v483 = vunpack.c.l.b16 %v147
  %v484 = vunpack.c.l.b16 %v148
  %v485 = vunpack.c.l.b16 %v149
  %v486 = vunpack.c.l.b16 %v150
  %v487 = vunpack.c.l.b16 %v151
  %v488 = vunpack.c.l.b16 %v152
  %v489 = vunpack.c.l.b16 %v153
  %v490 = vunpack.c.l.b16 %v154
  %v491 = vunpack.c.l.b16 %v155
  %v492 = vunpack.c.l.b16 %v156
  %v493 = vunpack.c.l.b16 %v157
  %v494 = vunpack.c.l.b16 %v158
  %v495 = vunpack.c.l.b16 %v159
  %v496 = vunpack.c.l.b16 %v160
  %v497 = vunpack.c.l.b16 %v161
  %v498 = vunpack.c.l.b16 %v162
  %v499 = vunpack.c.l.b16 %v163
  %v500 = vunpack.c.l.b16 %v164
  %v501 = vunpack.c.l.b16 %v165
  %v502 = vunpack.c.l.b16 %v166
  %v503 = vpack.c.b16 %v376, %v375
  %v504 = vpack.c.b16 %v378, %v377
  %v505 = vpack.c.b16 %v380, %v379
  %v506 = vpack.c.b16 %v382, %v381
  %v507 = vpack.c.b16 %v384, %v383
  %v508 = vpack.c.b16 %v386, %v385
  %v509 = vpack.c.b16 %v388, %v387
  %v510 = vpack.c.b16 %v390, %v389
  %v511 = vpack.c.b16 %v392, %v391
  %v512 = vpack.c.b16 %v394, %v393
  %v513 = vpack.c.b16 %v396, %v395
  %v514 = vpack.c.b16 %v398, %v397
  %v515 = vpack.c.b16 %v400, %v399
  %v516 = vpack.c.b16 %v402, %v401
  %v517 = vpack.c.b16 %v404, %v403
  %v518 = vpack.c.b16 %v406, %v405
  %v519 = vpack.c.b16 %v408, %v407
  %v520 = vpack.c.b16 %v410, %v409
  %v521 = vpack.c.b16 %v412, %v411
  %v522 = vpack.c.b16 %v414, %v413
  %v523 = vpack.c.b16 %v416, %v415
  %v524 = vpack.c.b16 %v418, %v417
  %v525 = vpack.c.b16 %v420, %v419
  %v526 = vpack.c.b16 %v422, %v421
  %v527 = vpack.c.b16 %v424, %v423
  %v528 = vpack.c.b16 %v426, %v425
  %v529 = vpack.c.b16 %v428, %v427
  %v530 = vpack.c.b16 %v430, %v429
  %v531 = vpack.c.b16 %v432, %v431
  %v532 = vpack.c.b16 %v434, %v433
  %v533 = vpack.c.b16 %v436, %v435
  %v534 = vpack.c.b16 %v438, %v437
  %v535 = vpack.c.b16 %v440, %v439
  %v536 = vpack.c.b16 %v442, %v441
  %v537 = vpack.c.b16 %v444, %v443
  %v538 = vpack.c.b16 %v446, %v445
  %v539 = vpack.c.b16 %v448, %v447
  %v540 = vpack.c.b16 %v450, %v449
  %v541 = vpack.c.b16 %v452, %v451
  %v542 = vpack.c.b16 %v454, %v453
  %v543 = vpack.c.b16 %v456, %v455
  %v544 = vpack.c.b16 %v458, %v457
  %v545 = vpack.c.b16 %v460, %v459
  %v546 = vpack.c.b16 %v462, %v461
  %v547 = vpack.c.b16 %v464, %v463
  %v548 = vpack.c.b16 %v466, %v465
  %v549 = vpack.c.b16 %v468, %v467
  %v550 = vpack.c.b16 %v470, %v469
  %v551 = vpack.c.b16 %v472, %v471
  %v552 = vpack.c.b16 %v474, %v473
  %v553 = vpack.c.b16 %v476, %v475
  %v554 = vpack.c.b16 %v478, %v477
  %v555 = vpack.c.b16 %v480, %v479
  %v556 = vpack.c.b16 %v482, %v481
  %v557 = vpack.c.b16 %v484, %v483
  %v558 = vpack.c.b16 %v486, %v485
  %v559 = vpack.c.b16 %v488, %v487
  %v560 = vpack.c.b16 %v490, %v489
  %v561 = vpack.c.b16 %v492, %v491
  %v562 = vpack.c.b16 %v494, %v493
  %v563 = vpack.c.b16 %v496, %v495
  %v564 = vpack.c.b16 %v498, %v497
  %v565 = vpack.c.b16 %v500, %v499
  %v566 = vpack.c.b16 %v502, %v501
  %631 = vmatprep.subr.bf16.mxu0 0
  %632 = vmatpush1.bf16.msra.mxu0 %v503
  %633 = vmatprep.subr.bf16.mxu0 0
  %634 = vmatpush1.bf16.msra.mxu0 %v504
  %635 = vmatprep.subr.bf16.mxu0 0
  %636 = vmatpush1.bf16.msra.mxu0 %v505
  %637 = vmatprep.subr.bf16.mxu0 0
  %638 = vmatpush1.bf16.msra.mxu0 %v506
  %639 = vmatprep.subr.bf16.mxu0 0
  %640 = vmatpush1.bf16.msra.mxu0 %v507
  %641 = vmatprep.subr.bf16.mxu0 0
  %642 = vmatpush1.bf16.msra.mxu0 %v508
  %643 = vmatprep.subr.bf16.mxu0 0
  %644 = vmatpush1.bf16.msra.mxu0 %v509
  %645 = vmatprep.subr.bf16.mxu0 0
  %646 = vmatpush1.bf16.msra.mxu0 %v510
  %647 = vmatprep.subr.bf16.mxu0 0
  %648 = vmatpush1.bf16.msra.mxu0 %v511
  %649 = vmatprep.subr.bf16.mxu0 0
  %650 = vmatpush1.bf16.msra.mxu0 %v512
  %651 = vmatprep.subr.bf16.mxu0 0
  %652 = vmatpush1.bf16.msra.mxu0 %v513
  %653 = vmatprep.subr.bf16.mxu0 0
  %654 = vmatpush1.bf16.msra.mxu0 %v514
  %655 = vmatprep.subr.bf16.mxu0 0
  %656 = vmatpush1.bf16.msra.mxu0 %v515
  %657 = vmatprep.subr.bf16.mxu0 0
  %658 = vmatpush1.bf16.msra.mxu0 %v516
  %659 = vmatprep.subr.bf16.mxu0 0
  %660 = vmatpush1.bf16.msra.mxu0 %v517
  %661 = vmatprep.subr.bf16.mxu0 0
  %662 = vmatpush1.bf16.msra.mxu0 %v518
  %663 = vmatprep.mubr.bf16.mxu0 %v216
  %664 = vmatmul.mubr.bf16.gmra.mrb[0].mxu0 %v215
  %v665 = vpop.f32.mrb[0].mxu0
  %v666 = vadd.f32 0.0, %v665
  %v667 = vpop.f32.mrb[0].mxu0
  %v668 = vpop.f32.mrb[0].mxu0
  %v669 = vadd.f32 0.0, %v668
  %v670 = vpop.f32.mrb[0].mxu0
  %671 = vmatprep.mubr.bf16.mxu0 %v224
  %672 = vmatmul.mubr.bf16.gmra.mrb[0].mxu0 %v223
  %v673 = vpop.f32.mrb[0].mxu0
  %v674 = vadd.f32 0.0, %v673
  %v675 = vpop.f32.mrb[0].mxu0
  %v676 = vpop.f32.mrb[0].mxu0
  %v677 = vadd.f32 0.0, %v676
  %v678 = vpop.f32.mrb[0].mxu0
  %679 = vdwg.mxu0
  %680 = vmatprep.subr.bf16.mxu0 0
  %681 = vmatpush1.bf16.msra.mxu0 %v519
  %682 = vmatprep.subr.bf16.mxu0 0
  %683 = vmatpush1.bf16.msra.mxu0 %v520
  %684 = vmatprep.subr.bf16.mxu0 0
  %685 = vmatpush1.bf16.msra.mxu0 %v521
  %686 = vmatprep.subr.bf16.mxu0 0
  %687 = vmatpush1.bf16.msra.mxu0 %v522
  %688 = vmatprep.subr.bf16.mxu0 0
  %689 = vmatpush1.bf16.msra.mxu0 %v523
  %690 = vmatprep.subr.bf16.mxu0 0
  %691 = vmatpush1.bf16.msra.mxu0 %v524
  %692 = vmatprep.subr.bf16.mxu0 0
  %693 = vmatpush1.bf16.msra.mxu0 %v525
  %694 = vmatprep.subr.bf16.mxu0 0
  %695 = vmatpush1.bf16.msra.mxu0 %v526
  %696 = vmatprep.subr.bf16.mxu0 0
  %697 = vmatpush1.bf16.msra.mxu0 %v527
  %698 = vmatprep.subr.bf16.mxu0 0
  %699 = vmatpush1.bf16.msra.mxu0 %v528
  %700 = vmatprep.subr.bf16.mxu0 0
  %701 = vmatpush1.bf16.msra.mxu0 %v529
  %702 = vmatprep.subr.bf16.mxu0 0
  %703 = vmatpush1.bf16.msra.mxu0 %v530
  %704 = vmatprep.subr.bf16.mxu0 0
  %705 = vmatpush1.bf16.msra.mxu0 %v531
  %706 = vmatprep.subr.bf16.mxu0 0
  %707 = vmatpush1.bf16.msra.mxu0 %v532
  %708 = vmatprep.subr.bf16.mxu0 0
  %709 = vmatpush1.bf16.msra.mxu0 %v533
  %710 = vmatprep.subr.bf16.mxu0 0
  %711 = vmatpush1.bf16.msra.mxu0 %v534
  %712 = vmatprep.mubr.bf16.mxu0 %v218
  %713 = vmatmul.mubr.bf16.gmra.mrb[0].mxu0 %v217
  %v714 = vpop.f32.mrb[0].mxu0
  %v715 = vadd.f32 %v666, %v714
  %v716 = vpop.f32.mrb[0].mxu0
  %v717 = vpop.f32.mrb[0].mxu0
  %v718 = vadd.f32 %v669, %v717
  %v719 = vpop.f32.mrb[0].mxu0
  %720 = vmatprep.mubr.bf16.mxu0 %v226
  %721 = vmatmul.mubr.bf16.gmra.mrb[0].mxu0 %v225
  %v722 = vpop.f32.mrb[0].mxu0
  %v723 = vadd.f32 %v674, %v722
  %v724 = vpop.f32.mrb[0].mxu0
  %v725 = vpop.f32.mrb[0].mxu0
  %v726 = vadd.f32 %v677, %v725
  %v727 = vpop.f32.mrb[0].mxu0
  %728 = vdwg.mxu0
  %729 = vmatprep.subr.bf16.mxu0 0
  %730 = vmatpush1.bf16.msra.mxu0 %v535
  %731 = vmatprep.subr.bf16.mxu0 0
  %732 = vmatpush1.bf16.msra.mxu0 %v536
  %733 = vmatprep.subr.bf16.mxu0 0
  %734 = vmatpush1.bf16.msra.mxu0 %v537
  %735 = vmatprep.subr.bf16.mxu0 0
  %736 = vmatpush1.bf16.msra.mxu0 %v538
  %737 = vmatprep.subr.bf16.mxu0 0
  %738 = vmatpush1.bf16.msra.mxu0 %v539
  %739 = vmatprep.subr.bf16.mxu0 0
  %740 = vmatpush1.bf16.msra.mxu0 %v540
  %741 = vmatprep.subr.bf16.mxu0 0
  %742 = vmatpush1.bf16.msra.mxu0 %v541
  %743 = vmatprep.subr.bf16.mxu0 0
  %744 = vmatpush1.bf16.msra.mxu0 %v542
  %745 = vmatprep.subr.bf16.mxu0 0
  %746 = vmatpush1.bf16.msra.mxu0 %v543
  %747 = vmatprep.subr.bf16.mxu0 0
  %748 = vmatpush1.bf16.msra.mxu0 %v544
  %749 = vmatprep.subr.bf16.mxu0 0
  %750 = vmatpush1.bf16.msra.mxu0 %v545
  %751 = vmatprep.subr.bf16.mxu0 0
  %752 = vmatpush1.bf16.msra.mxu0 %v546
  %753 = vmatprep.subr.bf16.mxu0 0
  %754 = vmatpush1.bf16.msra.mxu0 %v547
  %755 = vmatprep.subr.bf16.mxu0 0
  %756 = vmatpush1.bf16.msra.mxu0 %v548
  %757 = vmatprep.subr.bf16.mxu0 0
  %758 = vmatpush1.bf16.msra.mxu0 %v549
  %759 = vmatprep.subr.bf16.mxu0 0
  %760 = vmatpush1.bf16.msra.mxu0 %v550
  %761 = vmatprep.mubr.bf16.mxu0 %v220
  %762 = vmatmul.mubr.bf16.gmra.mrb[0].mxu0 %v219
  %v763 = vpop.f32.mrb[0].mxu0
  %v764 = vadd.f32 %v715, %v763
  %v765 = vpop.f32.mrb[0].mxu0
  %v766 = vpop.f32.mrb[0].mxu0
  %v767 = vadd.f32 %v718, %v766
  %v768 = vpop.f32.mrb[0].mxu0
  %769 = vmatprep.mubr.bf16.mxu0 %v228
  %770 = vmatmul.mubr.bf16.gmra.mrb[0].mxu0 %v227
  %v771 = vpop.f32.mrb[0].mxu0
  %v772 = vadd.f32 %v723, %v771
  %v773 = vpop.f32.mrb[0].mxu0
  %v774 = vpop.f32.mrb[0].mxu0
  %v775 = vadd.f32 %v726, %v774
  %v776 = vpop.f32.mrb[0].mxu0
  %777 = vdwg.mxu0
  %778 = vmatprep.subr.bf16.mxu0 0
  %779 = vmatpush1.bf16.msra.mxu0 %v551
  %780 = vmatprep.subr.bf16.mxu0 0
  %781 = vmatpush1.bf16.msra.mxu0 %v552
  %782 = vmatprep.subr.bf16.mxu0 0
  %783 = vmatpush1.bf16.msra.mxu0 %v553
  %784 = vmatprep.subr.bf16.mxu0 0
  %785 = vmatpush1.bf16.msra.mxu0 %v554
  %786 = vmatprep.subr.bf16.mxu0 0
  %787 = vmatpush1.bf16.msra.mxu0 %v555
  %788 = vmatprep.subr.bf16.mxu0 0
  %789 = vmatpush1.bf16.msra.mxu0 %v556
  %790 = vmatprep.subr.bf16.mxu0 0
  %791 = vmatpush1.bf16.msra.mxu0 %v557
  %792 = vmatprep.subr.bf16.mxu0 0
  %793 = vmatpush1.bf16.msra.mxu0 %v558
  %794 = vmatprep.subr.bf16.mxu0 0
  %795 = vmatpush1.bf16.msra.mxu0 %v559
  %796 = vmatprep.subr.bf16.mxu0 0
  %797 = vmatpush1.bf16.msra.mxu0 %v560
  %798 = vmatprep.subr.bf16.mxu0 0
  %799 = vmatpush1.bf16.msra.mxu0 %v561
  %800 = vmatprep.subr.bf16.mxu0 0
  %801 = vmatpush1.bf16.msra.mxu0 %v562
  %802 = vmatprep.subr.bf16.mxu0 0
  %803 = vmatpush1.bf16.msra.mxu0 %v563
  %804 = vmatprep.subr.bf16.mxu0 0
  %805 = vmatpush1.bf16.msra.mxu0 %v564
  %806 = vmatprep.subr.bf16.mxu0 0
  %807 = vmatpush1.bf16.msra.mxu0 %v565
  %808 = vmatprep.subr.bf16.mxu0 0
  %809 = vmatpush1.bf16.msra.mxu0 %v566
  %810 = vmatprep.mubr.bf16.mxu0 %v222
  %811 = vmatmul.mubr.bf16.gmra.mrb[0].mxu0 %v221
  %v812 = vpop.f32.mrb[0].mxu0
  %v813 = vadd.f32 %v764, %v812
  %v814 = vpop.f32.mrb[0].mxu0
  %v815 = vpop.f32.mrb[0].mxu0
  %v816 = vadd.f32 %v767, %v815
  %v817 = vpop.f32.mrb[0].mxu0
  %818 = vmatprep.mubr.bf16.mxu0 %v230
  %819 = vmatmul.mubr.bf16.gmra.mrb[0].mxu0 %v229
  %v820 = vpop.f32.mrb[0].mxu0
  %v821 = vadd.f32 %v772, %v820
  %v822 = vpop.f32.mrb[0].mxu0
  %v823 = vpop.f32.mrb[0].mxu0
  %v824 = vadd.f32 %v775, %v823
  %v825 = vpop.f32.mrb[0].mxu0
  %826 = vdwg.mxu0
  %v827 = vld [vmem:[%s2] sm:$0xff]
  %v828 = vld [vmem:[%s2 + $0x8] sm:$0xff]
  %v829 = vld [vmem:[%s3] sm:$0xff]
  %v830 = vld [vmem:[%s3 + $0x8] sm:$0xff]
  %v831 = vld [vmem:[%s4] sm:$0x1]
  %v832 = vmul.f32 %v813, %v827
  %v833 = vmul.f32 %v816, %v828
  %v834 = vmul.f32 %v821, %v827
  %v835 = vmul.f32 %v824, %v828
  %836 = vadd.xlane.f32.xlu0 %v832
  %v837 = vpop.xlane.xlu0 %836
  %838 = vadd.xlane.f32.xlu0 %v833
  %v839 = vpop.xlane.xlu0 %838
  %840 = vadd.xlane.f32.xlu0 %v834
  %v841 = vpop.xlane.xlu0 %840
  %842 = vadd.xlane.f32.xlu0 %v835
  %v843 = vpop.xlane.xlu0 %842
  %v848 = vlaneseq
  %v849 = vand.u32 %v848, 127
  %v850 = vlaneseq
  %v851 = vshrl.u32 %v850, 7
  %v852 = vsub.s32 %v849, %v851
  %v853 = vrot.slane %v837, %v852
  %v854 = vadd.s32 %v849, 4294967288
  %v855 = vlaneseq
  %v856 = vshrl.u32 %v855, 7
  %v857 = vsub.s32 %v854, %v856
  %v858 = vrot.slane %v839, %v857
  %vm859 = vcmask 130112
  %v860 = vsel %vm859, %v858, %v853
  %v861 = vlaneseq
  %v862 = vshrl.u32 %v861, 7
  %v863 = vsub.s32 %v849, %v862
  %v864 = vrot.slane %v841, %v863
  %v865 = vlaneseq
  %v866 = vshrl.u32 %v865, 7
  %v867 = vsub.s32 %v854, %v866
  %v868 = vrot.slane %v843, %v867
  %v869 = vsel %vm859, %v868, %v864
  %vm870 = vcmask 1041409
  %v871 = vsel %vm870, %v869, %v860
  %vm873 = vcmask 123904
  %v874 = vsel %vm873, %v871, 0.0
  %875 = vadd.xlane.f32.xlu0 %v874
  %v876 = vpop.xlane.xlu0 %875
  %v877 = vmul.f32 %v813, %v829
  %v878 = vmul.f32 %v816, %v830
  %v879 = vmul.f32 %v821, %v829
  %v880 = vmul.f32 %v824, %v830
  %881 = vadd.xlane.f32.xlu0 %v877
  %v882 = vpop.xlane.xlu0 %881
  %883 = vadd.xlane.f32.xlu0 %v878
  %v884 = vpop.xlane.xlu0 %883
  %885 = vadd.xlane.f32.xlu0 %v879
  %v886 = vpop.xlane.xlu0 %885
  %887 = vadd.xlane.f32.xlu0 %v880
  %v888 = vpop.xlane.xlu0 %887
  %v893 = vlaneseq
  %v894 = vshrl.u32 %v893, 7
  %v895 = vsub.s32 %v849, %v894
  %v896 = vrot.slane %v882, %v895
  %v897 = vlaneseq
  %v898 = vshrl.u32 %v897, 7
  %v899 = vsub.s32 %v854, %v898
  %v900 = vrot.slane %v884, %v899
  %v901 = vsel %vm859, %v900, %v896
  %v902 = vlaneseq
  %v903 = vshrl.u32 %v902, 7
  %v904 = vsub.s32 %v849, %v903
  %v905 = vrot.slane %v886, %v904
  %v906 = vlaneseq
  %v907 = vshrl.u32 %v906, 7
  %v908 = vsub.s32 %v854, %v907
  %v909 = vrot.slane %v888, %v908
  %v910 = vsel %vm859, %v909, %v905
  %v911 = vsel %vm870, %v910, %v901
  %v913 = vsel %vm873, %v911, 0.0
  %914 = vadd.xlane.f32.xlu0 %v913
  %v915 = vpop.xlane.xlu0 %914
  %v917 = vlaneseq
  %v918 = vshrl.u32 %v917, 7
  %v919 = vsub.s32 0, %v918
  %v920 = vrot.slane %v831, %v919
  %v922 = vadd.f32 %v876, %v920
  %v923 = vadd.f32 %v915, %v920
  %v924 = vmul.f32 %v923, 1.442695
  %v925 = vpow.pop %v924
  %vm926 = vcmask 1024
  %927 = vst.msk [vmem:[%s5] sm:$0x3] %vm926, %v922
  %929 = vrot.lane.b32.xlu0 %v925, 127
  %v930 = vpop.permute.xlu0 %929
  %932 = vst.msk [vmem:[%s6] sm:$0x3] %vm926, %v930
  // Predicated region
  $region22: #{qnet_forward.7} parent=0 // pred_check
    _
  $region23: #{qnet_forward.7} parent=0 // pred_check_branch
    %934 = sbr.rel (0) target = $region25
  $region24: #{qnet_forward.7} parent=0 // pred_region
    _
  $region25: #{qnet_forward.7} parent=0 // pred_fallthru
    _
  // Predicated region
  $region26: #{qnet_forward.7} parent=0 // pred_check
    _
  $region27: #{qnet_forward.7} parent=0 // pred_check_branch
    %936 = sbr.rel (0) target = $region29
  $region28: #{qnet_forward.7} parent=0 // pred_region
    _
  $region29: #{qnet_forward.7} parent=0 // pred_fallthru
    _
  // Predicated region
  $region30: #{qnet_forward.7} parent=0 // pred_check
    _
  $region31: #{qnet_forward.7} parent=0 // pred_check_branch
    %938 = sbr.rel (0) target = $region33
  $region32: #{qnet_forward.7} parent=0 // pred_region
    _
  $region33: #{qnet_forward.7} parent=0 // pred_fallthru
    _
  // Predicated region
  $region34: #{qnet_forward.7} parent=0 // pred_check
    _
  $region35: #{qnet_forward.7} parent=0 // pred_check_branch
    %940 = sbr.rel (0) target = $region37
  $region36: #{qnet_forward.7} parent=0 // pred_region
    _
  $region37: #{qnet_forward.7} parent=0 // pred_fallthru
    _

</llo_original>
